<compile_context>
chip_gen: v7x
topology: tpu7x:2x2x1
jax: 0.10.0
libtpu: 0.0.40
codegen_flags: <defaults>
</compile_context>

<pallas_src>
from functools import partial

import numpy as np
import jax
import jax.numpy as jnp
from jax.experimental import pallas as pl
from jax.experimental.pallas import tpu as pltpu


_WEIGHT_KEYS = ("s1", "s2", "w1", "b1", "w2", "b2",
                "w8", "b8", "w10", "b10", "w12", "b12")


def _round_up(x, m):
    return ((x + m - 1) // m) * m


# ----------------------------------------------------------------------------
# Fused LeNet5 kernel: TB images per grid step, fully VMEM resident
# ----------------------------------------------------------------------------
def _lenet5_kernel(x_ref, s1_ref, s2_ref, w1_ref, b1_ref, w2_ref, b2_ref,
                   w8_ref, b8_ref, w10_ref, b10_ref, w12_ref, b12_ref,
                   out_ref, p2_ref, *, tb, k, ph1, oh2, ph2, n1pad, n2pad):
    f32 = jnp.float32
    bf16 = jnp.bfloat16

    # ---- conv stages: one image at a time (unrolled), ONE matmul per conv ---
    for b in range(tb):
        # conv1 + bias + relu + 2x2 maxpool
        xc = x_ref[b]                                               # (OH1, K*W*Cin) bf16
        y = jnp.dot(xc, w1_ref[...], preferred_element_type=f32)    # (OH1, 2*n1pad)
        # W-pool via even/odd weight columns; bias/relu reorderings are exact
        # (monotone ops), same as the reference conv -> +bias -> relu -> pool.
        m1 = jnp.maximum(jnp.maximum(y[:, :n1pad], y[:, n1pad:])
                         + b1_ref[...], 0.0)                        # (OH1, n1pad)
        # H-pool: tiny precomputed selector matmul (even rows | odd rows).
        r1 = jnp.dot(s1_ref[...], m1.astype(bf16),
                     preferred_element_type=f32)                    # (2*PH1, n1pad)
        p1 = jnp.maximum(r1[:ph1], r1[ph1:])                        # (PH1, n1pad)

        # conv4 + bias + relu + 2x2 maxpool (input concat is 128-lane aligned)
        xc2 = jnp.concatenate([p1[kh:kh + oh2, :] for kh in range(k)],
                              axis=-1).astype(bf16)                 # (OH2, K*n1pad)
        y2 = jnp.dot(xc2, w2_ref[...], preferred_element_type=f32)  # (OH2, 2*n2pad)
        m2 = jnp.maximum(jnp.maximum(y2[:, :n2pad], y2[:, n2pad:])
                         + b2_ref[...], 0.0)                        # (OH2, n2pad)
        r2 = jnp.dot(s2_ref[...], m2.astype(bf16),
                     preferred_element_type=f32)                    # (2*PH2, n2pad)
        p2_ref[b] = jnp.maximum(r2[:ph2], r2[ph2:])                 # (PH2, n2pad)

    # ---- batched FC stage: M = TB -------------------------------------------
    p2 = p2_ref[...]                                                # (TB, PH2, n2pad)
    acc = jnp.dot(p2[:, 0, :].astype(bf16), w8_ref[0],
                  preferred_element_type=f32)                       # (TB, F8)
    for hh in range(1, ph2):
        acc = acc + jnp.dot(p2[:, hh, :].astype(bf16), w8_ref[hh],
                            preferred_element_type=f32)
    z = jnp.maximum(acc + b8_ref[...], 0.0).astype(bf16)            # (TB, F8)
    z = jnp.maximum(jnp.dot(z, w10_ref[...], preferred_element_type=f32)
                    + b10_ref[...], 0.0).astype(bf16)               # (TB, F10)
    out_ref[0] = (jnp.dot(z, w12_ref[...], preferred_element_type=f32)
                  + b12_ref[...])                                   # (TB, NPAD)


# ----------------------------------------------------------------------------
# One-time parameter repacking (PyTorch layout -> kernel-friendly tensors)
# ----------------------------------------------------------------------------
def _conv_banded_fused(w, w_in_spatial, in_stride, n_pad):
    """Fused banded weight for a valid KxK stride-1 conv with the 2x2 W-pool
    folded in.  Input rows are laid out as (h, w*Cin + ci) with lane stride
    `in_stride`; the kernel feeds xcat[oh, kh*in_stride + j] = slab[oh+kh, j],
    so one matmul xcat @ M gives columns [even | odd] of width n_pad each,
    laid out as (oh, parity*n_pad + p*Cout + co) with ow = 2p + parity."""
    w = np.asarray(w, np.float32)                    # (Cout, Cin, K, K)
    cout, cin, k, _ = w.shape
    ow = w_in_spatial - k + 1
    assert ow % 2 == 0
    pw = ow // 2
    assert w_in_spatial * cin <= in_stride
    assert pw * cout <= n_pad
    m = np.zeros((k * in_stride, 2 * n_pad), np.float32)
    for parity in (0, 1):
        cbase = parity * n_pad
        for kh in range(k):
            for kw in range(k):
                blk = w[:, :, kh, kw].T              # (Cin, Cout)
                for p in range(pw):
                    r0 = kh * in_stride + (2 * p + parity + kw) * cin
                    m[r0:r0 + cin, cbase + p * cout: cbase + (p + 1) * cout] = blk
    return m


def _pool_selector_stacked(oh):
    """(2*ph, oh) 0/1 matrix: first ph rows select even input rows, last ph
    rows select odd input rows (2x2 H-max-pool = max of the two halves)."""
    ph = oh // 2
    s = np.zeros((2 * ph, oh), np.float32)
    for p in range(ph):
        s[p, 2 * p] = 1.0
        s[ph + p, 2 * p + 1] = 1.0
    return s


def prepare_params(params, *, num_classes, h_in=32, w_in=32):
    w1 = np.asarray(params["w_conv1"], np.float32)
    c1, cin, k, _ = w1.shape
    w4 = np.asarray(params["w_conv4"], np.float32)
    c2 = w4.shape[0]

    oh1, ow1 = h_in - k + 1, w_in - k + 1
    ph1, pw1 = oh1 // 2, ow1 // 2
    oh2, ow2 = ph1 - k + 1, pw1 - k + 1
    ph2, pw2 = oh2 // 2, ow2 // 2
    assert oh1 % 2 == 0 and ow1 % 2 == 0 and oh2 % 2 == 0 and ow2 % 2 == 0

    n1pad = _round_up(pw1 * c1, 128)                 # 112 -> 128 (wf=1)
    n2pad = _round_up(pw2 * c2, 128)                 # 160 -> 256 (wf=1)
    f8 = int(params["w_fc8"].shape[0])
    f10 = int(params["w_fc10"].shape[0])
    npad = _round_up(num_classes, 128)

    # Fused banded conv weights (kh folded into the K dim, W-pool into N).
    w1f = _conv_banded_fused(params["w_conv1"], w_in, w_in * cin, n1pad)
    w2f = _conv_banded_fused(params["w_conv4"], pw1, n1pad, n2pad)

    # Biases tiled to the (p*Cout + co) lane layout, zero-padded to lane dense.
    b1 = np.zeros((1, n1pad), np.float32)
    b1[0, :pw1 * c1] = np.tile(np.asarray(params["b_conv1"], np.float32), pw1)
    b2 = np.zeros((1, n2pad), np.float32)
    b2[0, :pw2 * c2] = np.tile(np.asarray(params["b_conv4"], np.float32), pw2)

    # fc8: fold the NCHW flatten (c*PH2*PW2 + h*PW2 + w) into a
    # (PH2, n2pad, F8) weight consuming the (h, w*C2 + c)-ordered pooled slab.
    w8 = np.asarray(params["w_fc8"], np.float32)
    w8 = w8.reshape(f8, c2, ph2, pw2).transpose(2, 3, 1, 0).reshape(ph2, pw2 * c2, f8)
    w8p = np.zeros((ph2, n2pad, f8), np.float32)
    w8p[:, :pw2 * c2, :] = w8

    w12p = np.zeros((f10, npad), np.float32)
    w12p[:, :num_classes] = np.asarray(params["w_fc12"], np.float32).T
    b12p = np.zeros((1, npad), np.float32)
    b12p[0, :num_classes] = np.asarray(params["b_fc12"], np.float32)

    dims = dict(k=k, cin=cin, h=h_in, w=w_in, oh1=oh1, ph1=ph1, pw1=pw1,
                oh2=oh2, ph2=ph2, pw2=pw2, n1pad=n1pad, n2pad=n2pad,
                num_classes=num_classes, npad=npad)
    bf16 = jnp.bfloat16
    prep = dict(
        dims=dims,
        s1=jnp.asarray(_pool_selector_stacked(oh1), bf16),
        s2=jnp.asarray(_pool_selector_stacked(oh2), bf16),
        w1=jnp.asarray(w1f, bf16),
        b1=jnp.asarray(b1),
        w2=jnp.asarray(w2f, bf16),
        b2=jnp.asarray(b2),
        w8=jnp.asarray(w8p, bf16),
        b8=jnp.asarray(params["b_fc8"], jnp.float32).reshape(1, f8),
        w10=jnp.asarray(np.asarray(params["w_fc10"], np.float32).T, bf16),
        b10=jnp.asarray(params["b_fc10"], jnp.float32).reshape(1, f10),
        w12=jnp.asarray(w12p, bf16),
        b12=jnp.asarray(b12p),
    )
    return prep


# ----------------------------------------------------------------------------
# Forward wrapper: one pallas_call, grid over batch blocks
# ----------------------------------------------------------------------------
def make_forward(dims, *, batch_block=8):
    k, cin = dims["k"], dims["cin"]
    h, w = dims["h"], dims["w"]
    oh1, ph1 = dims["oh1"], dims["ph1"]
    oh2, ph2 = dims["oh2"], dims["ph2"]
    n1pad, n2pad = dims["n1pad"], dims["n2pad"]
    npad, ncls = dims["npad"], dims["num_classes"]
    kwc = k * w * cin

    @jax.jit
    def forward(x_nchw, s1, s2, w1, b1, w2, b2, w8, b8, w10, b10, w12, b12):
        bsz, c_in, hh, ww = x_nchw.shape
        assert (c_in, hh, ww) == (cin, h, w)

        # Batch blocking: amortize per-step overhead; keep >= 2 grid steps
        # when possible so v7x's two TensorCores split the batch.
        tb = max(1, min(batch_block, bsz // 2)) if bsz > 1 else 1
        nblk = pl.cdiv(bsz, tb)
        bpad = nblk * tb

        # Layout plumbing (no compute): NCHW -> (B, H, W*Cin) slab, then
        # row-im2col over kh so conv1 is a single deep-K matmul in-kernel.
        slab = jnp.transpose(x_nchw, (0, 2, 3, 1)).reshape(bsz, h, w * cin)
        xcat = jnp.concatenate([slab[:, kh:kh + oh1, :] for kh in range(k)],
                               axis=-1).astype(jnp.bfloat16)      # (B, OH1, K*W*Cin)
        if bpad != bsz:
            xcat = jnp.pad(xcat, ((0, bpad - bsz), (0, 0), (0, 0)))

        weights = (s1, s2, w1, b1, w2, b2, w8, b8, w10, b10, w12, b12)

        def full_spec(arr):
            nd = arr.ndim
            return pl.BlockSpec(arr.shape, lambda i, _nd=nd: (0,) * _nd)

        in_specs = [pl.BlockSpec((tb, oh1, kwc), lambda i: (i, 0, 0))]
        in_specs += [full_spec(a) for a in weights]

        kernel = partial(_lenet5_kernel, tb=tb, k=k, ph1=ph1, oh2=oh2,
                         ph2=ph2, n1pad=n1pad, n2pad=n2pad)

        out = pl.pallas_call(
            kernel,
            out_shape=jax.ShapeDtypeStruct((nblk, tb, npad), jnp.float32),
            grid_spec=pltpu.PrefetchScalarGridSpec(
                num_scalar_prefetch=0,
                grid=(nblk,),
                in_specs=in_specs,
                out_specs=pl.BlockSpec((1, tb, npad), lambda i: (i, 0, 0)),
                scratch_shapes=[pltpu.VMEM((tb, ph2, n2pad), jnp.float32)],
            ),
            compiler_params=pltpu.CompilerParams(
                dimension_semantics=("parallel",)),
        )(xcat, *weights)
        return out.reshape(bpad, npad)[:bsz, :ncls]

    return forward


# ----------------------------------------------------------------------------
# Plain-JAX reference (for correctness) and PyTorch-style init
# ----------------------------------------------------------------------------
def lenet5_reference(x_nchw, params):
    hp = jax.lax.Precision.HIGHEST
    dn = ("NCHW", "OIHW", "NCHW")
    y = jax.lax.conv_general_dilated(x_nchw, params["w_conv1"], (1, 1), "VALID",
                                     dimension_numbers=dn, precision=hp)
    y = jnp.maximum(y + params["b_conv1"][None, :, None, None], 0.0)
    y = jax.lax.reduce_window(y, -jnp.inf, jax.lax.max, (1, 1, 2, 2), (1, 1, 2, 2), "VALID")
    y = jax.lax.conv_general_dilated(y, params["w_conv4"], (1, 1), "VALID",
                                     dimension_numbers=dn, precision=hp)
    y = jnp.maximum(y + params["b_conv4"][None, :, None, None], 0.0)
    y = jax.lax.reduce_window(y, -jnp.inf, jax.lax.max, (1, 1, 2, 2), (1, 1, 2, 2), "VALID")
    y = y.reshape(y.shape[0], -1)
    y = jnp.maximum(jnp.dot(y, params["w_fc8"].T, precision=hp) + params["b_fc8"], 0.0)
    y = jnp.maximum(jnp.dot(y, params["w_fc10"].T, precision=hp) + params["b_fc10"], 0.0)
    return jnp.dot(y, params["w_fc12"].T, precision=hp) + params["b_fc12"]


def init_params(key, *, num_classes=10, wider_factor=1, n_channels=1):
    k = jax.random.split(key, 5)
    c1, c2 = 8 * wider_factor, 32 * wider_factor
    f8, f10 = 256 * wider_factor, 128 * wider_factor
    # Conv: kaiming_normal_(mode='fan_out', relu) -> std = sqrt(2 / (Cout*K*K))
    return {
        "w_conv1": jax.random.normal(k[0], (c1, n_channels, 5, 5), jnp.float32)
        * jnp.sqrt(2.0 / (c1 * 25)),
        "b_conv1": jnp.zeros((c1,), jnp.float32),
        "w_conv4": jax.random.normal(k[1], (c2, c1, 5, 5), jnp.float32)
        * jnp.sqrt(2.0 / (c2 * 25)),
        "b_conv4": jnp.zeros((c2,), jnp.float32),
        # Linear: normal(0, 0.01), zero bias
        "w_fc8": jax.random.normal(k[2], (f8, c2 * 5 * 5), jnp.float32) * 0.01,
        "b_fc8": jnp.zeros((f8,), jnp.float32),
        "w_fc10": jax.random.normal(k[3], (f10, f8), jnp.float32) * 0.01,
        "b_fc10": jnp.zeros((f10,), jnp.float32),
        "w_fc12": jax.random.normal(k[4], (num_classes, f10), jnp.float32) * 0.01,
        "b_fc12": jnp.zeros((num_classes,), jnp.float32),
    }


if __name__ == "__main__":
    num_classes = 10
    wider_factor = 1   # module default is 8; keep shapes small, architecture identical
    n_channels = 1
    batch = 8          # -> TB=4, grid=2 (demonstrates batch blocking / megacore split)

    key = jax.random.PRNGKey(0)
    pkey, xkey = jax.random.split(key)
    params = init_params(pkey, num_classes=num_classes, wider_factor=wider_factor,
                         n_channels=n_channels)
    # LeNet5 geometry requires 32x32 spatial input (-> 5x5 after two conv+pool stages).
    x = jax.random.normal(xkey, (batch, n_channels, 32, 32), jnp.float32)  # NCHW

    prep = prepare_params(params, num_classes=num_classes, h_in=32, w_in=32)
    forward = make_forward(prep["dims"], batch_block=8)
    weight_args = tuple(prep[name] for name in _WEIGHT_KEYS)

    out = jax.block_until_ready(forward(x, *weight_args))
    assert out.shape == (batch, num_classes), out.shape
    assert out.dtype == jnp.float32

    ref = jax.block_until_ready(lenet5_reference(x, params))
    err = float(jnp.max(jnp.abs(out - ref)))
    scale = float(jnp.max(jnp.abs(ref))) + 1e-6
    # bf16 MXU operands (f32 accumulation) -> tiny deviation vs. f32 reference.
    assert err <= 2e-4 + 3e-2 * scale, f"mismatch: max_abs_err={err}, scale={scale}"

    print("KERNEL_OK")
</pallas_src>

<mosaic_0001>
module attributes {stable_mosaic.version = 11 : i64} {
  func.func @_lenet5_kernel(%arg0: i32, %arg1: memref<4x28x160xbf16, #tpu.memory_space<vmem>>, %arg2: memref<28x28xbf16, #tpu.memory_space<vmem>>, %arg3: memref<10x10xbf16, #tpu.memory_space<vmem>>, %arg4: memref<160x256xbf16, #tpu.memory_space<vmem>>, %arg5: memref<1x128xf32, #tpu.memory_space<vmem>>, %arg6: memref<640x512xbf16, #tpu.memory_space<vmem>>, %arg7: memref<1x256xf32, #tpu.memory_space<vmem>>, %arg8: memref<5x256x256xbf16, #tpu.memory_space<vmem>>, %arg9: memref<1x256xf32, #tpu.memory_space<vmem>>, %arg10: memref<256x128xbf16, #tpu.memory_space<vmem>>, %arg11: memref<1x128xf32, #tpu.memory_space<vmem>>, %arg12: memref<128x128xbf16, #tpu.memory_space<vmem>>, %arg13: memref<1x128xf32, #tpu.memory_space<vmem>>, %arg14: memref<1x4x128xf32, #tpu.memory_space<vmem>>, %arg15: memref<4x5x256xf32, #tpu.memory_space<vmem>>) attributes {dimension_semantics = [#tpu.dimension_semantics<parallel>], iteration_bounds = array<i64: 2>, scalar_prefetch = 0 : i64, scratch_operands = 1 : i64, tpu.core_type = #tpu.core_type<tc>, window_params = [{transform_indices = @transform_0, window_bounds = array<i64: 4, 28, 160>}, {pipeline_mode = #tpu.pipeline_mode<synchronous>, transform_indices = @transform_1, window_bounds = array<i64: 28, 28>}, {pipeline_mode = #tpu.pipeline_mode<synchronous>, transform_indices = @transform_2, window_bounds = array<i64: 10, 10>}, {pipeline_mode = #tpu.pipeline_mode<synchronous>, transform_indices = @transform_3, window_bounds = array<i64: 160, 256>}, {pipeline_mode = #tpu.pipeline_mode<synchronous>, transform_indices = @transform_4, window_bounds = array<i64: 1, 128>}, {pipeline_mode = #tpu.pipeline_mode<synchronous>, transform_indices = @transform_5, window_bounds = array<i64: 640, 512>}, {pipeline_mode = #tpu.pipeline_mode<synchronous>, transform_indices = @transform_6, window_bounds = array<i64: 1, 256>}, {pipeline_mode = #tpu.pipeline_mode<synchronous>, transform_indices = @transform_7, window_bounds = array<i64: 5, 256, 256>}, {pipeline_mode = #tpu.pipeline_mode<synchronous>, transform_indices = @transform_8, window_bounds = array<i64: 1, 256>}, {pipeline_mode = #tpu.pipeline_mode<synchronous>, transform_indices = @transform_9, window_bounds = array<i64: 256, 128>}, {pipeline_mode = #tpu.pipeline_mode<synchronous>, transform_indices = @transform_10, window_bounds = array<i64: 1, 128>}, {pipeline_mode = #tpu.pipeline_mode<synchronous>, transform_indices = @transform_11, window_bounds = array<i64: 128, 128>}, {pipeline_mode = #tpu.pipeline_mode<synchronous>, transform_indices = @transform_12, window_bounds = array<i64: 1, 128>}, {transform_indices = @transform_13, window_bounds = array<i64: 1, 4, 128>}]} {
    %c0 = arith.constant 0 : index
    %c0_0 = arith.constant 0 : index
    %c0_1 = arith.constant 0 : index
    %0 = vector.load %arg1[%c0, %c0_0, %c0_1] : memref<4x28x160xbf16, #tpu.memory_space<vmem>>, vector<1x28x160xbf16>
    %1 = vector.shape_cast %0 : vector<1x28x160xbf16> to vector<28x160xbf16>
    %c0_2 = arith.constant 0 : index
    %c0_3 = arith.constant 0 : index
    %2 = vector.load %arg4[%c0_2, %c0_3] : memref<160x256xbf16, #tpu.memory_space<vmem>>, vector<160x256xbf16>
    %cst = arith.constant dense<0.000000e+00> : vector<28x256xf32>
    %3 = tpu.matmul %1, %2, %cst {dimension_numbers = #tpu.dot_dimension_numbers<[1], [0], [0], [1], [0, 0, 1, 1], [], []>} : vector<28x160xbf16>, vector<160x256xbf16>, vector<28x256xf32> -> vector<28x256xf32>
    %4 = vector.extract_strided_slice %3 {offsets = [0, 0], sizes = [28, 128], strides = [1, 1]} : vector<28x256xf32> to vector<28x128xf32>
    %5 = vector.extract_strided_slice %3 {offsets = [0, 128], sizes = [28, 128], strides = [1, 1]} : vector<28x256xf32> to vector<28x128xf32>
    %6 = arith.maximumf %4, %5 : vector<28x128xf32>
    %c0_4 = arith.constant 0 : index
    %c0_5 = arith.constant 0 : index
    %7 = vector.load %arg5[%c0_4, %c0_5] : memref<1x128xf32, #tpu.memory_space<vmem>>, vector<1x128xf32>
    %8 = vector.broadcast %7 : vector<1x128xf32> to vector<28x128xf32>
    %9 = arith.addf %6, %8 : vector<28x128xf32>
    %cst_6 = arith.constant 0.000000e+00 : f32
    %10 = vector.broadcast %cst_6 : f32 to vector<28x128xf32>
    %11 = arith.maximumf %9, %10 : vector<28x128xf32>
    %c0_7 = arith.constant 0 : index
    %c0_8 = arith.constant 0 : index
    %12 = vector.load %arg2[%c0_7, %c0_8] : memref<28x28xbf16, #tpu.memory_space<vmem>>, vector<28x28xbf16>
    %13 = arith.truncf %11 : vector<28x128xf32> to vector<28x128xbf16>
    %cst_9 = arith.constant dense<0.000000e+00> : vector<28x128xf32>
    %14 = tpu.matmul %12, %13, %cst_9 {dimension_numbers = #tpu.dot_dimension_numbers<[1], [0], [0], [1], [0, 0, 1, 1], [], []>} : vector<28x28xbf16>, vector<28x128xbf16>, vector<28x128xf32> -> vector<28x128xf32>
    %15 = vector.extract_strided_slice %14 {offsets = [0, 0], sizes = [14, 128], strides = [1, 1]} : vector<28x128xf32> to vector<14x128xf32>
    %16 = vector.extract_strided_slice %14 {offsets = [14, 0], sizes = [14, 128], strides = [1, 1]} : vector<28x128xf32> to vector<14x128xf32>
    %17 = arith.maximumf %15, %16 : vector<14x128xf32>
    %18 = vector.extract_strided_slice %17 {offsets = [0, 0], sizes = [10, 128], strides = [1, 1]} : vector<14x128xf32> to vector<10x128xf32>
    %19 = vector.extract_strided_slice %17 {offsets = [1, 0], sizes = [10, 128], strides = [1, 1]} : vector<14x128xf32> to vector<10x128xf32>
    %20 = vector.extract_strided_slice %17 {offsets = [2, 0], sizes = [10, 128], strides = [1, 1]} : vector<14x128xf32> to vector<10x128xf32>
    %21 = vector.extract_strided_slice %17 {offsets = [3, 0], sizes = [10, 128], strides = [1, 1]} : vector<14x128xf32> to vector<10x128xf32>
    %22 = vector.extract_strided_slice %17 {offsets = [4, 0], sizes = [10, 128], strides = [1, 1]} : vector<14x128xf32> to vector<10x128xf32>
    %23 = tpu.concatenate %18, %19, %20, %21, %22 in 1 : vector<10x128xf32>, vector<10x128xf32>, vector<10x128xf32>, vector<10x128xf32>, vector<10x128xf32> -> vector<10x640xf32>
    %24 = arith.truncf %23 : vector<10x640xf32> to vector<10x640xbf16>
    %c0_10 = arith.constant 0 : index
    %c0_11 = arith.constant 0 : index
    %25 = vector.load %arg6[%c0_10, %c0_11] : memref<640x512xbf16, #tpu.memory_space<vmem>>, vector<640x512xbf16>
    %cst_12 = arith.constant dense<0.000000e+00> : vector<10x512xf32>
    %26 = tpu.matmul %24, %25, %cst_12 {dimension_numbers = #tpu.dot_dimension_numbers<[1], [0], [0], [1], [0, 0, 1, 1], [], []>} : vector<10x640xbf16>, vector<640x512xbf16>, vector<10x512xf32> -> vector<10x512xf32>
    %27 = vector.extract_strided_slice %26 {offsets = [0, 0], sizes = [10, 256], strides = [1, 1]} : vector<10x512xf32> to vector<10x256xf32>
    %28 = vector.extract_strided_slice %26 {offsets = [0, 256], sizes = [10, 256], strides = [1, 1]} : vector<10x512xf32> to vector<10x256xf32>
    %29 = arith.maximumf %27, %28 : vector<10x256xf32>
    %c0_13 = arith.constant 0 : index
    %c0_14 = arith.constant 0 : index
    %30 = vector.load %arg7[%c0_13, %c0_14] : memref<1x256xf32, #tpu.memory_space<vmem>>, vector<1x256xf32>
    %31 = vector.broadcast %30 : vector<1x256xf32> to vector<10x256xf32>
    %32 = arith.addf %29, %31 : vector<10x256xf32>
    %cst_15 = arith.constant 0.000000e+00 : f32
    %33 = vector.broadcast %cst_15 : f32 to vector<10x256xf32>
    %34 = arith.maximumf %32, %33 : vector<10x256xf32>
    %c0_16 = arith.constant 0 : index
    %c0_17 = arith.constant 0 : index
    %35 = vector.load %arg3[%c0_16, %c0_17] : memref<10x10xbf16, #tpu.memory_space<vmem>>, vector<10x10xbf16>
    %36 = arith.truncf %34 : vector<10x256xf32> to vector<10x256xbf16>
    %cst_18 = arith.constant dense<0.000000e+00> : vector<10x256xf32>
    %37 = tpu.matmul %35, %36, %cst_18 {dimension_numbers = #tpu.dot_dimension_numbers<[1], [0], [0], [1], [0, 0, 1, 1], [], []>} : vector<10x10xbf16>, vector<10x256xbf16>, vector<10x256xf32> -> vector<10x256xf32>
    %38 = vector.extract_strided_slice %37 {offsets = [0, 0], sizes = [5, 256], strides = [1, 1]} : vector<10x256xf32> to vector<5x256xf32>
    %39 = vector.extract_strided_slice %37 {offsets = [5, 0], sizes = [5, 256], strides = [1, 1]} : vector<10x256xf32> to vector<5x256xf32>
    %40 = arith.maximumf %38, %39 : vector<5x256xf32>
    %c0_19 = arith.constant 0 : index
    %c0_20 = arith.constant 0 : index
    %c0_21 = arith.constant 0 : index
    %41 = vector.load %arg15[%c0_19, %c0_20, %c0_21] : memref<4x5x256xf32, #tpu.memory_space<vmem>>, vector<1x5x256xf32>
    %42 = vector.shape_cast %41 : vector<1x5x256xf32> to vector<5x256xf32>
    %43 = vector.shape_cast %40 : vector<5x256xf32> to vector<1x5x256xf32>
    tpu.vector_store %arg15[%c0_19, %c0_20, %c0_21], %43 {strides = array<i32>} : memref<4x5x256xf32, #tpu.memory_space<vmem>>, vector<1x5x256xf32>,
    %c1 = arith.constant 1 : index
    %c0_22 = arith.constant 0 : index
    %c0_23 = arith.constant 0 : index
    %44 = vector.load %arg1[%c1, %c0_22, %c0_23] : memref<4x28x160xbf16, #tpu.memory_space<vmem>>, vector<1x28x160xbf16>
    %45 = vector.shape_cast %44 : vector<1x28x160xbf16> to vector<28x160xbf16>
    %c0_24 = arith.constant 0 : index
    %c0_25 = arith.constant 0 : index
    %46 = vector.load %arg4[%c0_24, %c0_25] : memref<160x256xbf16, #tpu.memory_space<vmem>>, vector<160x256xbf16>
    %cst_26 = arith.constant dense<0.000000e+00> : vector<28x256xf32>
    %47 = tpu.matmul %45, %46, %cst_26 {dimension_numbers = #tpu.dot_dimension_numbers<[1], [0], [0], [1], [0, 0, 1, 1], [], []>} : vector<28x160xbf16>, vector<160x256xbf16>, vector<28x256xf32> -> vector<28x256xf32>
    %48 = vector.extract_strided_slice %47 {offsets = [0, 0], sizes = [28, 128], strides = [1, 1]} : vector<28x256xf32> to vector<28x128xf32>
    %49 = vector.extract_strided_slice %47 {offsets = [0, 128], sizes = [28, 128], strides = [1, 1]} : vector<28x256xf32> to vector<28x128xf32>
    %50 = arith.maximumf %48, %49 : vector<28x128xf32>
    %c0_27 = arith.constant 0 : index
    %c0_28 = arith.constant 0 : index
    %51 = vector.load %arg5[%c0_27, %c0_28] : memref<1x128xf32, #tpu.memory_space<vmem>>, vector<1x128xf32>
    %52 = vector.broadcast %51 : vector<1x128xf32> to vector<28x128xf32>
    %53 = arith.addf %50, %52 : vector<28x128xf32>
    %cst_29 = arith.constant 0.000000e+00 : f32
    %54 = vector.broadcast %cst_29 : f32 to vector<28x128xf32>
    %55 = arith.maximumf %53, %54 : vector<28x128xf32>
    %c0_30 = arith.constant 0 : index
    %c0_31 = arith.constant 0 : index
    %56 = vector.load %arg2[%c0_30, %c0_31] : memref<28x28xbf16, #tpu.memory_space<vmem>>, vector<28x28xbf16>
    %57 = arith.truncf %55 : vector<28x128xf32> to vector<28x128xbf16>
    %cst_32 = arith.constant dense<0.000000e+00> : vector<28x128xf32>
    %58 = tpu.matmul %56, %57, %cst_32 {dimension_numbers = #tpu.dot_dimension_numbers<[1], [0], [0], [1], [0, 0, 1, 1], [], []>} : vector<28x28xbf16>, vector<28x128xbf16>, vector<28x128xf32> -> vector<28x128xf32>
    %59 = vector.extract_strided_slice %58 {offsets = [0, 0], sizes = [14, 128], strides = [1, 1]} : vector<28x128xf32> to vector<14x128xf32>
    %60 = vector.extract_strided_slice %58 {offsets = [14, 0], sizes = [14, 128], strides = [1, 1]} : vector<28x128xf32> to vector<14x128xf32>
    %61 = arith.maximumf %59, %60 : vector<14x128xf32>
    %62 = vector.extract_strided_slice %61 {offsets = [0, 0], sizes = [10, 128], strides = [1, 1]} : vector<14x128xf32> to vector<10x128xf32>
    %63 = vector.extract_strided_slice %61 {offsets = [1, 0], sizes = [10, 128], strides = [1, 1]} : vector<14x128xf32> to vector<10x128xf32>
    %64 = vector.extract_strided_slice %61 {offsets = [2, 0], sizes = [10, 128], strides = [1, 1]} : vector<14x128xf32> to vector<10x128xf32>
    %65 = vector.extract_strided_slice %61 {offsets = [3, 0], sizes = [10, 128], strides = [1, 1]} : vector<14x128xf32> to vector<10x128xf32>
    %66 = vector.extract_strided_slice %61 {offsets = [4, 0], sizes = [10, 128], strides = [1, 1]} : vector<14x128xf32> to vector<10x128xf32>
    %67 = tpu.concatenate %62, %63, %64, %65, %66 in 1 : vector<10x128xf32>, vector<10x128xf32>, vector<10x128xf32>, vector<10x128xf32>, vector<10x128xf32> -> vector<10x640xf32>
    %68 = arith.truncf %67 : vector<10x640xf32> to vector<10x640xbf16>
    %c0_33 = arith.constant 0 : index
    %c0_34 = arith.constant 0 : index
    %69 = vector.load %arg6[%c0_33, %c0_34] : memref<640x512xbf16, #tpu.memory_space<vmem>>, vector<640x512xbf16>
    %cst_35 = arith.constant dense<0.000000e+00> : vector<10x512xf32>
    %70 = tpu.matmul %68, %69, %cst_35 {dimension_numbers = #tpu.dot_dimension_numbers<[1], [0], [0], [1], [0, 0, 1, 1], [], []>} : vector<10x640xbf16>, vector<640x512xbf16>, vector<10x512xf32> -> vector<10x512xf32>
    %71 = vector.extract_strided_slice %70 {offsets = [0, 0], sizes = [10, 256], strides = [1, 1]} : vector<10x512xf32> to vector<10x256xf32>
    %72 = vector.extract_strided_slice %70 {offsets = [0, 256], sizes = [10, 256], strides = [1, 1]} : vector<10x512xf32> to vector<10x256xf32>
    %73 = arith.maximumf %71, %72 : vector<10x256xf32>
    %c0_36 = arith.constant 0 : index
    %c0_37 = arith.constant 0 : index
    %74 = vector.load %arg7[%c0_36, %c0_37] : memref<1x256xf32, #tpu.memory_space<vmem>>, vector<1x256xf32>
    %75 = vector.broadcast %74 : vector<1x256xf32> to vector<10x256xf32>
    %76 = arith.addf %73, %75 : vector<10x256xf32>
    %cst_38 = arith.constant 0.000000e+00 : f32
    %77 = vector.broadcast %cst_38 : f32 to vector<10x256xf32>
    %78 = arith.maximumf %76, %77 : vector<10x256xf32>
    %c0_39 = arith.constant 0 : index
    %c0_40 = arith.constant 0 : index
    %79 = vector.load %arg3[%c0_39, %c0_40] : memref<10x10xbf16, #tpu.memory_space<vmem>>, vector<10x10xbf16>
    %80 = arith.truncf %78 : vector<10x256xf32> to vector<10x256xbf16>
    %cst_41 = arith.constant dense<0.000000e+00> : vector<10x256xf32>
    %81 = tpu.matmul %79, %80, %cst_41 {dimension_numbers = #tpu.dot_dimension_numbers<[1], [0], [0], [1], [0, 0, 1, 1], [], []>} : vector<10x10xbf16>, vector<10x256xbf16>, vector<10x256xf32> -> vector<10x256xf32>
    %82 = vector.extract_strided_slice %81 {offsets = [0, 0], sizes = [5, 256], strides = [1, 1]} : vector<10x256xf32> to vector<5x256xf32>
    %83 = vector.extract_strided_slice %81 {offsets = [5, 0], sizes = [5, 256], strides = [1, 1]} : vector<10x256xf32> to vector<5x256xf32>
    %84 = arith.maximumf %82, %83 : vector<5x256xf32>
    %c1_42 = arith.constant 1 : index
    %c0_43 = arith.constant 0 : index
    %c0_44 = arith.constant 0 : index
    %85 = vector.load %arg15[%c1_42, %c0_43, %c0_44] : memref<4x5x256xf32, #tpu.memory_space<vmem>>, vector<1x5x256xf32>
    %86 = vector.shape_cast %85 : vector<1x5x256xf32> to vector<5x256xf32>
    %87 = vector.shape_cast %84 : vector<5x256xf32> to vector<1x5x256xf32>
    tpu.vector_store %arg15[%c1_42, %c0_43, %c0_44], %87 {strides = array<i32>} : memref<4x5x256xf32, #tpu.memory_space<vmem>>, vector<1x5x256xf32>,
    %c2 = arith.constant 2 : index
    %c0_45 = arith.constant 0 : index
    %c0_46 = arith.constant 0 : index
    %88 = vector.load %arg1[%c2, %c0_45, %c0_46] : memref<4x28x160xbf16, #tpu.memory_space<vmem>>, vector<1x28x160xbf16>
    %89 = vector.shape_cast %88 : vector<1x28x160xbf16> to vector<28x160xbf16>
    %c0_47 = arith.constant 0 : index
    %c0_48 = arith.constant 0 : index
    %90 = vector.load %arg4[%c0_47, %c0_48] : memref<160x256xbf16, #tpu.memory_space<vmem>>, vector<160x256xbf16>
    %cst_49 = arith.constant dense<0.000000e+00> : vector<28x256xf32>
    %91 = tpu.matmul %89, %90, %cst_49 {dimension_numbers = #tpu.dot_dimension_numbers<[1], [0], [0], [1], [0, 0, 1, 1], [], []>} : vector<28x160xbf16>, vector<160x256xbf16>, vector<28x256xf32> -> vector<28x256xf32>
    %92 = vector.extract_strided_slice %91 {offsets = [0, 0], sizes = [28, 128], strides = [1, 1]} : vector<28x256xf32> to vector<28x128xf32>
    %93 = vector.extract_strided_slice %91 {offsets = [0, 128], sizes = [28, 128], strides = [1, 1]} : vector<28x256xf32> to vector<28x128xf32>
    %94 = arith.maximumf %92, %93 : vector<28x128xf32>
    %c0_50 = arith.constant 0 : index
    %c0_51 = arith.constant 0 : index
    %95 = vector.load %arg5[%c0_50, %c0_51] : memref<1x128xf32, #tpu.memory_space<vmem>>, vector<1x128xf32>
    %96 = vector.broadcast %95 : vector<1x128xf32> to vector<28x128xf32>
    %97 = arith.addf %94, %96 : vector<28x128xf32>
    %cst_52 = arith.constant 0.000000e+00 : f32
    %98 = vector.broadcast %cst_52 : f32 to vector<28x128xf32>
    %99 = arith.maximumf %97, %98 : vector<28x128xf32>
    %c0_53 = arith.constant 0 : index
    %c0_54 = arith.constant 0 : index
    %100 = vector.load %arg2[%c0_53, %c0_54] : memref<28x28xbf16, #tpu.memory_space<vmem>>, vector<28x28xbf16>
    %101 = arith.truncf %99 : vector<28x128xf32> to vector<28x128xbf16>
    %cst_55 = arith.constant dense<0.000000e+00> : vector<28x128xf32>
    %102 = tpu.matmul %100, %101, %cst_55 {dimension_numbers = #tpu.dot_dimension_numbers<[1], [0], [0], [1], [0, 0, 1, 1], [], []>} : vector<28x28xbf16>, vector<28x128xbf16>, vector<28x128xf32> -> vector<28x128xf32>
    %103 = vector.extract_strided_slice %102 {offsets = [0, 0], sizes = [14, 128], strides = [1, 1]} : vector<28x128xf32> to vector<14x128xf32>
    %104 = vector.extract_strided_slice %102 {offsets = [14, 0], sizes = [14, 128], strides = [1, 1]} : vector<28x128xf32> to vector<14x128xf32>
    %105 = arith.maximumf %103, %104 : vector<14x128xf32>
    %106 = vector.extract_strided_slice %105 {offsets = [0, 0], sizes = [10, 128], strides = [1, 1]} : vector<14x128xf32> to vector<10x128xf32>
    %107 = vector.extract_strided_slice %105 {offsets = [1, 0], sizes = [10, 128], strides = [1, 1]} : vector<14x128xf32> to vector<10x128xf32>
    %108 = vector.extract_strided_slice %105 {offsets = [2, 0], sizes = [10, 128], strides = [1, 1]} : vector<14x128xf32> to vector<10x128xf32>
    %109 = vector.extract_strided_slice %105 {offsets = [3, 0], sizes = [10, 128], strides = [1, 1]} : vector<14x128xf32> to vector<10x128xf32>
    %110 = vector.extract_strided_slice %105 {offsets = [4, 0], sizes = [10, 128], strides = [1, 1]} : vector<14x128xf32> to vector<10x128xf32>
    %111 = tpu.concatenate %106, %107, %108, %109, %110 in 1 : vector<10x128xf32>, vector<10x128xf32>, vector<10x128xf32>, vector<10x128xf32>, vector<10x128xf32> -> vector<10x640xf32>
    %112 = arith.truncf %111 : vector<10x640xf32> to vector<10x640xbf16>
    %c0_56 = arith.constant 0 : index
    %c0_57 = arith.constant 0 : index
    %113 = vector.load %arg6[%c0_56, %c0_57] : memref<640x512xbf16, #tpu.memory_space<vmem>>, vector<640x512xbf16>
    %cst_58 = arith.constant dense<0.000000e+00> : vector<10x512xf32>
    %114 = tpu.matmul %112, %113, %cst_58 {dimension_numbers = #tpu.dot_dimension_numbers<[1], [0], [0], [1], [0, 0, 1, 1], [], []>} : vector<10x640xbf16>, vector<640x512xbf16>, vector<10x512xf32> -> vector<10x512xf32>
    %115 = vector.extract_strided_slice %114 {offsets = [0, 0], sizes = [10, 256], strides = [1, 1]} : vector<10x512xf32> to vector<10x256xf32>
    %116 = vector.extract_strided_slice %114 {offsets = [0, 256], sizes = [10, 256], strides = [1, 1]} : vector<10x512xf32> to vector<10x256xf32>
    %117 = arith.maximumf %115, %116 : vector<10x256xf32>
    %c0_59 = arith.constant 0 : index
    %c0_60 = arith.constant 0 : index
    %118 = vector.load %arg7[%c0_59, %c0_60] : memref<1x256xf32, #tpu.memory_space<vmem>>, vector<1x256xf32>
    %119 = vector.broadcast %118 : vector<1x256xf32> to vector<10x256xf32>
    %120 = arith.addf %117, %119 : vector<10x256xf32>
    %cst_61 = arith.constant 0.000000e+00 : f32
    %121 = vector.broadcast %cst_61 : f32 to vector<10x256xf32>
    %122 = arith.maximumf %120, %121 : vector<10x256xf32>
    %c0_62 = arith.constant 0 : index
    %c0_63 = arith.constant 0 : index
    %123 = vector.load %arg3[%c0_62, %c0_63] : memref<10x10xbf16, #tpu.memory_space<vmem>>, vector<10x10xbf16>
    %124 = arith.truncf %122 : vector<10x256xf32> to vector<10x256xbf16>
    %cst_64 = arith.constant dense<0.000000e+00> : vector<10x256xf32>
    %125 = tpu.matmul %123, %124, %cst_64 {dimension_numbers = #tpu.dot_dimension_numbers<[1], [0], [0], [1], [0, 0, 1, 1], [], []>} : vector<10x10xbf16>, vector<10x256xbf16>, vector<10x256xf32> -> vector<10x256xf32>
    %126 = vector.extract_strided_slice %125 {offsets = [0, 0], sizes = [5, 256], strides = [1, 1]} : vector<10x256xf32> to vector<5x256xf32>
    %127 = vector.extract_strided_slice %125 {offsets = [5, 0], sizes = [5, 256], strides = [1, 1]} : vector<10x256xf32> to vector<5x256xf32>
    %128 = arith.maximumf %126, %127 : vector<5x256xf32>
    %c2_65 = arith.constant 2 : index
    %c0_66 = arith.constant 0 : index
    %c0_67 = arith.constant 0 : index
    %129 = vector.load %arg15[%c2_65, %c0_66, %c0_67] : memref<4x5x256xf32, #tpu.memory_space<vmem>>, vector<1x5x256xf32>
    %130 = vector.shape_cast %129 : vector<1x5x256xf32> to vector<5x256xf32>
    %131 = vector.shape_cast %128 : vector<5x256xf32> to vector<1x5x256xf32>
    tpu.vector_store %arg15[%c2_65, %c0_66, %c0_67], %131 {strides = array<i32>} : memref<4x5x256xf32, #tpu.memory_space<vmem>>, vector<1x5x256xf32>,
    %c3 = arith.constant 3 : index
    %c0_68 = arith.constant 0 : index
    %c0_69 = arith.constant 0 : index
    %132 = vector.load %arg1[%c3, %c0_68, %c0_69] : memref<4x28x160xbf16, #tpu.memory_space<vmem>>, vector<1x28x160xbf16>
    %133 = vector.shape_cast %132 : vector<1x28x160xbf16> to vector<28x160xbf16>
    %c0_70 = arith.constant 0 : index
    %c0_71 = arith.constant 0 : index
    %134 = vector.load %arg4[%c0_70, %c0_71] : memref<160x256xbf16, #tpu.memory_space<vmem>>, vector<160x256xbf16>
    %cst_72 = arith.constant dense<0.000000e+00> : vector<28x256xf32>
    %135 = tpu.matmul %133, %134, %cst_72 {dimension_numbers = #tpu.dot_dimension_numbers<[1], [0], [0], [1], [0, 0, 1, 1], [], []>} : vector<28x160xbf16>, vector<160x256xbf16>, vector<28x256xf32> -> vector<28x256xf32>
    %136 = vector.extract_strided_slice %135 {offsets = [0, 0], sizes = [28, 128], strides = [1, 1]} : vector<28x256xf32> to vector<28x128xf32>
    %137 = vector.extract_strided_slice %135 {offsets = [0, 128], sizes = [28, 128], strides = [1, 1]} : vector<28x256xf32> to vector<28x128xf32>
    %138 = arith.maximumf %136, %137 : vector<28x128xf32>
    %c0_73 = arith.constant 0 : index
    %c0_74 = arith.constant 0 : index
    %139 = vector.load %arg5[%c0_73, %c0_74] : memref<1x128xf32, #tpu.memory_space<vmem>>, vector<1x128xf32>
    %140 = vector.broadcast %139 : vector<1x128xf32> to vector<28x128xf32>
    %141 = arith.addf %138, %140 : vector<28x128xf32>
    %cst_75 = arith.constant 0.000000e+00 : f32
    %142 = vector.broadcast %cst_75 : f32 to vector<28x128xf32>
    %143 = arith.maximumf %141, %142 : vector<28x128xf32>
    %c0_76 = arith.constant 0 : index
    %c0_77 = arith.constant 0 : index
    %144 = vector.load %arg2[%c0_76, %c0_77] : memref<28x28xbf16, #tpu.memory_space<vmem>>, vector<28x28xbf16>
    %145 = arith.truncf %143 : vector<28x128xf32> to vector<28x128xbf16>
    %cst_78 = arith.constant dense<0.000000e+00> : vector<28x128xf32>
    %146 = tpu.matmul %144, %145, %cst_78 {dimension_numbers = #tpu.dot_dimension_numbers<[1], [0], [0], [1], [0, 0, 1, 1], [], []>} : vector<28x28xbf16>, vector<28x128xbf16>, vector<28x128xf32> -> vector<28x128xf32>
    %147 = vector.extract_strided_slice %146 {offsets = [0, 0], sizes = [14, 128], strides = [1, 1]} : vector<28x128xf32> to vector<14x128xf32>
    %148 = vector.extract_strided_slice %146 {offsets = [14, 0], sizes = [14, 128], strides = [1, 1]} : vector<28x128xf32> to vector<14x128xf32>
    %149 = arith.maximumf %147, %148 : vector<14x128xf32>
    %150 = vector.extract_strided_slice %149 {offsets = [0, 0], sizes = [10, 128], strides = [1, 1]} : vector<14x128xf32> to vector<10x128xf32>
    %151 = vector.extract_strided_slice %149 {offsets = [1, 0], sizes = [10, 128], strides = [1, 1]} : vector<14x128xf32> to vector<10x128xf32>
    %152 = vector.extract_strided_slice %149 {offsets = [2, 0], sizes = [10, 128], strides = [1, 1]} : vector<14x128xf32> to vector<10x128xf32>
    %153 = vector.extract_strided_slice %149 {offsets = [3, 0], sizes = [10, 128], strides = [1, 1]} : vector<14x128xf32> to vector<10x128xf32>
    %154 = vector.extract_strided_slice %149 {offsets = [4, 0], sizes = [10, 128], strides = [1, 1]} : vector<14x128xf32> to vector<10x128xf32>
    %155 = tpu.concatenate %150, %151, %152, %153, %154 in 1 : vector<10x128xf32>, vector<10x128xf32>, vector<10x128xf32>, vector<10x128xf32>, vector<10x128xf32> -> vector<10x640xf32>
    %156 = arith.truncf %155 : vector<10x640xf32> to vector<10x640xbf16>
    %c0_79 = arith.constant 0 : index
    %c0_80 = arith.constant 0 : index
    %157 = vector.load %arg6[%c0_79, %c0_80] : memref<640x512xbf16, #tpu.memory_space<vmem>>, vector<640x512xbf16>
    %cst_81 = arith.constant dense<0.000000e+00> : vector<10x512xf32>
    %158 = tpu.matmul %156, %157, %cst_81 {dimension_numbers = #tpu.dot_dimension_numbers<[1], [0], [0], [1], [0, 0, 1, 1], [], []>} : vector<10x640xbf16>, vector<640x512xbf16>, vector<10x512xf32> -> vector<10x512xf32>
    %159 = vector.extract_strided_slice %158 {offsets = [0, 0], sizes = [10, 256], strides = [1, 1]} : vector<10x512xf32> to vector<10x256xf32>
    %160 = vector.extract_strided_slice %158 {offsets = [0, 256], sizes = [10, 256], strides = [1, 1]} : vector<10x512xf32> to vector<10x256xf32>
    %161 = arith.maximumf %159, %160 : vector<10x256xf32>
    %c0_82 = arith.constant 0 : index
    %c0_83 = arith.constant 0 : index
    %162 = vector.load %arg7[%c0_82, %c0_83] : memref<1x256xf32, #tpu.memory_space<vmem>>, vector<1x256xf32>
    %163 = vector.broadcast %162 : vector<1x256xf32> to vector<10x256xf32>
    %164 = arith.addf %161, %163 : vector<10x256xf32>
    %cst_84 = arith.constant 0.000000e+00 : f32
    %165 = vector.broadcast %cst_84 : f32 to vector<10x256xf32>
    %166 = arith.maximumf %164, %165 : vector<10x256xf32>
    %c0_85 = arith.constant 0 : index
    %c0_86 = arith.constant 0 : index
    %167 = vector.load %arg3[%c0_85, %c0_86] : memref<10x10xbf16, #tpu.memory_space<vmem>>, vector<10x10xbf16>
    %168 = arith.truncf %166 : vector<10x256xf32> to vector<10x256xbf16>
    %cst_87 = arith.constant dense<0.000000e+00> : vector<10x256xf32>
    %169 = tpu.matmul %167, %168, %cst_87 {dimension_numbers = #tpu.dot_dimension_numbers<[1], [0], [0], [1], [0, 0, 1, 1], [], []>} : vector<10x10xbf16>, vector<10x256xbf16>, vector<10x256xf32> -> vector<10x256xf32>
    %170 = vector.extract_strided_slice %169 {offsets = [0, 0], sizes = [5, 256], strides = [1, 1]} : vector<10x256xf32> to vector<5x256xf32>
    %171 = vector.extract_strided_slice %169 {offsets = [5, 0], sizes = [5, 256], strides = [1, 1]} : vector<10x256xf32> to vector<5x256xf32>
    %172 = arith.maximumf %170, %171 : vector<5x256xf32>
    %c3_88 = arith.constant 3 : index
    %c0_89 = arith.constant 0 : index
    %c0_90 = arith.constant 0 : index
    %173 = vector.load %arg15[%c3_88, %c0_89, %c0_90] : memref<4x5x256xf32, #tpu.memory_space<vmem>>, vector<1x5x256xf32>
    %174 = vector.shape_cast %173 : vector<1x5x256xf32> to vector<5x256xf32>
    %175 = vector.shape_cast %172 : vector<5x256xf32> to vector<1x5x256xf32>
    tpu.vector_store %arg15[%c3_88, %c0_89, %c0_90], %175 {strides = array<i32>} : memref<4x5x256xf32, #tpu.memory_space<vmem>>, vector<1x5x256xf32>,
    %c0_91 = arith.constant 0 : index
    %c0_92 = arith.constant 0 : index
    %c0_93 = arith.constant 0 : index
    %176 = vector.load %arg15[%c0_91, %c0_92, %c0_93] : memref<4x5x256xf32, #tpu.memory_space<vmem>>, vector<4x5x256xf32>
    %177 = vector.extract_strided_slice %176 {offsets = [0, 0, 0], sizes = [4, 1, 256], strides = [1, 1, 1]} : vector<4x5x256xf32> to vector<4x1x256xf32>
    %178 = vector.shape_cast %177 : vector<4x1x256xf32> to vector<4x256xf32>
    %179 = arith.truncf %178 : vector<4x256xf32> to vector<4x256xbf16>
    %c0_94 = arith.constant 0 : index
    %c0_95 = arith.constant 0 : index
    %c0_96 = arith.constant 0 : index
    %180 = vector.load %arg8[%c0_94, %c0_95, %c0_96] : memref<5x256x256xbf16, #tpu.memory_space<vmem>>, vector<1x256x256xbf16>
    %181 = vector.shape_cast %180 : vector<1x256x256xbf16> to vector<256x256xbf16>
    %cst_97 = arith.constant dense<0.000000e+00> : vector<4x256xf32>
    %182 = tpu.matmul %179, %181, %cst_97 {dimension_numbers = #tpu.dot_dimension_numbers<[1], [0], [0], [1], [0, 0, 1, 1], [], []>} : vector<4x256xbf16>, vector<256x256xbf16>, vector<4x256xf32> -> vector<4x256xf32>
    %183 = vector.extract_strided_slice %176 {offsets = [0, 1, 0], sizes = [4, 1, 256], strides = [1, 1, 1]} : vector<4x5x256xf32> to vector<4x1x256xf32>
    %184 = vector.shape_cast %183 : vector<4x1x256xf32> to vector<4x256xf32>
    %185 = arith.truncf %184 : vector<4x256xf32> to vector<4x256xbf16>
    %c1_98 = arith.constant 1 : index
    %c0_99 = arith.constant 0 : index
    %c0_100 = arith.constant 0 : index
    %186 = vector.load %arg8[%c1_98, %c0_99, %c0_100] : memref<5x256x256xbf16, #tpu.memory_space<vmem>>, vector<1x256x256xbf16>
    %187 = vector.shape_cast %186 : vector<1x256x256xbf16> to vector<256x256xbf16>
    %cst_101 = arith.constant dense<0.000000e+00> : vector<4x256xf32>
    %188 = tpu.matmul %185, %187, %cst_101 {dimension_numbers = #tpu.dot_dimension_numbers<[1], [0], [0], [1], [0, 0, 1, 1], [], []>} : vector<4x256xbf16>, vector<256x256xbf16>, vector<4x256xf32> -> vector<4x256xf32>
    %189 = arith.addf %182, %188 : vector<4x256xf32>
    %190 = vector.extract_strided_slice %176 {offsets = [0, 2, 0], sizes = [4, 1, 256], strides = [1, 1, 1]} : vector<4x5x256xf32> to vector<4x1x256xf32>
    %191 = vector.shape_cast %190 : vector<4x1x256xf32> to vector<4x256xf32>
    %192 = arith.truncf %191 : vector<4x256xf32> to vector<4x256xbf16>
    %c2_102 = arith.constant 2 : index
    %c0_103 = arith.constant 0 : index
    %c0_104 = arith.constant 0 : index
    %193 = vector.load %arg8[%c2_102, %c0_103, %c0_104] : memref<5x256x256xbf16, #tpu.memory_space<vmem>>, vector<1x256x256xbf16>
    %194 = vector.shape_cast %193 : vector<1x256x256xbf16> to vector<256x256xbf16>
    %cst_105 = arith.constant dense<0.000000e+00> : vector<4x256xf32>
    %195 = tpu.matmul %192, %194, %cst_105 {dimension_numbers = #tpu.dot_dimension_numbers<[1], [0], [0], [1], [0, 0, 1, 1], [], []>} : vector<4x256xbf16>, vector<256x256xbf16>, vector<4x256xf32> -> vector<4x256xf32>
    %196 = arith.addf %189, %195 : vector<4x256xf32>
    %197 = vector.extract_strided_slice %176 {offsets = [0, 3, 0], sizes = [4, 1, 256], strides = [1, 1, 1]} : vector<4x5x256xf32> to vector<4x1x256xf32>
    %198 = vector.shape_cast %197 : vector<4x1x256xf32> to vector<4x256xf32>
    %199 = arith.truncf %198 : vector<4x256xf32> to vector<4x256xbf16>
    %c3_106 = arith.constant 3 : index
    %c0_107 = arith.constant 0 : index
    %c0_108 = arith.constant 0 : index
    %200 = vector.load %arg8[%c3_106, %c0_107, %c0_108] : memref<5x256x256xbf16, #tpu.memory_space<vmem>>, vector<1x256x256xbf16>
    %201 = vector.shape_cast %200 : vector<1x256x256xbf16> to vector<256x256xbf16>
    %cst_109 = arith.constant dense<0.000000e+00> : vector<4x256xf32>
    %202 = tpu.matmul %199, %201, %cst_109 {dimension_numbers = #tpu.dot_dimension_numbers<[1], [0], [0], [1], [0, 0, 1, 1], [], []>} : vector<4x256xbf16>, vector<256x256xbf16>, vector<4x256xf32> -> vector<4x256xf32>
    %203 = arith.addf %196, %202 : vector<4x256xf32>
    %204 = vector.extract_strided_slice %176 {offsets = [0, 4, 0], sizes = [4, 1, 256], strides = [1, 1, 1]} : vector<4x5x256xf32> to vector<4x1x256xf32>
    %205 = vector.shape_cast %204 : vector<4x1x256xf32> to vector<4x256xf32>
    %206 = arith.truncf %205 : vector<4x256xf32> to vector<4x256xbf16>
    %c4 = arith.constant 4 : index
    %c0_110 = arith.constant 0 : index
    %c0_111 = arith.constant 0 : index
    %207 = vector.load %arg8[%c4, %c0_110, %c0_111] : memref<5x256x256xbf16, #tpu.memory_space<vmem>>, vector<1x256x256xbf16>
    %208 = vector.shape_cast %207 : vector<1x256x256xbf16> to vector<256x256xbf16>
    %cst_112 = arith.constant dense<0.000000e+00> : vector<4x256xf32>
    %209 = tpu.matmul %206, %208, %cst_112 {dimension_numbers = #tpu.dot_dimension_numbers<[1], [0], [0], [1], [0, 0, 1, 1], [], []>} : vector<4x256xbf16>, vector<256x256xbf16>, vector<4x256xf32> -> vector<4x256xf32>
    %210 = arith.addf %203, %209 : vector<4x256xf32>
    %c0_113 = arith.constant 0 : index
    %c0_114 = arith.constant 0 : index
    %211 = vector.load %arg9[%c0_113, %c0_114] : memref<1x256xf32, #tpu.memory_space<vmem>>, vector<1x256xf32>
    %212 = vector.broadcast %211 : vector<1x256xf32> to vector<4x256xf32>
    %213 = arith.addf %210, %212 : vector<4x256xf32>
    %cst_115 = arith.constant 0.000000e+00 : f32
    %214 = vector.broadcast %cst_115 : f32 to vector<4x256xf32>
    %215 = arith.maximumf %213, %214 : vector<4x256xf32>
    %216 = arith.truncf %215 : vector<4x256xf32> to vector<4x256xbf16>
    %c0_116 = arith.constant 0 : index
    %c0_117 = arith.constant 0 : index
    %217 = vector.load %arg10[%c0_116, %c0_117] : memref<256x128xbf16, #tpu.memory_space<vmem>>, vector<256x128xbf16>
    %cst_118 = arith.constant dense<0.000000e+00> : vector<4x128xf32>
    %218 = tpu.matmul %216, %217, %cst_118 {dimension_numbers = #tpu.dot_dimension_numbers<[1], [0], [0], [1], [0, 0, 1, 1], [], []>} : vector<4x256xbf16>, vector<256x128xbf16>, vector<4x128xf32> -> vector<4x128xf32>
    %c0_119 = arith.constant 0 : index
    %c0_120 = arith.constant 0 : index
    %219 = vector.load %arg11[%c0_119, %c0_120] : memref<1x128xf32, #tpu.memory_space<vmem>>, vector<1x128xf32>
    %220 = vector.broadcast %219 : vector<1x128xf32> to vector<4x128xf32>
    %221 = arith.addf %218, %220 : vector<4x128xf32>
    %cst_121 = arith.constant 0.000000e+00 : f32
    %222 = vector.broadcast %cst_121 : f32 to vector<4x128xf32>
    %223 = arith.maximumf %221, %222 : vector<4x128xf32>
    %224 = arith.truncf %223 : vector<4x128xf32> to vector<4x128xbf16>
    %c0_122 = arith.constant 0 : index
    %c0_123 = arith.constant 0 : index
    %225 = vector.load %arg12[%c0_122, %c0_123] : memref<128x128xbf16, #tpu.memory_space<vmem>>, vector<128x128xbf16>
    %cst_124 = arith.constant dense<0.000000e+00> : vector<4x128xf32>
    %226 = tpu.matmul %224, %225, %cst_124 {dimension_numbers = #tpu.dot_dimension_numbers<[1], [0], [0], [1], [0, 0, 1, 1], [], []>} : vector<4x128xbf16>, vector<128x128xbf16>, vector<4x128xf32> -> vector<4x128xf32>
    %c0_125 = arith.constant 0 : index
    %c0_126 = arith.constant 0 : index
    %227 = vector.load %arg13[%c0_125, %c0_126] : memref<1x128xf32, #tpu.memory_space<vmem>>, vector<1x128xf32>
    %228 = vector.broadcast %227 : vector<1x128xf32> to vector<4x128xf32>
    %229 = arith.addf %226, %228 : vector<4x128xf32>
    %c0_127 = arith.constant 0 : index
    %c0_128 = arith.constant 0 : index
    %c0_129 = arith.constant 0 : index
    %230 = vector.load %arg14[%c0_127, %c0_128, %c0_129] : memref<1x4x128xf32, #tpu.memory_space<vmem>>, vector<1x4x128xf32>
    %231 = vector.shape_cast %230 : vector<1x4x128xf32> to vector<4x128xf32>
    %232 = vector.shape_cast %229 : vector<4x128xf32> to vector<1x4x128xf32>
    tpu.vector_store %arg14[%c0_127, %c0_128, %c0_129], %232 {strides = array<i32>} : memref<1x4x128xf32, #tpu.memory_space<vmem>>, vector<1x4x128xf32>,
    return
  }
  func.func @transform_0(%arg0: i32) -> (i32, i32, i32) {
    %c0_i32 = arith.constant 0 : i32
    %c0_i32_0 = arith.constant 0 : i32
    %c0_i32_1 = arith.constant 0 : i32
    return %arg0, %c0_i32, %c0_i32_0 : i32, i32, i32
  }
  func.func @transform_1(%arg0: i32) -> (i32, i32) {
    %c0_i32 = arith.constant 0 : i32
    %c0_i32_0 = arith.constant 0 : i32
    %c0_i32_1 = arith.constant 0 : i32
    return %c0_i32, %c0_i32_0 : i32, i32
  }
  func.func @transform_2(%arg0: i32) -> (i32, i32) {
    %c0_i32 = arith.constant 0 : i32
    %c0_i32_0 = arith.constant 0 : i32
    %c0_i32_1 = arith.constant 0 : i32
    return %c0_i32, %c0_i32_0 : i32, i32
  }
  func.func @transform_3(%arg0: i32) -> (i32, i32) {
    %c0_i32 = arith.constant 0 : i32
    %c0_i32_0 = arith.constant 0 : i32
    %c0_i32_1 = arith.constant 0 : i32
    return %c0_i32, %c0_i32_0 : i32, i32
  }
  func.func @transform_4(%arg0: i32) -> (i32, i32) {
    %c0_i32 = arith.constant 0 : i32
    %c0_i32_0 = arith.constant 0 : i32
    %c0_i32_1 = arith.constant 0 : i32
    return %c0_i32, %c0_i32_0 : i32, i32
  }
  func.func @transform_5(%arg0: i32) -> (i32, i32) {
    %c0_i32 = arith.constant 0 : i32
    %c0_i32_0 = arith.constant 0 : i32
    %c0_i32_1 = arith.constant 0 : i32
    return %c0_i32, %c0_i32_0 : i32, i32
  }
  func.func @transform_6(%arg0: i32) -> (i32, i32) {
    %c0_i32 = arith.constant 0 : i32
    %c0_i32_0 = arith.constant 0 : i32
    %c0_i32_1 = arith.constant 0 : i32
    return %c0_i32, %c0_i32_0 : i32, i32
  }
  func.func @transform_7(%arg0: i32) -> (i32, i32, i32) {
    %c0_i32 = arith.constant 0 : i32
    %c0_i32_0 = arith.constant 0 : i32
    %c0_i32_1 = arith.constant 0 : i32
    %c0_i32_2 = arith.constant 0 : i32
    return %c0_i32, %c0_i32_0, %c0_i32_1 : i32, i32, i32
  }
  func.func @transform_8(%arg0: i32) -> (i32, i32) {
    %c0_i32 = arith.constant 0 : i32
    %c0_i32_0 = arith.constant 0 : i32
    %c0_i32_1 = arith.constant 0 : i32
    return %c0_i32, %c0_i32_0 : i32, i32
  }
  func.func @transform_9(%arg0: i32) -> (i32, i32) {
    %c0_i32 = arith.constant 0 : i32
    %c0_i32_0 = arith.constant 0 : i32
    %c0_i32_1 = arith.constant 0 : i32
    return %c0_i32, %c0_i32_0 : i32, i32
  }
  func.func @transform_10(%arg0: i32) -> (i32, i32) {
    %c0_i32 = arith.constant 0 : i32
    %c0_i32_0 = arith.constant 0 : i32
    %c0_i32_1 = arith.constant 0 : i32
    return %c0_i32, %c0_i32_0 : i32, i32
  }
  func.func @transform_11(%arg0: i32) -> (i32, i32) {
    %c0_i32 = arith.constant 0 : i32
    %c0_i32_0 = arith.constant 0 : i32
    %c0_i32_1 = arith.constant 0 : i32
    return %c0_i32, %c0_i32_0 : i32, i32
  }
  func.func @transform_12(%arg0: i32) -> (i32, i32) {
    %c0_i32 = arith.constant 0 : i32
    %c0_i32_0 = arith.constant 0 : i32
    %c0_i32_1 = arith.constant 0 : i32
    return %c0_i32, %c0_i32_0 : i32, i32
  }
  func.func @transform_13(%arg0: i32) -> (i32, i32, i32) {
    %c0_i32 = arith.constant 0 : i32
    %c0_i32_0 = arith.constant 0 : i32
    %c0_i32_1 = arith.constant 0 : i32
    return %arg0, %c0_i32, %c0_i32_0 : i32, i32, i32
  }
}

</mosaic_0001>

<llo_original>
// kernel: forward.1
$region0: #{forward.1}
  #allocation0 [shape = 'u32[]', space=smem, size = 0x4, offset = 0x4, fixed_abs, tag = 'smem constant byte address 0x4 - core index']
  #allocation1 [shape = 'u32[144,128]{1,0:T(1,128)}', space=vmem, size = 0x12000, scoped, tag = 'internal scratch']
  #allocation2 [shape = 'f32[4,5,256]{2,1,0:T(8,128)}', space=vmem, size = 0x8000, scoped, tag = 'scratch operand']
  %s0 = inlined_call_operand.vmem [shape: bf16[8,28,160], index: 0, kind: input, shape index: {}]
  %s1 = inlined_call_operand.vmem [shape: bf16[28,28], index: 1, kind: input, shape index: {}]
  %s2 = inlined_call_operand.hbm [shape: bf16[10,10], index: 2, kind: input, shape index: {}]
  %s3 = inlined_call_operand.hbm [shape: bf16[160,256], index: 3, kind: input, shape index: {}]
  %s4 = inlined_call_operand.hbm [shape: f32[1,128], index: 4, kind: input, shape index: {}]
  %s5 = inlined_call_operand.vmem [shape: bf16[640,512], index: 5, kind: input, shape index: {}]
  %s6 = inlined_call_operand.vmem [shape: f32[1,256], index: 6, kind: input, shape index: {}]
  %s7 = inlined_call_operand.vmem [shape: bf16[5,256,256], index: 7, kind: input, shape index: {}]
  %s8 = inlined_call_operand.vmem [shape: f32[1,256], index: 8, kind: input, shape index: {}]
  %s9 = inlined_call_operand.hbm [shape: bf16[256,128], index: 9, kind: input, shape index: {}]
  %s10 = inlined_call_operand.vmem [shape: f32[1,128], index: 10, kind: input, shape index: {}]
  %s11 = inlined_call_operand.hbm [shape: bf16[128,128], index: 11, kind: input, shape index: {}]
  %s12 = inlined_call_operand.vmem [shape: f32[1,128], index: 12, kind: input, shape index: {}]
  %s13 = inlined_call_operand.hbm [shape: f32[2,4,128], index: 13, kind: output, shape index: {}]
  %s14 = sld [smem:[#allocation0]]
  $region105: #{forward.1} parent=0
    _
  %s16 = ssub.s32 1, %s14
  %s17 = scalar_select 0, %s16, %s14
  $region1: #{forward.1} parent=0
    #allocation3 [shape = 'u8[4096]{0}', space=vmem, size = 0x1000, scoped, tag = 'input window, operand 2, single buffered']
    #allocation4 [shape = 's32[2]{0}', space=sflag, size = 0x8, scoped, tag = 'scoped memory for forward.1']
    #allocation5 [shape = 's32[2]{0}', space=sflag, size = 0x8, scoped, tag = 'scoped memory for forward.1']
    #allocation6 [shape = 'u8[81920]{0}', space=vmem, size = 0x14000, scoped, tag = 'input window, operand 3, single buffered']
    #allocation7 [shape = 's32[1]{0}', space=sflag, size = 0x4, scoped, tag = 'scoped memory for forward.1']
    #allocation8 [shape = 'u8[512]{0}', space=vmem, size = 0x400, scoped, tag = 'input window, operand 4, single buffered']
    #allocation9 [shape = 'u8[65536]{0}', space=vmem, size = 0x10000, scoped, tag = 'input window, operand 9, single buffered']
    #allocation10 [shape = 's32[1]{0}', space=sflag, size = 0x4, scoped, tag = 'scoped memory for forward.1']
    #allocation11 [shape = 'u8[32768]{0}', space=vmem, size = 0x8000, scoped, tag = 'input window, operand 11, single buffered']
    #allocation12 [shape = 'u8[4096]{0}', space=vmem, size = 0x1000, scoped, tag = 'output window, operand 0']
    %18 = vsyncpa [#allocation4], 0
    %19 = vsyncpa [#allocation7], 0
    %20 = vsyncpa [#allocation10], 0
    %21 = vsyncpa [#allocation5], 0
    %s22 = scalar_lea.sflag [#allocation5], 1
    %23 = vsyncpa %s22, 0
    loop: start=0, step=1, limit=4
    $region2: #{forward.1} parent=1 // loop_pre_header
      _
    $region3: #{forward.1} parent=1 // loop_header
      %s25 = sphi 0, %s29
      %p26 = scmp.ge.s32.totalorder %s25, 4
      %s35 = sphi 0, %s37
      %s38 = sphi 0, %s35
      %s39 = sphi 0, %s38
      %s55 = sphi 0, %s39
      %s59 = sphi 0, %s59
      %s61 = sphi 0, %s59
      %s62 = sphi 0, %s61
      %s76 = sphi 0, %s62
      %s80 = sphi 0, %s80
      %s82 = sphi 0, %s80
      %s83 = sphi 0, %s82
      %s97 = sphi 0, %s83
      %s101 = sphi 0, %s101
      %s103 = sphi 0, %s101
      %s104 = sphi 0, %s103
      %s118 = sphi 0, %s104
      %s122 = sphi 0, %s122
      %s124 = sphi 0, %s122
      %s125 = sphi 0, %s124
      %s139 = sphi 0, %s125
      %s143 = sphi 0, %s143
      %s145 = sphi 0, %s143
      %s146 = sphi 0, %s145
      %s160 = sphi 0, %s146
      %s164 = sphi 0, %s164
      %s166 = sphi 0, %s164
      %s167 = sphi 0, %s166
      %s181 = sphi 0, %s167
      %s185 = sphi 0, %s185
      %s187 = sphi 0, %s185
      %s188 = sphi 0, %s187
      %s202 = sphi 0, %s188
      %s206 = sphi 0, %s206
      %s208 = sphi 0, %s206
      %s209 = sphi 0, %s208
      %s223 = sphi 0, %s209
      %s227 = sphi 0, %s227
      %s229 = sphi 0, %s227
      %s230 = sphi 0, %s229
      %s244 = sphi 0, %s230
      %s248 = sphi 0, %s248
      %s250 = sphi 0, %s248
      %s251 = sphi 0, %s250
      %s265 = sphi 0, %s251
      %s269 = sphi 0, %s269
      %s271 = sphi 0, %s269
      %s272 = sphi 0, %s271
      %s286 = sphi 0, %s272
      %s290 = sphi 0, %s290
      %s292 = sphi 0, %s290
      %s293 = sphi 0, %s292
      %s307 = sphi 0, %s293
      %s313 = sphi 0, %s315
      %s316 = sphi 0, %s313
      %s317 = sphi 0, %s316
      %s333 = sphi 0, %s317
    $region4: #{forward.1} parent=1 // loop_header_branch
      %28 = sbr.rel (%p26) target = $region8
    $region5: #{forward.1} parent=1 // loop_body
      %s30 = ssub.s32 %s25, 1
      %s31 = ssub.s32 %s25, 2
      %s32 = sadd.s32 %s25, 1
      %s33 = ssub.s32 %s25, %s32
      %p34 = scmp.eq.s32.totalorder %s33, 0
      %s36 = sadd.s32 %s35, 1
      %s37 = scalar_select %p34, %s35, %s36
      %p40 = pneg %p34
      %p41 = scmp.eq.s32.totalorder %s25, 1
      %p42 = por %p40, %p41
      %p43 = scmp.ne.s32.totalorder %s35, %s38
      %p44 = scmp.eq.s32.totalorder %s25, 0
      %p45 = por %p43, %p44
      %p46 = scmp.ne.s32.totalorder %s35, %s38
      %p47 = scmp.eq.s32.totalorder %s30, 1
      %p48 = por %p46, %p47
      %p49 = scmp.ne.s32.totalorder %s38, %s39
      %p50 = scmp.eq.s32.totalorder %s30, 0
      %p51 = por %p49, %p50
      %p52 = scmp.ne.s32.totalorder %s38, %s39
      %p53 = scmp.eq.s32.totalorder %s31, 1
      %p54 = por %p52, %p53
      %p56 = scmp.ne.s32.totalorder %s39, %s55
      %p57 = scmp.eq.s32.totalorder %s31, 0
      %p58 = por %p56, %p57
      %s60 = sadd.s32 %s59, 1
      %p63 = scmp.eq.s32.totalorder %s25, 1
      %p64 = scmp.ne.s32.totalorder %s59, %s61
      %p65 = scmp.eq.s32.totalorder %s25, 0
      %p66 = por %p64, %p65
      %p67 = scmp.ne.s32.totalorder %s59, %s61
      %p68 = scmp.eq.s32.totalorder %s30, 1
      %p69 = por %p67, %p68
      %p70 = scmp.ne.s32.totalorder %s61, %s62
      %p71 = scmp.eq.s32.totalorder %s30, 0
      %p72 = por %p70, %p71
      %p73 = scmp.ne.s32.totalorder %s61, %s62
      %p74 = scmp.eq.s32.totalorder %s31, 1
      %p75 = por %p73, %p74
      %p77 = scmp.ne.s32.totalorder %s62, %s76
      %p78 = scmp.eq.s32.totalorder %s31, 0
      %p79 = por %p77, %p78
      %s81 = sadd.s32 %s80, 1
      %p84 = scmp.eq.s32.totalorder %s25, 1
      %p85 = scmp.ne.s32.totalorder %s80, %s82
      %p86 = scmp.eq.s32.totalorder %s25, 0
      %p87 = por %p85, %p86
      %p88 = scmp.ne.s32.totalorder %s80, %s82
      %p89 = scmp.eq.s32.totalorder %s30, 1
      %p90 = por %p88, %p89
      %p91 = scmp.ne.s32.totalorder %s82, %s83
      %p92 = scmp.eq.s32.totalorder %s30, 0
      %p93 = por %p91, %p92
      %p94 = scmp.ne.s32.totalorder %s82, %s83
      %p95 = scmp.eq.s32.totalorder %s31, 1
      %p96 = por %p94, %p95
      %p98 = scmp.ne.s32.totalorder %s83, %s97
      %p99 = scmp.eq.s32.totalorder %s31, 0
      %p100 = por %p98, %p99
      %s102 = sadd.s32 %s101, 1
      %p105 = scmp.eq.s32.totalorder %s25, 1
      %p106 = scmp.ne.s32.totalorder %s101, %s103
      %p107 = scmp.eq.s32.totalorder %s25, 0
      %p108 = por %p106, %p107
      %p109 = scmp.ne.s32.totalorder %s101, %s103
      %p110 = scmp.eq.s32.totalorder %s30, 1
      %p111 = por %p109, %p110
      %p112 = scmp.ne.s32.totalorder %s103, %s104
      %p113 = scmp.eq.s32.totalorder %s30, 0
      %p114 = por %p112, %p113
      %p115 = scmp.ne.s32.totalorder %s103, %s104
      %p116 = scmp.eq.s32.totalorder %s31, 1
      %p117 = por %p115, %p116
      %p119 = scmp.ne.s32.totalorder %s104, %s118
      %p120 = scmp.eq.s32.totalorder %s31, 0
      %p121 = por %p119, %p120
      %s123 = sadd.s32 %s122, 1
      %p126 = scmp.eq.s32.totalorder %s25, 1
      %p127 = scmp.ne.s32.totalorder %s122, %s124
      %p128 = scmp.eq.s32.totalorder %s25, 0
      %p129 = por %p127, %p128
      %p130 = scmp.ne.s32.totalorder %s122, %s124
      %p131 = scmp.eq.s32.totalorder %s30, 1
      %p132 = por %p130, %p131
      %p133 = scmp.ne.s32.totalorder %s124, %s125
      %p134 = scmp.eq.s32.totalorder %s30, 0
      %p135 = por %p133, %p134
      %p136 = scmp.ne.s32.totalorder %s124, %s125
      %p137 = scmp.eq.s32.totalorder %s31, 1
      %p138 = por %p136, %p137
      %p140 = scmp.ne.s32.totalorder %s125, %s139
      %p141 = scmp.eq.s32.totalorder %s31, 0
      %p142 = por %p140, %p141
      %s144 = sadd.s32 %s143, 1
      %p147 = scmp.eq.s32.totalorder %s25, 1
      %p148 = scmp.ne.s32.totalorder %s143, %s145
      %p149 = scmp.eq.s32.totalorder %s25, 0
      %p150 = por %p148, %p149
      %p151 = scmp.ne.s32.totalorder %s143, %s145
      %p152 = scmp.eq.s32.totalorder %s30, 1
      %p153 = por %p151, %p152
      %p154 = scmp.ne.s32.totalorder %s145, %s146
      %p155 = scmp.eq.s32.totalorder %s30, 0
      %p156 = por %p154, %p155
      %p157 = scmp.ne.s32.totalorder %s145, %s146
      %p158 = scmp.eq.s32.totalorder %s31, 1
      %p159 = por %p157, %p158
      %p161 = scmp.ne.s32.totalorder %s146, %s160
      %p162 = scmp.eq.s32.totalorder %s31, 0
      %p163 = por %p161, %p162
      %s165 = sadd.s32 %s164, 1
      %p168 = scmp.eq.s32.totalorder %s25, 1
      %p169 = scmp.ne.s32.totalorder %s164, %s166
      %p170 = scmp.eq.s32.totalorder %s25, 0
      %p171 = por %p169, %p170
      %p172 = scmp.ne.s32.totalorder %s164, %s166
      %p173 = scmp.eq.s32.totalorder %s30, 1
      %p174 = por %p172, %p173
      %p175 = scmp.ne.s32.totalorder %s166, %s167
      %p176 = scmp.eq.s32.totalorder %s30, 0
      %p177 = por %p175, %p176
      %p178 = scmp.ne.s32.totalorder %s166, %s167
      %p179 = scmp.eq.s32.totalorder %s31, 1
      %p180 = por %p178, %p179
      %p182 = scmp.ne.s32.totalorder %s167, %s181
      %p183 = scmp.eq.s32.totalorder %s31, 0
      %p184 = por %p182, %p183
      %s186 = sadd.s32 %s185, 1
      %p189 = scmp.eq.s32.totalorder %s25, 1
      %p190 = scmp.ne.s32.totalorder %s185, %s187
      %p191 = scmp.eq.s32.totalorder %s25, 0
      %p192 = por %p190, %p191
      %p193 = scmp.ne.s32.totalorder %s185, %s187
      %p194 = scmp.eq.s32.totalorder %s30, 1
      %p195 = por %p193, %p194
      %p196 = scmp.ne.s32.totalorder %s187, %s188
      %p197 = scmp.eq.s32.totalorder %s30, 0
      %p198 = por %p196, %p197
      %p199 = scmp.ne.s32.totalorder %s187, %s188
      %p200 = scmp.eq.s32.totalorder %s31, 1
      %p201 = por %p199, %p200
      %p203 = scmp.ne.s32.totalorder %s188, %s202
      %p204 = scmp.eq.s32.totalorder %s31, 0
      %p205 = por %p203, %p204
      %s207 = sadd.s32 %s206, 1
      %p210 = scmp.eq.s32.totalorder %s25, 1
      %p211 = scmp.ne.s32.totalorder %s206, %s208
      %p212 = scmp.eq.s32.totalorder %s25, 0
      %p213 = por %p211, %p212
      %p214 = scmp.ne.s32.totalorder %s206, %s208
      %p215 = scmp.eq.s32.totalorder %s30, 1
      %p216 = por %p214, %p215
      %p217 = scmp.ne.s32.totalorder %s208, %s209
      %p218 = scmp.eq.s32.totalorder %s30, 0
      %p219 = por %p217, %p218
      %p220 = scmp.ne.s32.totalorder %s208, %s209
      %p221 = scmp.eq.s32.totalorder %s31, 1
      %p222 = por %p220, %p221
      %p224 = scmp.ne.s32.totalorder %s209, %s223
      %p225 = scmp.eq.s32.totalorder %s31, 0
      %p226 = por %p224, %p225
      %s228 = sadd.s32 %s227, 1
      %p231 = scmp.eq.s32.totalorder %s25, 1
      %p232 = scmp.ne.s32.totalorder %s227, %s229
      %p233 = scmp.eq.s32.totalorder %s25, 0
      %p234 = por %p232, %p233
      %p235 = scmp.ne.s32.totalorder %s227, %s229
      %p236 = scmp.eq.s32.totalorder %s30, 1
      %p237 = por %p235, %p236
      %p238 = scmp.ne.s32.totalorder %s229, %s230
      %p239 = scmp.eq.s32.totalorder %s30, 0
      %p240 = por %p238, %p239
      %p241 = scmp.ne.s32.totalorder %s229, %s230
      %p242 = scmp.eq.s32.totalorder %s31, 1
      %p243 = por %p241, %p242
      %p245 = scmp.ne.s32.totalorder %s230, %s244
      %p246 = scmp.eq.s32.totalorder %s31, 0
      %p247 = por %p245, %p246
      %s249 = sadd.s32 %s248, 1
      %p252 = scmp.eq.s32.totalorder %s25, 1
      %p253 = scmp.ne.s32.totalorder %s248, %s250
      %p254 = scmp.eq.s32.totalorder %s25, 0
      %p255 = por %p253, %p254
      %p256 = scmp.ne.s32.totalorder %s248, %s250
      %p257 = scmp.eq.s32.totalorder %s30, 1
      %p258 = por %p256, %p257
      %p259 = scmp.ne.s32.totalorder %s250, %s251
      %p260 = scmp.eq.s32.totalorder %s30, 0
      %p261 = por %p259, %p260
      %p262 = scmp.ne.s32.totalorder %s250, %s251
      %p263 = scmp.eq.s32.totalorder %s31, 1
      %p264 = por %p262, %p263
      %p266 = scmp.ne.s32.totalorder %s251, %s265
      %p267 = scmp.eq.s32.totalorder %s31, 0
      %p268 = por %p266, %p267
      %s270 = sadd.s32 %s269, 1
      %p273 = scmp.eq.s32.totalorder %s25, 1
      %p274 = scmp.ne.s32.totalorder %s269, %s271
      %p275 = scmp.eq.s32.totalorder %s25, 0
      %p276 = por %p274, %p275
      %p277 = scmp.ne.s32.totalorder %s269, %s271
      %p278 = scmp.eq.s32.totalorder %s30, 1
      %p279 = por %p277, %p278
      %p280 = scmp.ne.s32.totalorder %s271, %s272
      %p281 = scmp.eq.s32.totalorder %s30, 0
      %p282 = por %p280, %p281
      %p283 = scmp.ne.s32.totalorder %s271, %s272
      %p284 = scmp.eq.s32.totalorder %s31, 1
      %p285 = por %p283, %p284
      %p287 = scmp.ne.s32.totalorder %s272, %s286
      %p288 = scmp.eq.s32.totalorder %s31, 0
      %p289 = por %p287, %p288
      %s291 = sadd.s32 %s290, 1
      %p294 = scmp.eq.s32.totalorder %s25, 1
      %p295 = scmp.ne.s32.totalorder %s290, %s292
      %p296 = scmp.eq.s32.totalorder %s25, 0
      %p297 = por %p295, %p296
      %p298 = scmp.ne.s32.totalorder %s290, %s292
      %p299 = scmp.eq.s32.totalorder %s30, 1
      %p300 = por %p298, %p299
      %p301 = scmp.ne.s32.totalorder %s292, %s293
      %p302 = scmp.eq.s32.totalorder %s30, 0
      %p303 = por %p301, %p302
      %p304 = scmp.ne.s32.totalorder %s292, %s293
      %p305 = scmp.eq.s32.totalorder %s31, 1
      %p306 = por %p304, %p305
      %p308 = scmp.ne.s32.totalorder %s293, %s307
      %p309 = scmp.eq.s32.totalorder %s31, 0
      %p310 = por %p308, %p309
      %s311 = ssub.s32 %s25, %s32
      %p312 = scmp.eq.s32.totalorder %s311, 0
      %s314 = sadd.s32 %s313, 1
      %s315 = scalar_select %p312, %s313, %s314
      %p318 = pneg %p312
      %p319 = scmp.eq.s32.totalorder %s25, 1
      %p320 = por %p318, %p319
      %p321 = scmp.ne.s32.totalorder %s313, %s316
      %p322 = scmp.eq.s32.totalorder %s25, 0
      %p323 = por %p321, %p322
      %p324 = scmp.ne.s32.totalorder %s313, %s316
      %p325 = scmp.eq.s32.totalorder %s30, 1
      %p326 = por %p324, %p325
      %p327 = scmp.ne.s32.totalorder %s316, %s317
      %p328 = scmp.eq.s32.totalorder %s30, 0
      %p329 = por %p327, %p328
      %p330 = scmp.ne.s32.totalorder %s316, %s317
      %p331 = scmp.eq.s32.totalorder %s31, 1
      %p332 = por %p330, %p331
      %p334 = scmp.ne.s32.totalorder %s317, %s333
      %p335 = scmp.eq.s32.totalorder %s31, 0
      %p336 = por %p334, %p335
      %p337 = scmp.le.s32.totalorder 1, %s25
      %p338 = scmp.lt.s32.totalorder %s25, 3
      %p339 = pnand %p337, %p338
      %p340 = pneg %p339
      // Predicated region
      $region9: #{forward.1} parent=5 // pred_check
        _
      $region10: #{forward.1} parent=5 // pred_check_branch
        %342 = sbr.rel (%p339) target = $region12
      $region11: #{forward.1} parent=5 // pred_region
        %s343 = ssub.s32 %s25, 1
        // Predicated region
        $region13: #{forward.1} parent=11 // pred_check
          %p344 = pneg %p72
        $region14: #{forward.1} parent=11 // pred_check_branch
          %346 = sbr.rel (%p344) target = $region16
        $region15: #{forward.1} parent=11 // pred_region
          _
        $region16: #{forward.1} parent=11 // pred_fallthru
          _
        // Predicated region
        $region17: #{forward.1} parent=11 // pred_check
          %p347 = pneg %p93
        $region18: #{forward.1} parent=11 // pred_check_branch
          %349 = sbr.rel (%p347) target = $region20
        $region19: #{forward.1} parent=11 // pred_region
          %s351 = ssub.s32 128, 128
          %352 = vsyncadd [#allocation4], %s351
          %s353 = sshll.u32 [#allocation3], 4
          %s354 = int_to_ptr.vmem [resolvable:$true] %s353
          %359 = dma.hbm_to_vmem [thread:$0]  %s2, 128, %s354, [#allocation4], 64, 64, 4
        $region20: #{forward.1} parent=11 // pred_fallthru
          _
        // Predicated region
        $region21: #{forward.1} parent=11 // pred_check
          %p360 = pneg %p114
        $region22: #{forward.1} parent=11 // pred_check_branch
          %362 = sbr.rel (%p360) target = $region24
        $region23: #{forward.1} parent=11 // pred_region
          %s364 = ssub.s32 2560, 2560
          %365 = vsyncadd [#allocation7], %s364
          %s366 = sshll.u32 [#allocation6], 4
          %s367 = int_to_ptr.vmem [resolvable:$true] %s366
          %372 = dma.hbm_to_vmem [thread:$0]  %s3, 2560, %s367, [#allocation7], 128, 128, 8
        $region24: #{forward.1} parent=11 // pred_fallthru
          _
        // Predicated region
        $region25: #{forward.1} parent=11 // pred_check
          %p373 = pneg %p135
        $region26: #{forward.1} parent=11 // pred_check_branch
          %375 = sbr.rel (%p373) target = $region28
        $region27: #{forward.1} parent=11 // pred_region
          %s377 = ssub.s32 16, 16
          %378 = vsyncadd [#allocation7], %s377
          %s380 = sshll.u32 [#allocation8], 4
          %s381 = int_to_ptr.vmem [resolvable:$true] %s380
          %383 = dma.hbm_to_vmem [thread:$0]  %s4, 16, %s381, [#allocation7]
        $region28: #{forward.1} parent=11 // pred_fallthru
          _
        // Predicated region
        $region29: #{forward.1} parent=11 // pred_check
          %p384 = pneg %p156
        $region30: #{forward.1} parent=11 // pred_check_branch
          %386 = sbr.rel (%p384) target = $region32
        $region31: #{forward.1} parent=11 // pred_region
          _
        $region32: #{forward.1} parent=11 // pred_fallthru
          _
        // Predicated region
        $region33: #{forward.1} parent=11 // pred_check
          %p387 = pneg %p177
        $region34: #{forward.1} parent=11 // pred_check_branch
          %389 = sbr.rel (%p387) target = $region36
        $region35: #{forward.1} parent=11 // pred_region
          _
        $region36: #{forward.1} parent=11 // pred_fallthru
          _
        // Predicated region
        $region37: #{forward.1} parent=11 // pred_check
          %p390 = pneg %p198
        $region38: #{forward.1} parent=11 // pred_check_branch
          %392 = sbr.rel (%p390) target = $region40
        $region39: #{forward.1} parent=11 // pred_region
          _
        $region40: #{forward.1} parent=11 // pred_fallthru
          _
        // Predicated region
        $region41: #{forward.1} parent=11 // pred_check
          %p393 = pneg %p219
        $region42: #{forward.1} parent=11 // pred_check_branch
          %395 = sbr.rel (%p393) target = $region44
        $region43: #{forward.1} parent=11 // pred_region
          _
        $region44: #{forward.1} parent=11 // pred_fallthru
          _
        // Predicated region
        $region45: #{forward.1} parent=11 // pred_check
          %p396 = pneg %p240
        $region46: #{forward.1} parent=11 // pred_check_branch
          %398 = sbr.rel (%p396) target = $region48
        $region47: #{forward.1} parent=11 // pred_region
          %s400 = ssub.s32 2048, 2048
          %401 = vsyncadd [#allocation10], %s400
          %s402 = sshll.u32 [#allocation9], 4
          %s403 = int_to_ptr.vmem [resolvable:$true] %s402
          %408 = dma.hbm_to_vmem [thread:$0]  %s9, 2048, %s403, [#allocation10], 64, 64, 4
        $region48: #{forward.1} parent=11 // pred_fallthru
          _
        // Predicated region
        $region49: #{forward.1} parent=11 // pred_check
          %p409 = pneg %p261
        $region50: #{forward.1} parent=11 // pred_check_branch
          %411 = sbr.rel (%p409) target = $region52
        $region51: #{forward.1} parent=11 // pred_region
          _
        $region52: #{forward.1} parent=11 // pred_fallthru
          _
        // Predicated region
        $region53: #{forward.1} parent=11 // pred_check
          %p412 = pneg %p282
        $region54: #{forward.1} parent=11 // pred_check_branch
          %414 = sbr.rel (%p412) target = $region56
        $region55: #{forward.1} parent=11 // pred_region
          %s416 = ssub.s32 1024, 1024
          %417 = vsyncadd [#allocation10], %s416
          %s418 = sshll.u32 [#allocation11], 4
          %s419 = int_to_ptr.vmem [resolvable:$true] %s418
          %424 = dma.hbm_to_vmem [thread:$0]  %s11, 1024, %s419, [#allocation10], 64, 64, 4
        $region56: #{forward.1} parent=11 // pred_fallthru
          _
        // Predicated region
        $region57: #{forward.1} parent=11 // pred_check
          %p425 = pneg %p303
        $region58: #{forward.1} parent=11 // pred_check_branch
          %427 = sbr.rel (%p425) target = $region60
        $region59: #{forward.1} parent=11 // pred_region
          _
        $region60: #{forward.1} parent=11 // pred_fallthru
          _
      $region12: #{forward.1} parent=5 // pred_fallthru
        _
      %p428 = scmp.lt.s32.totalorder %s25, 2
      // Predicated region
      $region61: #{forward.1} parent=5 // pred_check
        %p429 = pneg %p428
      $region62: #{forward.1} parent=5 // pred_check_branch
        %431 = sbr.rel (%p429) target = $region64
      $region63: #{forward.1} parent=5 // pred_region
        // Predicated region
        $region65: #{forward.1} parent=63 // pred_check
          %p432 = pneg %p45
        $region66: #{forward.1} parent=63 // pred_check_branch
          %434 = sbr.rel (%p432) target = $region68
        $region67: #{forward.1} parent=63 // pred_region
          %s435 = smul.u32 4, %s25
          %p436 = scmp.lt.s32.totalorder %s435, 7
          %s437 = scalar_select %p436, %s435, 7
          %s438 = smul.addr %s437, 8
          %s439 = smul.addr %s438, 4
          %s440 = scalar_lea.vmem %s0, %s439
          %s441 = smul.u32 4, %s25
        $region68: #{forward.1} parent=63 // pred_fallthru
          _
      $region64: #{forward.1} parent=5 // pred_fallthru
        _
      %p442 = scmp.le.s32.totalorder 1, %s25
      %p443 = scmp.lt.s32.totalorder %s25, 3
      %p444 = pnand %p442, %p443
      %p445 = pneg %p444
      // Predicated region
      $region69: #{forward.1} parent=5 // pred_check
        _
      $region70: #{forward.1} parent=5 // pred_check_branch
        %447 = sbr.rel (%p444) target = $region72
      $region71: #{forward.1} parent=5 // pred_region
        %s448 = ssub.s32 %s25, 1
        // Predicated region
        $region73: #{forward.1} parent=71 // pred_check
          %p449 = pneg %p93
        $region74: #{forward.1} parent=71 // pred_check_branch
          %451 = sbr.rel (%p449) target = $region76
        $region75: #{forward.1} parent=71 // pred_region
          %452 = dma.done [#allocation4], 128
        $region76: #{forward.1} parent=71 // pred_fallthru
          _
        // Predicated region
        $region77: #{forward.1} parent=71 // pred_check
          %p453 = pneg %p114
        $region78: #{forward.1} parent=71 // pred_check_branch
          %455 = sbr.rel (%p453) target = $region80
        $region79: #{forward.1} parent=71 // pred_region
          %456 = dma.done [#allocation7], 2560
        $region80: #{forward.1} parent=71 // pred_fallthru
          _
        // Predicated region
        $region81: #{forward.1} parent=71 // pred_check
          %p457 = pneg %p135
        $region82: #{forward.1} parent=71 // pred_check_branch
          %459 = sbr.rel (%p457) target = $region84
        $region83: #{forward.1} parent=71 // pred_region
          %460 = dma.done [#allocation7], 16
        $region84: #{forward.1} parent=71 // pred_fallthru
          _
        // Predicated region
        $region85: #{forward.1} parent=71 // pred_check
          %p461 = pneg %p240
        $region86: #{forward.1} parent=71 // pred_check_branch
          %463 = sbr.rel (%p461) target = $region88
        $region87: #{forward.1} parent=71 // pred_region
          %464 = dma.done [#allocation10], 2048
        $region88: #{forward.1} parent=71 // pred_fallthru
          _
        // Predicated region
        $region89: #{forward.1} parent=71 // pred_check
          %p465 = pneg %p282
        $region90: #{forward.1} parent=71 // pred_check_branch
          %467 = sbr.rel (%p465) target = $region92
        $region91: #{forward.1} parent=71 // pred_region
          %468 = dma.done [#allocation10], 1024
        $region92: #{forward.1} parent=71 // pred_fallthru
          _
        %s469 = smul.u32 4, %s30
        %p470 = scmp.lt.s32.totalorder %s469, 7
        %s471 = scalar_select %p470, %s469, 7
        %s472 = smul.addr %s471, 8
        %s473 = smul.addr %s472, 4
        %s474 = scalar_lea.vmem %s0, %s473
        %p475 = pneg %p51
        %p476 = pneg %p48
        %p477 = pneg %p72
        %p478 = pneg %p69
        %p479 = pneg %p93
        %p480 = pneg %p90
        %p481 = pneg %p114
        %p482 = pneg %p111
        %p483 = pneg %p135
        %p484 = pneg %p132
        %p485 = pneg %p156
        %p486 = pneg %p153
        %p487 = pneg %p177
        %p488 = pneg %p174
        %p489 = pneg %p198
        %p490 = pneg %p195
        %p491 = pneg %p219
        %p492 = pneg %p216
        %p493 = pneg %p240
        %p494 = pneg %p237
        %p495 = pneg %p261
        %p496 = pneg %p258
        %p497 = pneg %p282
        %p498 = pneg %p279
        %p499 = pneg %p303
        %p500 = pneg %p300
        %p501 = pneg %p329
        %p502 = pneg %p326
        %s503 = sand.u32 %s316, 1
        %s504 = scalar_lea.sflag [#allocation5], %s503
        %s505 = sand.u32 %s316, 1
        %s506 = smul.addr %s505, 4
        %s507 = scalar_lea.vmem [#allocation12], %s506
        %s508 = smul.u32 4, %s30
        %p509 = scmp.lt.s32.totalorder %s508, 7
        %s510 = scalar_select %p509, %s508, 7
        %s511 = smul.addr %s510, 8
        %s512 = smul.addr %s511, 4
        %s513 = scalar_lea.vmem %s0, %s512
        %s514 = smul.u32 4, %s30
        %v516 = vld [vmem:[%s513] sm:$0xff]
        %v517 = vld [vmem:[%s513 + $0x8] sm:$0xff]
        %v518 = vld [vmem:[%s513 + $0x10] sm:$0xff]
        %v519 = vld [vmem:[%s513 + $0x18] sm:$0x33]
        %v520 = vld [vmem:[#allocation6] sm:$0xff]
        %v521 = vld [vmem:[#allocation6 + $0x8] sm:$0xff]
        %v522 = vld [vmem:[#allocation6 + $0x10] sm:$0xff]
        %v523 = vld [vmem:[#allocation6 + $0x18] sm:$0xff]
        %v524 = vld [vmem:[#allocation6 + $0x20] sm:$0xff]
        %v525 = vld [vmem:[#allocation6 + $0x28] sm:$0xff]
        %v526 = vld [vmem:[#allocation6 + $0x30] sm:$0xff]
        %v527 = vld [vmem:[#allocation6 + $0x38] sm:$0xff]
        %v528 = vld [vmem:[#allocation6 + $0x40] sm:$0xff]
        %v529 = vld [vmem:[#allocation6 + $0x48] sm:$0xff]
        %v530 = vld [vmem:[#allocation6 + $0x50] sm:$0xff]
        %v531 = vld [vmem:[#allocation6 + $0x58] sm:$0xff]
        %v532 = vld [vmem:[#allocation6 + $0x60] sm:$0xff]
        %v533 = vld [vmem:[#allocation6 + $0x68] sm:$0xff]
        %v534 = vld [vmem:[#allocation6 + $0x70] sm:$0xff]
        %v535 = vld [vmem:[#allocation6 + $0x78] sm:$0xff]
        %v536 = vld [vmem:[#allocation6 + $0x80] sm:$0xff]
        %v537 = vld [vmem:[#allocation6 + $0x88] sm:$0xff]
        %v538 = vld [vmem:[#allocation6 + $0x90] sm:$0xff]
        %v539 = vld [vmem:[#allocation6 + $0x98] sm:$0xff]
        %v544 = vunpack.c.l.b16 %v516
        %v545 = vunpack.c.h.b16 %v516
        %v546 = vunpack.c.l.b16 %v517
        %v547 = vunpack.c.h.b16 %v517
        %v548 = vunpack.c.l.b16 %v518
        %v549 = vunpack.c.h.b16 %v518
        %v550 = vunpack.c.l.b16 %v519
        %v551 = vunpack.c.h.b16 %v519
        %v552 = vpack.c.b16 %v546, %v544
        %v553 = vpack.c.b16 %v547, %v545
        %v554 = vpack.c.b16 %v550, %v548
        %v555 = vpack.c.b16 %v551, %v549
        %v578 = vunpack.c.l.b16 %v520
        %v579 = vunpack.c.h.b16 %v520
        %v580 = vunpack.c.l.b16 %v521
        %v581 = vunpack.c.h.b16 %v521
        %v582 = vunpack.c.l.b16 %v522
        %v583 = vunpack.c.h.b16 %v522
        %v584 = vunpack.c.l.b16 %v523
        %v585 = vunpack.c.h.b16 %v523
        %v586 = vunpack.c.l.b16 %v524
        %v587 = vunpack.c.h.b16 %v524
        %v588 = vunpack.c.l.b16 %v525
        %v589 = vunpack.c.h.b16 %v525
        %v590 = vunpack.c.l.b16 %v526
        %v591 = vunpack.c.h.b16 %v526
        %v592 = vunpack.c.l.b16 %v527
        %v593 = vunpack.c.h.b16 %v527
        %v594 = vunpack.c.l.b16 %v528
        %v595 = vunpack.c.h.b16 %v528
        %v596 = vunpack.c.l.b16 %v529
        %v597 = vunpack.c.h.b16 %v529
        %v598 = vunpack.c.l.b16 %v530
        %v599 = vunpack.c.h.b16 %v530
        %v600 = vunpack.c.l.b16 %v531
        %v601 = vunpack.c.h.b16 %v531
        %v602 = vunpack.c.l.b16 %v532
        %v603 = vunpack.c.h.b16 %v532
        %v604 = vunpack.c.l.b16 %v533
        %v605 = vunpack.c.h.b16 %v533
        %v606 = vunpack.c.l.b16 %v534
        %v607 = vunpack.c.h.b16 %v534
        %v608 = vunpack.c.l.b16 %v535
        %v609 = vunpack.c.h.b16 %v535
        %v610 = vunpack.c.l.b16 %v536
        %v611 = vunpack.c.h.b16 %v536
        %v612 = vunpack.c.l.b16 %v537
        %v613 = vunpack.c.h.b16 %v537
        %v614 = vunpack.c.l.b16 %v538
        %v615 = vunpack.c.h.b16 %v538
        %v616 = vunpack.c.l.b16 %v539
        %v617 = vunpack.c.h.b16 %v539
        %v618 = vpack.c.b16 %v580, %v578
        %v619 = vpack.c.b16 %v581, %v579
        %v620 = vpack.c.b16 %v584, %v582
        %v621 = vpack.c.b16 %v585, %v583
        %v622 = vpack.c.b16 %v588, %v586
        %v623 = vpack.c.b16 %v589, %v587
        %v624 = vpack.c.b16 %v592, %v590
        %v625 = vpack.c.b16 %v593, %v591
        %v626 = vpack.c.b16 %v596, %v594
        %v627 = vpack.c.b16 %v597, %v595
        %v628 = vpack.c.b16 %v600, %v598
        %v629 = vpack.c.b16 %v601, %v599
        %v630 = vpack.c.b16 %v604, %v602
        %v631 = vpack.c.b16 %v605, %v603
        %v632 = vpack.c.b16 %v608, %v606
        %v633 = vpack.c.b16 %v609, %v607
        %v634 = vpack.c.b16 %v612, %v610
        %v635 = vpack.c.b16 %v613, %v611
        %v636 = vpack.c.b16 %v616, %v614
        %v637 = vpack.c.b16 %v617, %v615
        %vm658 = vcmask 261120
        %v660 = vsel %vm658, %v553, 0
        %v663 = vsel %vm658, %v555, 0
        %665 = vmatprep.subr.bf16.mxu0 %v619
        %666 = vmatpush1.bf16.msra.mxu0 %v618
        %667 = vmatprep.subr.bf16.mxu0 %v621
        %668 = vmatpush1.bf16.msra.mxu0 %v620
        %669 = vmatprep.subr.bf16.mxu0 %v623
        %670 = vmatpush1.bf16.msra.mxu0 %v622
        %671 = vmatprep.subr.bf16.mxu0 %v625
        %672 = vmatpush1.bf16.msra.mxu0 %v624
        %673 = vmatprep.subr.bf16.mxu0 %v627
        %674 = vmatpush1.bf16.msra.mxu0 %v626
        %675 = vmatprep.subr.bf16.mxu0 %v629
        %676 = vmatpush1.bf16.msra.mxu0 %v628
        %677 = vmatprep.subr.bf16.mxu0 %v631
        %678 = vmatpush1.bf16.msra.mxu0 %v630
        %679 = vmatprep.subr.bf16.mxu0 %v633
        %680 = vmatpush1.bf16.msra.mxu0 %v632
        %681 = vmatprep.subr.bf16.mxu0 %v635
        %682 = vmatpush1.bf16.msra.mxu0 %v634
        %683 = vmatprep.subr.bf16.mxu0 %v637
        %684 = vmatpush1.bf16.msra.mxu0 %v636
        %685 = vmatprep.subr.bf16.mxu0 0
        %686 = vmatpush1.bf16.msra.mxu0 0
        %687 = vmatprep.subr.bf16.mxu0 0
        %688 = vmatpush1.bf16.msra.mxu0 0
        %689 = vmatprep.subr.bf16.mxu0 0
        %690 = vmatpush1.bf16.msra.mxu0 0
        %691 = vmatprep.subr.bf16.mxu0 0
        %692 = vmatpush1.bf16.msra.mxu0 0
        %693 = vmatprep.subr.bf16.mxu0 0
        %694 = vmatpush1.bf16.msra.mxu0 0
        %695 = vmatprep.subr.bf16.mxu0 0
        %696 = vmatpush1.bf16.msra.mxu0 0
        %697 = vmatprep.mubr.bf16.mxu0 %v660
        %698 = vmatmul.mubr.bf16.gmra.mrb[0].mxu0 %v552
        %v699 = vpop.f32.mrb[0].mxu0
        %v700 = vadd.f32 0.0, %v699
        %v701 = vpop.f32.mrb[0].mxu0
        %v702 = vadd.f32 0.0, %v701
        %v703 = vpop.f32.mrb[0].mxu0
        %v704 = vadd.f32 0.0, %v703
        %v705 = vpop.f32.mrb[0].mxu0
        %v706 = vadd.f32 0.0, %v705
        %707 = vmatprep.mubr.bf16.mxu0 %v663
        %708 = vmatmul.mubr.bf16.gmra.mrb[0].mxu0 %v554
        %v709 = vpop.f32.mrb[0].mxu0
        %v710 = vadd.f32 0.0, %v709
        %v711 = vpop.f32.mrb[0].mxu0
        %v712 = vadd.f32 0.0, %v711
        %v713 = vpop.f32.mrb[0].mxu0
        %v714 = vadd.f32 0.0, %v713
        %v715 = vpop.f32.mrb[0].mxu0
        %v716 = vadd.f32 0.0, %v715
        %717 = vdwg.mxu0
        %v718 = vmax.f32 %v700, %v702
        %v719 = vmax.f32 %v704, %v706
        %v720 = vmax.f32 %v710, %v712
        %v721 = vmax.f32 %v714, %v716
        %v722 = vld [vmem:[#allocation8] sm:$0x1]
        %v724 = vlaneseq
        %v725 = vshrl.u32 %v724, 7
        %v726 = vsub.s32 0, %v725
        %v727 = vrot.slane %v722, %v726
        %v729 = vadd.f32 %v718, %v727
        %v730 = vadd.f32 %v719, %v727
        %v731 = vadd.f32 %v720, %v727
        %v732 = vadd.f32 %v721, %v727
        %v733 = vmax.f32 %v729, 0.0
        %v734 = vmax.f32 %v730, 0.0
        %v735 = vmax.f32 %v731, 0.0
        %v736 = vmax.f32 %v732, 0.0
        %v737 = vld [vmem:[%s1] sm:$0xf]
        %v738 = vld [vmem:[%s1 + $0x4] sm:$0xf]
        %v739 = vld [vmem:[%s1 + $0x8] sm:$0xf]
        %v740 = vld [vmem:[%s1 + $0xc] sm:$0x3]
        %v741 = vpack.c.bf16 %v734, %v733
        %v742 = vpack.c.bf16 %v736, %v735
        %v747 = vunpack.c.l.b16 %v737
        %v748 = vunpack.c.l.b16 %v738
        %v749 = vunpack.c.l.b16 %v739
        %v750 = vunpack.c.l.b16 %v740
        %v751 = vpack.c.b16 %v748, %v747
        %v752 = vpack.c.b16 %v750, %v749
        %vm753 = vcmask 228352
        %v755 = vsel %vm753, %v751, 0
        %v758 = vsel %vm753, %v752, 0
        %vm760 = vcmask 1045504
        %v762 = vsel %vm760, %v742, 0
        %764 = vmatprep.subr.bf16.mxu0 0
        %765 = vmatpush1.bf16.msra.mxu0 %v741
        %766 = vmatprep.subr.bf16.mxu0 0
        %767 = vmatpush1.bf16.msra.mxu0 %v762
        %768 = vmatprep.subr.bf16.mxu0 0
        %769 = vmatpush1.bf16.msra.mxu0 0
        %770 = vmatprep.subr.bf16.mxu0 0
        %771 = vmatpush1.bf16.msra.mxu0 0
        %772 = vmatprep.subr.bf16.mxu0 0
        %773 = vmatpush1.bf16.msra.mxu0 0
        %774 = vmatprep.subr.bf16.mxu0 0
        %775 = vmatpush1.bf16.msra.mxu0 0
        %776 = vmatprep.subr.bf16.mxu0 0
        %777 = vmatpush1.bf16.msra.mxu0 0
        %778 = vmatprep.subr.bf16.mxu0 0
        %779 = vmatpush1.bf16.msra.mxu0 0
        %780 = vmatprep.subr.bf16.mxu0 0
        %781 = vmatpush1.bf16.msra.mxu0 0
        %782 = vmatprep.subr.bf16.mxu0 0
        %783 = vmatpush1.bf16.msra.mxu0 0
        %784 = vmatprep.subr.bf16.mxu0 0
        %785 = vmatpush1.bf16.msra.mxu0 0
        %786 = vmatprep.subr.bf16.mxu0 0
        %787 = vmatpush1.bf16.msra.mxu0 0
        %788 = vmatprep.subr.bf16.mxu0 0
        %789 = vmatpush1.bf16.msra.mxu0 0
        %790 = vmatprep.subr.bf16.mxu0 0
        %791 = vmatpush1.bf16.msra.mxu0 0
        %792 = vmatprep.subr.bf16.mxu0 0
        %793 = vmatpush1.bf16.msra.mxu0 0
        %794 = vmatprep.subr.bf16.mxu0 0
        %795 = vmatpush1.bf16.msra.mxu0 0
        %796 = vmatprep.mubr.bf16.mxu0 0
        %797 = vmatmul.mubr.bf16.gmra.mrb[0].mxu0 %v755
        %v798 = vpop.f32.mrb[0].mxu0
        %v799 = vadd.f32 0.0, %v798
        %v800 = vpop.f32.mrb[0].mxu0
        %v801 = vpop.f32.mrb[0].mxu0
        %v802 = vadd.f32 0.0, %v801
        %v803 = vpop.f32.mrb[0].mxu0
        %804 = vmatprep.mubr.bf16.mxu0 0
        %805 = vmatmul.mubr.bf16.gmra.mrb[0].mxu0 %v758
        %v806 = vpop.f32.mrb[0].mxu0
        %v807 = vadd.f32 0.0, %v806
        %v808 = vpop.f32.mrb[0].mxu0
        %v809 = vpop.f32.mrb[0].mxu0
        %v810 = vadd.f32 0.0, %v809
        %v811 = vpop.f32.mrb[0].mxu0
        %812 = vdwg.mxu0
        %vm816 = vcmask 1041408
        %v817 = vrot.slane %v802, 6
        %v818 = vrot.slane %v807, 6
        %v819 = vsel %vm816, %v817, %v818
        %v820 = vrot.slane %v810, 6
        %v821 = vsel %vm816, %v818, %v820
        %v824 = vmax.f32 %v799, %v819
        %v825 = vmax.f32 %v802, %v821
        %vm828 = vcmask 1046528
        %v829 = vrot.slane %v824, 1
        %v830 = vrot.slane %v825, 1
        %v831 = vsel %vm828, %v829, %v830
        %v834 = vrot.slane %v824, 2
        %v835 = vrot.slane %v825, 2
        %v836 = vsel %vm760, %v834, %v835
        %vm839 = vcmask 1044480
        %v840 = vrot.slane %v824, 3
        %v841 = vrot.slane %v825, 3
        %v842 = vsel %vm839, %v840, %v841
        %vm845 = vcmask 1043456
        %v846 = vrot.slane %v824, 4
        %v847 = vrot.slane %v825, 4
        %v848 = vsel %vm845, %v846, %v847
        %v851 = vpack.c.bf16 %v825, %v824
        %v852 = vpack.c.bf16 %v830, %v831
        %v853 = vpack.c.bf16 %v835, %v836
        %v854 = vpack.c.bf16 %v841, %v842
        %v855 = vpack.c.bf16 %v847, %v848
        %v856 = vld [vmem:[%s5] sm:$0xff]
        %v857 = vld [vmem:[%s5 + $0x8] sm:$0xff]
        %v858 = vld [vmem:[%s5 + $0x10] sm:$0xff]
        %v859 = vld [vmem:[%s5 + $0x18] sm:$0xff]
        %v860 = vld [vmem:[%s5 + $0x20] sm:$0xff]
        %v861 = vld [vmem:[%s5 + $0x28] sm:$0xff]
        %v862 = vld [vmem:[%s5 + $0x30] sm:$0xff]
        %v863 = vld [vmem:[%s5 + $0x38] sm:$0xff]
        %v864 = vld [vmem:[%s5 + $0x40] sm:$0xff]
        %v865 = vld [vmem:[%s5 + $0x48] sm:$0xff]
        %v866 = vld [vmem:[%s5 + $0x50] sm:$0xff]
        %v867 = vld [vmem:[%s5 + $0x58] sm:$0xff]
        %v868 = vld [vmem:[%s5 + $0x60] sm:$0xff]
        %v869 = vld [vmem:[%s5 + $0x68] sm:$0xff]
        %v870 = vld [vmem:[%s5 + $0x70] sm:$0xff]
        %v871 = vld [vmem:[%s5 + $0x78] sm:$0xff]
        %v872 = vld [vmem:[%s5 + $0x80] sm:$0xff]
        %v873 = vld [vmem:[%s5 + $0x88] sm:$0xff]
        %v874 = vld [vmem:[%s5 + $0x90] sm:$0xff]
        %v875 = vld [vmem:[%s5 + $0x98] sm:$0xff]
        %v876 = vld [vmem:[%s5 + $0xa0] sm:$0xff]
        %v877 = vld [vmem:[%s5 + $0xa8] sm:$0xff]
        %v878 = vld [vmem:[%s5 + $0xb0] sm:$0xff]
        %v879 = vld [vmem:[%s5 + $0xb8] sm:$0xff]
        %v880 = vld [vmem:[%s5 + $0xc0] sm:$0xff]
        %v881 = vld [vmem:[%s5 + $0xc8] sm:$0xff]
        %v882 = vld [vmem:[%s5 + $0xd0] sm:$0xff]
        %v883 = vld [vmem:[%s5 + $0xd8] sm:$0xff]
        %v884 = vld [vmem:[%s5 + $0xe0] sm:$0xff]
        %v885 = vld [vmem:[%s5 + $0xe8] sm:$0xff]
        %v886 = vld [vmem:[%s5 + $0xf0] sm:$0xff]
        %v887 = vld [vmem:[%s5 + $0xf8] sm:$0xff]
        %v888 = vld [vmem:[%s5 + $0x100] sm:$0xff]
        %v889 = vld [vmem:[%s5 + $0x108] sm:$0xff]
        %v890 = vld [vmem:[%s5 + $0x110] sm:$0xff]
        %v891 = vld [vmem:[%s5 + $0x118] sm:$0xff]
        %v892 = vld [vmem:[%s5 + $0x120] sm:$0xff]
        %v893 = vld [vmem:[%s5 + $0x128] sm:$0xff]
        %v894 = vld [vmem:[%s5 + $0x130] sm:$0xff]
        %v895 = vld [vmem:[%s5 + $0x138] sm:$0xff]
        %v896 = vld [vmem:[%s5 + $0x140] sm:$0xff]
        %v897 = vld [vmem:[%s5 + $0x148] sm:$0xff]
        %v898 = vld [vmem:[%s5 + $0x150] sm:$0xff]
        %v899 = vld [vmem:[%s5 + $0x158] sm:$0xff]
        %v900 = vld [vmem:[%s5 + $0x160] sm:$0xff]
        %v901 = vld [vmem:[%s5 + $0x168] sm:$0xff]
        %v902 = vld [vmem:[%s5 + $0x170] sm:$0xff]
        %v903 = vld [vmem:[%s5 + $0x178] sm:$0xff]
        %v904 = vld [vmem:[%s5 + $0x180] sm:$0xff]
        %v905 = vld [vmem:[%s5 + $0x188] sm:$0xff]
        %v906 = vld [vmem:[%s5 + $0x190] sm:$0xff]
        %v907 = vld [vmem:[%s5 + $0x198] sm:$0xff]
        %v908 = vld [vmem:[%s5 + $0x1a0] sm:$0xff]
        %v909 = vld [vmem:[%s5 + $0x1a8] sm:$0xff]
        %v910 = vld [vmem:[%s5 + $0x1b0] sm:$0xff]
        %v911 = vld [vmem:[%s5 + $0x1b8] sm:$0xff]
        %v912 = vld [vmem:[%s5 + $0x1c0] sm:$0xff]
        %v913 = vld [vmem:[%s5 + $0x1c8] sm:$0xff]
        %v914 = vld [vmem:[%s5 + $0x1d0] sm:$0xff]
        %v915 = vld [vmem:[%s5 + $0x1d8] sm:$0xff]
        %v916 = vld [vmem:[%s5 + $0x1e0] sm:$0xff]
        %v917 = vld [vmem:[%s5 + $0x1e8] sm:$0xff]
        %v918 = vld [vmem:[%s5 + $0x1f0] sm:$0xff]
        %v919 = vld [vmem:[%s5 + $0x1f8] sm:$0xff]
        %v920 = vld [vmem:[%s5 + $0x200] sm:$0xff]
        %v921 = vld [vmem:[%s5 + $0x208] sm:$0xff]
        %v922 = vld [vmem:[%s5 + $0x210] sm:$0xff]
        %v923 = vld [vmem:[%s5 + $0x218] sm:$0xff]
        %v924 = vld [vmem:[%s5 + $0x220] sm:$0xff]
        %v925 = vld [vmem:[%s5 + $0x228] sm:$0xff]
        %v926 = vld [vmem:[%s5 + $0x230] sm:$0xff]
        %v927 = vld [vmem:[%s5 + $0x238] sm:$0xff]
        %v928 = vld [vmem:[%s5 + $0x240] sm:$0xff]
        %v929 = vld [vmem:[%s5 + $0x248] sm:$0xff]
        %v930 = vld [vmem:[%s5 + $0x250] sm:$0xff]
        %v931 = vld [vmem:[%s5 + $0x258] sm:$0xff]
        %v932 = vld [vmem:[%s5 + $0x260] sm:$0xff]
        %v933 = vld [vmem:[%s5 + $0x268] sm:$0xff]
        %v934 = vld [vmem:[%s5 + $0x270] sm:$0xff]
        %v935 = vld [vmem:[%s5 + $0x278] sm:$0xff]
        %v936 = vld [vmem:[%s5 + $0x280] sm:$0xff]
        %v937 = vld [vmem:[%s5 + $0x288] sm:$0xff]
        %v938 = vld [vmem:[%s5 + $0x290] sm:$0xff]
        %v939 = vld [vmem:[%s5 + $0x298] sm:$0xff]
        %v940 = vld [vmem:[%s5 + $0x2a0] sm:$0xff]
        %v941 = vld [vmem:[%s5 + $0x2a8] sm:$0xff]
        %v942 = vld [vmem:[%s5 + $0x2b0] sm:$0xff]
        %v943 = vld [vmem:[%s5 + $0x2b8] sm:$0xff]
        %v944 = vld [vmem:[%s5 + $0x2c0] sm:$0xff]
        %v945 = vld [vmem:[%s5 + $0x2c8] sm:$0xff]
        %v946 = vld [vmem:[%s5 + $0x2d0] sm:$0xff]
        %v947 = vld [vmem:[%s5 + $0x2d8] sm:$0xff]
        %v948 = vld [vmem:[%s5 + $0x2e0] sm:$0xff]
        %v949 = vld [vmem:[%s5 + $0x2e8] sm:$0xff]
        %v950 = vld [vmem:[%s5 + $0x2f0] sm:$0xff]
        %v951 = vld [vmem:[%s5 + $0x2f8] sm:$0xff]
        %v952 = vld [vmem:[%s5 + $0x300] sm:$0xff]
        %v953 = vld [vmem:[%s5 + $0x308] sm:$0xff]
        %v954 = vld [vmem:[%s5 + $0x310] sm:$0xff]
        %v955 = vld [vmem:[%s5 + $0x318] sm:$0xff]
        %v956 = vld [vmem:[%s5 + $0x320] sm:$0xff]
        %v957 = vld [vmem:[%s5 + $0x328] sm:$0xff]
        %v958 = vld [vmem:[%s5 + $0x330] sm:$0xff]
        %v959 = vld [vmem:[%s5 + $0x338] sm:$0xff]
        %v960 = vld [vmem:[%s5 + $0x340] sm:$0xff]
        %v961 = vld [vmem:[%s5 + $0x348] sm:$0xff]
        %v962 = vld [vmem:[%s5 + $0x350] sm:$0xff]
        %v963 = vld [vmem:[%s5 + $0x358] sm:$0xff]
        %v964 = vld [vmem:[%s5 + $0x360] sm:$0xff]
        %v965 = vld [vmem:[%s5 + $0x368] sm:$0xff]
        %v966 = vld [vmem:[%s5 + $0x370] sm:$0xff]
        %v967 = vld [vmem:[%s5 + $0x378] sm:$0xff]
        %v968 = vld [vmem:[%s5 + $0x380] sm:$0xff]
        %v969 = vld [vmem:[%s5 + $0x388] sm:$0xff]
        %v970 = vld [vmem:[%s5 + $0x390] sm:$0xff]
        %v971 = vld [vmem:[%s5 + $0x398] sm:$0xff]
        %v972 = vld [vmem:[%s5 + $0x3a0] sm:$0xff]
        %v973 = vld [vmem:[%s5 + $0x3a8] sm:$0xff]
        %v974 = vld [vmem:[%s5 + $0x3b0] sm:$0xff]
        %v975 = vld [vmem:[%s5 + $0x3b8] sm:$0xff]
        %v976 = vld [vmem:[%s5 + $0x3c0] sm:$0xff]
        %v977 = vld [vmem:[%s5 + $0x3c8] sm:$0xff]
        %v978 = vld [vmem:[%s5 + $0x3d0] sm:$0xff]
        %v979 = vld [vmem:[%s5 + $0x3d8] sm:$0xff]
        %v980 = vld [vmem:[%s5 + $0x3e0] sm:$0xff]
        %v981 = vld [vmem:[%s5 + $0x3e8] sm:$0xff]
        %v982 = vld [vmem:[%s5 + $0x3f0] sm:$0xff]
        %v983 = vld [vmem:[%s5 + $0x3f8] sm:$0xff]
        %v984 = vld [vmem:[%s5 + $0x400] sm:$0xff]
        %v985 = vld [vmem:[%s5 + $0x408] sm:$0xff]
        %v986 = vld [vmem:[%s5 + $0x410] sm:$0xff]
        %v987 = vld [vmem:[%s5 + $0x418] sm:$0xff]
        %v988 = vld [vmem:[%s5 + $0x420] sm:$0xff]
        %v989 = vld [vmem:[%s5 + $0x428] sm:$0xff]
        %v990 = vld [vmem:[%s5 + $0x430] sm:$0xff]
        %v991 = vld [vmem:[%s5 + $0x438] sm:$0xff]
        %v992 = vld [vmem:[%s5 + $0x440] sm:$0xff]
        %v993 = vld [vmem:[%s5 + $0x448] sm:$0xff]
        %v994 = vld [vmem:[%s5 + $0x450] sm:$0xff]
        %v995 = vld [vmem:[%s5 + $0x458] sm:$0xff]
        %v996 = vld [vmem:[%s5 + $0x460] sm:$0xff]
        %v997 = vld [vmem:[%s5 + $0x468] sm:$0xff]
        %v998 = vld [vmem:[%s5 + $0x470] sm:$0xff]
        %v999 = vld [vmem:[%s5 + $0x478] sm:$0xff]
        %v1000 = vld [vmem:[%s5 + $0x480] sm:$0xff]
        %v1001 = vld [vmem:[%s5 + $0x488] sm:$0xff]
        %v1002 = vld [vmem:[%s5 + $0x490] sm:$0xff]
        %v1003 = vld [vmem:[%s5 + $0x498] sm:$0xff]
        %v1004 = vld [vmem:[%s5 + $0x4a0] sm:$0xff]
        %v1005 = vld [vmem:[%s5 + $0x4a8] sm:$0xff]
        %v1006 = vld [vmem:[%s5 + $0x4b0] sm:$0xff]
        %v1007 = vld [vmem:[%s5 + $0x4b8] sm:$0xff]
        %v1008 = vld [vmem:[%s5 + $0x4c0] sm:$0xff]
        %v1009 = vld [vmem:[%s5 + $0x4c8] sm:$0xff]
        %v1010 = vld [vmem:[%s5 + $0x4d0] sm:$0xff]
        %v1011 = vld [vmem:[%s5 + $0x4d8] sm:$0xff]
        %v1012 = vld [vmem:[%s5 + $0x4e0] sm:$0xff]
        %v1013 = vld [vmem:[%s5 + $0x4e8] sm:$0xff]
        %v1014 = vld [vmem:[%s5 + $0x4f0] sm:$0xff]
        %v1015 = vld [vmem:[%s5 + $0x4f8] sm:$0xff]
        %v1176 = vunpack.c.l.b16 %v856
        %v1177 = vunpack.c.h.b16 %v856
        %v1178 = vunpack.c.l.b16 %v857
        %v1179 = vunpack.c.h.b16 %v857
        %v1180 = vunpack.c.l.b16 %v858
        %v1181 = vunpack.c.h.b16 %v858
        %v1182 = vunpack.c.l.b16 %v859
        %v1183 = vunpack.c.h.b16 %v859
        %v1184 = vunpack.c.l.b16 %v860
        %v1185 = vunpack.c.h.b16 %v860
        %v1186 = vunpack.c.l.b16 %v861
        %v1187 = vunpack.c.h.b16 %v861
        %v1188 = vunpack.c.l.b16 %v862
        %v1189 = vunpack.c.h.b16 %v862
        %v1190 = vunpack.c.l.b16 %v863
        %v1191 = vunpack.c.h.b16 %v863
        %v1192 = vunpack.c.l.b16 %v864
        %v1193 = vunpack.c.h.b16 %v864
        %v1194 = vunpack.c.l.b16 %v865
        %v1195 = vunpack.c.h.b16 %v865
        %v1196 = vunpack.c.l.b16 %v866
        %v1197 = vunpack.c.h.b16 %v866
        %v1198 = vunpack.c.l.b16 %v867
        %v1199 = vunpack.c.h.b16 %v867
        %v1200 = vunpack.c.l.b16 %v868
        %v1201 = vunpack.c.h.b16 %v868
        %v1202 = vunpack.c.l.b16 %v869
        %v1203 = vunpack.c.h.b16 %v869
        %v1204 = vunpack.c.l.b16 %v870
        %v1205 = vunpack.c.h.b16 %v870
        %v1206 = vunpack.c.l.b16 %v871
        %v1207 = vunpack.c.h.b16 %v871
        %v1208 = vunpack.c.l.b16 %v872
        %v1209 = vunpack.c.h.b16 %v872
        %v1210 = vunpack.c.l.b16 %v873
        %v1211 = vunpack.c.h.b16 %v873
        %v1212 = vunpack.c.l.b16 %v874
        %v1213 = vunpack.c.h.b16 %v874
        %v1214 = vunpack.c.l.b16 %v875
        %v1215 = vunpack.c.h.b16 %v875
        %v1216 = vunpack.c.l.b16 %v876
        %v1217 = vunpack.c.h.b16 %v876
        %v1218 = vunpack.c.l.b16 %v877
        %v1219 = vunpack.c.h.b16 %v877
        %v1220 = vunpack.c.l.b16 %v878
        %v1221 = vunpack.c.h.b16 %v878
        %v1222 = vunpack.c.l.b16 %v879
        %v1223 = vunpack.c.h.b16 %v879
        %v1224 = vunpack.c.l.b16 %v880
        %v1225 = vunpack.c.h.b16 %v880
        %v1226 = vunpack.c.l.b16 %v881
        %v1227 = vunpack.c.h.b16 %v881
        %v1228 = vunpack.c.l.b16 %v882
        %v1229 = vunpack.c.h.b16 %v882
        %v1230 = vunpack.c.l.b16 %v883
        %v1231 = vunpack.c.h.b16 %v883
        %v1232 = vunpack.c.l.b16 %v884
        %v1233 = vunpack.c.h.b16 %v884
        %v1234 = vunpack.c.l.b16 %v885
        %v1235 = vunpack.c.h.b16 %v885
        %v1236 = vunpack.c.l.b16 %v886
        %v1237 = vunpack.c.h.b16 %v886
        %v1238 = vunpack.c.l.b16 %v887
        %v1239 = vunpack.c.h.b16 %v887
        %v1240 = vunpack.c.l.b16 %v888
        %v1241 = vunpack.c.h.b16 %v888
        %v1242 = vunpack.c.l.b16 %v889
        %v1243 = vunpack.c.h.b16 %v889
        %v1244 = vunpack.c.l.b16 %v890
        %v1245 = vunpack.c.h.b16 %v890
        %v1246 = vunpack.c.l.b16 %v891
        %v1247 = vunpack.c.h.b16 %v891
        %v1248 = vunpack.c.l.b16 %v892
        %v1249 = vunpack.c.h.b16 %v892
        %v1250 = vunpack.c.l.b16 %v893
        %v1251 = vunpack.c.h.b16 %v893
        %v1252 = vunpack.c.l.b16 %v894
        %v1253 = vunpack.c.h.b16 %v894
        %v1254 = vunpack.c.l.b16 %v895
        %v1255 = vunpack.c.h.b16 %v895
        %v1256 = vunpack.c.l.b16 %v896
        %v1257 = vunpack.c.h.b16 %v896
        %v1258 = vunpack.c.l.b16 %v897
        %v1259 = vunpack.c.h.b16 %v897
        %v1260 = vunpack.c.l.b16 %v898
        %v1261 = vunpack.c.h.b16 %v898
        %v1262 = vunpack.c.l.b16 %v899
        %v1263 = vunpack.c.h.b16 %v899
        %v1264 = vunpack.c.l.b16 %v900
        %v1265 = vunpack.c.h.b16 %v900
        %v1266 = vunpack.c.l.b16 %v901
        %v1267 = vunpack.c.h.b16 %v901
        %v1268 = vunpack.c.l.b16 %v902
        %v1269 = vunpack.c.h.b16 %v902
        %v1270 = vunpack.c.l.b16 %v903
        %v1271 = vunpack.c.h.b16 %v903
        %v1272 = vunpack.c.l.b16 %v904
        %v1273 = vunpack.c.h.b16 %v904
        %v1274 = vunpack.c.l.b16 %v905
        %v1275 = vunpack.c.h.b16 %v905
        %v1276 = vunpack.c.l.b16 %v906
        %v1277 = vunpack.c.h.b16 %v906
        %v1278 = vunpack.c.l.b16 %v907
        %v1279 = vunpack.c.h.b16 %v907
        %v1280 = vunpack.c.l.b16 %v908
        %v1281 = vunpack.c.h.b16 %v908
        %v1282 = vunpack.c.l.b16 %v909
        %v1283 = vunpack.c.h.b16 %v909
        %v1284 = vunpack.c.l.b16 %v910
        %v1285 = vunpack.c.h.b16 %v910
        %v1286 = vunpack.c.l.b16 %v911
        %v1287 = vunpack.c.h.b16 %v911
        %v1288 = vunpack.c.l.b16 %v912
        %v1289 = vunpack.c.h.b16 %v912
        %v1290 = vunpack.c.l.b16 %v913
        %v1291 = vunpack.c.h.b16 %v913
        %v1292 = vunpack.c.l.b16 %v914
        %v1293 = vunpack.c.h.b16 %v914
        %v1294 = vunpack.c.l.b16 %v915
        %v1295 = vunpack.c.h.b16 %v915
        %v1296 = vunpack.c.l.b16 %v916
        %v1297 = vunpack.c.h.b16 %v916
        %v1298 = vunpack.c.l.b16 %v917
        %v1299 = vunpack.c.h.b16 %v917
        %v1300 = vunpack.c.l.b16 %v918
        %v1301 = vunpack.c.h.b16 %v918
        %v1302 = vunpack.c.l.b16 %v919
        %v1303 = vunpack.c.h.b16 %v919
        %v1304 = vunpack.c.l.b16 %v920
        %v1305 = vunpack.c.h.b16 %v920
        %v1306 = vunpack.c.l.b16 %v921
        %v1307 = vunpack.c.h.b16 %v921
        %v1308 = vunpack.c.l.b16 %v922
        %v1309 = vunpack.c.h.b16 %v922
        %v1310 = vunpack.c.l.b16 %v923
        %v1311 = vunpack.c.h.b16 %v923
        %v1312 = vunpack.c.l.b16 %v924
        %v1313 = vunpack.c.h.b16 %v924
        %v1314 = vunpack.c.l.b16 %v925
        %v1315 = vunpack.c.h.b16 %v925
        %v1316 = vunpack.c.l.b16 %v926
        %v1317 = vunpack.c.h.b16 %v926
        %v1318 = vunpack.c.l.b16 %v927
        %v1319 = vunpack.c.h.b16 %v927
        %v1320 = vunpack.c.l.b16 %v928
        %v1321 = vunpack.c.h.b16 %v928
        %v1322 = vunpack.c.l.b16 %v929
        %v1323 = vunpack.c.h.b16 %v929
        %v1324 = vunpack.c.l.b16 %v930
        %v1325 = vunpack.c.h.b16 %v930
        %v1326 = vunpack.c.l.b16 %v931
        %v1327 = vunpack.c.h.b16 %v931
        %v1328 = vunpack.c.l.b16 %v932
        %v1329 = vunpack.c.h.b16 %v932
        %v1330 = vunpack.c.l.b16 %v933
        %v1331 = vunpack.c.h.b16 %v933
        %v1332 = vunpack.c.l.b16 %v934
        %v1333 = vunpack.c.h.b16 %v934
        %v1334 = vunpack.c.l.b16 %v935
        %v1335 = vunpack.c.h.b16 %v935
        %v1336 = vunpack.c.l.b16 %v936
        %v1337 = vunpack.c.h.b16 %v936
        %v1338 = vunpack.c.l.b16 %v937
        %v1339 = vunpack.c.h.b16 %v937
        %v1340 = vunpack.c.l.b16 %v938
        %v1341 = vunpack.c.h.b16 %v938
        %v1342 = vunpack.c.l.b16 %v939
        %v1343 = vunpack.c.h.b16 %v939
        %v1344 = vunpack.c.l.b16 %v940
        %v1345 = vunpack.c.h.b16 %v940
        %v1346 = vunpack.c.l.b16 %v941
        %v1347 = vunpack.c.h.b16 %v941
        %v1348 = vunpack.c.l.b16 %v942
        %v1349 = vunpack.c.h.b16 %v942
        %v1350 = vunpack.c.l.b16 %v943
        %v1351 = vunpack.c.h.b16 %v943
        %v1352 = vunpack.c.l.b16 %v944
        %v1353 = vunpack.c.h.b16 %v944
        %v1354 = vunpack.c.l.b16 %v945
        %v1355 = vunpack.c.h.b16 %v945
        %v1356 = vunpack.c.l.b16 %v946
        %v1357 = vunpack.c.h.b16 %v946
        %v1358 = vunpack.c.l.b16 %v947
        %v1359 = vunpack.c.h.b16 %v947
        %v1360 = vunpack.c.l.b16 %v948
        %v1361 = vunpack.c.h.b16 %v948
        %v1362 = vunpack.c.l.b16 %v949
        %v1363 = vunpack.c.h.b16 %v949
        %v1364 = vunpack.c.l.b16 %v950
        %v1365 = vunpack.c.h.b16 %v950
        %v1366 = vunpack.c.l.b16 %v951
        %v1367 = vunpack.c.h.b16 %v951
        %v1368 = vunpack.c.l.b16 %v952
        %v1369 = vunpack.c.h.b16 %v952
        %v1370 = vunpack.c.l.b16 %v953
        %v1371 = vunpack.c.h.b16 %v953
        %v1372 = vunpack.c.l.b16 %v954
        %v1373 = vunpack.c.h.b16 %v954
        %v1374 = vunpack.c.l.b16 %v955
        %v1375 = vunpack.c.h.b16 %v955
        %v1376 = vunpack.c.l.b16 %v956
        %v1377 = vunpack.c.h.b16 %v956
        %v1378 = vunpack.c.l.b16 %v957
        %v1379 = vunpack.c.h.b16 %v957
        %v1380 = vunpack.c.l.b16 %v958
        %v1381 = vunpack.c.h.b16 %v958
        %v1382 = vunpack.c.l.b16 %v959
        %v1383 = vunpack.c.h.b16 %v959
        %v1384 = vunpack.c.l.b16 %v960
        %v1385 = vunpack.c.h.b16 %v960
        %v1386 = vunpack.c.l.b16 %v961
        %v1387 = vunpack.c.h.b16 %v961
        %v1388 = vunpack.c.l.b16 %v962
        %v1389 = vunpack.c.h.b16 %v962
        %v1390 = vunpack.c.l.b16 %v963
        %v1391 = vunpack.c.h.b16 %v963
        %v1392 = vunpack.c.l.b16 %v964
        %v1393 = vunpack.c.h.b16 %v964
        %v1394 = vunpack.c.l.b16 %v965
        %v1395 = vunpack.c.h.b16 %v965
        %v1396 = vunpack.c.l.b16 %v966
        %v1397 = vunpack.c.h.b16 %v966
        %v1398 = vunpack.c.l.b16 %v967
        %v1399 = vunpack.c.h.b16 %v967
        %v1400 = vunpack.c.l.b16 %v968
        %v1401 = vunpack.c.h.b16 %v968
        %v1402 = vunpack.c.l.b16 %v969
        %v1403 = vunpack.c.h.b16 %v969
        %v1404 = vunpack.c.l.b16 %v970
        %v1405 = vunpack.c.h.b16 %v970
        %v1406 = vunpack.c.l.b16 %v971
        %v1407 = vunpack.c.h.b16 %v971
        %v1408 = vunpack.c.l.b16 %v972
        %v1409 = vunpack.c.h.b16 %v972
        %v1410 = vunpack.c.l.b16 %v973
        %v1411 = vunpack.c.h.b16 %v973
        %v1412 = vunpack.c.l.b16 %v974
        %v1413 = vunpack.c.h.b16 %v974
        %v1414 = vunpack.c.l.b16 %v975
        %v1415 = vunpack.c.h.b16 %v975
        %v1416 = vunpack.c.l.b16 %v976
        %v1417 = vunpack.c.h.b16 %v976
        %v1418 = vunpack.c.l.b16 %v977
        %v1419 = vunpack.c.h.b16 %v977
        %v1420 = vunpack.c.l.b16 %v978
        %v1421 = vunpack.c.h.b16 %v978
        %v1422 = vunpack.c.l.b16 %v979
        %v1423 = vunpack.c.h.b16 %v979
        %v1424 = vunpack.c.l.b16 %v980
        %v1425 = vunpack.c.h.b16 %v980
        %v1426 = vunpack.c.l.b16 %v981
        %v1427 = vunpack.c.h.b16 %v981
        %v1428 = vunpack.c.l.b16 %v982
        %v1429 = vunpack.c.h.b16 %v982
        %v1430 = vunpack.c.l.b16 %v983
        %v1431 = vunpack.c.h.b16 %v983
        %v1432 = vunpack.c.l.b16 %v984
        %v1433 = vunpack.c.h.b16 %v984
        %v1434 = vunpack.c.l.b16 %v985
        %v1435 = vunpack.c.h.b16 %v985
        %v1436 = vunpack.c.l.b16 %v986
        %v1437 = vunpack.c.h.b16 %v986
        %v1438 = vunpack.c.l.b16 %v987
        %v1439 = vunpack.c.h.b16 %v987
        %v1440 = vunpack.c.l.b16 %v988
        %v1441 = vunpack.c.h.b16 %v988
        %v1442 = vunpack.c.l.b16 %v989
        %v1443 = vunpack.c.h.b16 %v989
        %v1444 = vunpack.c.l.b16 %v990
        %v1445 = vunpack.c.h.b16 %v990
        %v1446 = vunpack.c.l.b16 %v991
        %v1447 = vunpack.c.h.b16 %v991
        %v1448 = vunpack.c.l.b16 %v992
        %v1449 = vunpack.c.h.b16 %v992
        %v1450 = vunpack.c.l.b16 %v993
        %v1451 = vunpack.c.h.b16 %v993
        %v1452 = vunpack.c.l.b16 %v994
        %v1453 = vunpack.c.h.b16 %v994
        %v1454 = vunpack.c.l.b16 %v995
        %v1455 = vunpack.c.h.b16 %v995
        %v1456 = vunpack.c.l.b16 %v996
        %v1457 = vunpack.c.h.b16 %v996
        %v1458 = vunpack.c.l.b16 %v997
        %v1459 = vunpack.c.h.b16 %v997
        %v1460 = vunpack.c.l.b16 %v998
        %v1461 = vunpack.c.h.b16 %v998
        %v1462 = vunpack.c.l.b16 %v999
        %v1463 = vunpack.c.h.b16 %v999
        %v1464 = vunpack.c.l.b16 %v1000
        %v1465 = vunpack.c.h.b16 %v1000
        %v1466 = vunpack.c.l.b16 %v1001
        %v1467 = vunpack.c.h.b16 %v1001
        %v1468 = vunpack.c.l.b16 %v1002
        %v1469 = vunpack.c.h.b16 %v1002
        %v1470 = vunpack.c.l.b16 %v1003
        %v1471 = vunpack.c.h.b16 %v1003
        %v1472 = vunpack.c.l.b16 %v1004
        %v1473 = vunpack.c.h.b16 %v1004
        %v1474 = vunpack.c.l.b16 %v1005
        %v1475 = vunpack.c.h.b16 %v1005
        %v1476 = vunpack.c.l.b16 %v1006
        %v1477 = vunpack.c.h.b16 %v1006
        %v1478 = vunpack.c.l.b16 %v1007
        %v1479 = vunpack.c.h.b16 %v1007
        %v1480 = vunpack.c.l.b16 %v1008
        %v1481 = vunpack.c.h.b16 %v1008
        %v1482 = vunpack.c.l.b16 %v1009
        %v1483 = vunpack.c.h.b16 %v1009
        %v1484 = vunpack.c.l.b16 %v1010
        %v1485 = vunpack.c.h.b16 %v1010
        %v1486 = vunpack.c.l.b16 %v1011
        %v1487 = vunpack.c.h.b16 %v1011
        %v1488 = vunpack.c.l.b16 %v1012
        %v1489 = vunpack.c.h.b16 %v1012
        %v1490 = vunpack.c.l.b16 %v1013
        %v1491 = vunpack.c.h.b16 %v1013
        %v1492 = vunpack.c.l.b16 %v1014
        %v1493 = vunpack.c.h.b16 %v1014
        %v1494 = vunpack.c.l.b16 %v1015
        %v1495 = vunpack.c.h.b16 %v1015
        %v1496 = vpack.c.b16 %v1180, %v1176
        %v1497 = vpack.c.b16 %v1181, %v1177
        %v1498 = vpack.c.b16 %v1182, %v1178
        %v1499 = vpack.c.b16 %v1183, %v1179
        %v1500 = vpack.c.b16 %v1188, %v1184
        %v1501 = vpack.c.b16 %v1189, %v1185
        %v1502 = vpack.c.b16 %v1190, %v1186
        %v1503 = vpack.c.b16 %v1191, %v1187
        %v1504 = vpack.c.b16 %v1196, %v1192
        %v1505 = vpack.c.b16 %v1197, %v1193
        %v1506 = vpack.c.b16 %v1198, %v1194
        %v1507 = vpack.c.b16 %v1199, %v1195
        %v1508 = vpack.c.b16 %v1204, %v1200
        %v1509 = vpack.c.b16 %v1205, %v1201
        %v1510 = vpack.c.b16 %v1206, %v1202
        %v1511 = vpack.c.b16 %v1207, %v1203
        %v1512 = vpack.c.b16 %v1212, %v1208
        %v1513 = vpack.c.b16 %v1213, %v1209
        %v1514 = vpack.c.b16 %v1214, %v1210
        %v1515 = vpack.c.b16 %v1215, %v1211
        %v1516 = vpack.c.b16 %v1220, %v1216
        %v1517 = vpack.c.b16 %v1221, %v1217
        %v1518 = vpack.c.b16 %v1222, %v1218
        %v1519 = vpack.c.b16 %v1223, %v1219
        %v1520 = vpack.c.b16 %v1228, %v1224
        %v1521 = vpack.c.b16 %v1229, %v1225
        %v1522 = vpack.c.b16 %v1230, %v1226
        %v1523 = vpack.c.b16 %v1231, %v1227
        %v1524 = vpack.c.b16 %v1236, %v1232
        %v1525 = vpack.c.b16 %v1237, %v1233
        %v1526 = vpack.c.b16 %v1238, %v1234
        %v1527 = vpack.c.b16 %v1239, %v1235
        %v1528 = vpack.c.b16 %v1244, %v1240
        %v1529 = vpack.c.b16 %v1245, %v1241
        %v1530 = vpack.c.b16 %v1246, %v1242
        %v1531 = vpack.c.b16 %v1247, %v1243
        %v1532 = vpack.c.b16 %v1252, %v1248
        %v1533 = vpack.c.b16 %v1253, %v1249
        %v1534 = vpack.c.b16 %v1254, %v1250
        %v1535 = vpack.c.b16 %v1255, %v1251
        %v1536 = vpack.c.b16 %v1260, %v1256
        %v1537 = vpack.c.b16 %v1261, %v1257
        %v1538 = vpack.c.b16 %v1262, %v1258
        %v1539 = vpack.c.b16 %v1263, %v1259
        %v1540 = vpack.c.b16 %v1268, %v1264
        %v1541 = vpack.c.b16 %v1269, %v1265
        %v1542 = vpack.c.b16 %v1270, %v1266
        %v1543 = vpack.c.b16 %v1271, %v1267
        %v1544 = vpack.c.b16 %v1276, %v1272
        %v1545 = vpack.c.b16 %v1277, %v1273
        %v1546 = vpack.c.b16 %v1278, %v1274
        %v1547 = vpack.c.b16 %v1279, %v1275
        %v1548 = vpack.c.b16 %v1284, %v1280
        %v1549 = vpack.c.b16 %v1285, %v1281
        %v1550 = vpack.c.b16 %v1286, %v1282
        %v1551 = vpack.c.b16 %v1287, %v1283
        %v1552 = vpack.c.b16 %v1292, %v1288
        %v1553 = vpack.c.b16 %v1293, %v1289
        %v1554 = vpack.c.b16 %v1294, %v1290
        %v1555 = vpack.c.b16 %v1295, %v1291
        %v1556 = vpack.c.b16 %v1300, %v1296
        %v1557 = vpack.c.b16 %v1301, %v1297
        %v1558 = vpack.c.b16 %v1302, %v1298
        %v1559 = vpack.c.b16 %v1303, %v1299
        %v1560 = vpack.c.b16 %v1308, %v1304
        %v1561 = vpack.c.b16 %v1309, %v1305
        %v1562 = vpack.c.b16 %v1310, %v1306
        %v1563 = vpack.c.b16 %v1311, %v1307
        %v1564 = vpack.c.b16 %v1316, %v1312
        %v1565 = vpack.c.b16 %v1317, %v1313
        %v1566 = vpack.c.b16 %v1318, %v1314
        %v1567 = vpack.c.b16 %v1319, %v1315
        %v1568 = vpack.c.b16 %v1324, %v1320
        %v1569 = vpack.c.b16 %v1325, %v1321
        %v1570 = vpack.c.b16 %v1326, %v1322
        %v1571 = vpack.c.b16 %v1327, %v1323
        %v1572 = vpack.c.b16 %v1332, %v1328
        %v1573 = vpack.c.b16 %v1333, %v1329
        %v1574 = vpack.c.b16 %v1334, %v1330
        %v1575 = vpack.c.b16 %v1335, %v1331
        %v1576 = vpack.c.b16 %v1340, %v1336
        %v1577 = vpack.c.b16 %v1341, %v1337
        %v1578 = vpack.c.b16 %v1342, %v1338
        %v1579 = vpack.c.b16 %v1343, %v1339
        %v1580 = vpack.c.b16 %v1348, %v1344
        %v1581 = vpack.c.b16 %v1349, %v1345
        %v1582 = vpack.c.b16 %v1350, %v1346
        %v1583 = vpack.c.b16 %v1351, %v1347
        %v1584 = vpack.c.b16 %v1356, %v1352
        %v1585 = vpack.c.b16 %v1357, %v1353
        %v1586 = vpack.c.b16 %v1358, %v1354
        %v1587 = vpack.c.b16 %v1359, %v1355
        %v1588 = vpack.c.b16 %v1364, %v1360
        %v1589 = vpack.c.b16 %v1365, %v1361
        %v1590 = vpack.c.b16 %v1366, %v1362
        %v1591 = vpack.c.b16 %v1367, %v1363
        %v1592 = vpack.c.b16 %v1372, %v1368
        %v1593 = vpack.c.b16 %v1373, %v1369
        %v1594 = vpack.c.b16 %v1374, %v1370
        %v1595 = vpack.c.b16 %v1375, %v1371
        %v1596 = vpack.c.b16 %v1380, %v1376
        %v1597 = vpack.c.b16 %v1381, %v1377
        %v1598 = vpack.c.b16 %v1382, %v1378
        %v1599 = vpack.c.b16 %v1383, %v1379
        %v1600 = vpack.c.b16 %v1388, %v1384
        %v1601 = vpack.c.b16 %v1389, %v1385
        %v1602 = vpack.c.b16 %v1390, %v1386
        %v1603 = vpack.c.b16 %v1391, %v1387
        %v1604 = vpack.c.b16 %v1396, %v1392
        %v1605 = vpack.c.b16 %v1397, %v1393
        %v1606 = vpack.c.b16 %v1398, %v1394
        %v1607 = vpack.c.b16 %v1399, %v1395
        %v1608 = vpack.c.b16 %v1404, %v1400
        %v1609 = vpack.c.b16 %v1405, %v1401
        %v1610 = vpack.c.b16 %v1406, %v1402
        %v1611 = vpack.c.b16 %v1407, %v1403
        %v1612 = vpack.c.b16 %v1412, %v1408
        %v1613 = vpack.c.b16 %v1413, %v1409
        %v1614 = vpack.c.b16 %v1414, %v1410
        %v1615 = vpack.c.b16 %v1415, %v1411
        %v1616 = vpack.c.b16 %v1420, %v1416
        %v1617 = vpack.c.b16 %v1421, %v1417
        %v1618 = vpack.c.b16 %v1422, %v1418
        %v1619 = vpack.c.b16 %v1423, %v1419
        %v1620 = vpack.c.b16 %v1428, %v1424
        %v1621 = vpack.c.b16 %v1429, %v1425
        %v1622 = vpack.c.b16 %v1430, %v1426
        %v1623 = vpack.c.b16 %v1431, %v1427
        %v1624 = vpack.c.b16 %v1436, %v1432
        %v1625 = vpack.c.b16 %v1437, %v1433
        %v1626 = vpack.c.b16 %v1438, %v1434
        %v1627 = vpack.c.b16 %v1439, %v1435
        %v1628 = vpack.c.b16 %v1444, %v1440
        %v1629 = vpack.c.b16 %v1445, %v1441
        %v1630 = vpack.c.b16 %v1446, %v1442
        %v1631 = vpack.c.b16 %v1447, %v1443
        %v1632 = vpack.c.b16 %v1452, %v1448
        %v1633 = vpack.c.b16 %v1453, %v1449
        %v1634 = vpack.c.b16 %v1454, %v1450
        %v1635 = vpack.c.b16 %v1455, %v1451
        %v1636 = vpack.c.b16 %v1460, %v1456
        %v1637 = vpack.c.b16 %v1461, %v1457
        %v1638 = vpack.c.b16 %v1462, %v1458
        %v1639 = vpack.c.b16 %v1463, %v1459
        %v1640 = vpack.c.b16 %v1468, %v1464
        %v1641 = vpack.c.b16 %v1469, %v1465
        %v1642 = vpack.c.b16 %v1470, %v1466
        %v1643 = vpack.c.b16 %v1471, %v1467
        %v1644 = vpack.c.b16 %v1476, %v1472
        %v1645 = vpack.c.b16 %v1477, %v1473
        %v1646 = vpack.c.b16 %v1478, %v1474
        %v1647 = vpack.c.b16 %v1479, %v1475
        %v1648 = vpack.c.b16 %v1484, %v1480
        %v1649 = vpack.c.b16 %v1485, %v1481
        %v1650 = vpack.c.b16 %v1486, %v1482
        %v1651 = vpack.c.b16 %v1487, %v1483
        %v1652 = vpack.c.b16 %v1492, %v1488
        %v1653 = vpack.c.b16 %v1493, %v1489
        %v1654 = vpack.c.b16 %v1494, %v1490
        %v1655 = vpack.c.b16 %v1495, %v1491
        %1816 = vmatprep.subr.bf16.mxu0 %v1497
        %1817 = vmatpush1.bf16.msra.mxu0 %v1496
        %1818 = vmatprep.subr.bf16.mxu0 %v1501
        %1819 = vmatpush1.bf16.msra.mxu0 %v1500
        %1820 = vmatprep.subr.bf16.mxu0 %v1505
        %1821 = vmatpush1.bf16.msra.mxu0 %v1504
        %1822 = vmatprep.subr.bf16.mxu0 %v1509
        %1823 = vmatpush1.bf16.msra.mxu0 %v1508
        %1824 = vmatprep.subr.bf16.mxu0 %v1513
        %1825 = vmatpush1.bf16.msra.mxu0 %v1512
        %1826 = vmatprep.subr.bf16.mxu0 %v1517
        %1827 = vmatpush1.bf16.msra.mxu0 %v1516
        %1828 = vmatprep.subr.bf16.mxu0 %v1521
        %1829 = vmatpush1.bf16.msra.mxu0 %v1520
        %1830 = vmatprep.subr.bf16.mxu0 %v1525
        %1831 = vmatpush1.bf16.msra.mxu0 %v1524
        %1832 = vmatprep.subr.bf16.mxu0 %v1529
        %1833 = vmatpush1.bf16.msra.mxu0 %v1528
        %1834 = vmatprep.subr.bf16.mxu0 %v1533
        %1835 = vmatpush1.bf16.msra.mxu0 %v1532
        %1836 = vmatprep.subr.bf16.mxu0 %v1537
        %1837 = vmatpush1.bf16.msra.mxu0 %v1536
        %1838 = vmatprep.subr.bf16.mxu0 %v1541
        %1839 = vmatpush1.bf16.msra.mxu0 %v1540
        %1840 = vmatprep.subr.bf16.mxu0 %v1545
        %1841 = vmatpush1.bf16.msra.mxu0 %v1544
        %1842 = vmatprep.subr.bf16.mxu0 %v1549
        %1843 = vmatpush1.bf16.msra.mxu0 %v1548
        %1844 = vmatprep.subr.bf16.mxu0 %v1553
        %1845 = vmatpush1.bf16.msra.mxu0 %v1552
        %1846 = vmatprep.subr.bf16.mxu0 %v1557
        %1847 = vmatpush1.bf16.msra.mxu0 %v1556
        %1848 = vmatprep.mubr.bf16.mxu0 %v852
        %1849 = vmatmul.mubr.bf16.gmra.mrb[0].mxu0 %v851
        %v1850 = vpop.f32.mrb[0].mxu0
        %v1851 = vadd.f32 0.0, %v1850
        %v1852 = vpop.f32.mrb[0].mxu0
        %v1853 = vadd.f32 0.0, %v1852
        %v1854 = vpop.f32.mrb[0].mxu0
        %v1855 = vadd.f32 0.0, %v1854
        %v1856 = vpop.f32.mrb[0].mxu0
        %v1857 = vadd.f32 0.0, %v1856
        %1858 = vdwg.mxu0
        %1859 = vmatprep.subr.bf16.mxu0 %v1561
        %1860 = vmatpush1.bf16.msra.mxu0 %v1560
        %1861 = vmatprep.subr.bf16.mxu0 %v1565
        %1862 = vmatpush1.bf16.msra.mxu0 %v1564
        %1863 = vmatprep.subr.bf16.mxu0 %v1569
        %1864 = vmatpush1.bf16.msra.mxu0 %v1568
        %1865 = vmatprep.subr.bf16.mxu0 %v1573
        %1866 = vmatpush1.bf16.msra.mxu0 %v1572
        %1867 = vmatprep.subr.bf16.mxu0 %v1577
        %1868 = vmatpush1.bf16.msra.mxu0 %v1576
        %1869 = vmatprep.subr.bf16.mxu0 %v1581
        %1870 = vmatpush1.bf16.msra.mxu0 %v1580
        %1871 = vmatprep.subr.bf16.mxu0 %v1585
        %1872 = vmatpush1.bf16.msra.mxu0 %v1584
        %1873 = vmatprep.subr.bf16.mxu0 %v1589
        %1874 = vmatpush1.bf16.msra.mxu0 %v1588
        %1875 = vmatprep.subr.bf16.mxu0 %v1593
        %1876 = vmatpush1.bf16.msra.mxu0 %v1592
        %1877 = vmatprep.subr.bf16.mxu0 %v1597
        %1878 = vmatpush1.bf16.msra.mxu0 %v1596
        %1879 = vmatprep.subr.bf16.mxu0 %v1601
        %1880 = vmatpush1.bf16.msra.mxu0 %v1600
        %1881 = vmatprep.subr.bf16.mxu0 %v1605
        %1882 = vmatpush1.bf16.msra.mxu0 %v1604
        %1883 = vmatprep.subr.bf16.mxu0 %v1609
        %1884 = vmatpush1.bf16.msra.mxu0 %v1608
        %1885 = vmatprep.subr.bf16.mxu0 %v1613
        %1886 = vmatpush1.bf16.msra.mxu0 %v1612
        %1887 = vmatprep.subr.bf16.mxu0 %v1617
        %1888 = vmatpush1.bf16.msra.mxu0 %v1616
        %1889 = vmatprep.subr.bf16.mxu0 %v1621
        %1890 = vmatpush1.bf16.msra.mxu0 %v1620
        %1891 = vmatprep.mubr.bf16.mxu0 %v854
        %1892 = vmatmul.mubr.bf16.gmra.mrb[0].mxu0 %v853
        %v1893 = vpop.f32.mrb[0].mxu0
        %v1894 = vadd.f32 %v1851, %v1893
        %v1895 = vpop.f32.mrb[0].mxu0
        %v1896 = vadd.f32 %v1853, %v1895
        %v1897 = vpop.f32.mrb[0].mxu0
        %v1898 = vadd.f32 %v1855, %v1897
        %v1899 = vpop.f32.mrb[0].mxu0
        %v1900 = vadd.f32 %v1857, %v1899
        %1901 = vdwg.mxu0
        %1902 = vmatprep.subr.bf16.mxu0 %v1625
        %1903 = vmatpush1.bf16.msra.mxu0 %v1624
        %1904 = vmatprep.subr.bf16.mxu0 %v1629
        %1905 = vmatpush1.bf16.msra.mxu0 %v1628
        %1906 = vmatprep.subr.bf16.mxu0 %v1633
        %1907 = vmatpush1.bf16.msra.mxu0 %v1632
        %1908 = vmatprep.subr.bf16.mxu0 %v1637
        %1909 = vmatpush1.bf16.msra.mxu0 %v1636
        %1910 = vmatprep.subr.bf16.mxu0 %v1641
        %1911 = vmatpush1.bf16.msra.mxu0 %v1640
        %1912 = vmatprep.subr.bf16.mxu0 %v1645
        %1913 = vmatpush1.bf16.msra.mxu0 %v1644
        %1914 = vmatprep.subr.bf16.mxu0 %v1649
        %1915 = vmatpush1.bf16.msra.mxu0 %v1648
        %1916 = vmatprep.subr.bf16.mxu0 %v1653
        %1917 = vmatpush1.bf16.msra.mxu0 %v1652
        %1918 = vmatprep.subr.bf16.mxu0 0
        %1919 = vmatpush1.bf16.msra.mxu0 0
        %1920 = vmatprep.subr.bf16.mxu0 0
        %1921 = vmatpush1.bf16.msra.mxu0 0
        %1922 = vmatprep.subr.bf16.mxu0 0
        %1923 = vmatpush1.bf16.msra.mxu0 0
        %1924 = vmatprep.subr.bf16.mxu0 0
        %1925 = vmatpush1.bf16.msra.mxu0 0
        %1926 = vmatprep.subr.bf16.mxu0 0
        %1927 = vmatpush1.bf16.msra.mxu0 0
        %1928 = vmatprep.subr.bf16.mxu0 0
        %1929 = vmatpush1.bf16.msra.mxu0 0
        %1930 = vmatprep.subr.bf16.mxu0 0
        %1931 = vmatpush1.bf16.msra.mxu0 0
        %1932 = vmatprep.subr.bf16.mxu0 0
        %1933 = vmatpush1.bf16.msra.mxu0 0
        %1934 = vmatprep.mubr.bf16.mxu0 0
        %1935 = vmatmul.mubr.bf16.gmra.mrb[0].mxu0 %v855
        %v1936 = vpop.f32.mrb[0].mxu0
        %v1937 = vadd.f32 %v1894, %v1936
        %v1938 = vpop.f32.mrb[0].mxu0
        %v1939 = vadd.f32 %v1896, %v1938
        %v1940 = vpop.f32.mrb[0].mxu0
        %v1941 = vadd.f32 %v1898, %v1940
        %v1942 = vpop.f32.mrb[0].mxu0
        %v1943 = vadd.f32 %v1900, %v1942
        %1944 = vdwg.mxu0
        %1945 = vmatprep.subr.bf16.mxu0 %v1499
        %1946 = vmatpush1.bf16.msra.mxu0 %v1498
        %1947 = vmatprep.subr.bf16.mxu0 %v1503
        %1948 = vmatpush1.bf16.msra.mxu0 %v1502
        %1949 = vmatprep.subr.bf16.mxu0 %v1507
        %1950 = vmatpush1.bf16.msra.mxu0 %v1506
        %1951 = vmatprep.subr.bf16.mxu0 %v1511
        %1952 = vmatpush1.bf16.msra.mxu0 %v1510
        %1953 = vmatprep.subr.bf16.mxu0 %v1515
        %1954 = vmatpush1.bf16.msra.mxu0 %v1514
        %1955 = vmatprep.subr.bf16.mxu0 %v1519
        %1956 = vmatpush1.bf16.msra.mxu0 %v1518
        %1957 = vmatprep.subr.bf16.mxu0 %v1523
        %1958 = vmatpush1.bf16.msra.mxu0 %v1522
        %1959 = vmatprep.subr.bf16.mxu0 %v1527
        %1960 = vmatpush1.bf16.msra.mxu0 %v1526
        %1961 = vmatprep.subr.bf16.mxu0 %v1531
        %1962 = vmatpush1.bf16.msra.mxu0 %v1530
        %1963 = vmatprep.subr.bf16.mxu0 %v1535
        %1964 = vmatpush1.bf16.msra.mxu0 %v1534
        %1965 = vmatprep.subr.bf16.mxu0 %v1539
        %1966 = vmatpush1.bf16.msra.mxu0 %v1538
        %1967 = vmatprep.subr.bf16.mxu0 %v1543
        %1968 = vmatpush1.bf16.msra.mxu0 %v1542
        %1969 = vmatprep.subr.bf16.mxu0 %v1547
        %1970 = vmatpush1.bf16.msra.mxu0 %v1546
        %1971 = vmatprep.subr.bf16.mxu0 %v1551
        %1972 = vmatpush1.bf16.msra.mxu0 %v1550
        %1973 = vmatprep.subr.bf16.mxu0 %v1555
        %1974 = vmatpush1.bf16.msra.mxu0 %v1554
        %1975 = vmatprep.subr.bf16.mxu0 %v1559
        %1976 = vmatpush1.bf16.msra.mxu0 %v1558
        %1977 = vmatprep.mubr.bf16.mxu0 %v852
        %1978 = vmatmul.mubr.bf16.gmra.mrb[0].mxu0 %v851
        %v1979 = vpop.f32.mrb[0].mxu0
        %v1980 = vadd.f32 0.0, %v1979
        %v1981 = vpop.f32.mrb[0].mxu0
        %v1982 = vadd.f32 0.0, %v1981
        %v1983 = vpop.f32.mrb[0].mxu0
        %v1984 = vadd.f32 0.0, %v1983
        %v1985 = vpop.f32.mrb[0].mxu0
        %v1986 = vadd.f32 0.0, %v1985
        %1987 = vdwg.mxu0
        %1988 = vmatprep.subr.bf16.mxu0 %v1563
        %1989 = vmatpush1.bf16.msra.mxu0 %v1562
        %1990 = vmatprep.subr.bf16.mxu0 %v1567
        %1991 = vmatpush1.bf16.msra.mxu0 %v1566
        %1992 = vmatprep.subr.bf16.mxu0 %v1571
        %1993 = vmatpush1.bf16.msra.mxu0 %v1570
        %1994 = vmatprep.subr.bf16.mxu0 %v1575
        %1995 = vmatpush1.bf16.msra.mxu0 %v1574
        %1996 = vmatprep.subr.bf16.mxu0 %v1579
        %1997 = vmatpush1.bf16.msra.mxu0 %v1578
        %1998 = vmatprep.subr.bf16.mxu0 %v1583
        %1999 = vmatpush1.bf16.msra.mxu0 %v1582
        %2000 = vmatprep.subr.bf16.mxu0 %v1587
        %2001 = vmatpush1.bf16.msra.mxu0 %v1586
        %2002 = vmatprep.subr.bf16.mxu0 %v1591
        %2003 = vmatpush1.bf16.msra.mxu0 %v1590
        %2004 = vmatprep.subr.bf16.mxu0 %v1595
        %2005 = vmatpush1.bf16.msra.mxu0 %v1594
        %2006 = vmatprep.subr.bf16.mxu0 %v1599
        %2007 = vmatpush1.bf16.msra.mxu0 %v1598
        %2008 = vmatprep.subr.bf16.mxu0 %v1603
        %2009 = vmatpush1.bf16.msra.mxu0 %v1602
        %2010 = vmatprep.subr.bf16.mxu0 %v1607
        %2011 = vmatpush1.bf16.msra.mxu0 %v1606
        %2012 = vmatprep.subr.bf16.mxu0 %v1611
        %2013 = vmatpush1.bf16.msra.mxu0 %v1610
        %2014 = vmatprep.subr.bf16.mxu0 %v1615
        %2015 = vmatpush1.bf16.msra.mxu0 %v1614
        %2016 = vmatprep.subr.bf16.mxu0 %v1619
        %2017 = vmatpush1.bf16.msra.mxu0 %v1618
        %2018 = vmatprep.subr.bf16.mxu0 %v1623
        %2019 = vmatpush1.bf16.msra.mxu0 %v1622
        %2020 = vmatprep.mubr.bf16.mxu0 %v854
        %2021 = vmatmul.mubr.bf16.gmra.mrb[0].mxu0 %v853
        %v2022 = vpop.f32.mrb[0].mxu0
        %v2023 = vadd.f32 %v1980, %v2022
        %v2024 = vpop.f32.mrb[0].mxu0
        %v2025 = vadd.f32 %v1982, %v2024
        %v2026 = vpop.f32.mrb[0].mxu0
        %v2027 = vadd.f32 %v1984, %v2026
        %v2028 = vpop.f32.mrb[0].mxu0
        %v2029 = vadd.f32 %v1986, %v2028
        %2030 = vdwg.mxu0
        %2031 = vmatprep.subr.bf16.mxu0 %v1627
        %2032 = vmatpush1.bf16.msra.mxu0 %v1626
        %2033 = vmatprep.subr.bf16.mxu0 %v1631
        %2034 = vmatpush1.bf16.msra.mxu0 %v1630
        %2035 = vmatprep.subr.bf16.mxu0 %v1635
        %2036 = vmatpush1.bf16.msra.mxu0 %v1634
        %2037 = vmatprep.subr.bf16.mxu0 %v1639
        %2038 = vmatpush1.bf16.msra.mxu0 %v1638
        %2039 = vmatprep.subr.bf16.mxu0 %v1643
        %2040 = vmatpush1.bf16.msra.mxu0 %v1642
        %2041 = vmatprep.subr.bf16.mxu0 %v1647
        %2042 = vmatpush1.bf16.msra.mxu0 %v1646
        %2043 = vmatprep.subr.bf16.mxu0 %v1651
        %2044 = vmatpush1.bf16.msra.mxu0 %v1650
        %2045 = vmatprep.subr.bf16.mxu0 %v1655
        %2046 = vmatpush1.bf16.msra.mxu0 %v1654
        %2047 = vmatprep.subr.bf16.mxu0 0
        %2048 = vmatpush1.bf16.msra.mxu0 0
        %2049 = vmatprep.subr.bf16.mxu0 0
        %2050 = vmatpush1.bf16.msra.mxu0 0
        %2051 = vmatprep.subr.bf16.mxu0 0
        %2052 = vmatpush1.bf16.msra.mxu0 0
        %2053 = vmatprep.subr.bf16.mxu0 0
        %2054 = vmatpush1.bf16.msra.mxu0 0
        %2055 = vmatprep.subr.bf16.mxu0 0
        %2056 = vmatpush1.bf16.msra.mxu0 0
        %2057 = vmatprep.subr.bf16.mxu0 0
        %2058 = vmatpush1.bf16.msra.mxu0 0
        %2059 = vmatprep.subr.bf16.mxu0 0
        %2060 = vmatpush1.bf16.msra.mxu0 0
        %2061 = vmatprep.subr.bf16.mxu0 0
        %2062 = vmatpush1.bf16.msra.mxu0 0
        %2063 = vmatprep.mubr.bf16.mxu0 0
        %2064 = vmatmul.mubr.bf16.gmra.mrb[0].mxu0 %v855
        %v2065 = vpop.f32.mrb[0].mxu0
        %v2066 = vadd.f32 %v2023, %v2065
        %v2067 = vpop.f32.mrb[0].mxu0
        %v2068 = vadd.f32 %v2025, %v2067
        %v2069 = vpop.f32.mrb[0].mxu0
        %v2070 = vadd.f32 %v2027, %v2069
        %v2071 = vpop.f32.mrb[0].mxu0
        %v2072 = vadd.f32 %v2029, %v2071
        %2073 = vdwg.mxu0
        %v2074 = vmax.f32 %v1937, %v2066
        %v2075 = vmax.f32 %v1939, %v2068
        %v2076 = vmax.f32 %v1941, %v2070
        %v2077 = vmax.f32 %v1943, %v2072
        %v2078 = vld [vmem:[%s6] sm:$0x3]
        %v2080 = vlaneseq
        %v2081 = vshrl.u32 %v2080, 7
        %v2082 = vsub.s32 0, %v2081
        %v2083 = vrot.slane %v2078, %v2082
        %v2084 = vlaneseq
        %v2085 = vshrl.u32 %v2084, 7
        %v2086 = vsub.s32 1, %v2085
        %v2087 = vrot.slane %v2078, %v2086
        %v2090 = vadd.f32 %v2074, %v2083
        %v2091 = vadd.f32 %v2075, %v2087
        %v2092 = vadd.f32 %v2076, %v2083
        %v2093 = vadd.f32 %v2077, %v2087
        %v2094 = vmax.f32 %v2090, 0.0
        %v2095 = vmax.f32 %v2091, 0.0
        %v2096 = vmax.f32 %v2092, 0.0
        %v2097 = vmax.f32 %v2093, 0.0
        %v2098 = vld [vmem:[#allocation3] sm:$0xf]
        %v2099 = vld [vmem:[#allocation3 + $0x4] sm:$0x1]
        %v2100 = vpack.c.bf16 %v2096, %v2094
        %v2101 = vpack.c.bf16 %v2097, %v2095
        %v2104 = vunpack.c.l.b16 %v2098
        %v2105 = vunpack.c.l.b16 %v2099
        %v2106 = vpack.c.b16 %v2105, %v2104
        %vm2107 = vcmask 80896
        %v2109 = vsel %vm2107, %v2106, 0
        %v2112 = vsel %vm839, %v2100, 0
        %v2115 = vsel %vm839, %v2101, 0
        %2117 = vmatprep.subr.bf16.mxu0 %v2115
        %2118 = vmatpush1.bf16.msra.mxu0 %v2112
        %2119 = vmatprep.subr.bf16.mxu0 0
        %2120 = vmatpush1.bf16.msra.mxu0 0
        %2121 = vmatprep.subr.bf16.mxu0 0
        %2122 = vmatpush1.bf16.msra.mxu0 0
        %2123 = vmatprep.subr.bf16.mxu0 0
        %2124 = vmatpush1.bf16.msra.mxu0 0
        %2125 = vmatprep.subr.bf16.mxu0 0
        %2126 = vmatpush1.bf16.msra.mxu0 0
        %2127 = vmatprep.subr.bf16.mxu0 0
        %2128 = vmatpush1.bf16.msra.mxu0 0
        %2129 = vmatprep.subr.bf16.mxu0 0
        %2130 = vmatpush1.bf16.msra.mxu0 0
        %2131 = vmatprep.subr.bf16.mxu0 0
        %2132 = vmatpush1.bf16.msra.mxu0 0
        %2133 = vmatprep.subr.bf16.mxu0 0
        %2134 = vmatpush1.bf16.msra.mxu0 0
        %2135 = vmatprep.subr.bf16.mxu0 0
        %2136 = vmatpush1.bf16.msra.mxu0 0
        %2137 = vmatprep.subr.bf16.mxu0 0
        %2138 = vmatpush1.bf16.msra.mxu0 0
        %2139 = vmatprep.subr.bf16.mxu0 0
        %2140 = vmatpush1.bf16.msra.mxu0 0
        %2141 = vmatprep.subr.bf16.mxu0 0
        %2142 = vmatpush1.bf16.msra.mxu0 0
        %2143 = vmatprep.subr.bf16.mxu0 0
        %2144 = vmatpush1.bf16.msra.mxu0 0
        %2145 = vmatprep.subr.bf16.mxu0 0
        %2146 = vmatpush1.bf16.msra.mxu0 0
        %2147 = vmatprep.subr.bf16.mxu0 0
        %2148 = vmatpush1.bf16.msra.mxu0 0
        %2149 = vmatprep.mubr.bf16.mxu0 0
        %2150 = vmatmul.mubr.bf16.gmra.mrb[0].mxu0 %v2109
        %v2151 = vpop.f32.mrb[0].mxu0
        %v2152 = vadd.f32 0.0, %v2151
        %v2153 = vpop.f32.mrb[0].mxu0
        %v2154 = vadd.f32 0.0, %v2153
        %v2155 = vpop.f32.mrb[0].mxu0
        %v2156 = vadd.f32 0.0, %v2155
        %v2157 = vpop.f32.mrb[0].mxu0
        %v2158 = vadd.f32 0.0, %v2157
        %2159 = vdwg.mxu0
        %vm2164 = vcmask 1042432
        %v2165 = vrot.slane %v2152, 5
        %v2166 = vrot.slane %v2156, 5
        %v2167 = vsel %vm2164, %v2165, %v2166
        %v2168 = vrot.slane %v2154, 5
        %v2169 = vrot.slane %v2158, 5
        %v2170 = vsel %vm2164, %v2168, %v2169
        %v2173 = vmax.f32 %v2152, %v2167
        %v2174 = vmax.f32 %v2154, %v2170
        %2175 = vst [vmem:[#allocation2] sm:$0x1f] %v2173
        %2176 = vst [vmem:[#allocation2 + $0x8] sm:$0x1f] %v2174
        %s2177 = scalar_lea.vmem %s513, 32
        %v2178 = vld [vmem:[%s2177] sm:$0xff]
        %v2179 = vld [vmem:[%s2177 + $0x8] sm:$0xff]
        %v2180 = vld [vmem:[%s2177 + $0x10] sm:$0xff]
        %v2181 = vld [vmem:[%s2177 + $0x18] sm:$0x33]
        %v2182 = vld [vmem:[#allocation6] sm:$0xff]
        %v2183 = vld [vmem:[#allocation6 + $0x8] sm:$0xff]
        %v2184 = vld [vmem:[#allocation6 + $0x10] sm:$0xff]
        %v2185 = vld [vmem:[#allocation6 + $0x18] sm:$0xff]
        %v2186 = vld [vmem:[#allocation6 + $0x20] sm:$0xff]
        %v2187 = vld [vmem:[#allocation6 + $0x28] sm:$0xff]
        %v2188 = vld [vmem:[#allocation6 + $0x30] sm:$0xff]
        %v2189 = vld [vmem:[#allocation6 + $0x38] sm:$0xff]
        %v2190 = vld [vmem:[#allocation6 + $0x40] sm:$0xff]
        %v2191 = vld [vmem:[#allocation6 + $0x48] sm:$0xff]
        %v2192 = vld [vmem:[#allocation6 + $0x50] sm:$0xff]
        %v2193 = vld [vmem:[#allocation6 + $0x58] sm:$0xff]
        %v2194 = vld [vmem:[#allocation6 + $0x60] sm:$0xff]
        %v2195 = vld [vmem:[#allocation6 + $0x68] sm:$0xff]
        %v2196 = vld [vmem:[#allocation6 + $0x70] sm:$0xff]
        %v2197 = vld [vmem:[#allocation6 + $0x78] sm:$0xff]
        %v2198 = vld [vmem:[#allocation6 + $0x80] sm:$0xff]
        %v2199 = vld [vmem:[#allocation6 + $0x88] sm:$0xff]
        %v2200 = vld [vmem:[#allocation6 + $0x90] sm:$0xff]
        %v2201 = vld [vmem:[#allocation6 + $0x98] sm:$0xff]
        %v2206 = vunpack.c.l.b16 %v2178
        %v2207 = vunpack.c.h.b16 %v2178
        %v2208 = vunpack.c.l.b16 %v2179
        %v2209 = vunpack.c.h.b16 %v2179
        %v2210 = vunpack.c.l.b16 %v2180
        %v2211 = vunpack.c.h.b16 %v2180
        %v2212 = vunpack.c.l.b16 %v2181
        %v2213 = vunpack.c.h.b16 %v2181
        %v2214 = vpack.c.b16 %v2208, %v2206
        %v2215 = vpack.c.b16 %v2209, %v2207
        %v2216 = vpack.c.b16 %v2212, %v2210
        %v2217 = vpack.c.b16 %v2213, %v2211
        %v2240 = vunpack.c.l.b16 %v2182
        %v2241 = vunpack.c.h.b16 %v2182
        %v2242 = vunpack.c.l.b16 %v2183
        %v2243 = vunpack.c.h.b16 %v2183
        %v2244 = vunpack.c.l.b16 %v2184
        %v2245 = vunpack.c.h.b16 %v2184
        %v2246 = vunpack.c.l.b16 %v2185
        %v2247 = vunpack.c.h.b16 %v2185
        %v2248 = vunpack.c.l.b16 %v2186
        %v2249 = vunpack.c.h.b16 %v2186
        %v2250 = vunpack.c.l.b16 %v2187
        %v2251 = vunpack.c.h.b16 %v2187
        %v2252 = vunpack.c.l.b16 %v2188
        %v2253 = vunpack.c.h.b16 %v2188
        %v2254 = vunpack.c.l.b16 %v2189
        %v2255 = vunpack.c.h.b16 %v2189
        %v2256 = vunpack.c.l.b16 %v2190
        %v2257 = vunpack.c.h.b16 %v2190
        %v2258 = vunpack.c.l.b16 %v2191
        %v2259 = vunpack.c.h.b16 %v2191
        %v2260 = vunpack.c.l.b16 %v2192
        %v2261 = vunpack.c.h.b16 %v2192
        %v2262 = vunpack.c.l.b16 %v2193
        %v2263 = vunpack.c.h.b16 %v2193
        %v2264 = vunpack.c.l.b16 %v2194
        %v2265 = vunpack.c.h.b16 %v2194
        %v2266 = vunpack.c.l.b16 %v2195
        %v2267 = vunpack.c.h.b16 %v2195
        %v2268 = vunpack.c.l.b16 %v2196
        %v2269 = vunpack.c.h.b16 %v2196
        %v2270 = vunpack.c.l.b16 %v2197
        %v2271 = vunpack.c.h.b16 %v2197
        %v2272 = vunpack.c.l.b16 %v2198
        %v2273 = vunpack.c.h.b16 %v2198
        %v2274 = vunpack.c.l.b16 %v2199
        %v2275 = vunpack.c.h.b16 %v2199
        %v2276 = vunpack.c.l.b16 %v2200
        %v2277 = vunpack.c.h.b16 %v2200
        %v2278 = vunpack.c.l.b16 %v2201
        %v2279 = vunpack.c.h.b16 %v2201
        %v2280 = vpack.c.b16 %v2242, %v2240
        %v2281 = vpack.c.b16 %v2243, %v2241
        %v2282 = vpack.c.b16 %v2246, %v2244
        %v2283 = vpack.c.b16 %v2247, %v2245
        %v2284 = vpack.c.b16 %v2250, %v2248
        %v2285 = vpack.c.b16 %v2251, %v2249
        %v2286 = vpack.c.b16 %v2254, %v2252
        %v2287 = vpack.c.b16 %v2255, %v2253
        %v2288 = vpack.c.b16 %v2258, %v2256
        %v2289 = vpack.c.b16 %v2259, %v2257
        %v2290 = vpack.c.b16 %v2262, %v2260
        %v2291 = vpack.c.b16 %v2263, %v2261
        %v2292 = vpack.c.b16 %v2266, %v2264
        %v2293 = vpack.c.b16 %v2267, %v2265
        %v2294 = vpack.c.b16 %v2270, %v2268
        %v2295 = vpack.c.b16 %v2271, %v2269
        %v2296 = vpack.c.b16 %v2274, %v2272
        %v2297 = vpack.c.b16 %v2275, %v2273
        %v2298 = vpack.c.b16 %v2278, %v2276
        %v2299 = vpack.c.b16 %v2279, %v2277
        %v2321 = vsel %vm658, %v2215, 0
        %v2324 = vsel %vm658, %v2217, 0
        %2326 = vmatprep.subr.bf16.mxu0 %v2281
        %2327 = vmatpush1.bf16.msra.mxu0 %v2280
        %2328 = vmatprep.subr.bf16.mxu0 %v2283
        %2329 = vmatpush1.bf16.msra.mxu0 %v2282
        %2330 = vmatprep.subr.bf16.mxu0 %v2285
        %2331 = vmatpush1.bf16.msra.mxu0 %v2284
        %2332 = vmatprep.subr.bf16.mxu0 %v2287
        %2333 = vmatpush1.bf16.msra.mxu0 %v2286
        %2334 = vmatprep.subr.bf16.mxu0 %v2289
        %2335 = vmatpush1.bf16.msra.mxu0 %v2288
        %2336 = vmatprep.subr.bf16.mxu0 %v2291
        %2337 = vmatpush1.bf16.msra.mxu0 %v2290
        %2338 = vmatprep.subr.bf16.mxu0 %v2293
        %2339 = vmatpush1.bf16.msra.mxu0 %v2292
        %2340 = vmatprep.subr.bf16.mxu0 %v2295
        %2341 = vmatpush1.bf16.msra.mxu0 %v2294
        %2342 = vmatprep.subr.bf16.mxu0 %v2297
        %2343 = vmatpush1.bf16.msra.mxu0 %v2296
        %2344 = vmatprep.subr.bf16.mxu0 %v2299
        %2345 = vmatpush1.bf16.msra.mxu0 %v2298
        %2346 = vmatprep.subr.bf16.mxu0 0
        %2347 = vmatpush1.bf16.msra.mxu0 0
        %2348 = vmatprep.subr.bf16.mxu0 0
        %2349 = vmatpush1.bf16.msra.mxu0 0
        %2350 = vmatprep.subr.bf16.mxu0 0
        %2351 = vmatpush1.bf16.msra.mxu0 0
        %2352 = vmatprep.subr.bf16.mxu0 0
        %2353 = vmatpush1.bf16.msra.mxu0 0
        %2354 = vmatprep.subr.bf16.mxu0 0
        %2355 = vmatpush1.bf16.msra.mxu0 0
        %2356 = vmatprep.subr.bf16.mxu0 0
        %2357 = vmatpush1.bf16.msra.mxu0 0
        %2358 = vmatprep.mubr.bf16.mxu0 %v2321
        %2359 = vmatmul.mubr.bf16.gmra.mrb[0].mxu0 %v2214
        %v2360 = vpop.f32.mrb[0].mxu0
        %v2361 = vadd.f32 0.0, %v2360
        %v2362 = vpop.f32.mrb[0].mxu0
        %v2363 = vadd.f32 0.0, %v2362
        %v2364 = vpop.f32.mrb[0].mxu0
        %v2365 = vadd.f32 0.0, %v2364
        %v2366 = vpop.f32.mrb[0].mxu0
        %v2367 = vadd.f32 0.0, %v2366
        %2368 = vmatprep.mubr.bf16.mxu0 %v2324
        %2369 = vmatmul.mubr.bf16.gmra.mrb[0].mxu0 %v2216
        %v2370 = vpop.f32.mrb[0].mxu0
        %v2371 = vadd.f32 0.0, %v2370
        %v2372 = vpop.f32.mrb[0].mxu0
        %v2373 = vadd.f32 0.0, %v2372
        %v2374 = vpop.f32.mrb[0].mxu0
        %v2375 = vadd.f32 0.0, %v2374
        %v2376 = vpop.f32.mrb[0].mxu0
        %v2377 = vadd.f32 0.0, %v2376
        %2378 = vdwg.mxu0
        %v2379 = vmax.f32 %v2361, %v2363
        %v2380 = vmax.f32 %v2365, %v2367
        %v2381 = vmax.f32 %v2371, %v2373
        %v2382 = vmax.f32 %v2375, %v2377
        %v2383 = vld [vmem:[#allocation8] sm:$0x1]
        %v2385 = vlaneseq
        %v2386 = vshrl.u32 %v2385, 7
        %v2387 = vsub.s32 0, %v2386
        %v2388 = vrot.slane %v2383, %v2387
        %v2390 = vadd.f32 %v2379, %v2388
        %v2391 = vadd.f32 %v2380, %v2388
        %v2392 = vadd.f32 %v2381, %v2388
        %v2393 = vadd.f32 %v2382, %v2388
        %v2394 = vmax.f32 %v2390, 0.0
        %v2395 = vmax.f32 %v2391, 0.0
        %v2396 = vmax.f32 %v2392, 0.0
        %v2397 = vmax.f32 %v2393, 0.0
        %v2398 = vld [vmem:[%s1] sm:$0xf]
        %v2399 = vld [vmem:[%s1 + $0x4] sm:$0xf]
        %v2400 = vld [vmem:[%s1 + $0x8] sm:$0xf]
        %v2401 = vld [vmem:[%s1 + $0xc] sm:$0x3]
        %v2402 = vpack.c.bf16 %v2395, %v2394
        %v2403 = vpack.c.bf16 %v2397, %v2396
        %v2408 = vunpack.c.l.b16 %v2398
        %v2409 = vunpack.c.l.b16 %v2399
        %v2410 = vunpack.c.l.b16 %v2400
        %v2411 = vunpack.c.l.b16 %v2401
        %v2412 = vpack.c.b16 %v2409, %v2408
        %v2413 = vpack.c.b16 %v2411, %v2410
        %v2415 = vsel %vm753, %v2412, 0
        %v2418 = vsel %vm753, %v2413, 0
        %v2421 = vsel %vm760, %v2403, 0
        %2423 = vmatprep.subr.bf16.mxu0 0
        %2424 = vmatpush1.bf16.msra.mxu0 %v2402
        %2425 = vmatprep.subr.bf16.mxu0 0
        %2426 = vmatpush1.bf16.msra.mxu0 %v2421
        %2427 = vmatprep.subr.bf16.mxu0 0
        %2428 = vmatpush1.bf16.msra.mxu0 0
        %2429 = vmatprep.subr.bf16.mxu0 0
        %2430 = vmatpush1.bf16.msra.mxu0 0
        %2431 = vmatprep.subr.bf16.mxu0 0
        %2432 = vmatpush1.bf16.msra.mxu0 0
        %2433 = vmatprep.subr.bf16.mxu0 0
        %2434 = vmatpush1.bf16.msra.mxu0 0
        %2435 = vmatprep.subr.bf16.mxu0 0
        %2436 = vmatpush1.bf16.msra.mxu0 0
        %2437 = vmatprep.subr.bf16.mxu0 0
        %2438 = vmatpush1.bf16.msra.mxu0 0
        %2439 = vmatprep.subr.bf16.mxu0 0
        %2440 = vmatpush1.bf16.msra.mxu0 0
        %2441 = vmatprep.subr.bf16.mxu0 0
        %2442 = vmatpush1.bf16.msra.mxu0 0
        %2443 = vmatprep.subr.bf16.mxu0 0
        %2444 = vmatpush1.bf16.msra.mxu0 0
        %2445 = vmatprep.subr.bf16.mxu0 0
        %2446 = vmatpush1.bf16.msra.mxu0 0
        %2447 = vmatprep.subr.bf16.mxu0 0
        %2448 = vmatpush1.bf16.msra.mxu0 0
        %2449 = vmatprep.subr.bf16.mxu0 0
        %2450 = vmatpush1.bf16.msra.mxu0 0
        %2451 = vmatprep.subr.bf16.mxu0 0
        %2452 = vmatpush1.bf16.msra.mxu0 0
        %2453 = vmatprep.subr.bf16.mxu0 0
        %2454 = vmatpush1.bf16.msra.mxu0 0
        %2455 = vmatprep.mubr.bf16.mxu0 0
        %2456 = vmatmul.mubr.bf16.gmra.mrb[0].mxu0 %v2415
        %v2457 = vpop.f32.mrb[0].mxu0
        %v2458 = vadd.f32 0.0, %v2457
        %v2459 = vpop.f32.mrb[0].mxu0
        %v2460 = vpop.f32.mrb[0].mxu0
        %v2461 = vadd.f32 0.0, %v2460
        %v2462 = vpop.f32.mrb[0].mxu0
        %2463 = vmatprep.mubr.bf16.mxu0 0
        %2464 = vmatmul.mubr.bf16.gmra.mrb[0].mxu0 %v2418
        %v2465 = vpop.f32.mrb[0].mxu0
        %v2466 = vadd.f32 0.0, %v2465
        %v2467 = vpop.f32.mrb[0].mxu0
        %v2468 = vpop.f32.mrb[0].mxu0
        %v2469 = vadd.f32 0.0, %v2468
        %v2470 = vpop.f32.mrb[0].mxu0
        %2471 = vdwg.mxu0
        %v2475 = vrot.slane %v2461, 6
        %v2476 = vrot.slane %v2466, 6
        %v2477 = vsel %vm816, %v2475, %v2476
        %v2478 = vrot.slane %v2469, 6
        %v2479 = vsel %vm816, %v2476, %v2478
        %v2482 = vmax.f32 %v2458, %v2477
        %v2483 = vmax.f32 %v2461, %v2479
        %v2486 = vrot.slane %v2482, 1
        %v2487 = vrot.slane %v2483, 1
        %v2488 = vsel %vm828, %v2486, %v2487
        %v2491 = vrot.slane %v2482, 2
        %v2492 = vrot.slane %v2483, 2
        %v2493 = vsel %vm760, %v2491, %v2492
        %v2496 = vrot.slane %v2482, 3
        %v2497 = vrot.slane %v2483, 3
        %v2498 = vsel %vm839, %v2496, %v2497
        %v2501 = vrot.slane %v2482, 4
        %v2502 = vrot.slane %v2483, 4
        %v2503 = vsel %vm845, %v2501, %v2502
        %v2506 = vpack.c.bf16 %v2483, %v2482
        %v2507 = vpack.c.bf16 %v2487, %v2488
        %v2508 = vpack.c.bf16 %v2492, %v2493
        %v2509 = vpack.c.bf16 %v2497, %v2498
        %v2510 = vpack.c.bf16 %v2502, %v2503
        %v2511 = vld [vmem:[%s5] sm:$0xff]
        %v2512 = vld [vmem:[%s5 + $0x8] sm:$0xff]
        %v2513 = vld [vmem:[%s5 + $0x10] sm:$0xff]
        %v2514 = vld [vmem:[%s5 + $0x18] sm:$0xff]
        %v2515 = vld [vmem:[%s5 + $0x20] sm:$0xff]
        %v2516 = vld [vmem:[%s5 + $0x28] sm:$0xff]
        %v2517 = vld [vmem:[%s5 + $0x30] sm:$0xff]
        %v2518 = vld [vmem:[%s5 + $0x38] sm:$0xff]
        %v2519 = vld [vmem:[%s5 + $0x40] sm:$0xff]
        %v2520 = vld [vmem:[%s5 + $0x48] sm:$0xff]
        %v2521 = vld [vmem:[%s5 + $0x50] sm:$0xff]
        %v2522 = vld [vmem:[%s5 + $0x58] sm:$0xff]
        %v2523 = vld [vmem:[%s5 + $0x60] sm:$0xff]
        %v2524 = vld [vmem:[%s5 + $0x68] sm:$0xff]
        %v2525 = vld [vmem:[%s5 + $0x70] sm:$0xff]
        %v2526 = vld [vmem:[%s5 + $0x78] sm:$0xff]
        %v2527 = vld [vmem:[%s5 + $0x80] sm:$0xff]
        %v2528 = vld [vmem:[%s5 + $0x88] sm:$0xff]
        %v2529 = vld [vmem:[%s5 + $0x90] sm:$0xff]
        %v2530 = vld [vmem:[%s5 + $0x98] sm:$0xff]
        %v2531 = vld [vmem:[%s5 + $0xa0] sm:$0xff]
        %v2532 = vld [vmem:[%s5 + $0xa8] sm:$0xff]
        %v2533 = vld [vmem:[%s5 + $0xb0] sm:$0xff]
        %v2534 = vld [vmem:[%s5 + $0xb8] sm:$0xff]
        %v2535 = vld [vmem:[%s5 + $0xc0] sm:$0xff]
        %v2536 = vld [vmem:[%s5 + $0xc8] sm:$0xff]
        %v2537 = vld [vmem:[%s5 + $0xd0] sm:$0xff]
        %v2538 = vld [vmem:[%s5 + $0xd8] sm:$0xff]
        %v2539 = vld [vmem:[%s5 + $0xe0] sm:$0xff]
        %v2540 = vld [vmem:[%s5 + $0xe8] sm:$0xff]
        %v2541 = vld [vmem:[%s5 + $0xf0] sm:$0xff]
        %v2542 = vld [vmem:[%s5 + $0xf8] sm:$0xff]
        %v2543 = vld [vmem:[%s5 + $0x100] sm:$0xff]
        %v2544 = vld [vmem:[%s5 + $0x108] sm:$0xff]
        %v2545 = vld [vmem:[%s5 + $0x110] sm:$0xff]
        %v2546 = vld [vmem:[%s5 + $0x118] sm:$0xff]
        %v2547 = vld [vmem:[%s5 + $0x120] sm:$0xff]
        %v2548 = vld [vmem:[%s5 + $0x128] sm:$0xff]
        %v2549 = vld [vmem:[%s5 + $0x130] sm:$0xff]
        %v2550 = vld [vmem:[%s5 + $0x138] sm:$0xff]
        %v2551 = vld [vmem:[%s5 + $0x140] sm:$0xff]
        %v2552 = vld [vmem:[%s5 + $0x148] sm:$0xff]
        %v2553 = vld [vmem:[%s5 + $0x150] sm:$0xff]
        %v2554 = vld [vmem:[%s5 + $0x158] sm:$0xff]
        %v2555 = vld [vmem:[%s5 + $0x160] sm:$0xff]
        %v2556 = vld [vmem:[%s5 + $0x168] sm:$0xff]
        %v2557 = vld [vmem:[%s5 + $0x170] sm:$0xff]
        %v2558 = vld [vmem:[%s5 + $0x178] sm:$0xff]
        %v2559 = vld [vmem:[%s5 + $0x180] sm:$0xff]
        %v2560 = vld [vmem:[%s5 + $0x188] sm:$0xff]
        %v2561 = vld [vmem:[%s5 + $0x190] sm:$0xff]
        %v2562 = vld [vmem:[%s5 + $0x198] sm:$0xff]
        %v2563 = vld [vmem:[%s5 + $0x1a0] sm:$0xff]
        %v2564 = vld [vmem:[%s5 + $0x1a8] sm:$0xff]
        %v2565 = vld [vmem:[%s5 + $0x1b0] sm:$0xff]
        %v2566 = vld [vmem:[%s5 + $0x1b8] sm:$0xff]
        %v2567 = vld [vmem:[%s5 + $0x1c0] sm:$0xff]
        %v2568 = vld [vmem:[%s5 + $0x1c8] sm:$0xff]
        %v2569 = vld [vmem:[%s5 + $0x1d0] sm:$0xff]
        %v2570 = vld [vmem:[%s5 + $0x1d8] sm:$0xff]
        %v2571 = vld [vmem:[%s5 + $0x1e0] sm:$0xff]
        %v2572 = vld [vmem:[%s5 + $0x1e8] sm:$0xff]
        %v2573 = vld [vmem:[%s5 + $0x1f0] sm:$0xff]
        %v2574 = vld [vmem:[%s5 + $0x1f8] sm:$0xff]
        %v2575 = vld [vmem:[%s5 + $0x200] sm:$0xff]
        %v2576 = vld [vmem:[%s5 + $0x208] sm:$0xff]
        %v2577 = vld [vmem:[%s5 + $0x210] sm:$0xff]
        %v2578 = vld [vmem:[%s5 + $0x218] sm:$0xff]
        %v2579 = vld [vmem:[%s5 + $0x220] sm:$0xff]
        %v2580 = vld [vmem:[%s5 + $0x228] sm:$0xff]
        %v2581 = vld [vmem:[%s5 + $0x230] sm:$0xff]
        %v2582 = vld [vmem:[%s5 + $0x238] sm:$0xff]
        %v2583 = vld [vmem:[%s5 + $0x240] sm:$0xff]
        %v2584 = vld [vmem:[%s5 + $0x248] sm:$0xff]
        %v2585 = vld [vmem:[%s5 + $0x250] sm:$0xff]
        %v2586 = vld [vmem:[%s5 + $0x258] sm:$0xff]
        %v2587 = vld [vmem:[%s5 + $0x260] sm:$0xff]
        %v2588 = vld [vmem:[%s5 + $0x268] sm:$0xff]
        %v2589 = vld [vmem:[%s5 + $0x270] sm:$0xff]
        %v2590 = vld [vmem:[%s5 + $0x278] sm:$0xff]
        %v2591 = vld [vmem:[%s5 + $0x280] sm:$0xff]
        %v2592 = vld [vmem:[%s5 + $0x288] sm:$0xff]
        %v2593 = vld [vmem:[%s5 + $0x290] sm:$0xff]
        %v2594 = vld [vmem:[%s5 + $0x298] sm:$0xff]
        %v2595 = vld [vmem:[%s5 + $0x2a0] sm:$0xff]
        %v2596 = vld [vmem:[%s5 + $0x2a8] sm:$0xff]
        %v2597 = vld [vmem:[%s5 + $0x2b0] sm:$0xff]
        %v2598 = vld [vmem:[%s5 + $0x2b8] sm:$0xff]
        %v2599 = vld [vmem:[%s5 + $0x2c0] sm:$0xff]
        %v2600 = vld [vmem:[%s5 + $0x2c8] sm:$0xff]
        %v2601 = vld [vmem:[%s5 + $0x2d0] sm:$0xff]
        %v2602 = vld [vmem:[%s5 + $0x2d8] sm:$0xff]
        %v2603 = vld [vmem:[%s5 + $0x2e0] sm:$0xff]
        %v2604 = vld [vmem:[%s5 + $0x2e8] sm:$0xff]
        %v2605 = vld [vmem:[%s5 + $0x2f0] sm:$0xff]
        %v2606 = vld [vmem:[%s5 + $0x2f8] sm:$0xff]
        %v2607 = vld [vmem:[%s5 + $0x300] sm:$0xff]
        %v2608 = vld [vmem:[%s5 + $0x308] sm:$0xff]
        %v2609 = vld [vmem:[%s5 + $0x310] sm:$0xff]
        %v2610 = vld [vmem:[%s5 + $0x318] sm:$0xff]
        %v2611 = vld [vmem:[%s5 + $0x320] sm:$0xff]
        %v2612 = vld [vmem:[%s5 + $0x328] sm:$0xff]
        %v2613 = vld [vmem:[%s5 + $0x330] sm:$0xff]
        %v2614 = vld [vmem:[%s5 + $0x338] sm:$0xff]
        %v2615 = vld [vmem:[%s5 + $0x340] sm:$0xff]
        %v2616 = vld [vmem:[%s5 + $0x348] sm:$0xff]
        %v2617 = vld [vmem:[%s5 + $0x350] sm:$0xff]
        %v2618 = vld [vmem:[%s5 + $0x358] sm:$0xff]
        %v2619 = vld [vmem:[%s5 + $0x360] sm:$0xff]
        %v2620 = vld [vmem:[%s5 + $0x368] sm:$0xff]
        %v2621 = vld [vmem:[%s5 + $0x370] sm:$0xff]
        %v2622 = vld [vmem:[%s5 + $0x378] sm:$0xff]
        %v2623 = vld [vmem:[%s5 + $0x380] sm:$0xff]
        %v2624 = vld [vmem:[%s5 + $0x388] sm:$0xff]
        %v2625 = vld [vmem:[%s5 + $0x390] sm:$0xff]
        %v2626 = vld [vmem:[%s5 + $0x398] sm:$0xff]
        %v2627 = vld [vmem:[%s5 + $0x3a0] sm:$0xff]
        %v2628 = vld [vmem:[%s5 + $0x3a8] sm:$0xff]
        %v2629 = vld [vmem:[%s5 + $0x3b0] sm:$0xff]
        %v2630 = vld [vmem:[%s5 + $0x3b8] sm:$0xff]
        %v2631 = vld [vmem:[%s5 + $0x3c0] sm:$0xff]
        %v2632 = vld [vmem:[%s5 + $0x3c8] sm:$0xff]
        %v2633 = vld [vmem:[%s5 + $0x3d0] sm:$0xff]
        %v2634 = vld [vmem:[%s5 + $0x3d8] sm:$0xff]
        %v2635 = vld [vmem:[%s5 + $0x3e0] sm:$0xff]
        %v2636 = vld [vmem:[%s5 + $0x3e8] sm:$0xff]
        %v2637 = vld [vmem:[%s5 + $0x3f0] sm:$0xff]
        %v2638 = vld [vmem:[%s5 + $0x3f8] sm:$0xff]
        %v2639 = vld [vmem:[%s5 + $0x400] sm:$0xff]
        %v2640 = vld [vmem:[%s5 + $0x408] sm:$0xff]
        %v2641 = vld [vmem:[%s5 + $0x410] sm:$0xff]
        %v2642 = vld [vmem:[%s5 + $0x418] sm:$0xff]
        %v2643 = vld [vmem:[%s5 + $0x420] sm:$0xff]
        %v2644 = vld [vmem:[%s5 + $0x428] sm:$0xff]
        %v2645 = vld [vmem:[%s5 + $0x430] sm:$0xff]
        %v2646 = vld [vmem:[%s5 + $0x438] sm:$0xff]
        %v2647 = vld [vmem:[%s5 + $0x440] sm:$0xff]
        %v2648 = vld [vmem:[%s5 + $0x448] sm:$0xff]
        %v2649 = vld [vmem:[%s5 + $0x450] sm:$0xff]
        %v2650 = vld [vmem:[%s5 + $0x458] sm:$0xff]
        %v2651 = vld [vmem:[%s5 + $0x460] sm:$0xff]
        %v2652 = vld [vmem:[%s5 + $0x468] sm:$0xff]
        %v2653 = vld [vmem:[%s5 + $0x470] sm:$0xff]
        %v2654 = vld [vmem:[%s5 + $0x478] sm:$0xff]
        %v2655 = vld [vmem:[%s5 + $0x480] sm:$0xff]
        %v2656 = vld [vmem:[%s5 + $0x488] sm:$0xff]
        %v2657 = vld [vmem:[%s5 + $0x490] sm:$0xff]
        %v2658 = vld [vmem:[%s5 + $0x498] sm:$0xff]
        %v2659 = vld [vmem:[%s5 + $0x4a0] sm:$0xff]
        %v2660 = vld [vmem:[%s5 + $0x4a8] sm:$0xff]
        %v2661 = vld [vmem:[%s5 + $0x4b0] sm:$0xff]
        %v2662 = vld [vmem:[%s5 + $0x4b8] sm:$0xff]
        %v2663 = vld [vmem:[%s5 + $0x4c0] sm:$0xff]
        %v2664 = vld [vmem:[%s5 + $0x4c8] sm:$0xff]
        %v2665 = vld [vmem:[%s5 + $0x4d0] sm:$0xff]
        %v2666 = vld [vmem:[%s5 + $0x4d8] sm:$0xff]
        %v2667 = vld [vmem:[%s5 + $0x4e0] sm:$0xff]
        %v2668 = vld [vmem:[%s5 + $0x4e8] sm:$0xff]
        %v2669 = vld [vmem:[%s5 + $0x4f0] sm:$0xff]
        %v2670 = vld [vmem:[%s5 + $0x4f8] sm:$0xff]
        %v2831 = vunpack.c.l.b16 %v2511
        %v2832 = vunpack.c.h.b16 %v2511
        %v2833 = vunpack.c.l.b16 %v2512
        %v2834 = vunpack.c.h.b16 %v2512
        %v2835 = vunpack.c.l.b16 %v2513
        %v2836 = vunpack.c.h.b16 %v2513
        %v2837 = vunpack.c.l.b16 %v2514
        %v2838 = vunpack.c.h.b16 %v2514
        %v2839 = vunpack.c.l.b16 %v2515
        %v2840 = vunpack.c.h.b16 %v2515
        %v2841 = vunpack.c.l.b16 %v2516
        %v2842 = vunpack.c.h.b16 %v2516
        %v2843 = vunpack.c.l.b16 %v2517
        %v2844 = vunpack.c.h.b16 %v2517
        %v2845 = vunpack.c.l.b16 %v2518
        %v2846 = vunpack.c.h.b16 %v2518
        %v2847 = vunpack.c.l.b16 %v2519
        %v2848 = vunpack.c.h.b16 %v2519
        %v2849 = vunpack.c.l.b16 %v2520
        %v2850 = vunpack.c.h.b16 %v2520
        %v2851 = vunpack.c.l.b16 %v2521
        %v2852 = vunpack.c.h.b16 %v2521
        %v2853 = vunpack.c.l.b16 %v2522
        %v2854 = vunpack.c.h.b16 %v2522
        %v2855 = vunpack.c.l.b16 %v2523
        %v2856 = vunpack.c.h.b16 %v2523
        %v2857 = vunpack.c.l.b16 %v2524
        %v2858 = vunpack.c.h.b16 %v2524
        %v2859 = vunpack.c.l.b16 %v2525
        %v2860 = vunpack.c.h.b16 %v2525
        %v2861 = vunpack.c.l.b16 %v2526
        %v2862 = vunpack.c.h.b16 %v2526
        %v2863 = vunpack.c.l.b16 %v2527
        %v2864 = vunpack.c.h.b16 %v2527
        %v2865 = vunpack.c.l.b16 %v2528
        %v2866 = vunpack.c.h.b16 %v2528
        %v2867 = vunpack.c.l.b16 %v2529
        %v2868 = vunpack.c.h.b16 %v2529
        %v2869 = vunpack.c.l.b16 %v2530
        %v2870 = vunpack.c.h.b16 %v2530
        %v2871 = vunpack.c.l.b16 %v2531
        %v2872 = vunpack.c.h.b16 %v2531
        %v2873 = vunpack.c.l.b16 %v2532
        %v2874 = vunpack.c.h.b16 %v2532
        %v2875 = vunpack.c.l.b16 %v2533
        %v2876 = vunpack.c.h.b16 %v2533
        %v2877 = vunpack.c.l.b16 %v2534
        %v2878 = vunpack.c.h.b16 %v2534
        %v2879 = vunpack.c.l.b16 %v2535
        %v2880 = vunpack.c.h.b16 %v2535
        %v2881 = vunpack.c.l.b16 %v2536
        %v2882 = vunpack.c.h.b16 %v2536
        %v2883 = vunpack.c.l.b16 %v2537
        %v2884 = vunpack.c.h.b16 %v2537
        %v2885 = vunpack.c.l.b16 %v2538
        %v2886 = vunpack.c.h.b16 %v2538
        %v2887 = vunpack.c.l.b16 %v2539
        %v2888 = vunpack.c.h.b16 %v2539
        %v2889 = vunpack.c.l.b16 %v2540
        %v2890 = vunpack.c.h.b16 %v2540
        %v2891 = vunpack.c.l.b16 %v2541
        %v2892 = vunpack.c.h.b16 %v2541
        %v2893 = vunpack.c.l.b16 %v2542
        %v2894 = vunpack.c.h.b16 %v2542
        %v2895 = vunpack.c.l.b16 %v2543
        %v2896 = vunpack.c.h.b16 %v2543
        %v2897 = vunpack.c.l.b16 %v2544
        %v2898 = vunpack.c.h.b16 %v2544
        %v2899 = vunpack.c.l.b16 %v2545
        %v2900 = vunpack.c.h.b16 %v2545
        %v2901 = vunpack.c.l.b16 %v2546
        %v2902 = vunpack.c.h.b16 %v2546
        %v2903 = vunpack.c.l.b16 %v2547
        %v2904 = vunpack.c.h.b16 %v2547
        %v2905 = vunpack.c.l.b16 %v2548
        %v2906 = vunpack.c.h.b16 %v2548
        %v2907 = vunpack.c.l.b16 %v2549
        %v2908 = vunpack.c.h.b16 %v2549
        %v2909 = vunpack.c.l.b16 %v2550
        %v2910 = vunpack.c.h.b16 %v2550
        %v2911 = vunpack.c.l.b16 %v2551
        %v2912 = vunpack.c.h.b16 %v2551
        %v2913 = vunpack.c.l.b16 %v2552
        %v2914 = vunpack.c.h.b16 %v2552
        %v2915 = vunpack.c.l.b16 %v2553
        %v2916 = vunpack.c.h.b16 %v2553
        %v2917 = vunpack.c.l.b16 %v2554
        %v2918 = vunpack.c.h.b16 %v2554
        %v2919 = vunpack.c.l.b16 %v2555
        %v2920 = vunpack.c.h.b16 %v2555
        %v2921 = vunpack.c.l.b16 %v2556
        %v2922 = vunpack.c.h.b16 %v2556
        %v2923 = vunpack.c.l.b16 %v2557
        %v2924 = vunpack.c.h.b16 %v2557
        %v2925 = vunpack.c.l.b16 %v2558
        %v2926 = vunpack.c.h.b16 %v2558
        %v2927 = vunpack.c.l.b16 %v2559
        %v2928 = vunpack.c.h.b16 %v2559
        %v2929 = vunpack.c.l.b16 %v2560
        %v2930 = vunpack.c.h.b16 %v2560
        %v2931 = vunpack.c.l.b16 %v2561
        %v2932 = vunpack.c.h.b16 %v2561
        %v2933 = vunpack.c.l.b16 %v2562
        %v2934 = vunpack.c.h.b16 %v2562
        %v2935 = vunpack.c.l.b16 %v2563
        %v2936 = vunpack.c.h.b16 %v2563
        %v2937 = vunpack.c.l.b16 %v2564
        %v2938 = vunpack.c.h.b16 %v2564
        %v2939 = vunpack.c.l.b16 %v2565
        %v2940 = vunpack.c.h.b16 %v2565
        %v2941 = vunpack.c.l.b16 %v2566
        %v2942 = vunpack.c.h.b16 %v2566
        %v2943 = vunpack.c.l.b16 %v2567
        %v2944 = vunpack.c.h.b16 %v2567
        %v2945 = vunpack.c.l.b16 %v2568
        %v2946 = vunpack.c.h.b16 %v2568
        %v2947 = vunpack.c.l.b16 %v2569
        %v2948 = vunpack.c.h.b16 %v2569
        %v2949 = vunpack.c.l.b16 %v2570
        %v2950 = vunpack.c.h.b16 %v2570
        %v2951 = vunpack.c.l.b16 %v2571
        %v2952 = vunpack.c.h.b16 %v2571
        %v2953 = vunpack.c.l.b16 %v2572
        %v2954 = vunpack.c.h.b16 %v2572
        %v2955 = vunpack.c.l.b16 %v2573
        %v2956 = vunpack.c.h.b16 %v2573
        %v2957 = vunpack.c.l.b16 %v2574
        %v2958 = vunpack.c.h.b16 %v2574
        %v2959 = vunpack.c.l.b16 %v2575
        %v2960 = vunpack.c.h.b16 %v2575
        %v2961 = vunpack.c.l.b16 %v2576
        %v2962 = vunpack.c.h.b16 %v2576
        %v2963 = vunpack.c.l.b16 %v2577
        %v2964 = vunpack.c.h.b16 %v2577
        %v2965 = vunpack.c.l.b16 %v2578
        %v2966 = vunpack.c.h.b16 %v2578
        %v2967 = vunpack.c.l.b16 %v2579
        %v2968 = vunpack.c.h.b16 %v2579
        %v2969 = vunpack.c.l.b16 %v2580
        %v2970 = vunpack.c.h.b16 %v2580
        %v2971 = vunpack.c.l.b16 %v2581
        %v2972 = vunpack.c.h.b16 %v2581
        %v2973 = vunpack.c.l.b16 %v2582
        %v2974 = vunpack.c.h.b16 %v2582
        %v2975 = vunpack.c.l.b16 %v2583
        %v2976 = vunpack.c.h.b16 %v2583
        %v2977 = vunpack.c.l.b16 %v2584
        %v2978 = vunpack.c.h.b16 %v2584
        %v2979 = vunpack.c.l.b16 %v2585
        %v2980 = vunpack.c.h.b16 %v2585
        %v2981 = vunpack.c.l.b16 %v2586
        %v2982 = vunpack.c.h.b16 %v2586
        %v2983 = vunpack.c.l.b16 %v2587
        %v2984 = vunpack.c.h.b16 %v2587
        %v2985 = vunpack.c.l.b16 %v2588
        %v2986 = vunpack.c.h.b16 %v2588
        %v2987 = vunpack.c.l.b16 %v2589
        %v2988 = vunpack.c.h.b16 %v2589
        %v2989 = vunpack.c.l.b16 %v2590
        %v2990 = vunpack.c.h.b16 %v2590
        %v2991 = vunpack.c.l.b16 %v2591
        %v2992 = vunpack.c.h.b16 %v2591
        %v2993 = vunpack.c.l.b16 %v2592
        %v2994 = vunpack.c.h.b16 %v2592
        %v2995 = vunpack.c.l.b16 %v2593
        %v2996 = vunpack.c.h.b16 %v2593
        %v2997 = vunpack.c.l.b16 %v2594
        %v2998 = vunpack.c.h.b16 %v2594
        %v2999 = vunpack.c.l.b16 %v2595
        %v3000 = vunpack.c.h.b16 %v2595
        %v3001 = vunpack.c.l.b16 %v2596
        %v3002 = vunpack.c.h.b16 %v2596
        %v3003 = vunpack.c.l.b16 %v2597
        %v3004 = vunpack.c.h.b16 %v2597
        %v3005 = vunpack.c.l.b16 %v2598
        %v3006 = vunpack.c.h.b16 %v2598
        %v3007 = vunpack.c.l.b16 %v2599
        %v3008 = vunpack.c.h.b16 %v2599
        %v3009 = vunpack.c.l.b16 %v2600
        %v3010 = vunpack.c.h.b16 %v2600
        %v3011 = vunpack.c.l.b16 %v2601
        %v3012 = vunpack.c.h.b16 %v2601
        %v3013 = vunpack.c.l.b16 %v2602
        %v3014 = vunpack.c.h.b16 %v2602
        %v3015 = vunpack.c.l.b16 %v2603
        %v3016 = vunpack.c.h.b16 %v2603
        %v3017 = vunpack.c.l.b16 %v2604
        %v3018 = vunpack.c.h.b16 %v2604
        %v3019 = vunpack.c.l.b16 %v2605
        %v3020 = vunpack.c.h.b16 %v2605
        %v3021 = vunpack.c.l.b16 %v2606
        %v3022 = vunpack.c.h.b16 %v2606
        %v3023 = vunpack.c.l.b16 %v2607
        %v3024 = vunpack.c.h.b16 %v2607
        %v3025 = vunpack.c.l.b16 %v2608
        %v3026 = vunpack.c.h.b16 %v2608
        %v3027 = vunpack.c.l.b16 %v2609
        %v3028 = vunpack.c.h.b16 %v2609
        %v3029 = vunpack.c.l.b16 %v2610
        %v3030 = vunpack.c.h.b16 %v2610
        %v3031 = vunpack.c.l.b16 %v2611
        %v3032 = vunpack.c.h.b16 %v2611
        %v3033 = vunpack.c.l.b16 %v2612
        %v3034 = vunpack.c.h.b16 %v2612
        %v3035 = vunpack.c.l.b16 %v2613
        %v3036 = vunpack.c.h.b16 %v2613
        %v3037 = vunpack.c.l.b16 %v2614
        %v3038 = vunpack.c.h.b16 %v2614
        %v3039 = vunpack.c.l.b16 %v2615
        %v3040 = vunpack.c.h.b16 %v2615
        %v3041 = vunpack.c.l.b16 %v2616
        %v3042 = vunpack.c.h.b16 %v2616
        %v3043 = vunpack.c.l.b16 %v2617
        %v3044 = vunpack.c.h.b16 %v2617
        %v3045 = vunpack.c.l.b16 %v2618
        %v3046 = vunpack.c.h.b16 %v2618
        %v3047 = vunpack.c.l.b16 %v2619
        %v3048 = vunpack.c.h.b16 %v2619
        %v3049 = vunpack.c.l.b16 %v2620
        %v3050 = vunpack.c.h.b16 %v2620
        %v3051 = vunpack.c.l.b16 %v2621
        %v3052 = vunpack.c.h.b16 %v2621
        %v3053 = vunpack.c.l.b16 %v2622
        %v3054 = vunpack.c.h.b16 %v2622
        %v3055 = vunpack.c.l.b16 %v2623
        %v3056 = vunpack.c.h.b16 %v2623
        %v3057 = vunpack.c.l.b16 %v2624
        %v3058 = vunpack.c.h.b16 %v2624
        %v3059 = vunpack.c.l.b16 %v2625
        %v3060 = vunpack.c.h.b16 %v2625
        %v3061 = vunpack.c.l.b16 %v2626
        %v3062 = vunpack.c.h.b16 %v2626
        %v3063 = vunpack.c.l.b16 %v2627
        %v3064 = vunpack.c.h.b16 %v2627
        %v3065 = vunpack.c.l.b16 %v2628
        %v3066 = vunpack.c.h.b16 %v2628
        %v3067 = vunpack.c.l.b16 %v2629
        %v3068 = vunpack.c.h.b16 %v2629
        %v3069 = vunpack.c.l.b16 %v2630
        %v3070 = vunpack.c.h.b16 %v2630
        %v3071 = vunpack.c.l.b16 %v2631
        %v3072 = vunpack.c.h.b16 %v2631
        %v3073 = vunpack.c.l.b16 %v2632
        %v3074 = vunpack.c.h.b16 %v2632
        %v3075 = vunpack.c.l.b16 %v2633
        %v3076 = vunpack.c.h.b16 %v2633
        %v3077 = vunpack.c.l.b16 %v2634
        %v3078 = vunpack.c.h.b16 %v2634
        %v3079 = vunpack.c.l.b16 %v2635
        %v3080 = vunpack.c.h.b16 %v2635
        %v3081 = vunpack.c.l.b16 %v2636
        %v3082 = vunpack.c.h.b16 %v2636
        %v3083 = vunpack.c.l.b16 %v2637
        %v3084 = vunpack.c.h.b16 %v2637
        %v3085 = vunpack.c.l.b16 %v2638
        %v3086 = vunpack.c.h.b16 %v2638
        %v3087 = vunpack.c.l.b16 %v2639
        %v3088 = vunpack.c.h.b16 %v2639
        %v3089 = vunpack.c.l.b16 %v2640
        %v3090 = vunpack.c.h.b16 %v2640
        %v3091 = vunpack.c.l.b16 %v2641
        %v3092 = vunpack.c.h.b16 %v2641
        %v3093 = vunpack.c.l.b16 %v2642
        %v3094 = vunpack.c.h.b16 %v2642
        %v3095 = vunpack.c.l.b16 %v2643
        %v3096 = vunpack.c.h.b16 %v2643
        %v3097 = vunpack.c.l.b16 %v2644
        %v3098 = vunpack.c.h.b16 %v2644
        %v3099 = vunpack.c.l.b16 %v2645
        %v3100 = vunpack.c.h.b16 %v2645
        %v3101 = vunpack.c.l.b16 %v2646
        %v3102 = vunpack.c.h.b16 %v2646
        %v3103 = vunpack.c.l.b16 %v2647
        %v3104 = vunpack.c.h.b16 %v2647
        %v3105 = vunpack.c.l.b16 %v2648
        %v3106 = vunpack.c.h.b16 %v2648
        %v3107 = vunpack.c.l.b16 %v2649
        %v3108 = vunpack.c.h.b16 %v2649
        %v3109 = vunpack.c.l.b16 %v2650
        %v3110 = vunpack.c.h.b16 %v2650
        %v3111 = vunpack.c.l.b16 %v2651
        %v3112 = vunpack.c.h.b16 %v2651
        %v3113 = vunpack.c.l.b16 %v2652
        %v3114 = vunpack.c.h.b16 %v2652
        %v3115 = vunpack.c.l.b16 %v2653
        %v3116 = vunpack.c.h.b16 %v2653
        %v3117 = vunpack.c.l.b16 %v2654
        %v3118 = vunpack.c.h.b16 %v2654
        %v3119 = vunpack.c.l.b16 %v2655
        %v3120 = vunpack.c.h.b16 %v2655
        %v3121 = vunpack.c.l.b16 %v2656
        %v3122 = vunpack.c.h.b16 %v2656
        %v3123 = vunpack.c.l.b16 %v2657
        %v3124 = vunpack.c.h.b16 %v2657
        %v3125 = vunpack.c.l.b16 %v2658
        %v3126 = vunpack.c.h.b16 %v2658
        %v3127 = vunpack.c.l.b16 %v2659
        %v3128 = vunpack.c.h.b16 %v2659
        %v3129 = vunpack.c.l.b16 %v2660
        %v3130 = vunpack.c.h.b16 %v2660
        %v3131 = vunpack.c.l.b16 %v2661
        %v3132 = vunpack.c.h.b16 %v2661
        %v3133 = vunpack.c.l.b16 %v2662
        %v3134 = vunpack.c.h.b16 %v2662
        %v3135 = vunpack.c.l.b16 %v2663
        %v3136 = vunpack.c.h.b16 %v2663
        %v3137 = vunpack.c.l.b16 %v2664
        %v3138 = vunpack.c.h.b16 %v2664
        %v3139 = vunpack.c.l.b16 %v2665
        %v3140 = vunpack.c.h.b16 %v2665
        %v3141 = vunpack.c.l.b16 %v2666
        %v3142 = vunpack.c.h.b16 %v2666
        %v3143 = vunpack.c.l.b16 %v2667
        %v3144 = vunpack.c.h.b16 %v2667
        %v3145 = vunpack.c.l.b16 %v2668
        %v3146 = vunpack.c.h.b16 %v2668
        %v3147 = vunpack.c.l.b16 %v2669
        %v3148 = vunpack.c.h.b16 %v2669
        %v3149 = vunpack.c.l.b16 %v2670
        %v3150 = vunpack.c.h.b16 %v2670
        %v3151 = vpack.c.b16 %v2835, %v2831
        %v3152 = vpack.c.b16 %v2836, %v2832
        %v3153 = vpack.c.b16 %v2837, %v2833
        %v3154 = vpack.c.b16 %v2838, %v2834
        %v3155 = vpack.c.b16 %v2843, %v2839
        %v3156 = vpack.c.b16 %v2844, %v2840
        %v3157 = vpack.c.b16 %v2845, %v2841
        %v3158 = vpack.c.b16 %v2846, %v2842
        %v3159 = vpack.c.b16 %v2851, %v2847
        %v3160 = vpack.c.b16 %v2852, %v2848
        %v3161 = vpack.c.b16 %v2853, %v2849
        %v3162 = vpack.c.b16 %v2854, %v2850
        %v3163 = vpack.c.b16 %v2859, %v2855
        %v3164 = vpack.c.b16 %v2860, %v2856
        %v3165 = vpack.c.b16 %v2861, %v2857
        %v3166 = vpack.c.b16 %v2862, %v2858
        %v3167 = vpack.c.b16 %v2867, %v2863
        %v3168 = vpack.c.b16 %v2868, %v2864
        %v3169 = vpack.c.b16 %v2869, %v2865
        %v3170 = vpack.c.b16 %v2870, %v2866
        %v3171 = vpack.c.b16 %v2875, %v2871
        %v3172 = vpack.c.b16 %v2876, %v2872
        %v3173 = vpack.c.b16 %v2877, %v2873
        %v3174 = vpack.c.b16 %v2878, %v2874
        %v3175 = vpack.c.b16 %v2883, %v2879
        %v3176 = vpack.c.b16 %v2884, %v2880
        %v3177 = vpack.c.b16 %v2885, %v2881
        %v3178 = vpack.c.b16 %v2886, %v2882
        %v3179 = vpack.c.b16 %v2891, %v2887
        %v3180 = vpack.c.b16 %v2892, %v2888
        %v3181 = vpack.c.b16 %v2893, %v2889
        %v3182 = vpack.c.b16 %v2894, %v2890
        %v3183 = vpack.c.b16 %v2899, %v2895
        %v3184 = vpack.c.b16 %v2900, %v2896
        %v3185 = vpack.c.b16 %v2901, %v2897
        %v3186 = vpack.c.b16 %v2902, %v2898
        %v3187 = vpack.c.b16 %v2907, %v2903
        %v3188 = vpack.c.b16 %v2908, %v2904
        %v3189 = vpack.c.b16 %v2909, %v2905
        %v3190 = vpack.c.b16 %v2910, %v2906
        %v3191 = vpack.c.b16 %v2915, %v2911
        %v3192 = vpack.c.b16 %v2916, %v2912
        %v3193 = vpack.c.b16 %v2917, %v2913
        %v3194 = vpack.c.b16 %v2918, %v2914
        %v3195 = vpack.c.b16 %v2923, %v2919
        %v3196 = vpack.c.b16 %v2924, %v2920
        %v3197 = vpack.c.b16 %v2925, %v2921
        %v3198 = vpack.c.b16 %v2926, %v2922
        %v3199 = vpack.c.b16 %v2931, %v2927
        %v3200 = vpack.c.b16 %v2932, %v2928
        %v3201 = vpack.c.b16 %v2933, %v2929
        %v3202 = vpack.c.b16 %v2934, %v2930
        %v3203 = vpack.c.b16 %v2939, %v2935
        %v3204 = vpack.c.b16 %v2940, %v2936
        %v3205 = vpack.c.b16 %v2941, %v2937
        %v3206 = vpack.c.b16 %v2942, %v2938
        %v3207 = vpack.c.b16 %v2947, %v2943
        %v3208 = vpack.c.b16 %v2948, %v2944
        %v3209 = vpack.c.b16 %v2949, %v2945
        %v3210 = vpack.c.b16 %v2950, %v2946
        %v3211 = vpack.c.b16 %v2955, %v2951
        %v3212 = vpack.c.b16 %v2956, %v2952
        %v3213 = vpack.c.b16 %v2957, %v2953
        %v3214 = vpack.c.b16 %v2958, %v2954
        %v3215 = vpack.c.b16 %v2963, %v2959
        %v3216 = vpack.c.b16 %v2964, %v2960
        %v3217 = vpack.c.b16 %v2965, %v2961
        %v3218 = vpack.c.b16 %v2966, %v2962
        %v3219 = vpack.c.b16 %v2971, %v2967
        %v3220 = vpack.c.b16 %v2972, %v2968
        %v3221 = vpack.c.b16 %v2973, %v2969
        %v3222 = vpack.c.b16 %v2974, %v2970
        %v3223 = vpack.c.b16 %v2979, %v2975
        %v3224 = vpack.c.b16 %v2980, %v2976
        %v3225 = vpack.c.b16 %v2981, %v2977
        %v3226 = vpack.c.b16 %v2982, %v2978
        %v3227 = vpack.c.b16 %v2987, %v2983
        %v3228 = vpack.c.b16 %v2988, %v2984
        %v3229 = vpack.c.b16 %v2989, %v2985
        %v3230 = vpack.c.b16 %v2990, %v2986
        %v3231 = vpack.c.b16 %v2995, %v2991
        %v3232 = vpack.c.b16 %v2996, %v2992
        %v3233 = vpack.c.b16 %v2997, %v2993
        %v3234 = vpack.c.b16 %v2998, %v2994
        %v3235 = vpack.c.b16 %v3003, %v2999
        %v3236 = vpack.c.b16 %v3004, %v3000
        %v3237 = vpack.c.b16 %v3005, %v3001
        %v3238 = vpack.c.b16 %v3006, %v3002
        %v3239 = vpack.c.b16 %v3011, %v3007
        %v3240 = vpack.c.b16 %v3012, %v3008
        %v3241 = vpack.c.b16 %v3013, %v3009
        %v3242 = vpack.c.b16 %v3014, %v3010
        %v3243 = vpack.c.b16 %v3019, %v3015
        %v3244 = vpack.c.b16 %v3020, %v3016
        %v3245 = vpack.c.b16 %v3021, %v3017
        %v3246 = vpack.c.b16 %v3022, %v3018
        %v3247 = vpack.c.b16 %v3027, %v3023
        %v3248 = vpack.c.b16 %v3028, %v3024
        %v3249 = vpack.c.b16 %v3029, %v3025
        %v3250 = vpack.c.b16 %v3030, %v3026
        %v3251 = vpack.c.b16 %v3035, %v3031
        %v3252 = vpack.c.b16 %v3036, %v3032
        %v3253 = vpack.c.b16 %v3037, %v3033
        %v3254 = vpack.c.b16 %v3038, %v3034
        %v3255 = vpack.c.b16 %v3043, %v3039
        %v3256 = vpack.c.b16 %v3044, %v3040
        %v3257 = vpack.c.b16 %v3045, %v3041
        %v3258 = vpack.c.b16 %v3046, %v3042
        %v3259 = vpack.c.b16 %v3051, %v3047
        %v3260 = vpack.c.b16 %v3052, %v3048
        %v3261 = vpack.c.b16 %v3053, %v3049
        %v3262 = vpack.c.b16 %v3054, %v3050
        %v3263 = vpack.c.b16 %v3059, %v3055
        %v3264 = vpack.c.b16 %v3060, %v3056
        %v3265 = vpack.c.b16 %v3061, %v3057
        %v3266 = vpack.c.b16 %v3062, %v3058
        %v3267 = vpack.c.b16 %v3067, %v3063
        %v3268 = vpack.c.b16 %v3068, %v3064
        %v3269 = vpack.c.b16 %v3069, %v3065
        %v3270 = vpack.c.b16 %v3070, %v3066
        %v3271 = vpack.c.b16 %v3075, %v3071
        %v3272 = vpack.c.b16 %v3076, %v3072
        %v3273 = vpack.c.b16 %v3077, %v3073
        %v3274 = vpack.c.b16 %v3078, %v3074
        %v3275 = vpack.c.b16 %v3083, %v3079
        %v3276 = vpack.c.b16 %v3084, %v3080
        %v3277 = vpack.c.b16 %v3085, %v3081
        %v3278 = vpack.c.b16 %v3086, %v3082
        %v3279 = vpack.c.b16 %v3091, %v3087
        %v3280 = vpack.c.b16 %v3092, %v3088
        %v3281 = vpack.c.b16 %v3093, %v3089
        %v3282 = vpack.c.b16 %v3094, %v3090
        %v3283 = vpack.c.b16 %v3099, %v3095
        %v3284 = vpack.c.b16 %v3100, %v3096
        %v3285 = vpack.c.b16 %v3101, %v3097
        %v3286 = vpack.c.b16 %v3102, %v3098
        %v3287 = vpack.c.b16 %v3107, %v3103
        %v3288 = vpack.c.b16 %v3108, %v3104
        %v3289 = vpack.c.b16 %v3109, %v3105
        %v3290 = vpack.c.b16 %v3110, %v3106
        %v3291 = vpack.c.b16 %v3115, %v3111
        %v3292 = vpack.c.b16 %v3116, %v3112
        %v3293 = vpack.c.b16 %v3117, %v3113
        %v3294 = vpack.c.b16 %v3118, %v3114
        %v3295 = vpack.c.b16 %v3123, %v3119
        %v3296 = vpack.c.b16 %v3124, %v3120
        %v3297 = vpack.c.b16 %v3125, %v3121
        %v3298 = vpack.c.b16 %v3126, %v3122
        %v3299 = vpack.c.b16 %v3131, %v3127
        %v3300 = vpack.c.b16 %v3132, %v3128
        %v3301 = vpack.c.b16 %v3133, %v3129
        %v3302 = vpack.c.b16 %v3134, %v3130
        %v3303 = vpack.c.b16 %v3139, %v3135
        %v3304 = vpack.c.b16 %v3140, %v3136
        %v3305 = vpack.c.b16 %v3141, %v3137
        %v3306 = vpack.c.b16 %v3142, %v3138
        %v3307 = vpack.c.b16 %v3147, %v3143
        %v3308 = vpack.c.b16 %v3148, %v3144
        %v3309 = vpack.c.b16 %v3149, %v3145
        %v3310 = vpack.c.b16 %v3150, %v3146
        %3471 = vmatprep.subr.bf16.mxu0 %v3152
        %3472 = vmatpush1.bf16.msra.mxu0 %v3151
        %3473 = vmatprep.subr.bf16.mxu0 %v3156
        %3474 = vmatpush1.bf16.msra.mxu0 %v3155
        %3475 = vmatprep.subr.bf16.mxu0 %v3160
        %3476 = vmatpush1.bf16.msra.mxu0 %v3159
        %3477 = vmatprep.subr.bf16.mxu0 %v3164
        %3478 = vmatpush1.bf16.msra.mxu0 %v3163
        %3479 = vmatprep.subr.bf16.mxu0 %v3168
        %3480 = vmatpush1.bf16.msra.mxu0 %v3167
        %3481 = vmatprep.subr.bf16.mxu0 %v3172
        %3482 = vmatpush1.bf16.msra.mxu0 %v3171
        %3483 = vmatprep.subr.bf16.mxu0 %v3176
        %3484 = vmatpush1.bf16.msra.mxu0 %v3175
        %3485 = vmatprep.subr.bf16.mxu0 %v3180
        %3486 = vmatpush1.bf16.msra.mxu0 %v3179
        %3487 = vmatprep.subr.bf16.mxu0 %v3184
        %3488 = vmatpush1.bf16.msra.mxu0 %v3183
        %3489 = vmatprep.subr.bf16.mxu0 %v3188
        %3490 = vmatpush1.bf16.msra.mxu0 %v3187
        %3491 = vmatprep.subr.bf16.mxu0 %v3192
        %3492 = vmatpush1.bf16.msra.mxu0 %v3191
        %3493 = vmatprep.subr.bf16.mxu0 %v3196
        %3494 = vmatpush1.bf16.msra.mxu0 %v3195
        %3495 = vmatprep.subr.bf16.mxu0 %v3200
        %3496 = vmatpush1.bf16.msra.mxu0 %v3199
        %3497 = vmatprep.subr.bf16.mxu0 %v3204
        %3498 = vmatpush1.bf16.msra.mxu0 %v3203
        %3499 = vmatprep.subr.bf16.mxu0 %v3208
        %3500 = vmatpush1.bf16.msra.mxu0 %v3207
        %3501 = vmatprep.subr.bf16.mxu0 %v3212
        %3502 = vmatpush1.bf16.msra.mxu0 %v3211
        %3503 = vmatprep.mubr.bf16.mxu0 %v2507
        %3504 = vmatmul.mubr.bf16.gmra.mrb[0].mxu0 %v2506
        %v3505 = vpop.f32.mrb[0].mxu0
        %v3506 = vadd.f32 0.0, %v3505
        %v3507 = vpop.f32.mrb[0].mxu0
        %v3508 = vadd.f32 0.0, %v3507
        %v3509 = vpop.f32.mrb[0].mxu0
        %v3510 = vadd.f32 0.0, %v3509
        %v3511 = vpop.f32.mrb[0].mxu0
        %v3512 = vadd.f32 0.0, %v3511
        %3513 = vdwg.mxu0
        %3514 = vmatprep.subr.bf16.mxu0 %v3216
        %3515 = vmatpush1.bf16.msra.mxu0 %v3215
        %3516 = vmatprep.subr.bf16.mxu0 %v3220
        %3517 = vmatpush1.bf16.msra.mxu0 %v3219
        %3518 = vmatprep.subr.bf16.mxu0 %v3224
        %3519 = vmatpush1.bf16.msra.mxu0 %v3223
        %3520 = vmatprep.subr.bf16.mxu0 %v3228
        %3521 = vmatpush1.bf16.msra.mxu0 %v3227
        %3522 = vmatprep.subr.bf16.mxu0 %v3232
        %3523 = vmatpush1.bf16.msra.mxu0 %v3231
        %3524 = vmatprep.subr.bf16.mxu0 %v3236
        %3525 = vmatpush1.bf16.msra.mxu0 %v3235
        %3526 = vmatprep.subr.bf16.mxu0 %v3240
        %3527 = vmatpush1.bf16.msra.mxu0 %v3239
        %3528 = vmatprep.subr.bf16.mxu0 %v3244
        %3529 = vmatpush1.bf16.msra.mxu0 %v3243
        %3530 = vmatprep.subr.bf16.mxu0 %v3248
        %3531 = vmatpush1.bf16.msra.mxu0 %v3247
        %3532 = vmatprep.subr.bf16.mxu0 %v3252
        %3533 = vmatpush1.bf16.msra.mxu0 %v3251
        %3534 = vmatprep.subr.bf16.mxu0 %v3256
        %3535 = vmatpush1.bf16.msra.mxu0 %v3255
        %3536 = vmatprep.subr.bf16.mxu0 %v3260
        %3537 = vmatpush1.bf16.msra.mxu0 %v3259
        %3538 = vmatprep.subr.bf16.mxu0 %v3264
        %3539 = vmatpush1.bf16.msra.mxu0 %v3263
        %3540 = vmatprep.subr.bf16.mxu0 %v3268
        %3541 = vmatpush1.bf16.msra.mxu0 %v3267
        %3542 = vmatprep.subr.bf16.mxu0 %v3272
        %3543 = vmatpush1.bf16.msra.mxu0 %v3271
        %3544 = vmatprep.subr.bf16.mxu0 %v3276
        %3545 = vmatpush1.bf16.msra.mxu0 %v3275
        %3546 = vmatprep.mubr.bf16.mxu0 %v2509
        %3547 = vmatmul.mubr.bf16.gmra.mrb[0].mxu0 %v2508
        %v3548 = vpop.f32.mrb[0].mxu0
        %v3549 = vadd.f32 %v3506, %v3548
        %v3550 = vpop.f32.mrb[0].mxu0
        %v3551 = vadd.f32 %v3508, %v3550
        %v3552 = vpop.f32.mrb[0].mxu0
        %v3553 = vadd.f32 %v3510, %v3552
        %v3554 = vpop.f32.mrb[0].mxu0
        %v3555 = vadd.f32 %v3512, %v3554
        %3556 = vdwg.mxu0
        %3557 = vmatprep.subr.bf16.mxu0 %v3280
        %3558 = vmatpush1.bf16.msra.mxu0 %v3279
        %3559 = vmatprep.subr.bf16.mxu0 %v3284
        %3560 = vmatpush1.bf16.msra.mxu0 %v3283
        %3561 = vmatprep.subr.bf16.mxu0 %v3288
        %3562 = vmatpush1.bf16.msra.mxu0 %v3287
        %3563 = vmatprep.subr.bf16.mxu0 %v3292
        %3564 = vmatpush1.bf16.msra.mxu0 %v3291
        %3565 = vmatprep.subr.bf16.mxu0 %v3296
        %3566 = vmatpush1.bf16.msra.mxu0 %v3295
        %3567 = vmatprep.subr.bf16.mxu0 %v3300
        %3568 = vmatpush1.bf16.msra.mxu0 %v3299
        %3569 = vmatprep.subr.bf16.mxu0 %v3304
        %3570 = vmatpush1.bf16.msra.mxu0 %v3303
        %3571 = vmatprep.subr.bf16.mxu0 %v3308
        %3572 = vmatpush1.bf16.msra.mxu0 %v3307
        %3573 = vmatprep.subr.bf16.mxu0 0
        %3574 = vmatpush1.bf16.msra.mxu0 0
        %3575 = vmatprep.subr.bf16.mxu0 0
        %3576 = vmatpush1.bf16.msra.mxu0 0
        %3577 = vmatprep.subr.bf16.mxu0 0
        %3578 = vmatpush1.bf16.msra.mxu0 0
        %3579 = vmatprep.subr.bf16.mxu0 0
        %3580 = vmatpush1.bf16.msra.mxu0 0
        %3581 = vmatprep.subr.bf16.mxu0 0
        %3582 = vmatpush1.bf16.msra.mxu0 0
        %3583 = vmatprep.subr.bf16.mxu0 0
        %3584 = vmatpush1.bf16.msra.mxu0 0
        %3585 = vmatprep.subr.bf16.mxu0 0
        %3586 = vmatpush1.bf16.msra.mxu0 0
        %3587 = vmatprep.subr.bf16.mxu0 0
        %3588 = vmatpush1.bf16.msra.mxu0 0
        %3589 = vmatprep.mubr.bf16.mxu0 0
        %3590 = vmatmul.mubr.bf16.gmra.mrb[0].mxu0 %v2510
        %v3591 = vpop.f32.mrb[0].mxu0
        %v3592 = vadd.f32 %v3549, %v3591
        %v3593 = vpop.f32.mrb[0].mxu0
        %v3594 = vadd.f32 %v3551, %v3593
        %v3595 = vpop.f32.mrb[0].mxu0
        %v3596 = vadd.f32 %v3553, %v3595
        %v3597 = vpop.f32.mrb[0].mxu0
        %v3598 = vadd.f32 %v3555, %v3597
        %3599 = vdwg.mxu0
        %3600 = vmatprep.subr.bf16.mxu0 %v3154
        %3601 = vmatpush1.bf16.msra.mxu0 %v3153
        %3602 = vmatprep.subr.bf16.mxu0 %v3158
        %3603 = vmatpush1.bf16.msra.mxu0 %v3157
        %3604 = vmatprep.subr.bf16.mxu0 %v3162
        %3605 = vmatpush1.bf16.msra.mxu0 %v3161
        %3606 = vmatprep.subr.bf16.mxu0 %v3166
        %3607 = vmatpush1.bf16.msra.mxu0 %v3165
        %3608 = vmatprep.subr.bf16.mxu0 %v3170
        %3609 = vmatpush1.bf16.msra.mxu0 %v3169
        %3610 = vmatprep.subr.bf16.mxu0 %v3174
        %3611 = vmatpush1.bf16.msra.mxu0 %v3173
        %3612 = vmatprep.subr.bf16.mxu0 %v3178
        %3613 = vmatpush1.bf16.msra.mxu0 %v3177
        %3614 = vmatprep.subr.bf16.mxu0 %v3182
        %3615 = vmatpush1.bf16.msra.mxu0 %v3181
        %3616 = vmatprep.subr.bf16.mxu0 %v3186
        %3617 = vmatpush1.bf16.msra.mxu0 %v3185
        %3618 = vmatprep.subr.bf16.mxu0 %v3190
        %3619 = vmatpush1.bf16.msra.mxu0 %v3189
        %3620 = vmatprep.subr.bf16.mxu0 %v3194
        %3621 = vmatpush1.bf16.msra.mxu0 %v3193
        %3622 = vmatprep.subr.bf16.mxu0 %v3198
        %3623 = vmatpush1.bf16.msra.mxu0 %v3197
        %3624 = vmatprep.subr.bf16.mxu0 %v3202
        %3625 = vmatpush1.bf16.msra.mxu0 %v3201
        %3626 = vmatprep.subr.bf16.mxu0 %v3206
        %3627 = vmatpush1.bf16.msra.mxu0 %v3205
        %3628 = vmatprep.subr.bf16.mxu0 %v3210
        %3629 = vmatpush1.bf16.msra.mxu0 %v3209
        %3630 = vmatprep.subr.bf16.mxu0 %v3214
        %3631 = vmatpush1.bf16.msra.mxu0 %v3213
        %3632 = vmatprep.mubr.bf16.mxu0 %v2507
        %3633 = vmatmul.mubr.bf16.gmra.mrb[0].mxu0 %v2506
        %v3634 = vpop.f32.mrb[0].mxu0
        %v3635 = vadd.f32 0.0, %v3634
        %v3636 = vpop.f32.mrb[0].mxu0
        %v3637 = vadd.f32 0.0, %v3636
        %v3638 = vpop.f32.mrb[0].mxu0
        %v3639 = vadd.f32 0.0, %v3638
        %v3640 = vpop.f32.mrb[0].mxu0
        %v3641 = vadd.f32 0.0, %v3640
        %3642 = vdwg.mxu0
        %3643 = vmatprep.subr.bf16.mxu0 %v3218
        %3644 = vmatpush1.bf16.msra.mxu0 %v3217
        %3645 = vmatprep.subr.bf16.mxu0 %v3222
        %3646 = vmatpush1.bf16.msra.mxu0 %v3221
        %3647 = vmatprep.subr.bf16.mxu0 %v3226
        %3648 = vmatpush1.bf16.msra.mxu0 %v3225
        %3649 = vmatprep.subr.bf16.mxu0 %v3230
        %3650 = vmatpush1.bf16.msra.mxu0 %v3229
        %3651 = vmatprep.subr.bf16.mxu0 %v3234
        %3652 = vmatpush1.bf16.msra.mxu0 %v3233
        %3653 = vmatprep.subr.bf16.mxu0 %v3238
        %3654 = vmatpush1.bf16.msra.mxu0 %v3237
        %3655 = vmatprep.subr.bf16.mxu0 %v3242
        %3656 = vmatpush1.bf16.msra.mxu0 %v3241
        %3657 = vmatprep.subr.bf16.mxu0 %v3246
        %3658 = vmatpush1.bf16.msra.mxu0 %v3245
        %3659 = vmatprep.subr.bf16.mxu0 %v3250
        %3660 = vmatpush1.bf16.msra.mxu0 %v3249
        %3661 = vmatprep.subr.bf16.mxu0 %v3254
        %3662 = vmatpush1.bf16.msra.mxu0 %v3253
        %3663 = vmatprep.subr.bf16.mxu0 %v3258
        %3664 = vmatpush1.bf16.msra.mxu0 %v3257
        %3665 = vmatprep.subr.bf16.mxu0 %v3262
        %3666 = vmatpush1.bf16.msra.mxu0 %v3261
        %3667 = vmatprep.subr.bf16.mxu0 %v3266
        %3668 = vmatpush1.bf16.msra.mxu0 %v3265
        %3669 = vmatprep.subr.bf16.mxu0 %v3270
        %3670 = vmatpush1.bf16.msra.mxu0 %v3269
        %3671 = vmatprep.subr.bf16.mxu0 %v3274
        %3672 = vmatpush1.bf16.msra.mxu0 %v3273
        %3673 = vmatprep.subr.bf16.mxu0 %v3278
        %3674 = vmatpush1.bf16.msra.mxu0 %v3277
        %3675 = vmatprep.mubr.bf16.mxu0 %v2509
        %3676 = vmatmul.mubr.bf16.gmra.mrb[0].mxu0 %v2508
        %v3677 = vpop.f32.mrb[0].mxu0
        %v3678 = vadd.f32 %v3635, %v3677
        %v3679 = vpop.f32.mrb[0].mxu0
        %v3680 = vadd.f32 %v3637, %v3679
        %v3681 = vpop.f32.mrb[0].mxu0
        %v3682 = vadd.f32 %v3639, %v3681
        %v3683 = vpop.f32.mrb[0].mxu0
        %v3684 = vadd.f32 %v3641, %v3683
        %3685 = vdwg.mxu0
        %3686 = vmatprep.subr.bf16.mxu0 %v3282
        %3687 = vmatpush1.bf16.msra.mxu0 %v3281
        %3688 = vmatprep.subr.bf16.mxu0 %v3286
        %3689 = vmatpush1.bf16.msra.mxu0 %v3285
        %3690 = vmatprep.subr.bf16.mxu0 %v3290
        %3691 = vmatpush1.bf16.msra.mxu0 %v3289
        %3692 = vmatprep.subr.bf16.mxu0 %v3294
        %3693 = vmatpush1.bf16.msra.mxu0 %v3293
        %3694 = vmatprep.subr.bf16.mxu0 %v3298
        %3695 = vmatpush1.bf16.msra.mxu0 %v3297
        %3696 = vmatprep.subr.bf16.mxu0 %v3302
        %3697 = vmatpush1.bf16.msra.mxu0 %v3301
        %3698 = vmatprep.subr.bf16.mxu0 %v3306
        %3699 = vmatpush1.bf16.msra.mxu0 %v3305
        %3700 = vmatprep.subr.bf16.mxu0 %v3310
        %3701 = vmatpush1.bf16.msra.mxu0 %v3309
        %3702 = vmatprep.subr.bf16.mxu0 0
        %3703 = vmatpush1.bf16.msra.mxu0 0
        %3704 = vmatprep.subr.bf16.mxu0 0
        %3705 = vmatpush1.bf16.msra.mxu0 0
        %3706 = vmatprep.subr.bf16.mxu0 0
        %3707 = vmatpush1.bf16.msra.mxu0 0
        %3708 = vmatprep.subr.bf16.mxu0 0
        %3709 = vmatpush1.bf16.msra.mxu0 0
        %3710 = vmatprep.subr.bf16.mxu0 0
        %3711 = vmatpush1.bf16.msra.mxu0 0
        %3712 = vmatprep.subr.bf16.mxu0 0
        %3713 = vmatpush1.bf16.msra.mxu0 0
        %3714 = vmatprep.subr.bf16.mxu0 0
        %3715 = vmatpush1.bf16.msra.mxu0 0
        %3716 = vmatprep.subr.bf16.mxu0 0
        %3717 = vmatpush1.bf16.msra.mxu0 0
        %3718 = vmatprep.mubr.bf16.mxu0 0
        %3719 = vmatmul.mubr.bf16.gmra.mrb[0].mxu0 %v2510
        %v3720 = vpop.f32.mrb[0].mxu0
        %v3721 = vadd.f32 %v3678, %v3720
        %v3722 = vpop.f32.mrb[0].mxu0
        %v3723 = vadd.f32 %v3680, %v3722
        %v3724 = vpop.f32.mrb[0].mxu0
        %v3725 = vadd.f32 %v3682, %v3724
        %v3726 = vpop.f32.mrb[0].mxu0
        %v3727 = vadd.f32 %v3684, %v3726
        %3728 = vdwg.mxu0
        %v3729 = vmax.f32 %v3592, %v3721
        %v3730 = vmax.f32 %v3594, %v3723
        %v3731 = vmax.f32 %v3596, %v3725
        %v3732 = vmax.f32 %v3598, %v3727
        %v3733 = vld [vmem:[%s6] sm:$0x3]
        %v3735 = vlaneseq
        %v3736 = vshrl.u32 %v3735, 7
        %v3737 = vsub.s32 0, %v3736
        %v3738 = vrot.slane %v3733, %v3737
        %v3739 = vlaneseq
        %v3740 = vshrl.u32 %v3739, 7
        %v3741 = vsub.s32 1, %v3740
        %v3742 = vrot.slane %v3733, %v3741
        %v3745 = vadd.f32 %v3729, %v3738
        %v3746 = vadd.f32 %v3730, %v3742
        %v3747 = vadd.f32 %v3731, %v3738
        %v3748 = vadd.f32 %v3732, %v3742
        %v3749 = vmax.f32 %v3745, 0.0
        %v3750 = vmax.f32 %v3746, 0.0
        %v3751 = vmax.f32 %v3747, 0.0
        %v3752 = vmax.f32 %v3748, 0.0
        %v3753 = vld [vmem:[#allocation3] sm:$0xf]
        %v3754 = vld [vmem:[#allocation3 + $0x4] sm:$0x1]
        %v3755 = vpack.c.bf16 %v3751, %v3749
        %v3756 = vpack.c.bf16 %v3752, %v3750
        %v3759 = vunpack.c.l.b16 %v3753
        %v3760 = vunpack.c.l.b16 %v3754
        %v3761 = vpack.c.b16 %v3760, %v3759
        %v3763 = vsel %vm2107, %v3761, 0
        %v3766 = vsel %vm839, %v3755, 0
        %v3769 = vsel %vm839, %v3756, 0
        %3771 = vmatprep.subr.bf16.mxu0 %v3769
        %3772 = vmatpush1.bf16.msra.mxu0 %v3766
        %3773 = vmatprep.subr.bf16.mxu0 0
        %3774 = vmatpush1.bf16.msra.mxu0 0
        %3775 = vmatprep.subr.bf16.mxu0 0
        %3776 = vmatpush1.bf16.msra.mxu0 0
        %3777 = vmatprep.subr.bf16.mxu0 0
        %3778 = vmatpush1.bf16.msra.mxu0 0
        %3779 = vmatprep.subr.bf16.mxu0 0
        %3780 = vmatpush1.bf16.msra.mxu0 0
        %3781 = vmatprep.subr.bf16.mxu0 0
        %3782 = vmatpush1.bf16.msra.mxu0 0
        %3783 = vmatprep.subr.bf16.mxu0 0
        %3784 = vmatpush1.bf16.msra.mxu0 0
        %3785 = vmatprep.subr.bf16.mxu0 0
        %3786 = vmatpush1.bf16.msra.mxu0 0
        %3787 = vmatprep.subr.bf16.mxu0 0
        %3788 = vmatpush1.bf16.msra.mxu0 0
        %3789 = vmatprep.subr.bf16.mxu0 0
        %3790 = vmatpush1.bf16.msra.mxu0 0
        %3791 = vmatprep.subr.bf16.mxu0 0
        %3792 = vmatpush1.bf16.msra.mxu0 0
        %3793 = vmatprep.subr.bf16.mxu0 0
        %3794 = vmatpush1.bf16.msra.mxu0 0
        %3795 = vmatprep.subr.bf16.mxu0 0
        %3796 = vmatpush1.bf16.msra.mxu0 0
        %3797 = vmatprep.subr.bf16.mxu0 0
        %3798 = vmatpush1.bf16.msra.mxu0 0
        %3799 = vmatprep.subr.bf16.mxu0 0
        %3800 = vmatpush1.bf16.msra.mxu0 0
        %3801 = vmatprep.subr.bf16.mxu0 0
        %3802 = vmatpush1.bf16.msra.mxu0 0
        %3803 = vmatprep.mubr.bf16.mxu0 0
        %3804 = vmatmul.mubr.bf16.gmra.mrb[0].mxu0 %v3763
        %v3805 = vpop.f32.mrb[0].mxu0
        %v3806 = vadd.f32 0.0, %v3805
        %v3807 = vpop.f32.mrb[0].mxu0
        %v3808 = vadd.f32 0.0, %v3807
        %v3809 = vpop.f32.mrb[0].mxu0
        %v3810 = vadd.f32 0.0, %v3809
        %v3811 = vpop.f32.mrb[0].mxu0
        %v3812 = vadd.f32 0.0, %v3811
        %3813 = vdwg.mxu0
        %v3818 = vrot.slane %v3806, 5
        %v3819 = vrot.slane %v3810, 5
        %v3820 = vsel %vm2164, %v3818, %v3819
        %v3821 = vrot.slane %v3808, 5
        %v3822 = vrot.slane %v3812, 5
        %v3823 = vsel %vm2164, %v3821, %v3822
        %v3826 = vmax.f32 %v3806, %v3820
        %v3827 = vmax.f32 %v3808, %v3823
        %s3828 = scalar_lea.vmem [#allocation2], 16
        %3829 = vst [vmem:[%s3828] sm:$0x1f] %v3826
        %3830 = vst [vmem:[%s3828 + $0x8] sm:$0x1f] %v3827
        %s3831 = scalar_lea.vmem %s513, 64
        %v3832 = vld [vmem:[%s3831] sm:$0xff]
        %v3833 = vld [vmem:[%s3831 + $0x8] sm:$0xff]
        %v3834 = vld [vmem:[%s3831 + $0x10] sm:$0xff]
        %v3835 = vld [vmem:[%s3831 + $0x18] sm:$0x33]
        %v3836 = vld [vmem:[#allocation6] sm:$0xff]
        %v3837 = vld [vmem:[#allocation6 + $0x8] sm:$0xff]
        %v3838 = vld [vmem:[#allocation6 + $0x10] sm:$0xff]
        %v3839 = vld [vmem:[#allocation6 + $0x18] sm:$0xff]
        %v3840 = vld [vmem:[#allocation6 + $0x20] sm:$0xff]
        %v3841 = vld [vmem:[#allocation6 + $0x28] sm:$0xff]
        %v3842 = vld [vmem:[#allocation6 + $0x30] sm:$0xff]
        %v3843 = vld [vmem:[#allocation6 + $0x38] sm:$0xff]
        %v3844 = vld [vmem:[#allocation6 + $0x40] sm:$0xff]
        %v3845 = vld [vmem:[#allocation6 + $0x48] sm:$0xff]
        %v3846 = vld [vmem:[#allocation6 + $0x50] sm:$0xff]
        %v3847 = vld [vmem:[#allocation6 + $0x58] sm:$0xff]
        %v3848 = vld [vmem:[#allocation6 + $0x60] sm:$0xff]
        %v3849 = vld [vmem:[#allocation6 + $0x68] sm:$0xff]
        %v3850 = vld [vmem:[#allocation6 + $0x70] sm:$0xff]
        %v3851 = vld [vmem:[#allocation6 + $0x78] sm:$0xff]
        %v3852 = vld [vmem:[#allocation6 + $0x80] sm:$0xff]
        %v3853 = vld [vmem:[#allocation6 + $0x88] sm:$0xff]
        %v3854 = vld [vmem:[#allocation6 + $0x90] sm:$0xff]
        %v3855 = vld [vmem:[#allocation6 + $0x98] sm:$0xff]
        %v3860 = vunpack.c.l.b16 %v3832
        %v3861 = vunpack.c.h.b16 %v3832
        %v3862 = vunpack.c.l.b16 %v3833
        %v3863 = vunpack.c.h.b16 %v3833
        %v3864 = vunpack.c.l.b16 %v3834
        %v3865 = vunpack.c.h.b16 %v3834
        %v3866 = vunpack.c.l.b16 %v3835
        %v3867 = vunpack.c.h.b16 %v3835
        %v3868 = vpack.c.b16 %v3862, %v3860
        %v3869 = vpack.c.b16 %v3863, %v3861
        %v3870 = vpack.c.b16 %v3866, %v3864
        %v3871 = vpack.c.b16 %v3867, %v3865
        %v3894 = vunpack.c.l.b16 %v3836
        %v3895 = vunpack.c.h.b16 %v3836
        %v3896 = vunpack.c.l.b16 %v3837
        %v3897 = vunpack.c.h.b16 %v3837
        %v3898 = vunpack.c.l.b16 %v3838
        %v3899 = vunpack.c.h.b16 %v3838
        %v3900 = vunpack.c.l.b16 %v3839
        %v3901 = vunpack.c.h.b16 %v3839
        %v3902 = vunpack.c.l.b16 %v3840
        %v3903 = vunpack.c.h.b16 %v3840
        %v3904 = vunpack.c.l.b16 %v3841
        %v3905 = vunpack.c.h.b16 %v3841
        %v3906 = vunpack.c.l.b16 %v3842
        %v3907 = vunpack.c.h.b16 %v3842
        %v3908 = vunpack.c.l.b16 %v3843
        %v3909 = vunpack.c.h.b16 %v3843
        %v3910 = vunpack.c.l.b16 %v3844
        %v3911 = vunpack.c.h.b16 %v3844
        %v3912 = vunpack.c.l.b16 %v3845
        %v3913 = vunpack.c.h.b16 %v3845
        %v3914 = vunpack.c.l.b16 %v3846
        %v3915 = vunpack.c.h.b16 %v3846
        %v3916 = vunpack.c.l.b16 %v3847
        %v3917 = vunpack.c.h.b16 %v3847
        %v3918 = vunpack.c.l.b16 %v3848
        %v3919 = vunpack.c.h.b16 %v3848
        %v3920 = vunpack.c.l.b16 %v3849
        %v3921 = vunpack.c.h.b16 %v3849
        %v3922 = vunpack.c.l.b16 %v3850
        %v3923 = vunpack.c.h.b16 %v3850
        %v3924 = vunpack.c.l.b16 %v3851
        %v3925 = vunpack.c.h.b16 %v3851
        %v3926 = vunpack.c.l.b16 %v3852
        %v3927 = vunpack.c.h.b16 %v3852
        %v3928 = vunpack.c.l.b16 %v3853
        %v3929 = vunpack.c.h.b16 %v3853
        %v3930 = vunpack.c.l.b16 %v3854
        %v3931 = vunpack.c.h.b16 %v3854
        %v3932 = vunpack.c.l.b16 %v3855
        %v3933 = vunpack.c.h.b16 %v3855
        %v3934 = vpack.c.b16 %v3896, %v3894
        %v3935 = vpack.c.b16 %v3897, %v3895
        %v3936 = vpack.c.b16 %v3900, %v3898
        %v3937 = vpack.c.b16 %v3901, %v3899
        %v3938 = vpack.c.b16 %v3904, %v3902
        %v3939 = vpack.c.b16 %v3905, %v3903
        %v3940 = vpack.c.b16 %v3908, %v3906
        %v3941 = vpack.c.b16 %v3909, %v3907
        %v3942 = vpack.c.b16 %v3912, %v3910
        %v3943 = vpack.c.b16 %v3913, %v3911
        %v3944 = vpack.c.b16 %v3916, %v3914
        %v3945 = vpack.c.b16 %v3917, %v3915
        %v3946 = vpack.c.b16 %v3920, %v3918
        %v3947 = vpack.c.b16 %v3921, %v3919
        %v3948 = vpack.c.b16 %v3924, %v3922
        %v3949 = vpack.c.b16 %v3925, %v3923
        %v3950 = vpack.c.b16 %v3928, %v3926
        %v3951 = vpack.c.b16 %v3929, %v3927
        %v3952 = vpack.c.b16 %v3932, %v3930
        %v3953 = vpack.c.b16 %v3933, %v3931
        %v3975 = vsel %vm658, %v3869, 0
        %v3978 = vsel %vm658, %v3871, 0
        %3980 = vmatprep.subr.bf16.mxu0 %v3935
        %3981 = vmatpush1.bf16.msra.mxu0 %v3934
        %3982 = vmatprep.subr.bf16.mxu0 %v3937
        %3983 = vmatpush1.bf16.msra.mxu0 %v3936
        %3984 = vmatprep.subr.bf16.mxu0 %v3939
        %3985 = vmatpush1.bf16.msra.mxu0 %v3938
        %3986 = vmatprep.subr.bf16.mxu0 %v3941
        %3987 = vmatpush1.bf16.msra.mxu0 %v3940
        %3988 = vmatprep.subr.bf16.mxu0 %v3943
        %3989 = vmatpush1.bf16.msra.mxu0 %v3942
        %3990 = vmatprep.subr.bf16.mxu0 %v3945
        %3991 = vmatpush1.bf16.msra.mxu0 %v3944
        %3992 = vmatprep.subr.bf16.mxu0 %v3947
        %3993 = vmatpush1.bf16.msra.mxu0 %v3946
        %3994 = vmatprep.subr.bf16.mxu0 %v3949
        %3995 = vmatpush1.bf16.msra.mxu0 %v3948
        %3996 = vmatprep.subr.bf16.mxu0 %v3951
        %3997 = vmatpush1.bf16.msra.mxu0 %v3950
        %3998 = vmatprep.subr.bf16.mxu0 %v3953
        %3999 = vmatpush1.bf16.msra.mxu0 %v3952
        %4000 = vmatprep.subr.bf16.mxu0 0
        %4001 = vmatpush1.bf16.msra.mxu0 0
        %4002 = vmatprep.subr.bf16.mxu0 0
        %4003 = vmatpush1.bf16.msra.mxu0 0
        %4004 = vmatprep.subr.bf16.mxu0 0
        %4005 = vmatpush1.bf16.msra.mxu0 0
        %4006 = vmatprep.subr.bf16.mxu0 0
        %4007 = vmatpush1.bf16.msra.mxu0 0
        %4008 = vmatprep.subr.bf16.mxu0 0
        %4009 = vmatpush1.bf16.msra.mxu0 0
        %4010 = vmatprep.subr.bf16.mxu0 0
        %4011 = vmatpush1.bf16.msra.mxu0 0
        %4012 = vmatprep.mubr.bf16.mxu0 %v3975
        %4013 = vmatmul.mubr.bf16.gmra.mrb[0].mxu0 %v3868
        %v4014 = vpop.f32.mrb[0].mxu0
        %v4015 = vadd.f32 0.0, %v4014
        %v4016 = vpop.f32.mrb[0].mxu0
        %v4017 = vadd.f32 0.0, %v4016
        %v4018 = vpop.f32.mrb[0].mxu0
        %v4019 = vadd.f32 0.0, %v4018
        %v4020 = vpop.f32.mrb[0].mxu0
        %v4021 = vadd.f32 0.0, %v4020
        %4022 = vmatprep.mubr.bf16.mxu0 %v3978
        %4023 = vmatmul.mubr.bf16.gmra.mrb[0].mxu0 %v3870
        %v4024 = vpop.f32.mrb[0].mxu0
        %v4025 = vadd.f32 0.0, %v4024
        %v4026 = vpop.f32.mrb[0].mxu0
        %v4027 = vadd.f32 0.0, %v4026
        %v4028 = vpop.f32.mrb[0].mxu0
        %v4029 = vadd.f32 0.0, %v4028
        %v4030 = vpop.f32.mrb[0].mxu0
        %v4031 = vadd.f32 0.0, %v4030
        %4032 = vdwg.mxu0
        %v4033 = vmax.f32 %v4015, %v4017
        %v4034 = vmax.f32 %v4019, %v4021
        %v4035 = vmax.f32 %v4025, %v4027
        %v4036 = vmax.f32 %v4029, %v4031
        %v4037 = vld [vmem:[#allocation8] sm:$0x1]
        %v4039 = vlaneseq
        %v4040 = vshrl.u32 %v4039, 7
        %v4041 = vsub.s32 0, %v4040
        %v4042 = vrot.slane %v4037, %v4041
        %v4044 = vadd.f32 %v4033, %v4042
        %v4045 = vadd.f32 %v4034, %v4042
        %v4046 = vadd.f32 %v4035, %v4042
        %v4047 = vadd.f32 %v4036, %v4042
        %v4048 = vmax.f32 %v4044, 0.0
        %v4049 = vmax.f32 %v4045, 0.0
        %v4050 = vmax.f32 %v4046, 0.0
        %v4051 = vmax.f32 %v4047, 0.0
        %v4052 = vld [vmem:[%s1] sm:$0xf]
        %v4053 = vld [vmem:[%s1 + $0x4] sm:$0xf]
        %v4054 = vld [vmem:[%s1 + $0x8] sm:$0xf]
        %v4055 = vld [vmem:[%s1 + $0xc] sm:$0x3]
        %v4056 = vpack.c.bf16 %v4049, %v4048
        %v4057 = vpack.c.bf16 %v4051, %v4050
        %v4062 = vunpack.c.l.b16 %v4052
        %v4063 = vunpack.c.l.b16 %v4053
        %v4064 = vunpack.c.l.b16 %v4054
        %v4065 = vunpack.c.l.b16 %v4055
        %v4066 = vpack.c.b16 %v4063, %v4062
        %v4067 = vpack.c.b16 %v4065, %v4064
        %v4069 = vsel %vm753, %v4066, 0
        %v4072 = vsel %vm753, %v4067, 0
        %v4075 = vsel %vm760, %v4057, 0
        %4077 = vmatprep.subr.bf16.mxu0 0
        %4078 = vmatpush1.bf16.msra.mxu0 %v4056
        %4079 = vmatprep.subr.bf16.mxu0 0
        %4080 = vmatpush1.bf16.msra.mxu0 %v4075
        %4081 = vmatprep.subr.bf16.mxu0 0
        %4082 = vmatpush1.bf16.msra.mxu0 0
        %4083 = vmatprep.subr.bf16.mxu0 0
        %4084 = vmatpush1.bf16.msra.mxu0 0
        %4085 = vmatprep.subr.bf16.mxu0 0
        %4086 = vmatpush1.bf16.msra.mxu0 0
        %4087 = vmatprep.subr.bf16.mxu0 0
        %4088 = vmatpush1.bf16.msra.mxu0 0
        %4089 = vmatprep.subr.bf16.mxu0 0
        %4090 = vmatpush1.bf16.msra.mxu0 0
        %4091 = vmatprep.subr.bf16.mxu0 0
        %4092 = vmatpush1.bf16.msra.mxu0 0
        %4093 = vmatprep.subr.bf16.mxu0 0
        %4094 = vmatpush1.bf16.msra.mxu0 0
        %4095 = vmatprep.subr.bf16.mxu0 0
        %4096 = vmatpush1.bf16.msra.mxu0 0
        %4097 = vmatprep.subr.bf16.mxu0 0
        %4098 = vmatpush1.bf16.msra.mxu0 0
        %4099 = vmatprep.subr.bf16.mxu0 0
        %4100 = vmatpush1.bf16.msra.mxu0 0
        %4101 = vmatprep.subr.bf16.mxu0 0
        %4102 = vmatpush1.bf16.msra.mxu0 0
        %4103 = vmatprep.subr.bf16.mxu0 0
        %4104 = vmatpush1.bf16.msra.mxu0 0
        %4105 = vmatprep.subr.bf16.mxu0 0
        %4106 = vmatpush1.bf16.msra.mxu0 0
        %4107 = vmatprep.subr.bf16.mxu0 0
        %4108 = vmatpush1.bf16.msra.mxu0 0
        %4109 = vmatprep.mubr.bf16.mxu0 0
        %4110 = vmatmul.mubr.bf16.gmra.mrb[0].mxu0 %v4069
        %v4111 = vpop.f32.mrb[0].mxu0
        %v4112 = vadd.f32 0.0, %v4111
        %v4113 = vpop.f32.mrb[0].mxu0
        %v4114 = vpop.f32.mrb[0].mxu0
        %v4115 = vadd.f32 0.0, %v4114
        %v4116 = vpop.f32.mrb[0].mxu0
        %4117 = vmatprep.mubr.bf16.mxu0 0
        %4118 = vmatmul.mubr.bf16.gmra.mrb[0].mxu0 %v4072
        %v4119 = vpop.f32.mrb[0].mxu0
        %v4120 = vadd.f32 0.0, %v4119
        %v4121 = vpop.f32.mrb[0].mxu0
        %v4122 = vpop.f32.mrb[0].mxu0
        %v4123 = vadd.f32 0.0, %v4122
        %v4124 = vpop.f32.mrb[0].mxu0
        %4125 = vdwg.mxu0
        %v4129 = vrot.slane %v4115, 6
        %v4130 = vrot.slane %v4120, 6
        %v4131 = vsel %vm816, %v4129, %v4130
        %v4132 = vrot.slane %v4123, 6
        %v4133 = vsel %vm816, %v4130, %v4132
        %v4136 = vmax.f32 %v4112, %v4131
        %v4137 = vmax.f32 %v4115, %v4133
        %v4140 = vrot.slane %v4136, 1
        %v4141 = vrot.slane %v4137, 1
        %v4142 = vsel %vm828, %v4140, %v4141
        %v4145 = vrot.slane %v4136, 2
        %v4146 = vrot.slane %v4137, 2
        %v4147 = vsel %vm760, %v4145, %v4146
        %v4150 = vrot.slane %v4136, 3
        %v4151 = vrot.slane %v4137, 3
        %v4152 = vsel %vm839, %v4150, %v4151
        %v4155 = vrot.slane %v4136, 4
        %v4156 = vrot.slane %v4137, 4
        %v4157 = vsel %vm845, %v4155, %v4156
        %v4160 = vpack.c.bf16 %v4137, %v4136
        %v4161 = vpack.c.bf16 %v4141, %v4142
        %v4162 = vpack.c.bf16 %v4146, %v4147
        %v4163 = vpack.c.bf16 %v4151, %v4152
        %v4164 = vpack.c.bf16 %v4156, %v4157
        %v4165 = vld [vmem:[%s5] sm:$0xff]
        %v4166 = vld [vmem:[%s5 + $0x8] sm:$0xff]
        %v4167 = vld [vmem:[%s5 + $0x10] sm:$0xff]
        %v4168 = vld [vmem:[%s5 + $0x18] sm:$0xff]
        %v4169 = vld [vmem:[%s5 + $0x20] sm:$0xff]
        %v4170 = vld [vmem:[%s5 + $0x28] sm:$0xff]
        %v4171 = vld [vmem:[%s5 + $0x30] sm:$0xff]
        %v4172 = vld [vmem:[%s5 + $0x38] sm:$0xff]
        %v4173 = vld [vmem:[%s5 + $0x40] sm:$0xff]
        %v4174 = vld [vmem:[%s5 + $0x48] sm:$0xff]
        %v4175 = vld [vmem:[%s5 + $0x50] sm:$0xff]
        %v4176 = vld [vmem:[%s5 + $0x58] sm:$0xff]
        %v4177 = vld [vmem:[%s5 + $0x60] sm:$0xff]
        %v4178 = vld [vmem:[%s5 + $0x68] sm:$0xff]
        %v4179 = vld [vmem:[%s5 + $0x70] sm:$0xff]
        %v4180 = vld [vmem:[%s5 + $0x78] sm:$0xff]
        %v4181 = vld [vmem:[%s5 + $0x80] sm:$0xff]
        %v4182 = vld [vmem:[%s5 + $0x88] sm:$0xff]
        %v4183 = vld [vmem:[%s5 + $0x90] sm:$0xff]
        %v4184 = vld [vmem:[%s5 + $0x98] sm:$0xff]
        %v4185 = vld [vmem:[%s5 + $0xa0] sm:$0xff]
        %v4186 = vld [vmem:[%s5 + $0xa8] sm:$0xff]
        %v4187 = vld [vmem:[%s5 + $0xb0] sm:$0xff]
        %v4188 = vld [vmem:[%s5 + $0xb8] sm:$0xff]
        %v4189 = vld [vmem:[%s5 + $0xc0] sm:$0xff]
        %v4190 = vld [vmem:[%s5 + $0xc8] sm:$0xff]
        %v4191 = vld [vmem:[%s5 + $0xd0] sm:$0xff]
        %v4192 = vld [vmem:[%s5 + $0xd8] sm:$0xff]
        %v4193 = vld [vmem:[%s5 + $0xe0] sm:$0xff]
        %v4194 = vld [vmem:[%s5 + $0xe8] sm:$0xff]
        %v4195 = vld [vmem:[%s5 + $0xf0] sm:$0xff]
        %v4196 = vld [vmem:[%s5 + $0xf8] sm:$0xff]
        %v4197 = vld [vmem:[%s5 + $0x100] sm:$0xff]
        %v4198 = vld [vmem:[%s5 + $0x108] sm:$0xff]
        %v4199 = vld [vmem:[%s5 + $0x110] sm:$0xff]
        %v4200 = vld [vmem:[%s5 + $0x118] sm:$0xff]
        %v4201 = vld [vmem:[%s5 + $0x120] sm:$0xff]
        %v4202 = vld [vmem:[%s5 + $0x128] sm:$0xff]
        %v4203 = vld [vmem:[%s5 + $0x130] sm:$0xff]
        %v4204 = vld [vmem:[%s5 + $0x138] sm:$0xff]
        %v4205 = vld [vmem:[%s5 + $0x140] sm:$0xff]
        %v4206 = vld [vmem:[%s5 + $0x148] sm:$0xff]
        %v4207 = vld [vmem:[%s5 + $0x150] sm:$0xff]
        %v4208 = vld [vmem:[%s5 + $0x158] sm:$0xff]
        %v4209 = vld [vmem:[%s5 + $0x160] sm:$0xff]
        %v4210 = vld [vmem:[%s5 + $0x168] sm:$0xff]
        %v4211 = vld [vmem:[%s5 + $0x170] sm:$0xff]
        %v4212 = vld [vmem:[%s5 + $0x178] sm:$0xff]
        %v4213 = vld [vmem:[%s5 + $0x180] sm:$0xff]
        %v4214 = vld [vmem:[%s5 + $0x188] sm:$0xff]
        %v4215 = vld [vmem:[%s5 + $0x190] sm:$0xff]
        %v4216 = vld [vmem:[%s5 + $0x198] sm:$0xff]
        %v4217 = vld [vmem:[%s5 + $0x1a0] sm:$0xff]
        %v4218 = vld [vmem:[%s5 + $0x1a8] sm:$0xff]
        %v4219 = vld [vmem:[%s5 + $0x1b0] sm:$0xff]
        %v4220 = vld [vmem:[%s5 + $0x1b8] sm:$0xff]
        %v4221 = vld [vmem:[%s5 + $0x1c0] sm:$0xff]
        %v4222 = vld [vmem:[%s5 + $0x1c8] sm:$0xff]
        %v4223 = vld [vmem:[%s5 + $0x1d0] sm:$0xff]
        %v4224 = vld [vmem:[%s5 + $0x1d8] sm:$0xff]
        %v4225 = vld [vmem:[%s5 + $0x1e0] sm:$0xff]
        %v4226 = vld [vmem:[%s5 + $0x1e8] sm:$0xff]
        %v4227 = vld [vmem:[%s5 + $0x1f0] sm:$0xff]
        %v4228 = vld [vmem:[%s5 + $0x1f8] sm:$0xff]
        %v4229 = vld [vmem:[%s5 + $0x200] sm:$0xff]
        %v4230 = vld [vmem:[%s5 + $0x208] sm:$0xff]
        %v4231 = vld [vmem:[%s5 + $0x210] sm:$0xff]
        %v4232 = vld [vmem:[%s5 + $0x218] sm:$0xff]
        %v4233 = vld [vmem:[%s5 + $0x220] sm:$0xff]
        %v4234 = vld [vmem:[%s5 + $0x228] sm:$0xff]
        %v4235 = vld [vmem:[%s5 + $0x230] sm:$0xff]
        %v4236 = vld [vmem:[%s5 + $0x238] sm:$0xff]
        %v4237 = vld [vmem:[%s5 + $0x240] sm:$0xff]
        %v4238 = vld [vmem:[%s5 + $0x248] sm:$0xff]
        %v4239 = vld [vmem:[%s5 + $0x250] sm:$0xff]
        %v4240 = vld [vmem:[%s5 + $0x258] sm:$0xff]
        %v4241 = vld [vmem:[%s5 + $0x260] sm:$0xff]
        %v4242 = vld [vmem:[%s5 + $0x268] sm:$0xff]
        %v4243 = vld [vmem:[%s5 + $0x270] sm:$0xff]
        %v4244 = vld [vmem:[%s5 + $0x278] sm:$0xff]
        %v4245 = vld [vmem:[%s5 + $0x280] sm:$0xff]
        %v4246 = vld [vmem:[%s5 + $0x288] sm:$0xff]
        %v4247 = vld [vmem:[%s5 + $0x290] sm:$0xff]
        %v4248 = vld [vmem:[%s5 + $0x298] sm:$0xff]
        %v4249 = vld [vmem:[%s5 + $0x2a0] sm:$0xff]
        %v4250 = vld [vmem:[%s5 + $0x2a8] sm:$0xff]
        %v4251 = vld [vmem:[%s5 + $0x2b0] sm:$0xff]
        %v4252 = vld [vmem:[%s5 + $0x2b8] sm:$0xff]
        %v4253 = vld [vmem:[%s5 + $0x2c0] sm:$0xff]
        %v4254 = vld [vmem:[%s5 + $0x2c8] sm:$0xff]
        %v4255 = vld [vmem:[%s5 + $0x2d0] sm:$0xff]
        %v4256 = vld [vmem:[%s5 + $0x2d8] sm:$0xff]
        %v4257 = vld [vmem:[%s5 + $0x2e0] sm:$0xff]
        %v4258 = vld [vmem:[%s5 + $0x2e8] sm:$0xff]
        %v4259 = vld [vmem:[%s5 + $0x2f0] sm:$0xff]
        %v4260 = vld [vmem:[%s5 + $0x2f8] sm:$0xff]
        %v4261 = vld [vmem:[%s5 + $0x300] sm:$0xff]
        %v4262 = vld [vmem:[%s5 + $0x308] sm:$0xff]
        %v4263 = vld [vmem:[%s5 + $0x310] sm:$0xff]
        %v4264 = vld [vmem:[%s5 + $0x318] sm:$0xff]
        %v4265 = vld [vmem:[%s5 + $0x320] sm:$0xff]
        %v4266 = vld [vmem:[%s5 + $0x328] sm:$0xff]
        %v4267 = vld [vmem:[%s5 + $0x330] sm:$0xff]
        %v4268 = vld [vmem:[%s5 + $0x338] sm:$0xff]
        %v4269 = vld [vmem:[%s5 + $0x340] sm:$0xff]
        %v4270 = vld [vmem:[%s5 + $0x348] sm:$0xff]
        %v4271 = vld [vmem:[%s5 + $0x350] sm:$0xff]
        %v4272 = vld [vmem:[%s5 + $0x358] sm:$0xff]
        %v4273 = vld [vmem:[%s5 + $0x360] sm:$0xff]
        %v4274 = vld [vmem:[%s5 + $0x368] sm:$0xff]
        %v4275 = vld [vmem:[%s5 + $0x370] sm:$0xff]
        %v4276 = vld [vmem:[%s5 + $0x378] sm:$0xff]
        %v4277 = vld [vmem:[%s5 + $0x380] sm:$0xff]
        %v4278 = vld [vmem:[%s5 + $0x388] sm:$0xff]
        %v4279 = vld [vmem:[%s5 + $0x390] sm:$0xff]
        %v4280 = vld [vmem:[%s5 + $0x398] sm:$0xff]
        %v4281 = vld [vmem:[%s5 + $0x3a0] sm:$0xff]
        %v4282 = vld [vmem:[%s5 + $0x3a8] sm:$0xff]
        %v4283 = vld [vmem:[%s5 + $0x3b0] sm:$0xff]
        %v4284 = vld [vmem:[%s5 + $0x3b8] sm:$0xff]
        %v4285 = vld [vmem:[%s5 + $0x3c0] sm:$0xff]
        %v4286 = vld [vmem:[%s5 + $0x3c8] sm:$0xff]
        %v4287 = vld [vmem:[%s5 + $0x3d0] sm:$0xff]
        %v4288 = vld [vmem:[%s5 + $0x3d8] sm:$0xff]
        %v4289 = vld [vmem:[%s5 + $0x3e0] sm:$0xff]
        %v4290 = vld [vmem:[%s5 + $0x3e8] sm:$0xff]
        %v4291 = vld [vmem:[%s5 + $0x3f0] sm:$0xff]
        %v4292 = vld [vmem:[%s5 + $0x3f8] sm:$0xff]
        %v4293 = vld [vmem:[%s5 + $0x400] sm:$0xff]
        %v4294 = vld [vmem:[%s5 + $0x408] sm:$0xff]
        %v4295 = vld [vmem:[%s5 + $0x410] sm:$0xff]
        %v4296 = vld [vmem:[%s5 + $0x418] sm:$0xff]
        %v4297 = vld [vmem:[%s5 + $0x420] sm:$0xff]
        %v4298 = vld [vmem:[%s5 + $0x428] sm:$0xff]
        %v4299 = vld [vmem:[%s5 + $0x430] sm:$0xff]
        %v4300 = vld [vmem:[%s5 + $0x438] sm:$0xff]
        %v4301 = vld [vmem:[%s5 + $0x440] sm:$0xff]
        %v4302 = vld [vmem:[%s5 + $0x448] sm:$0xff]
        %v4303 = vld [vmem:[%s5 + $0x450] sm:$0xff]
        %v4304 = vld [vmem:[%s5 + $0x458] sm:$0xff]
        %v4305 = vld [vmem:[%s5 + $0x460] sm:$0xff]
        %v4306 = vld [vmem:[%s5 + $0x468] sm:$0xff]
        %v4307 = vld [vmem:[%s5 + $0x470] sm:$0xff]
        %v4308 = vld [vmem:[%s5 + $0x478] sm:$0xff]
        %v4309 = vld [vmem:[%s5 + $0x480] sm:$0xff]
        %v4310 = vld [vmem:[%s5 + $0x488] sm:$0xff]
        %v4311 = vld [vmem:[%s5 + $0x490] sm:$0xff]
        %v4312 = vld [vmem:[%s5 + $0x498] sm:$0xff]
        %v4313 = vld [vmem:[%s5 + $0x4a0] sm:$0xff]
        %v4314 = vld [vmem:[%s5 + $0x4a8] sm:$0xff]
        %v4315 = vld [vmem:[%s5 + $0x4b0] sm:$0xff]
        %v4316 = vld [vmem:[%s5 + $0x4b8] sm:$0xff]
        %v4317 = vld [vmem:[%s5 + $0x4c0] sm:$0xff]
        %v4318 = vld [vmem:[%s5 + $0x4c8] sm:$0xff]
        %v4319 = vld [vmem:[%s5 + $0x4d0] sm:$0xff]
        %v4320 = vld [vmem:[%s5 + $0x4d8] sm:$0xff]
        %v4321 = vld [vmem:[%s5 + $0x4e0] sm:$0xff]
        %v4322 = vld [vmem:[%s5 + $0x4e8] sm:$0xff]
        %v4323 = vld [vmem:[%s5 + $0x4f0] sm:$0xff]
        %v4324 = vld [vmem:[%s5 + $0x4f8] sm:$0xff]
        %v4485 = vunpack.c.l.b16 %v4165
        %v4486 = vunpack.c.h.b16 %v4165
        %v4487 = vunpack.c.l.b16 %v4166
        %v4488 = vunpack.c.h.b16 %v4166
        %v4489 = vunpack.c.l.b16 %v4167
        %v4490 = vunpack.c.h.b16 %v4167
        %v4491 = vunpack.c.l.b16 %v4168
        %v4492 = vunpack.c.h.b16 %v4168
        %v4493 = vunpack.c.l.b16 %v4169
        %v4494 = vunpack.c.h.b16 %v4169
        %v4495 = vunpack.c.l.b16 %v4170
        %v4496 = vunpack.c.h.b16 %v4170
        %v4497 = vunpack.c.l.b16 %v4171
        %v4498 = vunpack.c.h.b16 %v4171
        %v4499 = vunpack.c.l.b16 %v4172
        %v4500 = vunpack.c.h.b16 %v4172
        %v4501 = vunpack.c.l.b16 %v4173
        %v4502 = vunpack.c.h.b16 %v4173
        %v4503 = vunpack.c.l.b16 %v4174
        %v4504 = vunpack.c.h.b16 %v4174
        %v4505 = vunpack.c.l.b16 %v4175
        %v4506 = vunpack.c.h.b16 %v4175
        %v4507 = vunpack.c.l.b16 %v4176
        %v4508 = vunpack.c.h.b16 %v4176
        %v4509 = vunpack.c.l.b16 %v4177
        %v4510 = vunpack.c.h.b16 %v4177
        %v4511 = vunpack.c.l.b16 %v4178
        %v4512 = vunpack.c.h.b16 %v4178
        %v4513 = vunpack.c.l.b16 %v4179
        %v4514 = vunpack.c.h.b16 %v4179
        %v4515 = vunpack.c.l.b16 %v4180
        %v4516 = vunpack.c.h.b16 %v4180
        %v4517 = vunpack.c.l.b16 %v4181
        %v4518 = vunpack.c.h.b16 %v4181
        %v4519 = vunpack.c.l.b16 %v4182
        %v4520 = vunpack.c.h.b16 %v4182
        %v4521 = vunpack.c.l.b16 %v4183
        %v4522 = vunpack.c.h.b16 %v4183
        %v4523 = vunpack.c.l.b16 %v4184
        %v4524 = vunpack.c.h.b16 %v4184
        %v4525 = vunpack.c.l.b16 %v4185
        %v4526 = vunpack.c.h.b16 %v4185
        %v4527 = vunpack.c.l.b16 %v4186
        %v4528 = vunpack.c.h.b16 %v4186
        %v4529 = vunpack.c.l.b16 %v4187
        %v4530 = vunpack.c.h.b16 %v4187
        %v4531 = vunpack.c.l.b16 %v4188
        %v4532 = vunpack.c.h.b16 %v4188
        %v4533 = vunpack.c.l.b16 %v4189
        %v4534 = vunpack.c.h.b16 %v4189
        %v4535 = vunpack.c.l.b16 %v4190
        %v4536 = vunpack.c.h.b16 %v4190
        %v4537 = vunpack.c.l.b16 %v4191
        %v4538 = vunpack.c.h.b16 %v4191
        %v4539 = vunpack.c.l.b16 %v4192
        %v4540 = vunpack.c.h.b16 %v4192
        %v4541 = vunpack.c.l.b16 %v4193
        %v4542 = vunpack.c.h.b16 %v4193
        %v4543 = vunpack.c.l.b16 %v4194
        %v4544 = vunpack.c.h.b16 %v4194
        %v4545 = vunpack.c.l.b16 %v4195
        %v4546 = vunpack.c.h.b16 %v4195
        %v4547 = vunpack.c.l.b16 %v4196
        %v4548 = vunpack.c.h.b16 %v4196
        %v4549 = vunpack.c.l.b16 %v4197
        %v4550 = vunpack.c.h.b16 %v4197
        %v4551 = vunpack.c.l.b16 %v4198
        %v4552 = vunpack.c.h.b16 %v4198
        %v4553 = vunpack.c.l.b16 %v4199
        %v4554 = vunpack.c.h.b16 %v4199
        %v4555 = vunpack.c.l.b16 %v4200
        %v4556 = vunpack.c.h.b16 %v4200
        %v4557 = vunpack.c.l.b16 %v4201
        %v4558 = vunpack.c.h.b16 %v4201
        %v4559 = vunpack.c.l.b16 %v4202
        %v4560 = vunpack.c.h.b16 %v4202
        %v4561 = vunpack.c.l.b16 %v4203
        %v4562 = vunpack.c.h.b16 %v4203
        %v4563 = vunpack.c.l.b16 %v4204
        %v4564 = vunpack.c.h.b16 %v4204
        %v4565 = vunpack.c.l.b16 %v4205
        %v4566 = vunpack.c.h.b16 %v4205
        %v4567 = vunpack.c.l.b16 %v4206
        %v4568 = vunpack.c.h.b16 %v4206
        %v4569 = vunpack.c.l.b16 %v4207
        %v4570 = vunpack.c.h.b16 %v4207
        %v4571 = vunpack.c.l.b16 %v4208
        %v4572 = vunpack.c.h.b16 %v4208
        %v4573 = vunpack.c.l.b16 %v4209
        %v4574 = vunpack.c.h.b16 %v4209
        %v4575 = vunpack.c.l.b16 %v4210
        %v4576 = vunpack.c.h.b16 %v4210
        %v4577 = vunpack.c.l.b16 %v4211
        %v4578 = vunpack.c.h.b16 %v4211
        %v4579 = vunpack.c.l.b16 %v4212
        %v4580 = vunpack.c.h.b16 %v4212
        %v4581 = vunpack.c.l.b16 %v4213
        %v4582 = vunpack.c.h.b16 %v4213
        %v4583 = vunpack.c.l.b16 %v4214
        %v4584 = vunpack.c.h.b16 %v4214
        %v4585 = vunpack.c.l.b16 %v4215
        %v4586 = vunpack.c.h.b16 %v4215
        %v4587 = vunpack.c.l.b16 %v4216
        %v4588 = vunpack.c.h.b16 %v4216
        %v4589 = vunpack.c.l.b16 %v4217
        %v4590 = vunpack.c.h.b16 %v4217
        %v4591 = vunpack.c.l.b16 %v4218
        %v4592 = vunpack.c.h.b16 %v4218
        %v4593 = vunpack.c.l.b16 %v4219
        %v4594 = vunpack.c.h.b16 %v4219
        %v4595 = vunpack.c.l.b16 %v4220
        %v4596 = vunpack.c.h.b16 %v4220
        %v4597 = vunpack.c.l.b16 %v4221
        %v4598 = vunpack.c.h.b16 %v4221
        %v4599 = vunpack.c.l.b16 %v4222
        %v4600 = vunpack.c.h.b16 %v4222
        %v4601 = vunpack.c.l.b16 %v4223
        %v4602 = vunpack.c.h.b16 %v4223
        %v4603 = vunpack.c.l.b16 %v4224
        %v4604 = vunpack.c.h.b16 %v4224
        %v4605 = vunpack.c.l.b16 %v4225
        %v4606 = vunpack.c.h.b16 %v4225
        %v4607 = vunpack.c.l.b16 %v4226
        %v4608 = vunpack.c.h.b16 %v4226
        %v4609 = vunpack.c.l.b16 %v4227
        %v4610 = vunpack.c.h.b16 %v4227
        %v4611 = vunpack.c.l.b16 %v4228
        %v4612 = vunpack.c.h.b16 %v4228
        %v4613 = vunpack.c.l.b16 %v4229
        %v4614 = vunpack.c.h.b16 %v4229
        %v4615 = vunpack.c.l.b16 %v4230
        %v4616 = vunpack.c.h.b16 %v4230
        %v4617 = vunpack.c.l.b16 %v4231
        %v4618 = vunpack.c.h.b16 %v4231
        %v4619 = vunpack.c.l.b16 %v4232
        %v4620 = vunpack.c.h.b16 %v4232
        %v4621 = vunpack.c.l.b16 %v4233
        %v4622 = vunpack.c.h.b16 %v4233
        %v4623 = vunpack.c.l.b16 %v4234
        %v4624 = vunpack.c.h.b16 %v4234
        %v4625 = vunpack.c.l.b16 %v4235
        %v4626 = vunpack.c.h.b16 %v4235
        %v4627 = vunpack.c.l.b16 %v4236
        %v4628 = vunpack.c.h.b16 %v4236
        %v4629 = vunpack.c.l.b16 %v4237
        %v4630 = vunpack.c.h.b16 %v4237
        %v4631 = vunpack.c.l.b16 %v4238
        %v4632 = vunpack.c.h.b16 %v4238
        %v4633 = vunpack.c.l.b16 %v4239
        %v4634 = vunpack.c.h.b16 %v4239
        %v4635 = vunpack.c.l.b16 %v4240
        %v4636 = vunpack.c.h.b16 %v4240
        %v4637 = vunpack.c.l.b16 %v4241
        %v4638 = vunpack.c.h.b16 %v4241
        %v4639 = vunpack.c.l.b16 %v4242
        %v4640 = vunpack.c.h.b16 %v4242
        %v4641 = vunpack.c.l.b16 %v4243
        %v4642 = vunpack.c.h.b16 %v4243
        %v4643 = vunpack.c.l.b16 %v4244
        %v4644 = vunpack.c.h.b16 %v4244
        %v4645 = vunpack.c.l.b16 %v4245
        %v4646 = vunpack.c.h.b16 %v4245
        %v4647 = vunpack.c.l.b16 %v4246
        %v4648 = vunpack.c.h.b16 %v4246
        %v4649 = vunpack.c.l.b16 %v4247
        %v4650 = vunpack.c.h.b16 %v4247
        %v4651 = vunpack.c.l.b16 %v4248
        %v4652 = vunpack.c.h.b16 %v4248
        %v4653 = vunpack.c.l.b16 %v4249
        %v4654 = vunpack.c.h.b16 %v4249
        %v4655 = vunpack.c.l.b16 %v4250
        %v4656 = vunpack.c.h.b16 %v4250
        %v4657 = vunpack.c.l.b16 %v4251
        %v4658 = vunpack.c.h.b16 %v4251
        %v4659 = vunpack.c.l.b16 %v4252
        %v4660 = vunpack.c.h.b16 %v4252
        %v4661 = vunpack.c.l.b16 %v4253
        %v4662 = vunpack.c.h.b16 %v4253
        %v4663 = vunpack.c.l.b16 %v4254
        %v4664 = vunpack.c.h.b16 %v4254
        %v4665 = vunpack.c.l.b16 %v4255
        %v4666 = vunpack.c.h.b16 %v4255
        %v4667 = vunpack.c.l.b16 %v4256
        %v4668 = vunpack.c.h.b16 %v4256
        %v4669 = vunpack.c.l.b16 %v4257
        %v4670 = vunpack.c.h.b16 %v4257
        %v4671 = vunpack.c.l.b16 %v4258
        %v4672 = vunpack.c.h.b16 %v4258
        %v4673 = vunpack.c.l.b16 %v4259
        %v4674 = vunpack.c.h.b16 %v4259
        %v4675 = vunpack.c.l.b16 %v4260
        %v4676 = vunpack.c.h.b16 %v4260
        %v4677 = vunpack.c.l.b16 %v4261
        %v4678 = vunpack.c.h.b16 %v4261
        %v4679 = vunpack.c.l.b16 %v4262
        %v4680 = vunpack.c.h.b16 %v4262
        %v4681 = vunpack.c.l.b16 %v4263
        %v4682 = vunpack.c.h.b16 %v4263
        %v4683 = vunpack.c.l.b16 %v4264
        %v4684 = vunpack.c.h.b16 %v4264
        %v4685 = vunpack.c.l.b16 %v4265
        %v4686 = vunpack.c.h.b16 %v4265
        %v4687 = vunpack.c.l.b16 %v4266
        %v4688 = vunpack.c.h.b16 %v4266
        %v4689 = vunpack.c.l.b16 %v4267
        %v4690 = vunpack.c.h.b16 %v4267
        %v4691 = vunpack.c.l.b16 %v4268
        %v4692 = vunpack.c.h.b16 %v4268
        %v4693 = vunpack.c.l.b16 %v4269
        %v4694 = vunpack.c.h.b16 %v4269
        %v4695 = vunpack.c.l.b16 %v4270
        %v4696 = vunpack.c.h.b16 %v4270
        %v4697 = vunpack.c.l.b16 %v4271
        %v4698 = vunpack.c.h.b16 %v4271
        %v4699 = vunpack.c.l.b16 %v4272
        %v4700 = vunpack.c.h.b16 %v4272
        %v4701 = vunpack.c.l.b16 %v4273
        %v4702 = vunpack.c.h.b16 %v4273
        %v4703 = vunpack.c.l.b16 %v4274
        %v4704 = vunpack.c.h.b16 %v4274
        %v4705 = vunpack.c.l.b16 %v4275
        %v4706 = vunpack.c.h.b16 %v4275
        %v4707 = vunpack.c.l.b16 %v4276
        %v4708 = vunpack.c.h.b16 %v4276
        %v4709 = vunpack.c.l.b16 %v4277
        %v4710 = vunpack.c.h.b16 %v4277
        %v4711 = vunpack.c.l.b16 %v4278
        %v4712 = vunpack.c.h.b16 %v4278
        %v4713 = vunpack.c.l.b16 %v4279
        %v4714 = vunpack.c.h.b16 %v4279
        %v4715 = vunpack.c.l.b16 %v4280
        %v4716 = vunpack.c.h.b16 %v4280
        %v4717 = vunpack.c.l.b16 %v4281
        %v4718 = vunpack.c.h.b16 %v4281
        %v4719 = vunpack.c.l.b16 %v4282
        %v4720 = vunpack.c.h.b16 %v4282
        %v4721 = vunpack.c.l.b16 %v4283
        %v4722 = vunpack.c.h.b16 %v4283
        %v4723 = vunpack.c.l.b16 %v4284
        %v4724 = vunpack.c.h.b16 %v4284
        %v4725 = vunpack.c.l.b16 %v4285
        %v4726 = vunpack.c.h.b16 %v4285
        %v4727 = vunpack.c.l.b16 %v4286
        %v4728 = vunpack.c.h.b16 %v4286
        %v4729 = vunpack.c.l.b16 %v4287
        %v4730 = vunpack.c.h.b16 %v4287
        %v4731 = vunpack.c.l.b16 %v4288
        %v4732 = vunpack.c.h.b16 %v4288
        %v4733 = vunpack.c.l.b16 %v4289
        %v4734 = vunpack.c.h.b16 %v4289
        %v4735 = vunpack.c.l.b16 %v4290
        %v4736 = vunpack.c.h.b16 %v4290
        %v4737 = vunpack.c.l.b16 %v4291
        %v4738 = vunpack.c.h.b16 %v4291
        %v4739 = vunpack.c.l.b16 %v4292
        %v4740 = vunpack.c.h.b16 %v4292
        %v4741 = vunpack.c.l.b16 %v4293
        %v4742 = vunpack.c.h.b16 %v4293
        %v4743 = vunpack.c.l.b16 %v4294
        %v4744 = vunpack.c.h.b16 %v4294
        %v4745 = vunpack.c.l.b16 %v4295
        %v4746 = vunpack.c.h.b16 %v4295
        %v4747 = vunpack.c.l.b16 %v4296
        %v4748 = vunpack.c.h.b16 %v4296
        %v4749 = vunpack.c.l.b16 %v4297
        %v4750 = vunpack.c.h.b16 %v4297
        %v4751 = vunpack.c.l.b16 %v4298
        %v4752 = vunpack.c.h.b16 %v4298
        %v4753 = vunpack.c.l.b16 %v4299
        %v4754 = vunpack.c.h.b16 %v4299
        %v4755 = vunpack.c.l.b16 %v4300
        %v4756 = vunpack.c.h.b16 %v4300
        %v4757 = vunpack.c.l.b16 %v4301
        %v4758 = vunpack.c.h.b16 %v4301
        %v4759 = vunpack.c.l.b16 %v4302
        %v4760 = vunpack.c.h.b16 %v4302
        %v4761 = vunpack.c.l.b16 %v4303
        %v4762 = vunpack.c.h.b16 %v4303
        %v4763 = vunpack.c.l.b16 %v4304
        %v4764 = vunpack.c.h.b16 %v4304
        %v4765 = vunpack.c.l.b16 %v4305
        %v4766 = vunpack.c.h.b16 %v4305
        %v4767 = vunpack.c.l.b16 %v4306
        %v4768 = vunpack.c.h.b16 %v4306
        %v4769 = vunpack.c.l.b16 %v4307
        %v4770 = vunpack.c.h.b16 %v4307
        %v4771 = vunpack.c.l.b16 %v4308
        %v4772 = vunpack.c.h.b16 %v4308
        %v4773 = vunpack.c.l.b16 %v4309
        %v4774 = vunpack.c.h.b16 %v4309
        %v4775 = vunpack.c.l.b16 %v4310
        %v4776 = vunpack.c.h.b16 %v4310
        %v4777 = vunpack.c.l.b16 %v4311
        %v4778 = vunpack.c.h.b16 %v4311
        %v4779 = vunpack.c.l.b16 %v4312
        %v4780 = vunpack.c.h.b16 %v4312
        %v4781 = vunpack.c.l.b16 %v4313
        %v4782 = vunpack.c.h.b16 %v4313
        %v4783 = vunpack.c.l.b16 %v4314
        %v4784 = vunpack.c.h.b16 %v4314
        %v4785 = vunpack.c.l.b16 %v4315
        %v4786 = vunpack.c.h.b16 %v4315
        %v4787 = vunpack.c.l.b16 %v4316
        %v4788 = vunpack.c.h.b16 %v4316
        %v4789 = vunpack.c.l.b16 %v4317
        %v4790 = vunpack.c.h.b16 %v4317
        %v4791 = vunpack.c.l.b16 %v4318
        %v4792 = vunpack.c.h.b16 %v4318
        %v4793 = vunpack.c.l.b16 %v4319
        %v4794 = vunpack.c.h.b16 %v4319
        %v4795 = vunpack.c.l.b16 %v4320
        %v4796 = vunpack.c.h.b16 %v4320
        %v4797 = vunpack.c.l.b16 %v4321
        %v4798 = vunpack.c.h.b16 %v4321
        %v4799 = vunpack.c.l.b16 %v4322
        %v4800 = vunpack.c.h.b16 %v4322
        %v4801 = vunpack.c.l.b16 %v4323
        %v4802 = vunpack.c.h.b16 %v4323
        %v4803 = vunpack.c.l.b16 %v4324
        %v4804 = vunpack.c.h.b16 %v4324
        %v4805 = vpack.c.b16 %v4489, %v4485
        %v4806 = vpack.c.b16 %v4490, %v4486
        %v4807 = vpack.c.b16 %v4491, %v4487
        %v4808 = vpack.c.b16 %v4492, %v4488
        %v4809 = vpack.c.b16 %v4497, %v4493
        %v4810 = vpack.c.b16 %v4498, %v4494
        %v4811 = vpack.c.b16 %v4499, %v4495
        %v4812 = vpack.c.b16 %v4500, %v4496
        %v4813 = vpack.c.b16 %v4505, %v4501
        %v4814 = vpack.c.b16 %v4506, %v4502
        %v4815 = vpack.c.b16 %v4507, %v4503
        %v4816 = vpack.c.b16 %v4508, %v4504
        %v4817 = vpack.c.b16 %v4513, %v4509
        %v4818 = vpack.c.b16 %v4514, %v4510
        %v4819 = vpack.c.b16 %v4515, %v4511
        %v4820 = vpack.c.b16 %v4516, %v4512
        %v4821 = vpack.c.b16 %v4521, %v4517
        %v4822 = vpack.c.b16 %v4522, %v4518
        %v4823 = vpack.c.b16 %v4523, %v4519
        %v4824 = vpack.c.b16 %v4524, %v4520
        %v4825 = vpack.c.b16 %v4529, %v4525
        %v4826 = vpack.c.b16 %v4530, %v4526
        %v4827 = vpack.c.b16 %v4531, %v4527
        %v4828 = vpack.c.b16 %v4532, %v4528
        %v4829 = vpack.c.b16 %v4537, %v4533
        %v4830 = vpack.c.b16 %v4538, %v4534
        %v4831 = vpack.c.b16 %v4539, %v4535
        %v4832 = vpack.c.b16 %v4540, %v4536
        %v4833 = vpack.c.b16 %v4545, %v4541
        %v4834 = vpack.c.b16 %v4546, %v4542
        %v4835 = vpack.c.b16 %v4547, %v4543
        %v4836 = vpack.c.b16 %v4548, %v4544
        %v4837 = vpack.c.b16 %v4553, %v4549
        %v4838 = vpack.c.b16 %v4554, %v4550
        %v4839 = vpack.c.b16 %v4555, %v4551
        %v4840 = vpack.c.b16 %v4556, %v4552
        %v4841 = vpack.c.b16 %v4561, %v4557
        %v4842 = vpack.c.b16 %v4562, %v4558
        %v4843 = vpack.c.b16 %v4563, %v4559
        %v4844 = vpack.c.b16 %v4564, %v4560
        %v4845 = vpack.c.b16 %v4569, %v4565
        %v4846 = vpack.c.b16 %v4570, %v4566
        %v4847 = vpack.c.b16 %v4571, %v4567
        %v4848 = vpack.c.b16 %v4572, %v4568
        %v4849 = vpack.c.b16 %v4577, %v4573
        %v4850 = vpack.c.b16 %v4578, %v4574
        %v4851 = vpack.c.b16 %v4579, %v4575
        %v4852 = vpack.c.b16 %v4580, %v4576
        %v4853 = vpack.c.b16 %v4585, %v4581
        %v4854 = vpack.c.b16 %v4586, %v4582
        %v4855 = vpack.c.b16 %v4587, %v4583
        %v4856 = vpack.c.b16 %v4588, %v4584
        %v4857 = vpack.c.b16 %v4593, %v4589
        %v4858 = vpack.c.b16 %v4594, %v4590
        %v4859 = vpack.c.b16 %v4595, %v4591
        %v4860 = vpack.c.b16 %v4596, %v4592
        %v4861 = vpack.c.b16 %v4601, %v4597
        %v4862 = vpack.c.b16 %v4602, %v4598
        %v4863 = vpack.c.b16 %v4603, %v4599
        %v4864 = vpack.c.b16 %v4604, %v4600
        %v4865 = vpack.c.b16 %v4609, %v4605
        %v4866 = vpack.c.b16 %v4610, %v4606
        %v4867 = vpack.c.b16 %v4611, %v4607
        %v4868 = vpack.c.b16 %v4612, %v4608
        %v4869 = vpack.c.b16 %v4617, %v4613
        %v4870 = vpack.c.b16 %v4618, %v4614
        %v4871 = vpack.c.b16 %v4619, %v4615
        %v4872 = vpack.c.b16 %v4620, %v4616
        %v4873 = vpack.c.b16 %v4625, %v4621
        %v4874 = vpack.c.b16 %v4626, %v4622
        %v4875 = vpack.c.b16 %v4627, %v4623
        %v4876 = vpack.c.b16 %v4628, %v4624
        %v4877 = vpack.c.b16 %v4633, %v4629
        %v4878 = vpack.c.b16 %v4634, %v4630
        %v4879 = vpack.c.b16 %v4635, %v4631
        %v4880 = vpack.c.b16 %v4636, %v4632
        %v4881 = vpack.c.b16 %v4641, %v4637
        %v4882 = vpack.c.b16 %v4642, %v4638
        %v4883 = vpack.c.b16 %v4643, %v4639
        %v4884 = vpack.c.b16 %v4644, %v4640
        %v4885 = vpack.c.b16 %v4649, %v4645
        %v4886 = vpack.c.b16 %v4650, %v4646
        %v4887 = vpack.c.b16 %v4651, %v4647
        %v4888 = vpack.c.b16 %v4652, %v4648
        %v4889 = vpack.c.b16 %v4657, %v4653
        %v4890 = vpack.c.b16 %v4658, %v4654
        %v4891 = vpack.c.b16 %v4659, %v4655
        %v4892 = vpack.c.b16 %v4660, %v4656
        %v4893 = vpack.c.b16 %v4665, %v4661
        %v4894 = vpack.c.b16 %v4666, %v4662
        %v4895 = vpack.c.b16 %v4667, %v4663
        %v4896 = vpack.c.b16 %v4668, %v4664
        %v4897 = vpack.c.b16 %v4673, %v4669
        %v4898 = vpack.c.b16 %v4674, %v4670
        %v4899 = vpack.c.b16 %v4675, %v4671
        %v4900 = vpack.c.b16 %v4676, %v4672
        %v4901 = vpack.c.b16 %v4681, %v4677
        %v4902 = vpack.c.b16 %v4682, %v4678
        %v4903 = vpack.c.b16 %v4683, %v4679
        %v4904 = vpack.c.b16 %v4684, %v4680
        %v4905 = vpack.c.b16 %v4689, %v4685
        %v4906 = vpack.c.b16 %v4690, %v4686
        %v4907 = vpack.c.b16 %v4691, %v4687
        %v4908 = vpack.c.b16 %v4692, %v4688
        %v4909 = vpack.c.b16 %v4697, %v4693
        %v4910 = vpack.c.b16 %v4698, %v4694
        %v4911 = vpack.c.b16 %v4699, %v4695
        %v4912 = vpack.c.b16 %v4700, %v4696
        %v4913 = vpack.c.b16 %v4705, %v4701
        %v4914 = vpack.c.b16 %v4706, %v4702
        %v4915 = vpack.c.b16 %v4707, %v4703
        %v4916 = vpack.c.b16 %v4708, %v4704
        %v4917 = vpack.c.b16 %v4713, %v4709
        %v4918 = vpack.c.b16 %v4714, %v4710
        %v4919 = vpack.c.b16 %v4715, %v4711
        %v4920 = vpack.c.b16 %v4716, %v4712
        %v4921 = vpack.c.b16 %v4721, %v4717
        %v4922 = vpack.c.b16 %v4722, %v4718
        %v4923 = vpack.c.b16 %v4723, %v4719
        %v4924 = vpack.c.b16 %v4724, %v4720
        %v4925 = vpack.c.b16 %v4729, %v4725
        %v4926 = vpack.c.b16 %v4730, %v4726
        %v4927 = vpack.c.b16 %v4731, %v4727
        %v4928 = vpack.c.b16 %v4732, %v4728
        %v4929 = vpack.c.b16 %v4737, %v4733
        %v4930 = vpack.c.b16 %v4738, %v4734
        %v4931 = vpack.c.b16 %v4739, %v4735
        %v4932 = vpack.c.b16 %v4740, %v4736
        %v4933 = vpack.c.b16 %v4745, %v4741
        %v4934 = vpack.c.b16 %v4746, %v4742
        %v4935 = vpack.c.b16 %v4747, %v4743
        %v4936 = vpack.c.b16 %v4748, %v4744
        %v4937 = vpack.c.b16 %v4753, %v4749
        %v4938 = vpack.c.b16 %v4754, %v4750
        %v4939 = vpack.c.b16 %v4755, %v4751
        %v4940 = vpack.c.b16 %v4756, %v4752
        %v4941 = vpack.c.b16 %v4761, %v4757
        %v4942 = vpack.c.b16 %v4762, %v4758
        %v4943 = vpack.c.b16 %v4763, %v4759
        %v4944 = vpack.c.b16 %v4764, %v4760
        %v4945 = vpack.c.b16 %v4769, %v4765
        %v4946 = vpack.c.b16 %v4770, %v4766
        %v4947 = vpack.c.b16 %v4771, %v4767
        %v4948 = vpack.c.b16 %v4772, %v4768
        %v4949 = vpack.c.b16 %v4777, %v4773
        %v4950 = vpack.c.b16 %v4778, %v4774
        %v4951 = vpack.c.b16 %v4779, %v4775
        %v4952 = vpack.c.b16 %v4780, %v4776
        %v4953 = vpack.c.b16 %v4785, %v4781
        %v4954 = vpack.c.b16 %v4786, %v4782
        %v4955 = vpack.c.b16 %v4787, %v4783
        %v4956 = vpack.c.b16 %v4788, %v4784
        %v4957 = vpack.c.b16 %v4793, %v4789
        %v4958 = vpack.c.b16 %v4794, %v4790
        %v4959 = vpack.c.b16 %v4795, %v4791
        %v4960 = vpack.c.b16 %v4796, %v4792
        %v4961 = vpack.c.b16 %v4801, %v4797
        %v4962 = vpack.c.b16 %v4802, %v4798
        %v4963 = vpack.c.b16 %v4803, %v4799
        %v4964 = vpack.c.b16 %v4804, %v4800
        %5125 = vmatprep.subr.bf16.mxu0 %v4806
        %5126 = vmatpush1.bf16.msra.mxu0 %v4805
        %5127 = vmatprep.subr.bf16.mxu0 %v4810
        %5128 = vmatpush1.bf16.msra.mxu0 %v4809
        %5129 = vmatprep.subr.bf16.mxu0 %v4814
        %5130 = vmatpush1.bf16.msra.mxu0 %v4813
        %5131 = vmatprep.subr.bf16.mxu0 %v4818
        %5132 = vmatpush1.bf16.msra.mxu0 %v4817
        %5133 = vmatprep.subr.bf16.mxu0 %v4822
        %5134 = vmatpush1.bf16.msra.mxu0 %v4821
        %5135 = vmatprep.subr.bf16.mxu0 %v4826
        %5136 = vmatpush1.bf16.msra.mxu0 %v4825
        %5137 = vmatprep.subr.bf16.mxu0 %v4830
        %5138 = vmatpush1.bf16.msra.mxu0 %v4829
        %5139 = vmatprep.subr.bf16.mxu0 %v4834
        %5140 = vmatpush1.bf16.msra.mxu0 %v4833
        %5141 = vmatprep.subr.bf16.mxu0 %v4838
        %5142 = vmatpush1.bf16.msra.mxu0 %v4837
        %5143 = vmatprep.subr.bf16.mxu0 %v4842
        %5144 = vmatpush1.bf16.msra.mxu0 %v4841
        %5145 = vmatprep.subr.bf16.mxu0 %v4846
        %5146 = vmatpush1.bf16.msra.mxu0 %v4845
        %5147 = vmatprep.subr.bf16.mxu0 %v4850
        %5148 = vmatpush1.bf16.msra.mxu0 %v4849
        %5149 = vmatprep.subr.bf16.mxu0 %v4854
        %5150 = vmatpush1.bf16.msra.mxu0 %v4853
        %5151 = vmatprep.subr.bf16.mxu0 %v4858
        %5152 = vmatpush1.bf16.msra.mxu0 %v4857
        %5153 = vmatprep.subr.bf16.mxu0 %v4862
        %5154 = vmatpush1.bf16.msra.mxu0 %v4861
        %5155 = vmatprep.subr.bf16.mxu0 %v4866
        %5156 = vmatpush1.bf16.msra.mxu0 %v4865
        %5157 = vmatprep.mubr.bf16.mxu0 %v4161
        %5158 = vmatmul.mubr.bf16.gmra.mrb[0].mxu0 %v4160
        %v5159 = vpop.f32.mrb[0].mxu0
        %v5160 = vadd.f32 0.0, %v5159
        %v5161 = vpop.f32.mrb[0].mxu0
        %v5162 = vadd.f32 0.0, %v5161
        %v5163 = vpop.f32.mrb[0].mxu0
        %v5164 = vadd.f32 0.0, %v5163
        %v5165 = vpop.f32.mrb[0].mxu0
        %v5166 = vadd.f32 0.0, %v5165
        %5167 = vdwg.mxu0
        %5168 = vmatprep.subr.bf16.mxu0 %v4870
        %5169 = vmatpush1.bf16.msra.mxu0 %v4869
        %5170 = vmatprep.subr.bf16.mxu0 %v4874
        %5171 = vmatpush1.bf16.msra.mxu0 %v4873
        %5172 = vmatprep.subr.bf16.mxu0 %v4878
        %5173 = vmatpush1.bf16.msra.mxu0 %v4877
        %5174 = vmatprep.subr.bf16.mxu0 %v4882
        %5175 = vmatpush1.bf16.msra.mxu0 %v4881
        %5176 = vmatprep.subr.bf16.mxu0 %v4886
        %5177 = vmatpush1.bf16.msra.mxu0 %v4885
        %5178 = vmatprep.subr.bf16.mxu0 %v4890
        %5179 = vmatpush1.bf16.msra.mxu0 %v4889
        %5180 = vmatprep.subr.bf16.mxu0 %v4894
        %5181 = vmatpush1.bf16.msra.mxu0 %v4893
        %5182 = vmatprep.subr.bf16.mxu0 %v4898
        %5183 = vmatpush1.bf16.msra.mxu0 %v4897
        %5184 = vmatprep.subr.bf16.mxu0 %v4902
        %5185 = vmatpush1.bf16.msra.mxu0 %v4901
        %5186 = vmatprep.subr.bf16.mxu0 %v4906
        %5187 = vmatpush1.bf16.msra.mxu0 %v4905
        %5188 = vmatprep.subr.bf16.mxu0 %v4910
        %5189 = vmatpush1.bf16.msra.mxu0 %v4909
        %5190 = vmatprep.subr.bf16.mxu0 %v4914
        %5191 = vmatpush1.bf16.msra.mxu0 %v4913
        %5192 = vmatprep.subr.bf16.mxu0 %v4918
        %5193 = vmatpush1.bf16.msra.mxu0 %v4917
        %5194 = vmatprep.subr.bf16.mxu0 %v4922
        %5195 = vmatpush1.bf16.msra.mxu0 %v4921
        %5196 = vmatprep.subr.bf16.mxu0 %v4926
        %5197 = vmatpush1.bf16.msra.mxu0 %v4925
        %5198 = vmatprep.subr.bf16.mxu0 %v4930
        %5199 = vmatpush1.bf16.msra.mxu0 %v4929
        %5200 = vmatprep.mubr.bf16.mxu0 %v4163
        %5201 = vmatmul.mubr.bf16.gmra.mrb[0].mxu0 %v4162
        %v5202 = vpop.f32.mrb[0].mxu0
        %v5203 = vadd.f32 %v5160, %v5202
        %v5204 = vpop.f32.mrb[0].mxu0
        %v5205 = vadd.f32 %v5162, %v5204
        %v5206 = vpop.f32.mrb[0].mxu0
        %v5207 = vadd.f32 %v5164, %v5206
        %v5208 = vpop.f32.mrb[0].mxu0
        %v5209 = vadd.f32 %v5166, %v5208
        %5210 = vdwg.mxu0
        %5211 = vmatprep.subr.bf16.mxu0 %v4934
        %5212 = vmatpush1.bf16.msra.mxu0 %v4933
        %5213 = vmatprep.subr.bf16.mxu0 %v4938
        %5214 = vmatpush1.bf16.msra.mxu0 %v4937
        %5215 = vmatprep.subr.bf16.mxu0 %v4942
        %5216 = vmatpush1.bf16.msra.mxu0 %v4941
        %5217 = vmatprep.subr.bf16.mxu0 %v4946
        %5218 = vmatpush1.bf16.msra.mxu0 %v4945
        %5219 = vmatprep.subr.bf16.mxu0 %v4950
        %5220 = vmatpush1.bf16.msra.mxu0 %v4949
        %5221 = vmatprep.subr.bf16.mxu0 %v4954
        %5222 = vmatpush1.bf16.msra.mxu0 %v4953
        %5223 = vmatprep.subr.bf16.mxu0 %v4958
        %5224 = vmatpush1.bf16.msra.mxu0 %v4957
        %5225 = vmatprep.subr.bf16.mxu0 %v4962
        %5226 = vmatpush1.bf16.msra.mxu0 %v4961
        %5227 = vmatprep.subr.bf16.mxu0 0
        %5228 = vmatpush1.bf16.msra.mxu0 0
        %5229 = vmatprep.subr.bf16.mxu0 0
        %5230 = vmatpush1.bf16.msra.mxu0 0
        %5231 = vmatprep.subr.bf16.mxu0 0
        %5232 = vmatpush1.bf16.msra.mxu0 0
        %5233 = vmatprep.subr.bf16.mxu0 0
        %5234 = vmatpush1.bf16.msra.mxu0 0
        %5235 = vmatprep.subr.bf16.mxu0 0
        %5236 = vmatpush1.bf16.msra.mxu0 0
        %5237 = vmatprep.subr.bf16.mxu0 0
        %5238 = vmatpush1.bf16.msra.mxu0 0
        %5239 = vmatprep.subr.bf16.mxu0 0
        %5240 = vmatpush1.bf16.msra.mxu0 0
        %5241 = vmatprep.subr.bf16.mxu0 0
        %5242 = vmatpush1.bf16.msra.mxu0 0
        %5243 = vmatprep.mubr.bf16.mxu0 0
        %5244 = vmatmul.mubr.bf16.gmra.mrb[0].mxu0 %v4164
        %v5245 = vpop.f32.mrb[0].mxu0
        %v5246 = vadd.f32 %v5203, %v5245
        %v5247 = vpop.f32.mrb[0].mxu0
        %v5248 = vadd.f32 %v5205, %v5247
        %v5249 = vpop.f32.mrb[0].mxu0
        %v5250 = vadd.f32 %v5207, %v5249
        %v5251 = vpop.f32.mrb[0].mxu0
        %v5252 = vadd.f32 %v5209, %v5251
        %5253 = vdwg.mxu0
        %5254 = vmatprep.subr.bf16.mxu0 %v4808
        %5255 = vmatpush1.bf16.msra.mxu0 %v4807
        %5256 = vmatprep.subr.bf16.mxu0 %v4812
        %5257 = vmatpush1.bf16.msra.mxu0 %v4811
        %5258 = vmatprep.subr.bf16.mxu0 %v4816
        %5259 = vmatpush1.bf16.msra.mxu0 %v4815
        %5260 = vmatprep.subr.bf16.mxu0 %v4820
        %5261 = vmatpush1.bf16.msra.mxu0 %v4819
        %5262 = vmatprep.subr.bf16.mxu0 %v4824
        %5263 = vmatpush1.bf16.msra.mxu0 %v4823
        %5264 = vmatprep.subr.bf16.mxu0 %v4828
        %5265 = vmatpush1.bf16.msra.mxu0 %v4827
        %5266 = vmatprep.subr.bf16.mxu0 %v4832
        %5267 = vmatpush1.bf16.msra.mxu0 %v4831
        %5268 = vmatprep.subr.bf16.mxu0 %v4836
        %5269 = vmatpush1.bf16.msra.mxu0 %v4835
        %5270 = vmatprep.subr.bf16.mxu0 %v4840
        %5271 = vmatpush1.bf16.msra.mxu0 %v4839
        %5272 = vmatprep.subr.bf16.mxu0 %v4844
        %5273 = vmatpush1.bf16.msra.mxu0 %v4843
        %5274 = vmatprep.subr.bf16.mxu0 %v4848
        %5275 = vmatpush1.bf16.msra.mxu0 %v4847
        %5276 = vmatprep.subr.bf16.mxu0 %v4852
        %5277 = vmatpush1.bf16.msra.mxu0 %v4851
        %5278 = vmatprep.subr.bf16.mxu0 %v4856
        %5279 = vmatpush1.bf16.msra.mxu0 %v4855
        %5280 = vmatprep.subr.bf16.mxu0 %v4860
        %5281 = vmatpush1.bf16.msra.mxu0 %v4859
        %5282 = vmatprep.subr.bf16.mxu0 %v4864
        %5283 = vmatpush1.bf16.msra.mxu0 %v4863
        %5284 = vmatprep.subr.bf16.mxu0 %v4868
        %5285 = vmatpush1.bf16.msra.mxu0 %v4867
        %5286 = vmatprep.mubr.bf16.mxu0 %v4161
        %5287 = vmatmul.mubr.bf16.gmra.mrb[0].mxu0 %v4160
        %v5288 = vpop.f32.mrb[0].mxu0
        %v5289 = vadd.f32 0.0, %v5288
        %v5290 = vpop.f32.mrb[0].mxu0
        %v5291 = vadd.f32 0.0, %v5290
        %v5292 = vpop.f32.mrb[0].mxu0
        %v5293 = vadd.f32 0.0, %v5292
        %v5294 = vpop.f32.mrb[0].mxu0
        %v5295 = vadd.f32 0.0, %v5294
        %5296 = vdwg.mxu0
        %5297 = vmatprep.subr.bf16.mxu0 %v4872
        %5298 = vmatpush1.bf16.msra.mxu0 %v4871
        %5299 = vmatprep.subr.bf16.mxu0 %v4876
        %5300 = vmatpush1.bf16.msra.mxu0 %v4875
        %5301 = vmatprep.subr.bf16.mxu0 %v4880
        %5302 = vmatpush1.bf16.msra.mxu0 %v4879
        %5303 = vmatprep.subr.bf16.mxu0 %v4884
        %5304 = vmatpush1.bf16.msra.mxu0 %v4883
        %5305 = vmatprep.subr.bf16.mxu0 %v4888
        %5306 = vmatpush1.bf16.msra.mxu0 %v4887
        %5307 = vmatprep.subr.bf16.mxu0 %v4892
        %5308 = vmatpush1.bf16.msra.mxu0 %v4891
        %5309 = vmatprep.subr.bf16.mxu0 %v4896
        %5310 = vmatpush1.bf16.msra.mxu0 %v4895
        %5311 = vmatprep.subr.bf16.mxu0 %v4900
        %5312 = vmatpush1.bf16.msra.mxu0 %v4899
        %5313 = vmatprep.subr.bf16.mxu0 %v4904
        %5314 = vmatpush1.bf16.msra.mxu0 %v4903
        %5315 = vmatprep.subr.bf16.mxu0 %v4908
        %5316 = vmatpush1.bf16.msra.mxu0 %v4907
        %5317 = vmatprep.subr.bf16.mxu0 %v4912
        %5318 = vmatpush1.bf16.msra.mxu0 %v4911
        %5319 = vmatprep.subr.bf16.mxu0 %v4916
        %5320 = vmatpush1.bf16.msra.mxu0 %v4915
        %5321 = vmatprep.subr.bf16.mxu0 %v4920
        %5322 = vmatpush1.bf16.msra.mxu0 %v4919
        %5323 = vmatprep.subr.bf16.mxu0 %v4924
        %5324 = vmatpush1.bf16.msra.mxu0 %v4923
        %5325 = vmatprep.subr.bf16.mxu0 %v4928
        %5326 = vmatpush1.bf16.msra.mxu0 %v4927
        %5327 = vmatprep.subr.bf16.mxu0 %v4932
        %5328 = vmatpush1.bf16.msra.mxu0 %v4931
        %5329 = vmatprep.mubr.bf16.mxu0 %v4163
        %5330 = vmatmul.mubr.bf16.gmra.mrb[0].mxu0 %v4162
        %v5331 = vpop.f32.mrb[0].mxu0
        %v5332 = vadd.f32 %v5289, %v5331
        %v5333 = vpop.f32.mrb[0].mxu0
        %v5334 = vadd.f32 %v5291, %v5333
        %v5335 = vpop.f32.mrb[0].mxu0
        %v5336 = vadd.f32 %v5293, %v5335
        %v5337 = vpop.f32.mrb[0].mxu0
        %v5338 = vadd.f32 %v5295, %v5337
        %5339 = vdwg.mxu0
        %5340 = vmatprep.subr.bf16.mxu0 %v4936
        %5341 = vmatpush1.bf16.msra.mxu0 %v4935
        %5342 = vmatprep.subr.bf16.mxu0 %v4940
        %5343 = vmatpush1.bf16.msra.mxu0 %v4939
        %5344 = vmatprep.subr.bf16.mxu0 %v4944
        %5345 = vmatpush1.bf16.msra.mxu0 %v4943
        %5346 = vmatprep.subr.bf16.mxu0 %v4948
        %5347 = vmatpush1.bf16.msra.mxu0 %v4947
        %5348 = vmatprep.subr.bf16.mxu0 %v4952
        %5349 = vmatpush1.bf16.msra.mxu0 %v4951
        %5350 = vmatprep.subr.bf16.mxu0 %v4956
        %5351 = vmatpush1.bf16.msra.mxu0 %v4955
        %5352 = vmatprep.subr.bf16.mxu0 %v4960
        %5353 = vmatpush1.bf16.msra.mxu0 %v4959
        %5354 = vmatprep.subr.bf16.mxu0 %v4964
        %5355 = vmatpush1.bf16.msra.mxu0 %v4963
        %5356 = vmatprep.subr.bf16.mxu0 0
        %5357 = vmatpush1.bf16.msra.mxu0 0
        %5358 = vmatprep.subr.bf16.mxu0 0
        %5359 = vmatpush1.bf16.msra.mxu0 0
        %5360 = vmatprep.subr.bf16.mxu0 0
        %5361 = vmatpush1.bf16.msra.mxu0 0
        %5362 = vmatprep.subr.bf16.mxu0 0
        %5363 = vmatpush1.bf16.msra.mxu0 0
        %5364 = vmatprep.subr.bf16.mxu0 0
        %5365 = vmatpush1.bf16.msra.mxu0 0
        %5366 = vmatprep.subr.bf16.mxu0 0
        %5367 = vmatpush1.bf16.msra.mxu0 0
        %5368 = vmatprep.subr.bf16.mxu0 0
        %5369 = vmatpush1.bf16.msra.mxu0 0
        %5370 = vmatprep.subr.bf16.mxu0 0
        %5371 = vmatpush1.bf16.msra.mxu0 0
        %5372 = vmatprep.mubr.bf16.mxu0 0
        %5373 = vmatmul.mubr.bf16.gmra.mrb[0].mxu0 %v4164
        %v5374 = vpop.f32.mrb[0].mxu0
        %v5375 = vadd.f32 %v5332, %v5374
        %v5376 = vpop.f32.mrb[0].mxu0
        %v5377 = vadd.f32 %v5334, %v5376
        %v5378 = vpop.f32.mrb[0].mxu0
        %v5379 = vadd.f32 %v5336, %v5378
        %v5380 = vpop.f32.mrb[0].mxu0
        %v5381 = vadd.f32 %v5338, %v5380
        %5382 = vdwg.mxu0
        %v5383 = vmax.f32 %v5246, %v5375
        %v5384 = vmax.f32 %v5248, %v5377
        %v5385 = vmax.f32 %v5250, %v5379
        %v5386 = vmax.f32 %v5252, %v5381
        %v5387 = vld [vmem:[%s6] sm:$0x3]
        %v5389 = vlaneseq
        %v5390 = vshrl.u32 %v5389, 7
        %v5391 = vsub.s32 0, %v5390
        %v5392 = vrot.slane %v5387, %v5391
        %v5393 = vlaneseq
        %v5394 = vshrl.u32 %v5393, 7
        %v5395 = vsub.s32 1, %v5394
        %v5396 = vrot.slane %v5387, %v5395
        %v5399 = vadd.f32 %v5383, %v5392
        %v5400 = vadd.f32 %v5384, %v5396
        %v5401 = vadd.f32 %v5385, %v5392
        %v5402 = vadd.f32 %v5386, %v5396
        %v5403 = vmax.f32 %v5399, 0.0
        %v5404 = vmax.f32 %v5400, 0.0
        %v5405 = vmax.f32 %v5401, 0.0
        %v5406 = vmax.f32 %v5402, 0.0
        %v5407 = vld [vmem:[#allocation3] sm:$0xf]
        %v5408 = vld [vmem:[#allocation3 + $0x4] sm:$0x1]
        %v5409 = vpack.c.bf16 %v5405, %v5403
        %v5410 = vpack.c.bf16 %v5406, %v5404
        %v5413 = vunpack.c.l.b16 %v5407
        %v5414 = vunpack.c.l.b16 %v5408
        %v5415 = vpack.c.b16 %v5414, %v5413
        %v5417 = vsel %vm2107, %v5415, 0
        %v5420 = vsel %vm839, %v5409, 0
        %v5423 = vsel %vm839, %v5410, 0
        %5425 = vmatprep.subr.bf16.mxu0 %v5423
        %5426 = vmatpush1.bf16.msra.mxu0 %v5420
        %5427 = vmatprep.subr.bf16.mxu0 0
        %5428 = vmatpush1.bf16.msra.mxu0 0
        %5429 = vmatprep.subr.bf16.mxu0 0
        %5430 = vmatpush1.bf16.msra.mxu0 0
        %5431 = vmatprep.subr.bf16.mxu0 0
        %5432 = vmatpush1.bf16.msra.mxu0 0
        %5433 = vmatprep.subr.bf16.mxu0 0
        %5434 = vmatpush1.bf16.msra.mxu0 0
        %5435 = vmatprep.subr.bf16.mxu0 0
        %5436 = vmatpush1.bf16.msra.mxu0 0
        %5437 = vmatprep.subr.bf16.mxu0 0
        %5438 = vmatpush1.bf16.msra.mxu0 0
        %5439 = vmatprep.subr.bf16.mxu0 0
        %5440 = vmatpush1.bf16.msra.mxu0 0
        %5441 = vmatprep.subr.bf16.mxu0 0
        %5442 = vmatpush1.bf16.msra.mxu0 0
        %5443 = vmatprep.subr.bf16.mxu0 0
        %5444 = vmatpush1.bf16.msra.mxu0 0
        %5445 = vmatprep.subr.bf16.mxu0 0
        %5446 = vmatpush1.bf16.msra.mxu0 0
        %5447 = vmatprep.subr.bf16.mxu0 0
        %5448 = vmatpush1.bf16.msra.mxu0 0
        %5449 = vmatprep.subr.bf16.mxu0 0
        %5450 = vmatpush1.bf16.msra.mxu0 0
        %5451 = vmatprep.subr.bf16.mxu0 0
        %5452 = vmatpush1.bf16.msra.mxu0 0
        %5453 = vmatprep.subr.bf16.mxu0 0
        %5454 = vmatpush1.bf16.msra.mxu0 0
        %5455 = vmatprep.subr.bf16.mxu0 0
        %5456 = vmatpush1.bf16.msra.mxu0 0
        %5457 = vmatprep.mubr.bf16.mxu0 0
        %5458 = vmatmul.mubr.bf16.gmra.mrb[0].mxu0 %v5417
        %v5459 = vpop.f32.mrb[0].mxu0
        %v5460 = vadd.f32 0.0, %v5459
        %v5461 = vpop.f32.mrb[0].mxu0
        %v5462 = vadd.f32 0.0, %v5461
        %v5463 = vpop.f32.mrb[0].mxu0
        %v5464 = vadd.f32 0.0, %v5463
        %v5465 = vpop.f32.mrb[0].mxu0
        %v5466 = vadd.f32 0.0, %v5465
        %5467 = vdwg.mxu0
        %v5472 = vrot.slane %v5460, 5
        %v5473 = vrot.slane %v5464, 5
        %v5474 = vsel %vm2164, %v5472, %v5473
        %v5475 = vrot.slane %v5462, 5
        %v5476 = vrot.slane %v5466, 5
        %v5477 = vsel %vm2164, %v5475, %v5476
        %v5480 = vmax.f32 %v5460, %v5474
        %v5481 = vmax.f32 %v5462, %v5477
        %s5482 = scalar_lea.vmem [#allocation2], 32
        %5483 = vst [vmem:[%s5482] sm:$0x1f] %v5480
        %5484 = vst [vmem:[%s5482 + $0x8] sm:$0x1f] %v5481
        %s5485 = scalar_lea.vmem %s513, 96
        %v5486 = vld [vmem:[%s5485] sm:$0xff]
        %v5487 = vld [vmem:[%s5485 + $0x8] sm:$0xff]
        %v5488 = vld [vmem:[%s5485 + $0x10] sm:$0xff]
        %v5489 = vld [vmem:[%s5485 + $0x18] sm:$0x33]
        %v5490 = vld [vmem:[#allocation6] sm:$0xff]
        %v5491 = vld [vmem:[#allocation6 + $0x8] sm:$0xff]
        %v5492 = vld [vmem:[#allocation6 + $0x10] sm:$0xff]
        %v5493 = vld [vmem:[#allocation6 + $0x18] sm:$0xff]
        %v5494 = vld [vmem:[#allocation6 + $0x20] sm:$0xff]
        %v5495 = vld [vmem:[#allocation6 + $0x28] sm:$0xff]
        %v5496 = vld [vmem:[#allocation6 + $0x30] sm:$0xff]
        %v5497 = vld [vmem:[#allocation6 + $0x38] sm:$0xff]
        %v5498 = vld [vmem:[#allocation6 + $0x40] sm:$0xff]
        %v5499 = vld [vmem:[#allocation6 + $0x48] sm:$0xff]
        %v5500 = vld [vmem:[#allocation6 + $0x50] sm:$0xff]
        %v5501 = vld [vmem:[#allocation6 + $0x58] sm:$0xff]
        %v5502 = vld [vmem:[#allocation6 + $0x60] sm:$0xff]
        %v5503 = vld [vmem:[#allocation6 + $0x68] sm:$0xff]
        %v5504 = vld [vmem:[#allocation6 + $0x70] sm:$0xff]
        %v5505 = vld [vmem:[#allocation6 + $0x78] sm:$0xff]
        %v5506 = vld [vmem:[#allocation6 + $0x80] sm:$0xff]
        %v5507 = vld [vmem:[#allocation6 + $0x88] sm:$0xff]
        %v5508 = vld [vmem:[#allocation6 + $0x90] sm:$0xff]
        %v5509 = vld [vmem:[#allocation6 + $0x98] sm:$0xff]
        %v5514 = vunpack.c.l.b16 %v5486
        %v5515 = vunpack.c.h.b16 %v5486
        %v5516 = vunpack.c.l.b16 %v5487
        %v5517 = vunpack.c.h.b16 %v5487
        %v5518 = vunpack.c.l.b16 %v5488
        %v5519 = vunpack.c.h.b16 %v5488
        %v5520 = vunpack.c.l.b16 %v5489
        %v5521 = vunpack.c.h.b16 %v5489
        %v5522 = vpack.c.b16 %v5516, %v5514
        %v5523 = vpack.c.b16 %v5517, %v5515
        %v5524 = vpack.c.b16 %v5520, %v5518
        %v5525 = vpack.c.b16 %v5521, %v5519
        %v5548 = vunpack.c.l.b16 %v5490
        %v5549 = vunpack.c.h.b16 %v5490
        %v5550 = vunpack.c.l.b16 %v5491
        %v5551 = vunpack.c.h.b16 %v5491
        %v5552 = vunpack.c.l.b16 %v5492
        %v5553 = vunpack.c.h.b16 %v5492
        %v5554 = vunpack.c.l.b16 %v5493
        %v5555 = vunpack.c.h.b16 %v5493
        %v5556 = vunpack.c.l.b16 %v5494
        %v5557 = vunpack.c.h.b16 %v5494
        %v5558 = vunpack.c.l.b16 %v5495
        %v5559 = vunpack.c.h.b16 %v5495
        %v5560 = vunpack.c.l.b16 %v5496
        %v5561 = vunpack.c.h.b16 %v5496
        %v5562 = vunpack.c.l.b16 %v5497
        %v5563 = vunpack.c.h.b16 %v5497
        %v5564 = vunpack.c.l.b16 %v5498
        %v5565 = vunpack.c.h.b16 %v5498
        %v5566 = vunpack.c.l.b16 %v5499
        %v5567 = vunpack.c.h.b16 %v5499
        %v5568 = vunpack.c.l.b16 %v5500
        %v5569 = vunpack.c.h.b16 %v5500
        %v5570 = vunpack.c.l.b16 %v5501
        %v5571 = vunpack.c.h.b16 %v5501
        %v5572 = vunpack.c.l.b16 %v5502
        %v5573 = vunpack.c.h.b16 %v5502
        %v5574 = vunpack.c.l.b16 %v5503
        %v5575 = vunpack.c.h.b16 %v5503
        %v5576 = vunpack.c.l.b16 %v5504
        %v5577 = vunpack.c.h.b16 %v5504
        %v5578 = vunpack.c.l.b16 %v5505
        %v5579 = vunpack.c.h.b16 %v5505
        %v5580 = vunpack.c.l.b16 %v5506
        %v5581 = vunpack.c.h.b16 %v5506
        %v5582 = vunpack.c.l.b16 %v5507
        %v5583 = vunpack.c.h.b16 %v5507
        %v5584 = vunpack.c.l.b16 %v5508
        %v5585 = vunpack.c.h.b16 %v5508
        %v5586 = vunpack.c.l.b16 %v5509
        %v5587 = vunpack.c.h.b16 %v5509
        %v5588 = vpack.c.b16 %v5550, %v5548
        %v5589 = vpack.c.b16 %v5551, %v5549
        %v5590 = vpack.c.b16 %v5554, %v5552
        %v5591 = vpack.c.b16 %v5555, %v5553
        %v5592 = vpack.c.b16 %v5558, %v5556
        %v5593 = vpack.c.b16 %v5559, %v5557
        %v5594 = vpack.c.b16 %v5562, %v5560
        %v5595 = vpack.c.b16 %v5563, %v5561
        %v5596 = vpack.c.b16 %v5566, %v5564
        %v5597 = vpack.c.b16 %v5567, %v5565
        %v5598 = vpack.c.b16 %v5570, %v5568
        %v5599 = vpack.c.b16 %v5571, %v5569
        %v5600 = vpack.c.b16 %v5574, %v5572
        %v5601 = vpack.c.b16 %v5575, %v5573
        %v5602 = vpack.c.b16 %v5578, %v5576
        %v5603 = vpack.c.b16 %v5579, %v5577
        %v5604 = vpack.c.b16 %v5582, %v5580
        %v5605 = vpack.c.b16 %v5583, %v5581
        %v5606 = vpack.c.b16 %v5586, %v5584
        %v5607 = vpack.c.b16 %v5587, %v5585
        %v5629 = vsel %vm658, %v5523, 0
        %v5632 = vsel %vm658, %v5525, 0
        %5634 = vmatprep.subr.bf16.mxu0 %v5589
        %5635 = vmatpush1.bf16.msra.mxu0 %v5588
        %5636 = vmatprep.subr.bf16.mxu0 %v5591
        %5637 = vmatpush1.bf16.msra.mxu0 %v5590
        %5638 = vmatprep.subr.bf16.mxu0 %v5593
        %5639 = vmatpush1.bf16.msra.mxu0 %v5592
        %5640 = vmatprep.subr.bf16.mxu0 %v5595
        %5641 = vmatpush1.bf16.msra.mxu0 %v5594
        %5642 = vmatprep.subr.bf16.mxu0 %v5597
        %5643 = vmatpush1.bf16.msra.mxu0 %v5596
        %5644 = vmatprep.subr.bf16.mxu0 %v5599
        %5645 = vmatpush1.bf16.msra.mxu0 %v5598
        %5646 = vmatprep.subr.bf16.mxu0 %v5601
        %5647 = vmatpush1.bf16.msra.mxu0 %v5600
        %5648 = vmatprep.subr.bf16.mxu0 %v5603
        %5649 = vmatpush1.bf16.msra.mxu0 %v5602
        %5650 = vmatprep.subr.bf16.mxu0 %v5605
        %5651 = vmatpush1.bf16.msra.mxu0 %v5604
        %5652 = vmatprep.subr.bf16.mxu0 %v5607
        %5653 = vmatpush1.bf16.msra.mxu0 %v5606
        %5654 = vmatprep.subr.bf16.mxu0 0
        %5655 = vmatpush1.bf16.msra.mxu0 0
        %5656 = vmatprep.subr.bf16.mxu0 0
        %5657 = vmatpush1.bf16.msra.mxu0 0
        %5658 = vmatprep.subr.bf16.mxu0 0
        %5659 = vmatpush1.bf16.msra.mxu0 0
        %5660 = vmatprep.subr.bf16.mxu0 0
        %5661 = vmatpush1.bf16.msra.mxu0 0
        %5662 = vmatprep.subr.bf16.mxu0 0
        %5663 = vmatpush1.bf16.msra.mxu0 0
        %5664 = vmatprep.subr.bf16.mxu0 0
        %5665 = vmatpush1.bf16.msra.mxu0 0
        %5666 = vmatprep.mubr.bf16.mxu0 %v5629
        %5667 = vmatmul.mubr.bf16.gmra.mrb[0].mxu0 %v5522
        %v5668 = vpop.f32.mrb[0].mxu0
        %v5669 = vadd.f32 0.0, %v5668
        %v5670 = vpop.f32.mrb[0].mxu0
        %v5671 = vadd.f32 0.0, %v5670
        %v5672 = vpop.f32.mrb[0].mxu0
        %v5673 = vadd.f32 0.0, %v5672
        %v5674 = vpop.f32.mrb[0].mxu0
        %v5675 = vadd.f32 0.0, %v5674
        %5676 = vmatprep.mubr.bf16.mxu0 %v5632
        %5677 = vmatmul.mubr.bf16.gmra.mrb[0].mxu0 %v5524
        %v5678 = vpop.f32.mrb[0].mxu0
        %v5679 = vadd.f32 0.0, %v5678
        %v5680 = vpop.f32.mrb[0].mxu0
        %v5681 = vadd.f32 0.0, %v5680
        %v5682 = vpop.f32.mrb[0].mxu0
        %v5683 = vadd.f32 0.0, %v5682
        %v5684 = vpop.f32.mrb[0].mxu0
        %v5685 = vadd.f32 0.0, %v5684
        %5686 = vdwg.mxu0
        %v5687 = vmax.f32 %v5669, %v5671
        %v5688 = vmax.f32 %v5673, %v5675
        %v5689 = vmax.f32 %v5679, %v5681
        %v5690 = vmax.f32 %v5683, %v5685
        %v5691 = vld [vmem:[#allocation8] sm:$0x1]
        %v5693 = vlaneseq
        %v5694 = vshrl.u32 %v5693, 7
        %v5695 = vsub.s32 0, %v5694
        %v5696 = vrot.slane %v5691, %v5695
        %v5698 = vadd.f32 %v5687, %v5696
        %v5699 = vadd.f32 %v5688, %v5696
        %v5700 = vadd.f32 %v5689, %v5696
        %v5701 = vadd.f32 %v5690, %v5696
        %v5702 = vmax.f32 %v5698, 0.0
        %v5703 = vmax.f32 %v5699, 0.0
        %v5704 = vmax.f32 %v5700, 0.0
        %v5705 = vmax.f32 %v5701, 0.0
        %v5706 = vld [vmem:[%s1] sm:$0xf]
        %v5707 = vld [vmem:[%s1 + $0x4] sm:$0xf]
        %v5708 = vld [vmem:[%s1 + $0x8] sm:$0xf]
        %v5709 = vld [vmem:[%s1 + $0xc] sm:$0x3]
        %v5710 = vpack.c.bf16 %v5703, %v5702
        %v5711 = vpack.c.bf16 %v5705, %v5704
        %v5716 = vunpack.c.l.b16 %v5706
        %v5717 = vunpack.c.l.b16 %v5707
        %v5718 = vunpack.c.l.b16 %v5708
        %v5719 = vunpack.c.l.b16 %v5709
        %v5720 = vpack.c.b16 %v5717, %v5716
        %v5721 = vpack.c.b16 %v5719, %v5718
        %v5723 = vsel %vm753, %v5720, 0
        %v5726 = vsel %vm753, %v5721, 0
        %v5729 = vsel %vm760, %v5711, 0
        %5731 = vmatprep.subr.bf16.mxu0 0
        %5732 = vmatpush1.bf16.msra.mxu0 %v5710
        %5733 = vmatprep.subr.bf16.mxu0 0
        %5734 = vmatpush1.bf16.msra.mxu0 %v5729
        %5735 = vmatprep.subr.bf16.mxu0 0
        %5736 = vmatpush1.bf16.msra.mxu0 0
        %5737 = vmatprep.subr.bf16.mxu0 0
        %5738 = vmatpush1.bf16.msra.mxu0 0
        %5739 = vmatprep.subr.bf16.mxu0 0
        %5740 = vmatpush1.bf16.msra.mxu0 0
        %5741 = vmatprep.subr.bf16.mxu0 0
        %5742 = vmatpush1.bf16.msra.mxu0 0
        %5743 = vmatprep.subr.bf16.mxu0 0
        %5744 = vmatpush1.bf16.msra.mxu0 0
        %5745 = vmatprep.subr.bf16.mxu0 0
        %5746 = vmatpush1.bf16.msra.mxu0 0
        %5747 = vmatprep.subr.bf16.mxu0 0
        %5748 = vmatpush1.bf16.msra.mxu0 0
        %5749 = vmatprep.subr.bf16.mxu0 0
        %5750 = vmatpush1.bf16.msra.mxu0 0
        %5751 = vmatprep.subr.bf16.mxu0 0
        %5752 = vmatpush1.bf16.msra.mxu0 0
        %5753 = vmatprep.subr.bf16.mxu0 0
        %5754 = vmatpush1.bf16.msra.mxu0 0
        %5755 = vmatprep.subr.bf16.mxu0 0
        %5756 = vmatpush1.bf16.msra.mxu0 0
        %5757 = vmatprep.subr.bf16.mxu0 0
        %5758 = vmatpush1.bf16.msra.mxu0 0
        %5759 = vmatprep.subr.bf16.mxu0 0
        %5760 = vmatpush1.bf16.msra.mxu0 0
        %5761 = vmatprep.subr.bf16.mxu0 0
        %5762 = vmatpush1.bf16.msra.mxu0 0
        %5763 = vmatprep.mubr.bf16.mxu0 0
        %5764 = vmatmul.mubr.bf16.gmra.mrb[0].mxu0 %v5723
        %v5765 = vpop.f32.mrb[0].mxu0
        %v5766 = vadd.f32 0.0, %v5765
        %v5767 = vpop.f32.mrb[0].mxu0
        %v5768 = vpop.f32.mrb[0].mxu0
        %v5769 = vadd.f32 0.0, %v5768
        %v5770 = vpop.f32.mrb[0].mxu0
        %5771 = vmatprep.mubr.bf16.mxu0 0
        %5772 = vmatmul.mubr.bf16.gmra.mrb[0].mxu0 %v5726
        %v5773 = vpop.f32.mrb[0].mxu0
        %v5774 = vadd.f32 0.0, %v5773
        %v5775 = vpop.f32.mrb[0].mxu0
        %v5776 = vpop.f32.mrb[0].mxu0
        %v5777 = vadd.f32 0.0, %v5776
        %v5778 = vpop.f32.mrb[0].mxu0
        %5779 = vdwg.mxu0
        %v5783 = vrot.slane %v5769, 6
        %v5784 = vrot.slane %v5774, 6
        %v5785 = vsel %vm816, %v5783, %v5784
        %v5786 = vrot.slane %v5777, 6
        %v5787 = vsel %vm816, %v5784, %v5786
        %v5790 = vmax.f32 %v5766, %v5785
        %v5791 = vmax.f32 %v5769, %v5787
        %v5794 = vrot.slane %v5790, 1
        %v5795 = vrot.slane %v5791, 1
        %v5796 = vsel %vm828, %v5794, %v5795
        %v5799 = vrot.slane %v5790, 2
        %v5800 = vrot.slane %v5791, 2
        %v5801 = vsel %vm760, %v5799, %v5800
        %v5804 = vrot.slane %v5790, 3
        %v5805 = vrot.slane %v5791, 3
        %v5806 = vsel %vm839, %v5804, %v5805
        %v5809 = vrot.slane %v5790, 4
        %v5810 = vrot.slane %v5791, 4
        %v5811 = vsel %vm845, %v5809, %v5810
        %v5814 = vpack.c.bf16 %v5791, %v5790
        %v5815 = vpack.c.bf16 %v5795, %v5796
        %v5816 = vpack.c.bf16 %v5800, %v5801
        %v5817 = vpack.c.bf16 %v5805, %v5806
        %v5818 = vpack.c.bf16 %v5810, %v5811
        %v5819 = vld [vmem:[%s5] sm:$0xff]
        %v5820 = vld [vmem:[%s5 + $0x8] sm:$0xff]
        %v5821 = vld [vmem:[%s5 + $0x10] sm:$0xff]
        %v5822 = vld [vmem:[%s5 + $0x18] sm:$0xff]
        %v5823 = vld [vmem:[%s5 + $0x20] sm:$0xff]
        %v5824 = vld [vmem:[%s5 + $0x28] sm:$0xff]
        %v5825 = vld [vmem:[%s5 + $0x30] sm:$0xff]
        %v5826 = vld [vmem:[%s5 + $0x38] sm:$0xff]
        %v5827 = vld [vmem:[%s5 + $0x40] sm:$0xff]
        %v5828 = vld [vmem:[%s5 + $0x48] sm:$0xff]
        %v5829 = vld [vmem:[%s5 + $0x50] sm:$0xff]
        %v5830 = vld [vmem:[%s5 + $0x58] sm:$0xff]
        %v5831 = vld [vmem:[%s5 + $0x60] sm:$0xff]
        %v5832 = vld [vmem:[%s5 + $0x68] sm:$0xff]
        %v5833 = vld [vmem:[%s5 + $0x70] sm:$0xff]
        %v5834 = vld [vmem:[%s5 + $0x78] sm:$0xff]
        %v5835 = vld [vmem:[%s5 + $0x80] sm:$0xff]
        %v5836 = vld [vmem:[%s5 + $0x88] sm:$0xff]
        %v5837 = vld [vmem:[%s5 + $0x90] sm:$0xff]
        %v5838 = vld [vmem:[%s5 + $0x98] sm:$0xff]
        %v5839 = vld [vmem:[%s5 + $0xa0] sm:$0xff]
        %v5840 = vld [vmem:[%s5 + $0xa8] sm:$0xff]
        %v5841 = vld [vmem:[%s5 + $0xb0] sm:$0xff]
        %v5842 = vld [vmem:[%s5 + $0xb8] sm:$0xff]
        %v5843 = vld [vmem:[%s5 + $0xc0] sm:$0xff]
        %v5844 = vld [vmem:[%s5 + $0xc8] sm:$0xff]
        %v5845 = vld [vmem:[%s5 + $0xd0] sm:$0xff]
        %v5846 = vld [vmem:[%s5 + $0xd8] sm:$0xff]
        %v5847 = vld [vmem:[%s5 + $0xe0] sm:$0xff]
        %v5848 = vld [vmem:[%s5 + $0xe8] sm:$0xff]
        %v5849 = vld [vmem:[%s5 + $0xf0] sm:$0xff]
        %v5850 = vld [vmem:[%s5 + $0xf8] sm:$0xff]
        %v5851 = vld [vmem:[%s5 + $0x100] sm:$0xff]
        %v5852 = vld [vmem:[%s5 + $0x108] sm:$0xff]
        %v5853 = vld [vmem:[%s5 + $0x110] sm:$0xff]
        %v5854 = vld [vmem:[%s5 + $0x118] sm:$0xff]
        %v5855 = vld [vmem:[%s5 + $0x120] sm:$0xff]
        %v5856 = vld [vmem:[%s5 + $0x128] sm:$0xff]
        %v5857 = vld [vmem:[%s5 + $0x130] sm:$0xff]
        %v5858 = vld [vmem:[%s5 + $0x138] sm:$0xff]
        %v5859 = vld [vmem:[%s5 + $0x140] sm:$0xff]
        %v5860 = vld [vmem:[%s5 + $0x148] sm:$0xff]
        %v5861 = vld [vmem:[%s5 + $0x150] sm:$0xff]
        %v5862 = vld [vmem:[%s5 + $0x158] sm:$0xff]
        %v5863 = vld [vmem:[%s5 + $0x160] sm:$0xff]
        %v5864 = vld [vmem:[%s5 + $0x168] sm:$0xff]
        %v5865 = vld [vmem:[%s5 + $0x170] sm:$0xff]
        %v5866 = vld [vmem:[%s5 + $0x178] sm:$0xff]
        %v5867 = vld [vmem:[%s5 + $0x180] sm:$0xff]
        %v5868 = vld [vmem:[%s5 + $0x188] sm:$0xff]
        %v5869 = vld [vmem:[%s5 + $0x190] sm:$0xff]
        %v5870 = vld [vmem:[%s5 + $0x198] sm:$0xff]
        %v5871 = vld [vmem:[%s5 + $0x1a0] sm:$0xff]
        %v5872 = vld [vmem:[%s5 + $0x1a8] sm:$0xff]
        %v5873 = vld [vmem:[%s5 + $0x1b0] sm:$0xff]
        %v5874 = vld [vmem:[%s5 + $0x1b8] sm:$0xff]
        %v5875 = vld [vmem:[%s5 + $0x1c0] sm:$0xff]
        %v5876 = vld [vmem:[%s5 + $0x1c8] sm:$0xff]
        %v5877 = vld [vmem:[%s5 + $0x1d0] sm:$0xff]
        %v5878 = vld [vmem:[%s5 + $0x1d8] sm:$0xff]
        %v5879 = vld [vmem:[%s5 + $0x1e0] sm:$0xff]
        %v5880 = vld [vmem:[%s5 + $0x1e8] sm:$0xff]
        %v5881 = vld [vmem:[%s5 + $0x1f0] sm:$0xff]
        %v5882 = vld [vmem:[%s5 + $0x1f8] sm:$0xff]
        %v5883 = vld [vmem:[%s5 + $0x200] sm:$0xff]
        %v5884 = vld [vmem:[%s5 + $0x208] sm:$0xff]
        %v5885 = vld [vmem:[%s5 + $0x210] sm:$0xff]
        %v5886 = vld [vmem:[%s5 + $0x218] sm:$0xff]
        %v5887 = vld [vmem:[%s5 + $0x220] sm:$0xff]
        %v5888 = vld [vmem:[%s5 + $0x228] sm:$0xff]
        %v5889 = vld [vmem:[%s5 + $0x230] sm:$0xff]
        %v5890 = vld [vmem:[%s5 + $0x238] sm:$0xff]
        %v5891 = vld [vmem:[%s5 + $0x240] sm:$0xff]
        %v5892 = vld [vmem:[%s5 + $0x248] sm:$0xff]
        %v5893 = vld [vmem:[%s5 + $0x250] sm:$0xff]
        %v5894 = vld [vmem:[%s5 + $0x258] sm:$0xff]
        %v5895 = vld [vmem:[%s5 + $0x260] sm:$0xff]
        %v5896 = vld [vmem:[%s5 + $0x268] sm:$0xff]
        %v5897 = vld [vmem:[%s5 + $0x270] sm:$0xff]
        %v5898 = vld [vmem:[%s5 + $0x278] sm:$0xff]
        %v5899 = vld [vmem:[%s5 + $0x280] sm:$0xff]
        %v5900 = vld [vmem:[%s5 + $0x288] sm:$0xff]
        %v5901 = vld [vmem:[%s5 + $0x290] sm:$0xff]
        %v5902 = vld [vmem:[%s5 + $0x298] sm:$0xff]
        %v5903 = vld [vmem:[%s5 + $0x2a0] sm:$0xff]
        %v5904 = vld [vmem:[%s5 + $0x2a8] sm:$0xff]
        %v5905 = vld [vmem:[%s5 + $0x2b0] sm:$0xff]
        %v5906 = vld [vmem:[%s5 + $0x2b8] sm:$0xff]
        %v5907 = vld [vmem:[%s5 + $0x2c0] sm:$0xff]
        %v5908 = vld [vmem:[%s5 + $0x2c8] sm:$0xff]
        %v5909 = vld [vmem:[%s5 + $0x2d0] sm:$0xff]
        %v5910 = vld [vmem:[%s5 + $0x2d8] sm:$0xff]
        %v5911 = vld [vmem:[%s5 + $0x2e0] sm:$0xff]
        %v5912 = vld [vmem:[%s5 + $0x2e8] sm:$0xff]
        %v5913 = vld [vmem:[%s5 + $0x2f0] sm:$0xff]
        %v5914 = vld [vmem:[%s5 + $0x2f8] sm:$0xff]
        %v5915 = vld [vmem:[%s5 + $0x300] sm:$0xff]
        %v5916 = vld [vmem:[%s5 + $0x308] sm:$0xff]
        %v5917 = vld [vmem:[%s5 + $0x310] sm:$0xff]
        %v5918 = vld [vmem:[%s5 + $0x318] sm:$0xff]
        %v5919 = vld [vmem:[%s5 + $0x320] sm:$0xff]
        %v5920 = vld [vmem:[%s5 + $0x328] sm:$0xff]
        %v5921 = vld [vmem:[%s5 + $0x330] sm:$0xff]
        %v5922 = vld [vmem:[%s5 + $0x338] sm:$0xff]
        %v5923 = vld [vmem:[%s5 + $0x340] sm:$0xff]
        %v5924 = vld [vmem:[%s5 + $0x348] sm:$0xff]
        %v5925 = vld [vmem:[%s5 + $0x350] sm:$0xff]
        %v5926 = vld [vmem:[%s5 + $0x358] sm:$0xff]
        %v5927 = vld [vmem:[%s5 + $0x360] sm:$0xff]
        %v5928 = vld [vmem:[%s5 + $0x368] sm:$0xff]
        %v5929 = vld [vmem:[%s5 + $0x370] sm:$0xff]
        %v5930 = vld [vmem:[%s5 + $0x378] sm:$0xff]
        %v5931 = vld [vmem:[%s5 + $0x380] sm:$0xff]
        %v5932 = vld [vmem:[%s5 + $0x388] sm:$0xff]
        %v5933 = vld [vmem:[%s5 + $0x390] sm:$0xff]
        %v5934 = vld [vmem:[%s5 + $0x398] sm:$0xff]
        %v5935 = vld [vmem:[%s5 + $0x3a0] sm:$0xff]
        %v5936 = vld [vmem:[%s5 + $0x3a8] sm:$0xff]
        %v5937 = vld [vmem:[%s5 + $0x3b0] sm:$0xff]
        %v5938 = vld [vmem:[%s5 + $0x3b8] sm:$0xff]
        %v5939 = vld [vmem:[%s5 + $0x3c0] sm:$0xff]
        %v5940 = vld [vmem:[%s5 + $0x3c8] sm:$0xff]
        %v5941 = vld [vmem:[%s5 + $0x3d0] sm:$0xff]
        %v5942 = vld [vmem:[%s5 + $0x3d8] sm:$0xff]
        %v5943 = vld [vmem:[%s5 + $0x3e0] sm:$0xff]
        %v5944 = vld [vmem:[%s5 + $0x3e8] sm:$0xff]
        %v5945 = vld [vmem:[%s5 + $0x3f0] sm:$0xff]
        %v5946 = vld [vmem:[%s5 + $0x3f8] sm:$0xff]
        %v5947 = vld [vmem:[%s5 + $0x400] sm:$0xff]
        %v5948 = vld [vmem:[%s5 + $0x408] sm:$0xff]
        %v5949 = vld [vmem:[%s5 + $0x410] sm:$0xff]
        %v5950 = vld [vmem:[%s5 + $0x418] sm:$0xff]
        %v5951 = vld [vmem:[%s5 + $0x420] sm:$0xff]
        %v5952 = vld [vmem:[%s5 + $0x428] sm:$0xff]
        %v5953 = vld [vmem:[%s5 + $0x430] sm:$0xff]
        %v5954 = vld [vmem:[%s5 + $0x438] sm:$0xff]
        %v5955 = vld [vmem:[%s5 + $0x440] sm:$0xff]
        %v5956 = vld [vmem:[%s5 + $0x448] sm:$0xff]
        %v5957 = vld [vmem:[%s5 + $0x450] sm:$0xff]
        %v5958 = vld [vmem:[%s5 + $0x458] sm:$0xff]
        %v5959 = vld [vmem:[%s5 + $0x460] sm:$0xff]
        %v5960 = vld [vmem:[%s5 + $0x468] sm:$0xff]
        %v5961 = vld [vmem:[%s5 + $0x470] sm:$0xff]
        %v5962 = vld [vmem:[%s5 + $0x478] sm:$0xff]
        %v5963 = vld [vmem:[%s5 + $0x480] sm:$0xff]
        %v5964 = vld [vmem:[%s5 + $0x488] sm:$0xff]
        %v5965 = vld [vmem:[%s5 + $0x490] sm:$0xff]
        %v5966 = vld [vmem:[%s5 + $0x498] sm:$0xff]
        %v5967 = vld [vmem:[%s5 + $0x4a0] sm:$0xff]
        %v5968 = vld [vmem:[%s5 + $0x4a8] sm:$0xff]
        %v5969 = vld [vmem:[%s5 + $0x4b0] sm:$0xff]
        %v5970 = vld [vmem:[%s5 + $0x4b8] sm:$0xff]
        %v5971 = vld [vmem:[%s5 + $0x4c0] sm:$0xff]
        %v5972 = vld [vmem:[%s5 + $0x4c8] sm:$0xff]
        %v5973 = vld [vmem:[%s5 + $0x4d0] sm:$0xff]
        %v5974 = vld [vmem:[%s5 + $0x4d8] sm:$0xff]
        %v5975 = vld [vmem:[%s5 + $0x4e0] sm:$0xff]
        %v5976 = vld [vmem:[%s5 + $0x4e8] sm:$0xff]
        %v5977 = vld [vmem:[%s5 + $0x4f0] sm:$0xff]
        %v5978 = vld [vmem:[%s5 + $0x4f8] sm:$0xff]
        %v6139 = vunpack.c.l.b16 %v5819
        %v6140 = vunpack.c.h.b16 %v5819
        %v6141 = vunpack.c.l.b16 %v5820
        %v6142 = vunpack.c.h.b16 %v5820
        %v6143 = vunpack.c.l.b16 %v5821
        %v6144 = vunpack.c.h.b16 %v5821
        %v6145 = vunpack.c.l.b16 %v5822
        %v6146 = vunpack.c.h.b16 %v5822
        %v6147 = vunpack.c.l.b16 %v5823
        %v6148 = vunpack.c.h.b16 %v5823
        %v6149 = vunpack.c.l.b16 %v5824
        %v6150 = vunpack.c.h.b16 %v5824
        %v6151 = vunpack.c.l.b16 %v5825
        %v6152 = vunpack.c.h.b16 %v5825
        %v6153 = vunpack.c.l.b16 %v5826
        %v6154 = vunpack.c.h.b16 %v5826
        %v6155 = vunpack.c.l.b16 %v5827
        %v6156 = vunpack.c.h.b16 %v5827
        %v6157 = vunpack.c.l.b16 %v5828
        %v6158 = vunpack.c.h.b16 %v5828
        %v6159 = vunpack.c.l.b16 %v5829
        %v6160 = vunpack.c.h.b16 %v5829
        %v6161 = vunpack.c.l.b16 %v5830
        %v6162 = vunpack.c.h.b16 %v5830
        %v6163 = vunpack.c.l.b16 %v5831
        %v6164 = vunpack.c.h.b16 %v5831
        %v6165 = vunpack.c.l.b16 %v5832
        %v6166 = vunpack.c.h.b16 %v5832
        %v6167 = vunpack.c.l.b16 %v5833
        %v6168 = vunpack.c.h.b16 %v5833
        %v6169 = vunpack.c.l.b16 %v5834
        %v6170 = vunpack.c.h.b16 %v5834
        %v6171 = vunpack.c.l.b16 %v5835
        %v6172 = vunpack.c.h.b16 %v5835
        %v6173 = vunpack.c.l.b16 %v5836
        %v6174 = vunpack.c.h.b16 %v5836
        %v6175 = vunpack.c.l.b16 %v5837
        %v6176 = vunpack.c.h.b16 %v5837
        %v6177 = vunpack.c.l.b16 %v5838
        %v6178 = vunpack.c.h.b16 %v5838
        %v6179 = vunpack.c.l.b16 %v5839
        %v6180 = vunpack.c.h.b16 %v5839
        %v6181 = vunpack.c.l.b16 %v5840
        %v6182 = vunpack.c.h.b16 %v5840
        %v6183 = vunpack.c.l.b16 %v5841
        %v6184 = vunpack.c.h.b16 %v5841
        %v6185 = vunpack.c.l.b16 %v5842
        %v6186 = vunpack.c.h.b16 %v5842
        %v6187 = vunpack.c.l.b16 %v5843
        %v6188 = vunpack.c.h.b16 %v5843
        %v6189 = vunpack.c.l.b16 %v5844
        %v6190 = vunpack.c.h.b16 %v5844
        %v6191 = vunpack.c.l.b16 %v5845
        %v6192 = vunpack.c.h.b16 %v5845
        %v6193 = vunpack.c.l.b16 %v5846
        %v6194 = vunpack.c.h.b16 %v5846
        %v6195 = vunpack.c.l.b16 %v5847
        %v6196 = vunpack.c.h.b16 %v5847
        %v6197 = vunpack.c.l.b16 %v5848
        %v6198 = vunpack.c.h.b16 %v5848
        %v6199 = vunpack.c.l.b16 %v5849
        %v6200 = vunpack.c.h.b16 %v5849
        %v6201 = vunpack.c.l.b16 %v5850
        %v6202 = vunpack.c.h.b16 %v5850
        %v6203 = vunpack.c.l.b16 %v5851
        %v6204 = vunpack.c.h.b16 %v5851
        %v6205 = vunpack.c.l.b16 %v5852
        %v6206 = vunpack.c.h.b16 %v5852
        %v6207 = vunpack.c.l.b16 %v5853
        %v6208 = vunpack.c.h.b16 %v5853
        %v6209 = vunpack.c.l.b16 %v5854
        %v6210 = vunpack.c.h.b16 %v5854
        %v6211 = vunpack.c.l.b16 %v5855
        %v6212 = vunpack.c.h.b16 %v5855
        %v6213 = vunpack.c.l.b16 %v5856
        %v6214 = vunpack.c.h.b16 %v5856
        %v6215 = vunpack.c.l.b16 %v5857
        %v6216 = vunpack.c.h.b16 %v5857
        %v6217 = vunpack.c.l.b16 %v5858
        %v6218 = vunpack.c.h.b16 %v5858
        %v6219 = vunpack.c.l.b16 %v5859
        %v6220 = vunpack.c.h.b16 %v5859
        %v6221 = vunpack.c.l.b16 %v5860
        %v6222 = vunpack.c.h.b16 %v5860
        %v6223 = vunpack.c.l.b16 %v5861
        %v6224 = vunpack.c.h.b16 %v5861
        %v6225 = vunpack.c.l.b16 %v5862
        %v6226 = vunpack.c.h.b16 %v5862
        %v6227 = vunpack.c.l.b16 %v5863
        %v6228 = vunpack.c.h.b16 %v5863
        %v6229 = vunpack.c.l.b16 %v5864
        %v6230 = vunpack.c.h.b16 %v5864
        %v6231 = vunpack.c.l.b16 %v5865
        %v6232 = vunpack.c.h.b16 %v5865
        %v6233 = vunpack.c.l.b16 %v5866
        %v6234 = vunpack.c.h.b16 %v5866
        %v6235 = vunpack.c.l.b16 %v5867
        %v6236 = vunpack.c.h.b16 %v5867
        %v6237 = vunpack.c.l.b16 %v5868
        %v6238 = vunpack.c.h.b16 %v5868
        %v6239 = vunpack.c.l.b16 %v5869
        %v6240 = vunpack.c.h.b16 %v5869
        %v6241 = vunpack.c.l.b16 %v5870
        %v6242 = vunpack.c.h.b16 %v5870
        %v6243 = vunpack.c.l.b16 %v5871
        %v6244 = vunpack.c.h.b16 %v5871
        %v6245 = vunpack.c.l.b16 %v5872
        %v6246 = vunpack.c.h.b16 %v5872
        %v6247 = vunpack.c.l.b16 %v5873
        %v6248 = vunpack.c.h.b16 %v5873
        %v6249 = vunpack.c.l.b16 %v5874
        %v6250 = vunpack.c.h.b16 %v5874
        %v6251 = vunpack.c.l.b16 %v5875
        %v6252 = vunpack.c.h.b16 %v5875
        %v6253 = vunpack.c.l.b16 %v5876
        %v6254 = vunpack.c.h.b16 %v5876
        %v6255 = vunpack.c.l.b16 %v5877
        %v6256 = vunpack.c.h.b16 %v5877
        %v6257 = vunpack.c.l.b16 %v5878
        %v6258 = vunpack.c.h.b16 %v5878
        %v6259 = vunpack.c.l.b16 %v5879
        %v6260 = vunpack.c.h.b16 %v5879
        %v6261 = vunpack.c.l.b16 %v5880
        %v6262 = vunpack.c.h.b16 %v5880
        %v6263 = vunpack.c.l.b16 %v5881
        %v6264 = vunpack.c.h.b16 %v5881
        %v6265 = vunpack.c.l.b16 %v5882
        %v6266 = vunpack.c.h.b16 %v5882
        %v6267 = vunpack.c.l.b16 %v5883
        %v6268 = vunpack.c.h.b16 %v5883
        %v6269 = vunpack.c.l.b16 %v5884
        %v6270 = vunpack.c.h.b16 %v5884
        %v6271 = vunpack.c.l.b16 %v5885
        %v6272 = vunpack.c.h.b16 %v5885
        %v6273 = vunpack.c.l.b16 %v5886
        %v6274 = vunpack.c.h.b16 %v5886
        %v6275 = vunpack.c.l.b16 %v5887
        %v6276 = vunpack.c.h.b16 %v5887
        %v6277 = vunpack.c.l.b16 %v5888
        %v6278 = vunpack.c.h.b16 %v5888
        %v6279 = vunpack.c.l.b16 %v5889
        %v6280 = vunpack.c.h.b16 %v5889
        %v6281 = vunpack.c.l.b16 %v5890
        %v6282 = vunpack.c.h.b16 %v5890
        %v6283 = vunpack.c.l.b16 %v5891
        %v6284 = vunpack.c.h.b16 %v5891
        %v6285 = vunpack.c.l.b16 %v5892
        %v6286 = vunpack.c.h.b16 %v5892
        %v6287 = vunpack.c.l.b16 %v5893
        %v6288 = vunpack.c.h.b16 %v5893
        %v6289 = vunpack.c.l.b16 %v5894
        %v6290 = vunpack.c.h.b16 %v5894
        %v6291 = vunpack.c.l.b16 %v5895
        %v6292 = vunpack.c.h.b16 %v5895
        %v6293 = vunpack.c.l.b16 %v5896
        %v6294 = vunpack.c.h.b16 %v5896
        %v6295 = vunpack.c.l.b16 %v5897
        %v6296 = vunpack.c.h.b16 %v5897
        %v6297 = vunpack.c.l.b16 %v5898
        %v6298 = vunpack.c.h.b16 %v5898
        %v6299 = vunpack.c.l.b16 %v5899
        %v6300 = vunpack.c.h.b16 %v5899
        %v6301 = vunpack.c.l.b16 %v5900
        %v6302 = vunpack.c.h.b16 %v5900
        %v6303 = vunpack.c.l.b16 %v5901
        %v6304 = vunpack.c.h.b16 %v5901
        %v6305 = vunpack.c.l.b16 %v5902
        %v6306 = vunpack.c.h.b16 %v5902
        %v6307 = vunpack.c.l.b16 %v5903
        %v6308 = vunpack.c.h.b16 %v5903
        %v6309 = vunpack.c.l.b16 %v5904
        %v6310 = vunpack.c.h.b16 %v5904
        %v6311 = vunpack.c.l.b16 %v5905
        %v6312 = vunpack.c.h.b16 %v5905
        %v6313 = vunpack.c.l.b16 %v5906
        %v6314 = vunpack.c.h.b16 %v5906
        %v6315 = vunpack.c.l.b16 %v5907
        %v6316 = vunpack.c.h.b16 %v5907
        %v6317 = vunpack.c.l.b16 %v5908
        %v6318 = vunpack.c.h.b16 %v5908
        %v6319 = vunpack.c.l.b16 %v5909
        %v6320 = vunpack.c.h.b16 %v5909
        %v6321 = vunpack.c.l.b16 %v5910
        %v6322 = vunpack.c.h.b16 %v5910
        %v6323 = vunpack.c.l.b16 %v5911
        %v6324 = vunpack.c.h.b16 %v5911
        %v6325 = vunpack.c.l.b16 %v5912
        %v6326 = vunpack.c.h.b16 %v5912
        %v6327 = vunpack.c.l.b16 %v5913
        %v6328 = vunpack.c.h.b16 %v5913
        %v6329 = vunpack.c.l.b16 %v5914
        %v6330 = vunpack.c.h.b16 %v5914
        %v6331 = vunpack.c.l.b16 %v5915
        %v6332 = vunpack.c.h.b16 %v5915
        %v6333 = vunpack.c.l.b16 %v5916
        %v6334 = vunpack.c.h.b16 %v5916
        %v6335 = vunpack.c.l.b16 %v5917
        %v6336 = vunpack.c.h.b16 %v5917
        %v6337 = vunpack.c.l.b16 %v5918
        %v6338 = vunpack.c.h.b16 %v5918
        %v6339 = vunpack.c.l.b16 %v5919
        %v6340 = vunpack.c.h.b16 %v5919
        %v6341 = vunpack.c.l.b16 %v5920
        %v6342 = vunpack.c.h.b16 %v5920
        %v6343 = vunpack.c.l.b16 %v5921
        %v6344 = vunpack.c.h.b16 %v5921
        %v6345 = vunpack.c.l.b16 %v5922
        %v6346 = vunpack.c.h.b16 %v5922
        %v6347 = vunpack.c.l.b16 %v5923
        %v6348 = vunpack.c.h.b16 %v5923
        %v6349 = vunpack.c.l.b16 %v5924
        %v6350 = vunpack.c.h.b16 %v5924
        %v6351 = vunpack.c.l.b16 %v5925
        %v6352 = vunpack.c.h.b16 %v5925
        %v6353 = vunpack.c.l.b16 %v5926
        %v6354 = vunpack.c.h.b16 %v5926
        %v6355 = vunpack.c.l.b16 %v5927
        %v6356 = vunpack.c.h.b16 %v5927
        %v6357 = vunpack.c.l.b16 %v5928
        %v6358 = vunpack.c.h.b16 %v5928
        %v6359 = vunpack.c.l.b16 %v5929
        %v6360 = vunpack.c.h.b16 %v5929
        %v6361 = vunpack.c.l.b16 %v5930
        %v6362 = vunpack.c.h.b16 %v5930
        %v6363 = vunpack.c.l.b16 %v5931
        %v6364 = vunpack.c.h.b16 %v5931
        %v6365 = vunpack.c.l.b16 %v5932
        %v6366 = vunpack.c.h.b16 %v5932
        %v6367 = vunpack.c.l.b16 %v5933
        %v6368 = vunpack.c.h.b16 %v5933
        %v6369 = vunpack.c.l.b16 %v5934
        %v6370 = vunpack.c.h.b16 %v5934
        %v6371 = vunpack.c.l.b16 %v5935
        %v6372 = vunpack.c.h.b16 %v5935
        %v6373 = vunpack.c.l.b16 %v5936
        %v6374 = vunpack.c.h.b16 %v5936
        %v6375 = vunpack.c.l.b16 %v5937
        %v6376 = vunpack.c.h.b16 %v5937
        %v6377 = vunpack.c.l.b16 %v5938
        %v6378 = vunpack.c.h.b16 %v5938
        %v6379 = vunpack.c.l.b16 %v5939
        %v6380 = vunpack.c.h.b16 %v5939
        %v6381 = vunpack.c.l.b16 %v5940
        %v6382 = vunpack.c.h.b16 %v5940
        %v6383 = vunpack.c.l.b16 %v5941
        %v6384 = vunpack.c.h.b16 %v5941
        %v6385 = vunpack.c.l.b16 %v5942
        %v6386 = vunpack.c.h.b16 %v5942
        %v6387 = vunpack.c.l.b16 %v5943
        %v6388 = vunpack.c.h.b16 %v5943
        %v6389 = vunpack.c.l.b16 %v5944
        %v6390 = vunpack.c.h.b16 %v5944
        %v6391 = vunpack.c.l.b16 %v5945
        %v6392 = vunpack.c.h.b16 %v5945
        %v6393 = vunpack.c.l.b16 %v5946
        %v6394 = vunpack.c.h.b16 %v5946
        %v6395 = vunpack.c.l.b16 %v5947
        %v6396 = vunpack.c.h.b16 %v5947
        %v6397 = vunpack.c.l.b16 %v5948
        %v6398 = vunpack.c.h.b16 %v5948
        %v6399 = vunpack.c.l.b16 %v5949
        %v6400 = vunpack.c.h.b16 %v5949
        %v6401 = vunpack.c.l.b16 %v5950
        %v6402 = vunpack.c.h.b16 %v5950
        %v6403 = vunpack.c.l.b16 %v5951
        %v6404 = vunpack.c.h.b16 %v5951
        %v6405 = vunpack.c.l.b16 %v5952
        %v6406 = vunpack.c.h.b16 %v5952
        %v6407 = vunpack.c.l.b16 %v5953
        %v6408 = vunpack.c.h.b16 %v5953
        %v6409 = vunpack.c.l.b16 %v5954
        %v6410 = vunpack.c.h.b16 %v5954
        %v6411 = vunpack.c.l.b16 %v5955
        %v6412 = vunpack.c.h.b16 %v5955
        %v6413 = vunpack.c.l.b16 %v5956
        %v6414 = vunpack.c.h.b16 %v5956
        %v6415 = vunpack.c.l.b16 %v5957
        %v6416 = vunpack.c.h.b16 %v5957
        %v6417 = vunpack.c.l.b16 %v5958
        %v6418 = vunpack.c.h.b16 %v5958
        %v6419 = vunpack.c.l.b16 %v5959
        %v6420 = vunpack.c.h.b16 %v5959
        %v6421 = vunpack.c.l.b16 %v5960
        %v6422 = vunpack.c.h.b16 %v5960
        %v6423 = vunpack.c.l.b16 %v5961
        %v6424 = vunpack.c.h.b16 %v5961
        %v6425 = vunpack.c.l.b16 %v5962
        %v6426 = vunpack.c.h.b16 %v5962
        %v6427 = vunpack.c.l.b16 %v5963
        %v6428 = vunpack.c.h.b16 %v5963
        %v6429 = vunpack.c.l.b16 %v5964
        %v6430 = vunpack.c.h.b16 %v5964
        %v6431 = vunpack.c.l.b16 %v5965
        %v6432 = vunpack.c.h.b16 %v5965
        %v6433 = vunpack.c.l.b16 %v5966
        %v6434 = vunpack.c.h.b16 %v5966
        %v6435 = vunpack.c.l.b16 %v5967
        %v6436 = vunpack.c.h.b16 %v5967
        %v6437 = vunpack.c.l.b16 %v5968
        %v6438 = vunpack.c.h.b16 %v5968
        %v6439 = vunpack.c.l.b16 %v5969
        %v6440 = vunpack.c.h.b16 %v5969
        %v6441 = vunpack.c.l.b16 %v5970
        %v6442 = vunpack.c.h.b16 %v5970
        %v6443 = vunpack.c.l.b16 %v5971
        %v6444 = vunpack.c.h.b16 %v5971
        %v6445 = vunpack.c.l.b16 %v5972
        %v6446 = vunpack.c.h.b16 %v5972
        %v6447 = vunpack.c.l.b16 %v5973
        %v6448 = vunpack.c.h.b16 %v5973
        %v6449 = vunpack.c.l.b16 %v5974
        %v6450 = vunpack.c.h.b16 %v5974
        %v6451 = vunpack.c.l.b16 %v5975
        %v6452 = vunpack.c.h.b16 %v5975
        %v6453 = vunpack.c.l.b16 %v5976
        %v6454 = vunpack.c.h.b16 %v5976
        %v6455 = vunpack.c.l.b16 %v5977
        %v6456 = vunpack.c.h.b16 %v5977
        %v6457 = vunpack.c.l.b16 %v5978
        %v6458 = vunpack.c.h.b16 %v5978
        %v6459 = vpack.c.b16 %v6143, %v6139
        %v6460 = vpack.c.b16 %v6144, %v6140
        %v6461 = vpack.c.b16 %v6145, %v6141
        %v6462 = vpack.c.b16 %v6146, %v6142
        %v6463 = vpack.c.b16 %v6151, %v6147
        %v6464 = vpack.c.b16 %v6152, %v6148
        %v6465 = vpack.c.b16 %v6153, %v6149
        %v6466 = vpack.c.b16 %v6154, %v6150
        %v6467 = vpack.c.b16 %v6159, %v6155
        %v6468 = vpack.c.b16 %v6160, %v6156
        %v6469 = vpack.c.b16 %v6161, %v6157
        %v6470 = vpack.c.b16 %v6162, %v6158
        %v6471 = vpack.c.b16 %v6167, %v6163
        %v6472 = vpack.c.b16 %v6168, %v6164
        %v6473 = vpack.c.b16 %v6169, %v6165
        %v6474 = vpack.c.b16 %v6170, %v6166
        %v6475 = vpack.c.b16 %v6175, %v6171
        %v6476 = vpack.c.b16 %v6176, %v6172
        %v6477 = vpack.c.b16 %v6177, %v6173
        %v6478 = vpack.c.b16 %v6178, %v6174
        %v6479 = vpack.c.b16 %v6183, %v6179
        %v6480 = vpack.c.b16 %v6184, %v6180
        %v6481 = vpack.c.b16 %v6185, %v6181
        %v6482 = vpack.c.b16 %v6186, %v6182
        %v6483 = vpack.c.b16 %v6191, %v6187
        %v6484 = vpack.c.b16 %v6192, %v6188
        %v6485 = vpack.c.b16 %v6193, %v6189
        %v6486 = vpack.c.b16 %v6194, %v6190
        %v6487 = vpack.c.b16 %v6199, %v6195
        %v6488 = vpack.c.b16 %v6200, %v6196
        %v6489 = vpack.c.b16 %v6201, %v6197
        %v6490 = vpack.c.b16 %v6202, %v6198
        %v6491 = vpack.c.b16 %v6207, %v6203
        %v6492 = vpack.c.b16 %v6208, %v6204
        %v6493 = vpack.c.b16 %v6209, %v6205
        %v6494 = vpack.c.b16 %v6210, %v6206
        %v6495 = vpack.c.b16 %v6215, %v6211
        %v6496 = vpack.c.b16 %v6216, %v6212
        %v6497 = vpack.c.b16 %v6217, %v6213
        %v6498 = vpack.c.b16 %v6218, %v6214
        %v6499 = vpack.c.b16 %v6223, %v6219
        %v6500 = vpack.c.b16 %v6224, %v6220
        %v6501 = vpack.c.b16 %v6225, %v6221
        %v6502 = vpack.c.b16 %v6226, %v6222
        %v6503 = vpack.c.b16 %v6231, %v6227
        %v6504 = vpack.c.b16 %v6232, %v6228
        %v6505 = vpack.c.b16 %v6233, %v6229
        %v6506 = vpack.c.b16 %v6234, %v6230
        %v6507 = vpack.c.b16 %v6239, %v6235
        %v6508 = vpack.c.b16 %v6240, %v6236
        %v6509 = vpack.c.b16 %v6241, %v6237
        %v6510 = vpack.c.b16 %v6242, %v6238
        %v6511 = vpack.c.b16 %v6247, %v6243
        %v6512 = vpack.c.b16 %v6248, %v6244
        %v6513 = vpack.c.b16 %v6249, %v6245
        %v6514 = vpack.c.b16 %v6250, %v6246
        %v6515 = vpack.c.b16 %v6255, %v6251
        %v6516 = vpack.c.b16 %v6256, %v6252
        %v6517 = vpack.c.b16 %v6257, %v6253
        %v6518 = vpack.c.b16 %v6258, %v6254
        %v6519 = vpack.c.b16 %v6263, %v6259
        %v6520 = vpack.c.b16 %v6264, %v6260
        %v6521 = vpack.c.b16 %v6265, %v6261
        %v6522 = vpack.c.b16 %v6266, %v6262
        %v6523 = vpack.c.b16 %v6271, %v6267
        %v6524 = vpack.c.b16 %v6272, %v6268
        %v6525 = vpack.c.b16 %v6273, %v6269
        %v6526 = vpack.c.b16 %v6274, %v6270
        %v6527 = vpack.c.b16 %v6279, %v6275
        %v6528 = vpack.c.b16 %v6280, %v6276
        %v6529 = vpack.c.b16 %v6281, %v6277
        %v6530 = vpack.c.b16 %v6282, %v6278
        %v6531 = vpack.c.b16 %v6287, %v6283
        %v6532 = vpack.c.b16 %v6288, %v6284
        %v6533 = vpack.c.b16 %v6289, %v6285
        %v6534 = vpack.c.b16 %v6290, %v6286
        %v6535 = vpack.c.b16 %v6295, %v6291
        %v6536 = vpack.c.b16 %v6296, %v6292
        %v6537 = vpack.c.b16 %v6297, %v6293
        %v6538 = vpack.c.b16 %v6298, %v6294
        %v6539 = vpack.c.b16 %v6303, %v6299
        %v6540 = vpack.c.b16 %v6304, %v6300
        %v6541 = vpack.c.b16 %v6305, %v6301
        %v6542 = vpack.c.b16 %v6306, %v6302
        %v6543 = vpack.c.b16 %v6311, %v6307
        %v6544 = vpack.c.b16 %v6312, %v6308
        %v6545 = vpack.c.b16 %v6313, %v6309
        %v6546 = vpack.c.b16 %v6314, %v6310
        %v6547 = vpack.c.b16 %v6319, %v6315
        %v6548 = vpack.c.b16 %v6320, %v6316
        %v6549 = vpack.c.b16 %v6321, %v6317
        %v6550 = vpack.c.b16 %v6322, %v6318
        %v6551 = vpack.c.b16 %v6327, %v6323
        %v6552 = vpack.c.b16 %v6328, %v6324
        %v6553 = vpack.c.b16 %v6329, %v6325
        %v6554 = vpack.c.b16 %v6330, %v6326
        %v6555 = vpack.c.b16 %v6335, %v6331
        %v6556 = vpack.c.b16 %v6336, %v6332
        %v6557 = vpack.c.b16 %v6337, %v6333
        %v6558 = vpack.c.b16 %v6338, %v6334
        %v6559 = vpack.c.b16 %v6343, %v6339
        %v6560 = vpack.c.b16 %v6344, %v6340
        %v6561 = vpack.c.b16 %v6345, %v6341
        %v6562 = vpack.c.b16 %v6346, %v6342
        %v6563 = vpack.c.b16 %v6351, %v6347
        %v6564 = vpack.c.b16 %v6352, %v6348
        %v6565 = vpack.c.b16 %v6353, %v6349
        %v6566 = vpack.c.b16 %v6354, %v6350
        %v6567 = vpack.c.b16 %v6359, %v6355
        %v6568 = vpack.c.b16 %v6360, %v6356
        %v6569 = vpack.c.b16 %v6361, %v6357
        %v6570 = vpack.c.b16 %v6362, %v6358
        %v6571 = vpack.c.b16 %v6367, %v6363
        %v6572 = vpack.c.b16 %v6368, %v6364
        %v6573 = vpack.c.b16 %v6369, %v6365
        %v6574 = vpack.c.b16 %v6370, %v6366
        %v6575 = vpack.c.b16 %v6375, %v6371
        %v6576 = vpack.c.b16 %v6376, %v6372
        %v6577 = vpack.c.b16 %v6377, %v6373
        %v6578 = vpack.c.b16 %v6378, %v6374
        %v6579 = vpack.c.b16 %v6383, %v6379
        %v6580 = vpack.c.b16 %v6384, %v6380
        %v6581 = vpack.c.b16 %v6385, %v6381
        %v6582 = vpack.c.b16 %v6386, %v6382
        %v6583 = vpack.c.b16 %v6391, %v6387
        %v6584 = vpack.c.b16 %v6392, %v6388
        %v6585 = vpack.c.b16 %v6393, %v6389
        %v6586 = vpack.c.b16 %v6394, %v6390
        %v6587 = vpack.c.b16 %v6399, %v6395
        %v6588 = vpack.c.b16 %v6400, %v6396
        %v6589 = vpack.c.b16 %v6401, %v6397
        %v6590 = vpack.c.b16 %v6402, %v6398
        %v6591 = vpack.c.b16 %v6407, %v6403
        %v6592 = vpack.c.b16 %v6408, %v6404
        %v6593 = vpack.c.b16 %v6409, %v6405
        %v6594 = vpack.c.b16 %v6410, %v6406
        %v6595 = vpack.c.b16 %v6415, %v6411
        %v6596 = vpack.c.b16 %v6416, %v6412
        %v6597 = vpack.c.b16 %v6417, %v6413
        %v6598 = vpack.c.b16 %v6418, %v6414
        %v6599 = vpack.c.b16 %v6423, %v6419
        %v6600 = vpack.c.b16 %v6424, %v6420
        %v6601 = vpack.c.b16 %v6425, %v6421
        %v6602 = vpack.c.b16 %v6426, %v6422
        %v6603 = vpack.c.b16 %v6431, %v6427
        %v6604 = vpack.c.b16 %v6432, %v6428
        %v6605 = vpack.c.b16 %v6433, %v6429
        %v6606 = vpack.c.b16 %v6434, %v6430
        %v6607 = vpack.c.b16 %v6439, %v6435
        %v6608 = vpack.c.b16 %v6440, %v6436
        %v6609 = vpack.c.b16 %v6441, %v6437
        %v6610 = vpack.c.b16 %v6442, %v6438
        %v6611 = vpack.c.b16 %v6447, %v6443
        %v6612 = vpack.c.b16 %v6448, %v6444
        %v6613 = vpack.c.b16 %v6449, %v6445
        %v6614 = vpack.c.b16 %v6450, %v6446
        %v6615 = vpack.c.b16 %v6455, %v6451
        %v6616 = vpack.c.b16 %v6456, %v6452
        %v6617 = vpack.c.b16 %v6457, %v6453
        %v6618 = vpack.c.b16 %v6458, %v6454
        %6779 = vmatprep.subr.bf16.mxu0 %v6460
        %6780 = vmatpush1.bf16.msra.mxu0 %v6459
        %6781 = vmatprep.subr.bf16.mxu0 %v6464
        %6782 = vmatpush1.bf16.msra.mxu0 %v6463
        %6783 = vmatprep.subr.bf16.mxu0 %v6468
        %6784 = vmatpush1.bf16.msra.mxu0 %v6467
        %6785 = vmatprep.subr.bf16.mxu0 %v6472
        %6786 = vmatpush1.bf16.msra.mxu0 %v6471
        %6787 = vmatprep.subr.bf16.mxu0 %v6476
        %6788 = vmatpush1.bf16.msra.mxu0 %v6475
        %6789 = vmatprep.subr.bf16.mxu0 %v6480
        %6790 = vmatpush1.bf16.msra.mxu0 %v6479
        %6791 = vmatprep.subr.bf16.mxu0 %v6484
        %6792 = vmatpush1.bf16.msra.mxu0 %v6483
        %6793 = vmatprep.subr.bf16.mxu0 %v6488
        %6794 = vmatpush1.bf16.msra.mxu0 %v6487
        %6795 = vmatprep.subr.bf16.mxu0 %v6492
        %6796 = vmatpush1.bf16.msra.mxu0 %v6491
        %6797 = vmatprep.subr.bf16.mxu0 %v6496
        %6798 = vmatpush1.bf16.msra.mxu0 %v6495
        %6799 = vmatprep.subr.bf16.mxu0 %v6500
        %6800 = vmatpush1.bf16.msra.mxu0 %v6499
        %6801 = vmatprep.subr.bf16.mxu0 %v6504
        %6802 = vmatpush1.bf16.msra.mxu0 %v6503
        %6803 = vmatprep.subr.bf16.mxu0 %v6508
        %6804 = vmatpush1.bf16.msra.mxu0 %v6507
        %6805 = vmatprep.subr.bf16.mxu0 %v6512
        %6806 = vmatpush1.bf16.msra.mxu0 %v6511
        %6807 = vmatprep.subr.bf16.mxu0 %v6516
        %6808 = vmatpush1.bf16.msra.mxu0 %v6515
        %6809 = vmatprep.subr.bf16.mxu0 %v6520
        %6810 = vmatpush1.bf16.msra.mxu0 %v6519
        %6811 = vmatprep.mubr.bf16.mxu0 %v5815
        %6812 = vmatmul.mubr.bf16.gmra.mrb[0].mxu0 %v5814
        %v6813 = vpop.f32.mrb[0].mxu0
        %v6814 = vadd.f32 0.0, %v6813
        %v6815 = vpop.f32.mrb[0].mxu0
        %v6816 = vadd.f32 0.0, %v6815
        %v6817 = vpop.f32.mrb[0].mxu0
        %v6818 = vadd.f32 0.0, %v6817
        %v6819 = vpop.f32.mrb[0].mxu0
        %v6820 = vadd.f32 0.0, %v6819
        %6821 = vdwg.mxu0
        %6822 = vmatprep.subr.bf16.mxu0 %v6524
        %6823 = vmatpush1.bf16.msra.mxu0 %v6523
        %6824 = vmatprep.subr.bf16.mxu0 %v6528
        %6825 = vmatpush1.bf16.msra.mxu0 %v6527
        %6826 = vmatprep.subr.bf16.mxu0 %v6532
        %6827 = vmatpush1.bf16.msra.mxu0 %v6531
        %6828 = vmatprep.subr.bf16.mxu0 %v6536
        %6829 = vmatpush1.bf16.msra.mxu0 %v6535
        %6830 = vmatprep.subr.bf16.mxu0 %v6540
        %6831 = vmatpush1.bf16.msra.mxu0 %v6539
        %6832 = vmatprep.subr.bf16.mxu0 %v6544
        %6833 = vmatpush1.bf16.msra.mxu0 %v6543
        %6834 = vmatprep.subr.bf16.mxu0 %v6548
        %6835 = vmatpush1.bf16.msra.mxu0 %v6547
        %6836 = vmatprep.subr.bf16.mxu0 %v6552
        %6837 = vmatpush1.bf16.msra.mxu0 %v6551
        %6838 = vmatprep.subr.bf16.mxu0 %v6556
        %6839 = vmatpush1.bf16.msra.mxu0 %v6555
        %6840 = vmatprep.subr.bf16.mxu0 %v6560
        %6841 = vmatpush1.bf16.msra.mxu0 %v6559
        %6842 = vmatprep.subr.bf16.mxu0 %v6564
        %6843 = vmatpush1.bf16.msra.mxu0 %v6563
        %6844 = vmatprep.subr.bf16.mxu0 %v6568
        %6845 = vmatpush1.bf16.msra.mxu0 %v6567
        %6846 = vmatprep.subr.bf16.mxu0 %v6572
        %6847 = vmatpush1.bf16.msra.mxu0 %v6571
        %6848 = vmatprep.subr.bf16.mxu0 %v6576
        %6849 = vmatpush1.bf16.msra.mxu0 %v6575
        %6850 = vmatprep.subr.bf16.mxu0 %v6580
        %6851 = vmatpush1.bf16.msra.mxu0 %v6579
        %6852 = vmatprep.subr.bf16.mxu0 %v6584
        %6853 = vmatpush1.bf16.msra.mxu0 %v6583
        %6854 = vmatprep.mubr.bf16.mxu0 %v5817
        %6855 = vmatmul.mubr.bf16.gmra.mrb[0].mxu0 %v5816
        %v6856 = vpop.f32.mrb[0].mxu0
        %v6857 = vadd.f32 %v6814, %v6856
        %v6858 = vpop.f32.mrb[0].mxu0
        %v6859 = vadd.f32 %v6816, %v6858
        %v6860 = vpop.f32.mrb[0].mxu0
        %v6861 = vadd.f32 %v6818, %v6860
        %v6862 = vpop.f32.mrb[0].mxu0
        %v6863 = vadd.f32 %v6820, %v6862
        %6864 = vdwg.mxu0
        %6865 = vmatprep.subr.bf16.mxu0 %v6588
        %6866 = vmatpush1.bf16.msra.mxu0 %v6587
        %6867 = vmatprep.subr.bf16.mxu0 %v6592
        %6868 = vmatpush1.bf16.msra.mxu0 %v6591
        %6869 = vmatprep.subr.bf16.mxu0 %v6596
        %6870 = vmatpush1.bf16.msra.mxu0 %v6595
        %6871 = vmatprep.subr.bf16.mxu0 %v6600
        %6872 = vmatpush1.bf16.msra.mxu0 %v6599
        %6873 = vmatprep.subr.bf16.mxu0 %v6604
        %6874 = vmatpush1.bf16.msra.mxu0 %v6603
        %6875 = vmatprep.subr.bf16.mxu0 %v6608
        %6876 = vmatpush1.bf16.msra.mxu0 %v6607
        %6877 = vmatprep.subr.bf16.mxu0 %v6612
        %6878 = vmatpush1.bf16.msra.mxu0 %v6611
        %6879 = vmatprep.subr.bf16.mxu0 %v6616
        %6880 = vmatpush1.bf16.msra.mxu0 %v6615
        %6881 = vmatprep.subr.bf16.mxu0 0
        %6882 = vmatpush1.bf16.msra.mxu0 0
        %6883 = vmatprep.subr.bf16.mxu0 0
        %6884 = vmatpush1.bf16.msra.mxu0 0
        %6885 = vmatprep.subr.bf16.mxu0 0
        %6886 = vmatpush1.bf16.msra.mxu0 0
        %6887 = vmatprep.subr.bf16.mxu0 0
        %6888 = vmatpush1.bf16.msra.mxu0 0
        %6889 = vmatprep.subr.bf16.mxu0 0
        %6890 = vmatpush1.bf16.msra.mxu0 0
        %6891 = vmatprep.subr.bf16.mxu0 0
        %6892 = vmatpush1.bf16.msra.mxu0 0
        %6893 = vmatprep.subr.bf16.mxu0 0
        %6894 = vmatpush1.bf16.msra.mxu0 0
        %6895 = vmatprep.subr.bf16.mxu0 0
        %6896 = vmatpush1.bf16.msra.mxu0 0
        %6897 = vmatprep.mubr.bf16.mxu0 0
        %6898 = vmatmul.mubr.bf16.gmra.mrb[0].mxu0 %v5818
        %v6899 = vpop.f32.mrb[0].mxu0
        %v6900 = vadd.f32 %v6857, %v6899
        %v6901 = vpop.f32.mrb[0].mxu0
        %v6902 = vadd.f32 %v6859, %v6901
        %v6903 = vpop.f32.mrb[0].mxu0
        %v6904 = vadd.f32 %v6861, %v6903
        %v6905 = vpop.f32.mrb[0].mxu0
        %v6906 = vadd.f32 %v6863, %v6905
        %6907 = vdwg.mxu0
        %6908 = vmatprep.subr.bf16.mxu0 %v6462
        %6909 = vmatpush1.bf16.msra.mxu0 %v6461
        %6910 = vmatprep.subr.bf16.mxu0 %v6466
        %6911 = vmatpush1.bf16.msra.mxu0 %v6465
        %6912 = vmatprep.subr.bf16.mxu0 %v6470
        %6913 = vmatpush1.bf16.msra.mxu0 %v6469
        %6914 = vmatprep.subr.bf16.mxu0 %v6474
        %6915 = vmatpush1.bf16.msra.mxu0 %v6473
        %6916 = vmatprep.subr.bf16.mxu0 %v6478
        %6917 = vmatpush1.bf16.msra.mxu0 %v6477
        %6918 = vmatprep.subr.bf16.mxu0 %v6482
        %6919 = vmatpush1.bf16.msra.mxu0 %v6481
        %6920 = vmatprep.subr.bf16.mxu0 %v6486
        %6921 = vmatpush1.bf16.msra.mxu0 %v6485
        %6922 = vmatprep.subr.bf16.mxu0 %v6490
        %6923 = vmatpush1.bf16.msra.mxu0 %v6489
        %6924 = vmatprep.subr.bf16.mxu0 %v6494
        %6925 = vmatpush1.bf16.msra.mxu0 %v6493
        %6926 = vmatprep.subr.bf16.mxu0 %v6498
        %6927 = vmatpush1.bf16.msra.mxu0 %v6497
        %6928 = vmatprep.subr.bf16.mxu0 %v6502
        %6929 = vmatpush1.bf16.msra.mxu0 %v6501
        %6930 = vmatprep.subr.bf16.mxu0 %v6506
        %6931 = vmatpush1.bf16.msra.mxu0 %v6505
        %6932 = vmatprep.subr.bf16.mxu0 %v6510
        %6933 = vmatpush1.bf16.msra.mxu0 %v6509
        %6934 = vmatprep.subr.bf16.mxu0 %v6514
        %6935 = vmatpush1.bf16.msra.mxu0 %v6513
        %6936 = vmatprep.subr.bf16.mxu0 %v6518
        %6937 = vmatpush1.bf16.msra.mxu0 %v6517
        %6938 = vmatprep.subr.bf16.mxu0 %v6522
        %6939 = vmatpush1.bf16.msra.mxu0 %v6521
        %6940 = vmatprep.mubr.bf16.mxu0 %v5815
        %6941 = vmatmul.mubr.bf16.gmra.mrb[0].mxu0 %v5814
        %v6942 = vpop.f32.mrb[0].mxu0
        %v6943 = vadd.f32 0.0, %v6942
        %v6944 = vpop.f32.mrb[0].mxu0
        %v6945 = vadd.f32 0.0, %v6944
        %v6946 = vpop.f32.mrb[0].mxu0
        %v6947 = vadd.f32 0.0, %v6946
        %v6948 = vpop.f32.mrb[0].mxu0
        %v6949 = vadd.f32 0.0, %v6948
        %6950 = vdwg.mxu0
        %6951 = vmatprep.subr.bf16.mxu0 %v6526
        %6952 = vmatpush1.bf16.msra.mxu0 %v6525
        %6953 = vmatprep.subr.bf16.mxu0 %v6530
        %6954 = vmatpush1.bf16.msra.mxu0 %v6529
        %6955 = vmatprep.subr.bf16.mxu0 %v6534
        %6956 = vmatpush1.bf16.msra.mxu0 %v6533
        %6957 = vmatprep.subr.bf16.mxu0 %v6538
        %6958 = vmatpush1.bf16.msra.mxu0 %v6537
        %6959 = vmatprep.subr.bf16.mxu0 %v6542
        %6960 = vmatpush1.bf16.msra.mxu0 %v6541
        %6961 = vmatprep.subr.bf16.mxu0 %v6546
        %6962 = vmatpush1.bf16.msra.mxu0 %v6545
        %6963 = vmatprep.subr.bf16.mxu0 %v6550
        %6964 = vmatpush1.bf16.msra.mxu0 %v6549
        %6965 = vmatprep.subr.bf16.mxu0 %v6554
        %6966 = vmatpush1.bf16.msra.mxu0 %v6553
        %6967 = vmatprep.subr.bf16.mxu0 %v6558
        %6968 = vmatpush1.bf16.msra.mxu0 %v6557
        %6969 = vmatprep.subr.bf16.mxu0 %v6562
        %6970 = vmatpush1.bf16.msra.mxu0 %v6561
        %6971 = vmatprep.subr.bf16.mxu0 %v6566
        %6972 = vmatpush1.bf16.msra.mxu0 %v6565
        %6973 = vmatprep.subr.bf16.mxu0 %v6570
        %6974 = vmatpush1.bf16.msra.mxu0 %v6569
        %6975 = vmatprep.subr.bf16.mxu0 %v6574
        %6976 = vmatpush1.bf16.msra.mxu0 %v6573
        %6977 = vmatprep.subr.bf16.mxu0 %v6578
        %6978 = vmatpush1.bf16.msra.mxu0 %v6577
        %6979 = vmatprep.subr.bf16.mxu0 %v6582
        %6980 = vmatpush1.bf16.msra.mxu0 %v6581
        %6981 = vmatprep.subr.bf16.mxu0 %v6586
        %6982 = vmatpush1.bf16.msra.mxu0 %v6585
        %6983 = vmatprep.mubr.bf16.mxu0 %v5817
        %6984 = vmatmul.mubr.bf16.gmra.mrb[0].mxu0 %v5816
        %v6985 = vpop.f32.mrb[0].mxu0
        %v6986 = vadd.f32 %v6943, %v6985
        %v6987 = vpop.f32.mrb[0].mxu0
        %v6988 = vadd.f32 %v6945, %v6987
        %v6989 = vpop.f32.mrb[0].mxu0
        %v6990 = vadd.f32 %v6947, %v6989
        %v6991 = vpop.f32.mrb[0].mxu0
        %v6992 = vadd.f32 %v6949, %v6991
        %6993 = vdwg.mxu0
        %6994 = vmatprep.subr.bf16.mxu0 %v6590
        %6995 = vmatpush1.bf16.msra.mxu0 %v6589
        %6996 = vmatprep.subr.bf16.mxu0 %v6594
        %6997 = vmatpush1.bf16.msra.mxu0 %v6593
        %6998 = vmatprep.subr.bf16.mxu0 %v6598
        %6999 = vmatpush1.bf16.msra.mxu0 %v6597
        %7000 = vmatprep.subr.bf16.mxu0 %v6602
        %7001 = vmatpush1.bf16.msra.mxu0 %v6601
        %7002 = vmatprep.subr.bf16.mxu0 %v6606
        %7003 = vmatpush1.bf16.msra.mxu0 %v6605
        %7004 = vmatprep.subr.bf16.mxu0 %v6610
        %7005 = vmatpush1.bf16.msra.mxu0 %v6609
        %7006 = vmatprep.subr.bf16.mxu0 %v6614
        %7007 = vmatpush1.bf16.msra.mxu0 %v6613
        %7008 = vmatprep.subr.bf16.mxu0 %v6618
        %7009 = vmatpush1.bf16.msra.mxu0 %v6617
        %7010 = vmatprep.subr.bf16.mxu0 0
        %7011 = vmatpush1.bf16.msra.mxu0 0
        %7012 = vmatprep.subr.bf16.mxu0 0
        %7013 = vmatpush1.bf16.msra.mxu0 0
        %7014 = vmatprep.subr.bf16.mxu0 0
        %7015 = vmatpush1.bf16.msra.mxu0 0
        %7016 = vmatprep.subr.bf16.mxu0 0
        %7017 = vmatpush1.bf16.msra.mxu0 0
        %7018 = vmatprep.subr.bf16.mxu0 0
        %7019 = vmatpush1.bf16.msra.mxu0 0
        %7020 = vmatprep.subr.bf16.mxu0 0
        %7021 = vmatpush1.bf16.msra.mxu0 0
        %7022 = vmatprep.subr.bf16.mxu0 0
        %7023 = vmatpush1.bf16.msra.mxu0 0
        %7024 = vmatprep.subr.bf16.mxu0 0
        %7025 = vmatpush1.bf16.msra.mxu0 0
        %7026 = vmatprep.mubr.bf16.mxu0 0
        %7027 = vmatmul.mubr.bf16.gmra.mrb[0].mxu0 %v5818
        %v7028 = vpop.f32.mrb[0].mxu0
        %v7029 = vadd.f32 %v6986, %v7028
        %v7030 = vpop.f32.mrb[0].mxu0
        %v7031 = vadd.f32 %v6988, %v7030
        %v7032 = vpop.f32.mrb[0].mxu0
        %v7033 = vadd.f32 %v6990, %v7032
        %v7034 = vpop.f32.mrb[0].mxu0
        %v7035 = vadd.f32 %v6992, %v7034
        %7036 = vdwg.mxu0
        %v7037 = vmax.f32 %v6900, %v7029
        %v7038 = vmax.f32 %v6902, %v7031
        %v7039 = vmax.f32 %v6904, %v7033
        %v7040 = vmax.f32 %v6906, %v7035
        %v7041 = vld [vmem:[%s6] sm:$0x3]
        %v7043 = vlaneseq
        %v7044 = vshrl.u32 %v7043, 7
        %v7045 = vsub.s32 0, %v7044
        %v7046 = vrot.slane %v7041, %v7045
        %v7047 = vlaneseq
        %v7048 = vshrl.u32 %v7047, 7
        %v7049 = vsub.s32 1, %v7048
        %v7050 = vrot.slane %v7041, %v7049
        %v7053 = vadd.f32 %v7037, %v7046
        %v7054 = vadd.f32 %v7038, %v7050
        %v7055 = vadd.f32 %v7039, %v7046
        %v7056 = vadd.f32 %v7040, %v7050
        %v7057 = vmax.f32 %v7053, 0.0
        %v7058 = vmax.f32 %v7054, 0.0
        %v7059 = vmax.f32 %v7055, 0.0
        %v7060 = vmax.f32 %v7056, 0.0
        %v7061 = vld [vmem:[#allocation3] sm:$0xf]
        %v7062 = vld [vmem:[#allocation3 + $0x4] sm:$0x1]
        %v7063 = vpack.c.bf16 %v7059, %v7057
        %v7064 = vpack.c.bf16 %v7060, %v7058
        %v7067 = vunpack.c.l.b16 %v7061
        %v7068 = vunpack.c.l.b16 %v7062
        %v7069 = vpack.c.b16 %v7068, %v7067
        %v7071 = vsel %vm2107, %v7069, 0
        %v7074 = vsel %vm839, %v7063, 0
        %v7077 = vsel %vm839, %v7064, 0
        %7079 = vmatprep.subr.bf16.mxu0 %v7077
        %7080 = vmatpush1.bf16.msra.mxu0 %v7074
        %7081 = vmatprep.subr.bf16.mxu0 0
        %7082 = vmatpush1.bf16.msra.mxu0 0
        %7083 = vmatprep.subr.bf16.mxu0 0
        %7084 = vmatpush1.bf16.msra.mxu0 0
        %7085 = vmatprep.subr.bf16.mxu0 0
        %7086 = vmatpush1.bf16.msra.mxu0 0
        %7087 = vmatprep.subr.bf16.mxu0 0
        %7088 = vmatpush1.bf16.msra.mxu0 0
        %7089 = vmatprep.subr.bf16.mxu0 0
        %7090 = vmatpush1.bf16.msra.mxu0 0
        %7091 = vmatprep.subr.bf16.mxu0 0
        %7092 = vmatpush1.bf16.msra.mxu0 0
        %7093 = vmatprep.subr.bf16.mxu0 0
        %7094 = vmatpush1.bf16.msra.mxu0 0
        %7095 = vmatprep.subr.bf16.mxu0 0
        %7096 = vmatpush1.bf16.msra.mxu0 0
        %7097 = vmatprep.subr.bf16.mxu0 0
        %7098 = vmatpush1.bf16.msra.mxu0 0
        %7099 = vmatprep.subr.bf16.mxu0 0
        %7100 = vmatpush1.bf16.msra.mxu0 0
        %7101 = vmatprep.subr.bf16.mxu0 0
        %7102 = vmatpush1.bf16.msra.mxu0 0
        %7103 = vmatprep.subr.bf16.mxu0 0
        %7104 = vmatpush1.bf16.msra.mxu0 0
        %7105 = vmatprep.subr.bf16.mxu0 0
        %7106 = vmatpush1.bf16.msra.mxu0 0
        %7107 = vmatprep.subr.bf16.mxu0 0
        %7108 = vmatpush1.bf16.msra.mxu0 0
        %7109 = vmatprep.subr.bf16.mxu0 0
        %7110 = vmatpush1.bf16.msra.mxu0 0
        %7111 = vmatprep.mubr.bf16.mxu0 0
        %7112 = vmatmul.mubr.bf16.gmra.mrb[0].mxu0 %v7071
        %v7113 = vpop.f32.mrb[0].mxu0
        %v7114 = vadd.f32 0.0, %v7113
        %v7115 = vpop.f32.mrb[0].mxu0
        %v7116 = vadd.f32 0.0, %v7115
        %v7117 = vpop.f32.mrb[0].mxu0
        %v7118 = vadd.f32 0.0, %v7117
        %v7119 = vpop.f32.mrb[0].mxu0
        %v7120 = vadd.f32 0.0, %v7119
        %7121 = vdwg.mxu0
        %v7126 = vrot.slane %v7114, 5
        %v7127 = vrot.slane %v7118, 5
        %v7128 = vsel %vm2164, %v7126, %v7127
        %v7129 = vrot.slane %v7116, 5
        %v7130 = vrot.slane %v7120, 5
        %v7131 = vsel %vm2164, %v7129, %v7130
        %v7134 = vmax.f32 %v7114, %v7128
        %v7135 = vmax.f32 %v7116, %v7131
        %s7136 = scalar_lea.vmem [#allocation2], 48
        %7137 = vst [vmem:[%s7136] sm:$0x1f] %v7134
        %7138 = vst [vmem:[%s7136 + $0x8] sm:$0x1f] %v7135
        %v7139 = vld [vmem:[#allocation2] sm:$0x1f]
        %v7140 = vld [vmem:[#allocation2 + $0x8] sm:$0x1f]
        %v7141 = vld [vmem:[#allocation2 + $0x10] sm:$0x1f]
        %v7142 = vld [vmem:[#allocation2 + $0x18] sm:$0x1f]
        %v7143 = vld [vmem:[#allocation2 + $0x20] sm:$0x1f]
        %v7144 = vld [vmem:[#allocation2 + $0x28] sm:$0x1f]
        %v7145 = vld [vmem:[#allocation2 + $0x30] sm:$0x1f]
        %v7146 = vld [vmem:[#allocation2 + $0x38] sm:$0x1f]
        %v7147 = vpack.c.bf16 %v7139, %v7139
        %v7148 = vpack.c.bf16 %v7140, %v7140
        %v7149 = vpack.c.bf16 %v7141, %v7141
        %v7150 = vpack.c.bf16 %v7142, %v7142
        %v7151 = vpack.c.bf16 %v7143, %v7143
        %v7152 = vpack.c.bf16 %v7144, %v7144
        %v7153 = vpack.c.bf16 %v7145, %v7145
        %v7154 = vpack.c.bf16 %v7146, %v7146
        %v7155 = vld [vmem:[%s7] sm:$0xff]
        %v7156 = vld [vmem:[%s7 + $0x8] sm:$0xff]
        %v7157 = vld [vmem:[%s7 + $0x10] sm:$0xff]
        %v7158 = vld [vmem:[%s7 + $0x18] sm:$0xff]
        %v7159 = vld [vmem:[%s7 + $0x20] sm:$0xff]
        %v7160 = vld [vmem:[%s7 + $0x28] sm:$0xff]
        %v7161 = vld [vmem:[%s7 + $0x30] sm:$0xff]
        %v7162 = vld [vmem:[%s7 + $0x38] sm:$0xff]
        %v7163 = vld [vmem:[%s7 + $0x40] sm:$0xff]
        %v7164 = vld [vmem:[%s7 + $0x48] sm:$0xff]
        %v7165 = vld [vmem:[%s7 + $0x50] sm:$0xff]
        %v7166 = vld [vmem:[%s7 + $0x58] sm:$0xff]
        %v7167 = vld [vmem:[%s7 + $0x60] sm:$0xff]
        %v7168 = vld [vmem:[%s7 + $0x68] sm:$0xff]
        %v7169 = vld [vmem:[%s7 + $0x70] sm:$0xff]
        %v7170 = vld [vmem:[%s7 + $0x78] sm:$0xff]
        %v7171 = vld [vmem:[%s7 + $0x80] sm:$0xff]
        %v7172 = vld [vmem:[%s7 + $0x88] sm:$0xff]
        %v7173 = vld [vmem:[%s7 + $0x90] sm:$0xff]
        %v7174 = vld [vmem:[%s7 + $0x98] sm:$0xff]
        %v7175 = vld [vmem:[%s7 + $0xa0] sm:$0xff]
        %v7176 = vld [vmem:[%s7 + $0xa8] sm:$0xff]
        %v7177 = vld [vmem:[%s7 + $0xb0] sm:$0xff]
        %v7178 = vld [vmem:[%s7 + $0xb8] sm:$0xff]
        %v7179 = vld [vmem:[%s7 + $0xc0] sm:$0xff]
        %v7180 = vld [vmem:[%s7 + $0xc8] sm:$0xff]
        %v7181 = vld [vmem:[%s7 + $0xd0] sm:$0xff]
        %v7182 = vld [vmem:[%s7 + $0xd8] sm:$0xff]
        %v7183 = vld [vmem:[%s7 + $0xe0] sm:$0xff]
        %v7184 = vld [vmem:[%s7 + $0xe8] sm:$0xff]
        %v7185 = vld [vmem:[%s7 + $0xf0] sm:$0xff]
        %v7186 = vld [vmem:[%s7 + $0xf8] sm:$0xff]
        %s7187 = scalar_lea.vmem %s7, 256
        %v7188 = vld [vmem:[%s7187] sm:$0xff]
        %v7189 = vld [vmem:[%s7187 + $0x8] sm:$0xff]
        %v7190 = vld [vmem:[%s7187 + $0x10] sm:$0xff]
        %v7191 = vld [vmem:[%s7187 + $0x18] sm:$0xff]
        %v7192 = vld [vmem:[%s7187 + $0x20] sm:$0xff]
        %v7193 = vld [vmem:[%s7187 + $0x28] sm:$0xff]
        %v7194 = vld [vmem:[%s7187 + $0x30] sm:$0xff]
        %v7195 = vld [vmem:[%s7187 + $0x38] sm:$0xff]
        %v7196 = vld [vmem:[%s7187 + $0x40] sm:$0xff]
        %v7197 = vld [vmem:[%s7187 + $0x48] sm:$0xff]
        %v7198 = vld [vmem:[%s7187 + $0x50] sm:$0xff]
        %v7199 = vld [vmem:[%s7187 + $0x58] sm:$0xff]
        %v7200 = vld [vmem:[%s7187 + $0x60] sm:$0xff]
        %v7201 = vld [vmem:[%s7187 + $0x68] sm:$0xff]
        %v7202 = vld [vmem:[%s7187 + $0x70] sm:$0xff]
        %v7203 = vld [vmem:[%s7187 + $0x78] sm:$0xff]
        %v7204 = vld [vmem:[%s7187 + $0x80] sm:$0xff]
        %v7205 = vld [vmem:[%s7187 + $0x88] sm:$0xff]
        %v7206 = vld [vmem:[%s7187 + $0x90] sm:$0xff]
        %v7207 = vld [vmem:[%s7187 + $0x98] sm:$0xff]
        %v7208 = vld [vmem:[%s7187 + $0xa0] sm:$0xff]
        %v7209 = vld [vmem:[%s7187 + $0xa8] sm:$0xff]
        %v7210 = vld [vmem:[%s7187 + $0xb0] sm:$0xff]
        %v7211 = vld [vmem:[%s7187 + $0xb8] sm:$0xff]
        %v7212 = vld [vmem:[%s7187 + $0xc0] sm:$0xff]
        %v7213 = vld [vmem:[%s7187 + $0xc8] sm:$0xff]
        %v7214 = vld [vmem:[%s7187 + $0xd0] sm:$0xff]
        %v7215 = vld [vmem:[%s7187 + $0xd8] sm:$0xff]
        %v7216 = vld [vmem:[%s7187 + $0xe0] sm:$0xff]
        %v7217 = vld [vmem:[%s7187 + $0xe8] sm:$0xff]
        %v7218 = vld [vmem:[%s7187 + $0xf0] sm:$0xff]
        %v7219 = vld [vmem:[%s7187 + $0xf8] sm:$0xff]
        %v7228 = vunpack.c.l.b16 %v7147
        %v7229 = vunpack.c.l.b16 %v7148
        %v7230 = vunpack.c.l.b16 %v7149
        %v7231 = vunpack.c.l.b16 %v7150
        %v7232 = vunpack.c.l.b16 %v7151
        %v7233 = vunpack.c.l.b16 %v7152
        %v7234 = vunpack.c.l.b16 %v7153
        %v7235 = vunpack.c.l.b16 %v7154
        %v7236 = vrot.slane %v7228, 1
        %vm7237 = vcmask 1041409
        %v7238 = vsel %vm7237, %v7230, %v7236
        %v7239 = vrot.slane %v7232, 7
        %vm7240 = vcmask 1042434
        %v7241 = vsel %vm7240, %v7239, %v7238
        %v7242 = vrot.slane %v7234, 6
        %vm7243 = vcmask 1043459
        %v7244 = vsel %vm7243, %v7242, %v7241
        %v7245 = vrot.slane %v7229, 1
        %v7246 = vsel %vm7237, %v7231, %v7245
        %v7247 = vrot.slane %v7233, 7
        %v7248 = vsel %vm7240, %v7247, %v7246
        %v7249 = vrot.slane %v7235, 6
        %v7250 = vsel %vm7243, %v7249, %v7248
        %v7251 = vpack.c.b16 %v7244, %v7244
        %v7252 = vpack.c.b16 %v7250, %v7250
        %v7287 = vunpack.c.l.b16 %v7188
        %v7288 = vunpack.c.h.b16 %v7188
        %v7289 = vunpack.c.l.b16 %v7189
        %v7290 = vunpack.c.h.b16 %v7189
        %v7291 = vunpack.c.l.b16 %v7190
        %v7292 = vunpack.c.h.b16 %v7190
        %v7293 = vunpack.c.l.b16 %v7191
        %v7294 = vunpack.c.h.b16 %v7191
        %v7295 = vunpack.c.l.b16 %v7192
        %v7296 = vunpack.c.h.b16 %v7192
        %v7297 = vunpack.c.l.b16 %v7193
        %v7298 = vunpack.c.h.b16 %v7193
        %v7299 = vunpack.c.l.b16 %v7194
        %v7300 = vunpack.c.h.b16 %v7194
        %v7301 = vunpack.c.l.b16 %v7195
        %v7302 = vunpack.c.h.b16 %v7195
        %v7303 = vunpack.c.l.b16 %v7196
        %v7304 = vunpack.c.h.b16 %v7196
        %v7305 = vunpack.c.l.b16 %v7197
        %v7306 = vunpack.c.h.b16 %v7197
        %v7307 = vunpack.c.l.b16 %v7198
        %v7308 = vunpack.c.h.b16 %v7198
        %v7309 = vunpack.c.l.b16 %v7199
        %v7310 = vunpack.c.h.b16 %v7199
        %v7311 = vunpack.c.l.b16 %v7200
        %v7312 = vunpack.c.h.b16 %v7200
        %v7313 = vunpack.c.l.b16 %v7201
        %v7314 = vunpack.c.h.b16 %v7201
        %v7315 = vunpack.c.l.b16 %v7202
        %v7316 = vunpack.c.h.b16 %v7202
        %v7317 = vunpack.c.l.b16 %v7203
        %v7318 = vunpack.c.h.b16 %v7203
        %v7319 = vunpack.c.l.b16 %v7204
        %v7320 = vunpack.c.h.b16 %v7204
        %v7321 = vunpack.c.l.b16 %v7205
        %v7322 = vunpack.c.h.b16 %v7205
        %v7323 = vunpack.c.l.b16 %v7206
        %v7324 = vunpack.c.h.b16 %v7206
        %v7325 = vunpack.c.l.b16 %v7207
        %v7326 = vunpack.c.h.b16 %v7207
        %v7327 = vunpack.c.l.b16 %v7208
        %v7328 = vunpack.c.h.b16 %v7208
        %v7329 = vunpack.c.l.b16 %v7209
        %v7330 = vunpack.c.h.b16 %v7209
        %v7331 = vunpack.c.l.b16 %v7210
        %v7332 = vunpack.c.h.b16 %v7210
        %v7333 = vunpack.c.l.b16 %v7211
        %v7334 = vunpack.c.h.b16 %v7211
        %v7335 = vunpack.c.l.b16 %v7212
        %v7336 = vunpack.c.h.b16 %v7212
        %v7337 = vunpack.c.l.b16 %v7213
        %v7338 = vunpack.c.h.b16 %v7213
        %v7339 = vunpack.c.l.b16 %v7214
        %v7340 = vunpack.c.h.b16 %v7214
        %v7341 = vunpack.c.l.b16 %v7215
        %v7342 = vunpack.c.h.b16 %v7215
        %v7343 = vunpack.c.l.b16 %v7216
        %v7344 = vunpack.c.h.b16 %v7216
        %v7345 = vunpack.c.l.b16 %v7217
        %v7346 = vunpack.c.h.b16 %v7217
        %v7347 = vunpack.c.l.b16 %v7218
        %v7348 = vunpack.c.h.b16 %v7218
        %v7349 = vunpack.c.l.b16 %v7219
        %v7350 = vunpack.c.h.b16 %v7219
        %v7351 = vpack.c.b16 %v7289, %v7287
        %v7352 = vpack.c.b16 %v7290, %v7288
        %v7353 = vpack.c.b16 %v7293, %v7291
        %v7354 = vpack.c.b16 %v7294, %v7292
        %v7355 = vpack.c.b16 %v7297, %v7295
        %v7356 = vpack.c.b16 %v7298, %v7296
        %v7357 = vpack.c.b16 %v7301, %v7299
        %v7358 = vpack.c.b16 %v7302, %v7300
        %v7359 = vpack.c.b16 %v7305, %v7303
        %v7360 = vpack.c.b16 %v7306, %v7304
        %v7361 = vpack.c.b16 %v7309, %v7307
        %v7362 = vpack.c.b16 %v7310, %v7308
        %v7363 = vpack.c.b16 %v7313, %v7311
        %v7364 = vpack.c.b16 %v7314, %v7312
        %v7365 = vpack.c.b16 %v7317, %v7315
        %v7366 = vpack.c.b16 %v7318, %v7316
        %v7367 = vpack.c.b16 %v7321, %v7319
        %v7368 = vpack.c.b16 %v7322, %v7320
        %v7369 = vpack.c.b16 %v7325, %v7323
        %v7370 = vpack.c.b16 %v7326, %v7324
        %v7371 = vpack.c.b16 %v7329, %v7327
        %v7372 = vpack.c.b16 %v7330, %v7328
        %v7373 = vpack.c.b16 %v7333, %v7331
        %v7374 = vpack.c.b16 %v7334, %v7332
        %v7375 = vpack.c.b16 %v7337, %v7335
        %v7376 = vpack.c.b16 %v7338, %v7336
        %v7377 = vpack.c.b16 %v7341, %v7339
        %v7378 = vpack.c.b16 %v7342, %v7340
        %v7379 = vpack.c.b16 %v7345, %v7343
        %v7380 = vpack.c.b16 %v7346, %v7344
        %v7381 = vpack.c.b16 %v7349, %v7347
        %v7382 = vpack.c.b16 %v7350, %v7348
        %7415 = vmatprep.subr.bf16.mxu0 %v7352
        %7416 = vmatpush1.bf16.msra.mxu0 %v7351
        %7417 = vmatprep.subr.bf16.mxu0 %v7354
        %7418 = vmatpush1.bf16.msra.mxu0 %v7353
        %7419 = vmatprep.subr.bf16.mxu0 %v7356
        %7420 = vmatpush1.bf16.msra.mxu0 %v7355
        %7421 = vmatprep.subr.bf16.mxu0 %v7358
        %7422 = vmatpush1.bf16.msra.mxu0 %v7357
        %7423 = vmatprep.subr.bf16.mxu0 %v7360
        %7424 = vmatpush1.bf16.msra.mxu0 %v7359
        %7425 = vmatprep.subr.bf16.mxu0 %v7362
        %7426 = vmatpush1.bf16.msra.mxu0 %v7361
        %7427 = vmatprep.subr.bf16.mxu0 %v7364
        %7428 = vmatpush1.bf16.msra.mxu0 %v7363
        %7429 = vmatprep.subr.bf16.mxu0 %v7366
        %7430 = vmatpush1.bf16.msra.mxu0 %v7365
        %7431 = vmatprep.subr.bf16.mxu0 %v7368
        %7432 = vmatpush1.bf16.msra.mxu0 %v7367
        %7433 = vmatprep.subr.bf16.mxu0 %v7370
        %7434 = vmatpush1.bf16.msra.mxu0 %v7369
        %7435 = vmatprep.subr.bf16.mxu0 %v7372
        %7436 = vmatpush1.bf16.msra.mxu0 %v7371
        %7437 = vmatprep.subr.bf16.mxu0 %v7374
        %7438 = vmatpush1.bf16.msra.mxu0 %v7373
        %7439 = vmatprep.subr.bf16.mxu0 %v7376
        %7440 = vmatpush1.bf16.msra.mxu0 %v7375
        %7441 = vmatprep.subr.bf16.mxu0 %v7378
        %7442 = vmatpush1.bf16.msra.mxu0 %v7377
        %7443 = vmatprep.subr.bf16.mxu0 %v7380
        %7444 = vmatpush1.bf16.msra.mxu0 %v7379
        %7445 = vmatprep.subr.bf16.mxu0 %v7382
        %7446 = vmatpush1.bf16.msra.mxu0 %v7381
        %7447 = vmatprep.mubr.bf16.mxu0 %v7252
        %7448 = vmatmul.mubr.bf16.gmra.mrb[0].mxu0 %v7251
        %v7449 = vpop.f32.mrb[0].mxu0
        %v7450 = vadd.f32 0.0, %v7449
        %v7451 = vpop.f32.mrb[0].mxu0
        %v7452 = vadd.f32 0.0, %v7451
        %v7453 = vpop.f32.mrb[0].mxu0
        %v7454 = vpop.f32.mrb[0].mxu0
        %7455 = vdwg.mxu0
        %v7456 = vrot.slane %v7230, 7
        %v7457 = vsel %vm7237, %v7456, %v7228
        %v7458 = vrot.slane %v7232, 6
        %v7459 = vsel %vm7240, %v7458, %v7457
        %v7460 = vrot.slane %v7234, 5
        %v7461 = vsel %vm7243, %v7460, %v7459
        %v7462 = vrot.slane %v7231, 7
        %v7463 = vsel %vm7237, %v7462, %v7229
        %v7464 = vrot.slane %v7233, 6
        %v7465 = vsel %vm7240, %v7464, %v7463
        %v7466 = vrot.slane %v7235, 5
        %v7467 = vsel %vm7243, %v7466, %v7465
        %v7468 = vpack.c.b16 %v7461, %v7461
        %v7469 = vpack.c.b16 %v7467, %v7467
        %v7504 = vunpack.c.l.b16 %v7155
        %v7505 = vunpack.c.h.b16 %v7155
        %v7506 = vunpack.c.l.b16 %v7156
        %v7507 = vunpack.c.h.b16 %v7156
        %v7508 = vunpack.c.l.b16 %v7157
        %v7509 = vunpack.c.h.b16 %v7157
        %v7510 = vunpack.c.l.b16 %v7158
        %v7511 = vunpack.c.h.b16 %v7158
        %v7512 = vunpack.c.l.b16 %v7159
        %v7513 = vunpack.c.h.b16 %v7159
        %v7514 = vunpack.c.l.b16 %v7160
        %v7515 = vunpack.c.h.b16 %v7160
        %v7516 = vunpack.c.l.b16 %v7161
        %v7517 = vunpack.c.h.b16 %v7161
        %v7518 = vunpack.c.l.b16 %v7162
        %v7519 = vunpack.c.h.b16 %v7162
        %v7520 = vunpack.c.l.b16 %v7163
        %v7521 = vunpack.c.h.b16 %v7163
        %v7522 = vunpack.c.l.b16 %v7164
        %v7523 = vunpack.c.h.b16 %v7164
        %v7524 = vunpack.c.l.b16 %v7165
        %v7525 = vunpack.c.h.b16 %v7165
        %v7526 = vunpack.c.l.b16 %v7166
        %v7527 = vunpack.c.h.b16 %v7166
        %v7528 = vunpack.c.l.b16 %v7167
        %v7529 = vunpack.c.h.b16 %v7167
        %v7530 = vunpack.c.l.b16 %v7168
        %v7531 = vunpack.c.h.b16 %v7168
        %v7532 = vunpack.c.l.b16 %v7169
        %v7533 = vunpack.c.h.b16 %v7169
        %v7534 = vunpack.c.l.b16 %v7170
        %v7535 = vunpack.c.h.b16 %v7170
        %v7536 = vunpack.c.l.b16 %v7171
        %v7537 = vunpack.c.h.b16 %v7171
        %v7538 = vunpack.c.l.b16 %v7172
        %v7539 = vunpack.c.h.b16 %v7172
        %v7540 = vunpack.c.l.b16 %v7173
        %v7541 = vunpack.c.h.b16 %v7173
        %v7542 = vunpack.c.l.b16 %v7174
        %v7543 = vunpack.c.h.b16 %v7174
        %v7544 = vunpack.c.l.b16 %v7175
        %v7545 = vunpack.c.h.b16 %v7175
        %v7546 = vunpack.c.l.b16 %v7176
        %v7547 = vunpack.c.h.b16 %v7176
        %v7548 = vunpack.c.l.b16 %v7177
        %v7549 = vunpack.c.h.b16 %v7177
        %v7550 = vunpack.c.l.b16 %v7178
        %v7551 = vunpack.c.h.b16 %v7178
        %v7552 = vunpack.c.l.b16 %v7179
        %v7553 = vunpack.c.h.b16 %v7179
        %v7554 = vunpack.c.l.b16 %v7180
        %v7555 = vunpack.c.h.b16 %v7180
        %v7556 = vunpack.c.l.b16 %v7181
        %v7557 = vunpack.c.h.b16 %v7181
        %v7558 = vunpack.c.l.b16 %v7182
        %v7559 = vunpack.c.h.b16 %v7182
        %v7560 = vunpack.c.l.b16 %v7183
        %v7561 = vunpack.c.h.b16 %v7183
        %v7562 = vunpack.c.l.b16 %v7184
        %v7563 = vunpack.c.h.b16 %v7184
        %v7564 = vunpack.c.l.b16 %v7185
        %v7565 = vunpack.c.h.b16 %v7185
        %v7566 = vunpack.c.l.b16 %v7186
        %v7567 = vunpack.c.h.b16 %v7186
        %v7568 = vpack.c.b16 %v7506, %v7504
        %v7569 = vpack.c.b16 %v7507, %v7505
        %v7570 = vpack.c.b16 %v7510, %v7508
        %v7571 = vpack.c.b16 %v7511, %v7509
        %v7572 = vpack.c.b16 %v7514, %v7512
        %v7573 = vpack.c.b16 %v7515, %v7513
        %v7574 = vpack.c.b16 %v7518, %v7516
        %v7575 = vpack.c.b16 %v7519, %v7517
        %v7576 = vpack.c.b16 %v7522, %v7520
        %v7577 = vpack.c.b16 %v7523, %v7521
        %v7578 = vpack.c.b16 %v7526, %v7524
        %v7579 = vpack.c.b16 %v7527, %v7525
        %v7580 = vpack.c.b16 %v7530, %v7528
        %v7581 = vpack.c.b16 %v7531, %v7529
        %v7582 = vpack.c.b16 %v7534, %v7532
        %v7583 = vpack.c.b16 %v7535, %v7533
        %v7584 = vpack.c.b16 %v7538, %v7536
        %v7585 = vpack.c.b16 %v7539, %v7537
        %v7586 = vpack.c.b16 %v7542, %v7540
        %v7587 = vpack.c.b16 %v7543, %v7541
        %v7588 = vpack.c.b16 %v7546, %v7544
        %v7589 = vpack.c.b16 %v7547, %v7545
        %v7590 = vpack.c.b16 %v7550, %v7548
        %v7591 = vpack.c.b16 %v7551, %v7549
        %v7592 = vpack.c.b16 %v7554, %v7552
        %v7593 = vpack.c.b16 %v7555, %v7553
        %v7594 = vpack.c.b16 %v7558, %v7556
        %v7595 = vpack.c.b16 %v7559, %v7557
        %v7596 = vpack.c.b16 %v7562, %v7560
        %v7597 = vpack.c.b16 %v7563, %v7561
        %v7598 = vpack.c.b16 %v7566, %v7564
        %v7599 = vpack.c.b16 %v7567, %v7565
        %7632 = vmatprep.subr.bf16.mxu0 %v7569
        %7633 = vmatpush1.bf16.msra.mxu0 %v7568
        %7634 = vmatprep.subr.bf16.mxu0 %v7571
        %7635 = vmatpush1.bf16.msra.mxu0 %v7570
        %7636 = vmatprep.subr.bf16.mxu0 %v7573
        %7637 = vmatpush1.bf16.msra.mxu0 %v7572
        %7638 = vmatprep.subr.bf16.mxu0 %v7575
        %7639 = vmatpush1.bf16.msra.mxu0 %v7574
        %7640 = vmatprep.subr.bf16.mxu0 %v7577
        %7641 = vmatpush1.bf16.msra.mxu0 %v7576
        %7642 = vmatprep.subr.bf16.mxu0 %v7579
        %7643 = vmatpush1.bf16.msra.mxu0 %v7578
        %7644 = vmatprep.subr.bf16.mxu0 %v7581
        %7645 = vmatpush1.bf16.msra.mxu0 %v7580
        %7646 = vmatprep.subr.bf16.mxu0 %v7583
        %7647 = vmatpush1.bf16.msra.mxu0 %v7582
        %7648 = vmatprep.subr.bf16.mxu0 %v7585
        %7649 = vmatpush1.bf16.msra.mxu0 %v7584
        %7650 = vmatprep.subr.bf16.mxu0 %v7587
        %7651 = vmatpush1.bf16.msra.mxu0 %v7586
        %7652 = vmatprep.subr.bf16.mxu0 %v7589
        %7653 = vmatpush1.bf16.msra.mxu0 %v7588
        %7654 = vmatprep.subr.bf16.mxu0 %v7591
        %7655 = vmatpush1.bf16.msra.mxu0 %v7590
        %7656 = vmatprep.subr.bf16.mxu0 %v7593
        %7657 = vmatpush1.bf16.msra.mxu0 %v7592
        %7658 = vmatprep.subr.bf16.mxu0 %v7595
        %7659 = vmatpush1.bf16.msra.mxu0 %v7594
        %7660 = vmatprep.subr.bf16.mxu0 %v7597
        %7661 = vmatpush1.bf16.msra.mxu0 %v7596
        %7662 = vmatprep.subr.bf16.mxu0 %v7599
        %7663 = vmatpush1.bf16.msra.mxu0 %v7598
        %7664 = vmatprep.mubr.bf16.mxu0 %v7469
        %7665 = vmatmul.mubr.bf16.gmra.mrb[0].mxu0 %v7468
        %v7666 = vpop.f32.mrb[0].mxu0
        %v7667 = vadd.f32 %v7450, %v7666
        %v7668 = vpop.f32.mrb[0].mxu0
        %v7669 = vadd.f32 %v7452, %v7668
        %v7670 = vpop.f32.mrb[0].mxu0
        %v7671 = vpop.f32.mrb[0].mxu0
        %7672 = vdwg.mxu0
        %s7673 = scalar_lea.vmem %s7, 512
        %v7674 = vld [vmem:[%s7673] sm:$0xff]
        %v7675 = vld [vmem:[%s7673 + $0x8] sm:$0xff]
        %v7676 = vld [vmem:[%s7673 + $0x10] sm:$0xff]
        %v7677 = vld [vmem:[%s7673 + $0x18] sm:$0xff]
        %v7678 = vld [vmem:[%s7673 + $0x20] sm:$0xff]
        %v7679 = vld [vmem:[%s7673 + $0x28] sm:$0xff]
        %v7680 = vld [vmem:[%s7673 + $0x30] sm:$0xff]
        %v7681 = vld [vmem:[%s7673 + $0x38] sm:$0xff]
        %v7682 = vld [vmem:[%s7673 + $0x40] sm:$0xff]
        %v7683 = vld [vmem:[%s7673 + $0x48] sm:$0xff]
        %v7684 = vld [vmem:[%s7673 + $0x50] sm:$0xff]
        %v7685 = vld [vmem:[%s7673 + $0x58] sm:$0xff]
        %v7686 = vld [vmem:[%s7673 + $0x60] sm:$0xff]
        %v7687 = vld [vmem:[%s7673 + $0x68] sm:$0xff]
        %v7688 = vld [vmem:[%s7673 + $0x70] sm:$0xff]
        %v7689 = vld [vmem:[%s7673 + $0x78] sm:$0xff]
        %v7690 = vld [vmem:[%s7673 + $0x80] sm:$0xff]
        %v7691 = vld [vmem:[%s7673 + $0x88] sm:$0xff]
        %v7692 = vld [vmem:[%s7673 + $0x90] sm:$0xff]
        %v7693 = vld [vmem:[%s7673 + $0x98] sm:$0xff]
        %v7694 = vld [vmem:[%s7673 + $0xa0] sm:$0xff]
        %v7695 = vld [vmem:[%s7673 + $0xa8] sm:$0xff]
        %v7696 = vld [vmem:[%s7673 + $0xb0] sm:$0xff]
        %v7697 = vld [vmem:[%s7673 + $0xb8] sm:$0xff]
        %v7698 = vld [vmem:[%s7673 + $0xc0] sm:$0xff]
        %v7699 = vld [vmem:[%s7673 + $0xc8] sm:$0xff]
        %v7700 = vld [vmem:[%s7673 + $0xd0] sm:$0xff]
        %v7701 = vld [vmem:[%s7673 + $0xd8] sm:$0xff]
        %v7702 = vld [vmem:[%s7673 + $0xe0] sm:$0xff]
        %v7703 = vld [vmem:[%s7673 + $0xe8] sm:$0xff]
        %v7704 = vld [vmem:[%s7673 + $0xf0] sm:$0xff]
        %v7705 = vld [vmem:[%s7673 + $0xf8] sm:$0xff]
        %v7706 = vrot.slane %v7228, 2
        %v7707 = vrot.slane %v7230, 1
        %v7708 = vsel %vm7237, %v7707, %v7706
        %v7709 = vsel %vm7240, %v7232, %v7708
        %v7710 = vrot.slane %v7234, 7
        %v7711 = vsel %vm7243, %v7710, %v7709
        %v7712 = vrot.slane %v7229, 2
        %v7713 = vrot.slane %v7231, 1
        %v7714 = vsel %vm7237, %v7713, %v7712
        %v7715 = vsel %vm7240, %v7233, %v7714
        %v7716 = vrot.slane %v7235, 7
        %v7717 = vsel %vm7243, %v7716, %v7715
        %v7718 = vpack.c.b16 %v7711, %v7711
        %v7719 = vpack.c.b16 %v7717, %v7717
        %v7754 = vunpack.c.l.b16 %v7674
        %v7755 = vunpack.c.h.b16 %v7674
        %v7756 = vunpack.c.l.b16 %v7675
        %v7757 = vunpack.c.h.b16 %v7675
        %v7758 = vunpack.c.l.b16 %v7676
        %v7759 = vunpack.c.h.b16 %v7676
        %v7760 = vunpack.c.l.b16 %v7677
        %v7761 = vunpack.c.h.b16 %v7677
        %v7762 = vunpack.c.l.b16 %v7678
        %v7763 = vunpack.c.h.b16 %v7678
        %v7764 = vunpack.c.l.b16 %v7679
        %v7765 = vunpack.c.h.b16 %v7679
        %v7766 = vunpack.c.l.b16 %v7680
        %v7767 = vunpack.c.h.b16 %v7680
        %v7768 = vunpack.c.l.b16 %v7681
        %v7769 = vunpack.c.h.b16 %v7681
        %v7770 = vunpack.c.l.b16 %v7682
        %v7771 = vunpack.c.h.b16 %v7682
        %v7772 = vunpack.c.l.b16 %v7683
        %v7773 = vunpack.c.h.b16 %v7683
        %v7774 = vunpack.c.l.b16 %v7684
        %v7775 = vunpack.c.h.b16 %v7684
        %v7776 = vunpack.c.l.b16 %v7685
        %v7777 = vunpack.c.h.b16 %v7685
        %v7778 = vunpack.c.l.b16 %v7686
        %v7779 = vunpack.c.h.b16 %v7686
        %v7780 = vunpack.c.l.b16 %v7687
        %v7781 = vunpack.c.h.b16 %v7687
        %v7782 = vunpack.c.l.b16 %v7688
        %v7783 = vunpack.c.h.b16 %v7688
        %v7784 = vunpack.c.l.b16 %v7689
        %v7785 = vunpack.c.h.b16 %v7689
        %v7786 = vunpack.c.l.b16 %v7690
        %v7787 = vunpack.c.h.b16 %v7690
        %v7788 = vunpack.c.l.b16 %v7691
        %v7789 = vunpack.c.h.b16 %v7691
        %v7790 = vunpack.c.l.b16 %v7692
        %v7791 = vunpack.c.h.b16 %v7692
        %v7792 = vunpack.c.l.b16 %v7693
        %v7793 = vunpack.c.h.b16 %v7693
        %v7794 = vunpack.c.l.b16 %v7694
        %v7795 = vunpack.c.h.b16 %v7694
        %v7796 = vunpack.c.l.b16 %v7695
        %v7797 = vunpack.c.h.b16 %v7695
        %v7798 = vunpack.c.l.b16 %v7696
        %v7799 = vunpack.c.h.b16 %v7696
        %v7800 = vunpack.c.l.b16 %v7697
        %v7801 = vunpack.c.h.b16 %v7697
        %v7802 = vunpack.c.l.b16 %v7698
        %v7803 = vunpack.c.h.b16 %v7698
        %v7804 = vunpack.c.l.b16 %v7699
        %v7805 = vunpack.c.h.b16 %v7699
        %v7806 = vunpack.c.l.b16 %v7700
        %v7807 = vunpack.c.h.b16 %v7700
        %v7808 = vunpack.c.l.b16 %v7701
        %v7809 = vunpack.c.h.b16 %v7701
        %v7810 = vunpack.c.l.b16 %v7702
        %v7811 = vunpack.c.h.b16 %v7702
        %v7812 = vunpack.c.l.b16 %v7703
        %v7813 = vunpack.c.h.b16 %v7703
        %v7814 = vunpack.c.l.b16 %v7704
        %v7815 = vunpack.c.h.b16 %v7704
        %v7816 = vunpack.c.l.b16 %v7705
        %v7817 = vunpack.c.h.b16 %v7705
        %v7818 = vpack.c.b16 %v7756, %v7754
        %v7819 = vpack.c.b16 %v7757, %v7755
        %v7820 = vpack.c.b16 %v7760, %v7758
        %v7821 = vpack.c.b16 %v7761, %v7759
        %v7822 = vpack.c.b16 %v7764, %v7762
        %v7823 = vpack.c.b16 %v7765, %v7763
        %v7824 = vpack.c.b16 %v7768, %v7766
        %v7825 = vpack.c.b16 %v7769, %v7767
        %v7826 = vpack.c.b16 %v7772, %v7770
        %v7827 = vpack.c.b16 %v7773, %v7771
        %v7828 = vpack.c.b16 %v7776, %v7774
        %v7829 = vpack.c.b16 %v7777, %v7775
        %v7830 = vpack.c.b16 %v7780, %v7778
        %v7831 = vpack.c.b16 %v7781, %v7779
        %v7832 = vpack.c.b16 %v7784, %v7782
        %v7833 = vpack.c.b16 %v7785, %v7783
        %v7834 = vpack.c.b16 %v7788, %v7786
        %v7835 = vpack.c.b16 %v7789, %v7787
        %v7836 = vpack.c.b16 %v7792, %v7790
        %v7837 = vpack.c.b16 %v7793, %v7791
        %v7838 = vpack.c.b16 %v7796, %v7794
        %v7839 = vpack.c.b16 %v7797, %v7795
        %v7840 = vpack.c.b16 %v7800, %v7798
        %v7841 = vpack.c.b16 %v7801, %v7799
        %v7842 = vpack.c.b16 %v7804, %v7802
        %v7843 = vpack.c.b16 %v7805, %v7803
        %v7844 = vpack.c.b16 %v7808, %v7806
        %v7845 = vpack.c.b16 %v7809, %v7807
        %v7846 = vpack.c.b16 %v7812, %v7810
        %v7847 = vpack.c.b16 %v7813, %v7811
        %v7848 = vpack.c.b16 %v7816, %v7814
        %v7849 = vpack.c.b16 %v7817, %v7815
        %7882 = vmatprep.subr.bf16.mxu0 %v7819
        %7883 = vmatpush1.bf16.msra.mxu0 %v7818
        %7884 = vmatprep.subr.bf16.mxu0 %v7821
        %7885 = vmatpush1.bf16.msra.mxu0 %v7820
        %7886 = vmatprep.subr.bf16.mxu0 %v7823
        %7887 = vmatpush1.bf16.msra.mxu0 %v7822
        %7888 = vmatprep.subr.bf16.mxu0 %v7825
        %7889 = vmatpush1.bf16.msra.mxu0 %v7824
        %7890 = vmatprep.subr.bf16.mxu0 %v7827
        %7891 = vmatpush1.bf16.msra.mxu0 %v7826
        %7892 = vmatprep.subr.bf16.mxu0 %v7829
        %7893 = vmatpush1.bf16.msra.mxu0 %v7828
        %7894 = vmatprep.subr.bf16.mxu0 %v7831
        %7895 = vmatpush1.bf16.msra.mxu0 %v7830
        %7896 = vmatprep.subr.bf16.mxu0 %v7833
        %7897 = vmatpush1.bf16.msra.mxu0 %v7832
        %7898 = vmatprep.subr.bf16.mxu0 %v7835
        %7899 = vmatpush1.bf16.msra.mxu0 %v7834
        %7900 = vmatprep.subr.bf16.mxu0 %v7837
        %7901 = vmatpush1.bf16.msra.mxu0 %v7836
        %7902 = vmatprep.subr.bf16.mxu0 %v7839
        %7903 = vmatpush1.bf16.msra.mxu0 %v7838
        %7904 = vmatprep.subr.bf16.mxu0 %v7841
        %7905 = vmatpush1.bf16.msra.mxu0 %v7840
        %7906 = vmatprep.subr.bf16.mxu0 %v7843
        %7907 = vmatpush1.bf16.msra.mxu0 %v7842
        %7908 = vmatprep.subr.bf16.mxu0 %v7845
        %7909 = vmatpush1.bf16.msra.mxu0 %v7844
        %7910 = vmatprep.subr.bf16.mxu0 %v7847
        %7911 = vmatpush1.bf16.msra.mxu0 %v7846
        %7912 = vmatprep.subr.bf16.mxu0 %v7849
        %7913 = vmatpush1.bf16.msra.mxu0 %v7848
        %7914 = vmatprep.mubr.bf16.mxu0 %v7719
        %7915 = vmatmul.mubr.bf16.gmra.mrb[0].mxu0 %v7718
        %v7916 = vpop.f32.mrb[0].mxu0
        %v7917 = vadd.f32 0.0, %v7916
        %v7918 = vpop.f32.mrb[0].mxu0
        %v7919 = vadd.f32 0.0, %v7918
        %v7920 = vpop.f32.mrb[0].mxu0
        %v7921 = vpop.f32.mrb[0].mxu0
        %7922 = vdwg.mxu0
        %v7923 = vadd.f32 %v7667, %v7917
        %v7924 = vadd.f32 %v7669, %v7919
        %s7925 = scalar_lea.vmem %s7, 768
        %v7926 = vld [vmem:[%s7925] sm:$0xff]
        %v7927 = vld [vmem:[%s7925 + $0x8] sm:$0xff]
        %v7928 = vld [vmem:[%s7925 + $0x10] sm:$0xff]
        %v7929 = vld [vmem:[%s7925 + $0x18] sm:$0xff]
        %v7930 = vld [vmem:[%s7925 + $0x20] sm:$0xff]
        %v7931 = vld [vmem:[%s7925 + $0x28] sm:$0xff]
        %v7932 = vld [vmem:[%s7925 + $0x30] sm:$0xff]
        %v7933 = vld [vmem:[%s7925 + $0x38] sm:$0xff]
        %v7934 = vld [vmem:[%s7925 + $0x40] sm:$0xff]
        %v7935 = vld [vmem:[%s7925 + $0x48] sm:$0xff]
        %v7936 = vld [vmem:[%s7925 + $0x50] sm:$0xff]
        %v7937 = vld [vmem:[%s7925 + $0x58] sm:$0xff]
        %v7938 = vld [vmem:[%s7925 + $0x60] sm:$0xff]
        %v7939 = vld [vmem:[%s7925 + $0x68] sm:$0xff]
        %v7940 = vld [vmem:[%s7925 + $0x70] sm:$0xff]
        %v7941 = vld [vmem:[%s7925 + $0x78] sm:$0xff]
        %v7942 = vld [vmem:[%s7925 + $0x80] sm:$0xff]
        %v7943 = vld [vmem:[%s7925 + $0x88] sm:$0xff]
        %v7944 = vld [vmem:[%s7925 + $0x90] sm:$0xff]
        %v7945 = vld [vmem:[%s7925 + $0x98] sm:$0xff]
        %v7946 = vld [vmem:[%s7925 + $0xa0] sm:$0xff]
        %v7947 = vld [vmem:[%s7925 + $0xa8] sm:$0xff]
        %v7948 = vld [vmem:[%s7925 + $0xb0] sm:$0xff]
        %v7949 = vld [vmem:[%s7925 + $0xb8] sm:$0xff]
        %v7950 = vld [vmem:[%s7925 + $0xc0] sm:$0xff]
        %v7951 = vld [vmem:[%s7925 + $0xc8] sm:$0xff]
        %v7952 = vld [vmem:[%s7925 + $0xd0] sm:$0xff]
        %v7953 = vld [vmem:[%s7925 + $0xd8] sm:$0xff]
        %v7954 = vld [vmem:[%s7925 + $0xe0] sm:$0xff]
        %v7955 = vld [vmem:[%s7925 + $0xe8] sm:$0xff]
        %v7956 = vld [vmem:[%s7925 + $0xf0] sm:$0xff]
        %v7957 = vld [vmem:[%s7925 + $0xf8] sm:$0xff]
        %v7958 = vrot.slane %v7228, 3
        %v7959 = vrot.slane %v7230, 2
        %v7960 = vsel %vm7237, %v7959, %v7958
        %v7961 = vrot.slane %v7232, 1
        %v7962 = vsel %vm7240, %v7961, %v7960
        %v7963 = vsel %vm7243, %v7234, %v7962
        %v7964 = vrot.slane %v7229, 3
        %v7965 = vrot.slane %v7231, 2
        %v7966 = vsel %vm7237, %v7965, %v7964
        %v7967 = vrot.slane %v7233, 1
        %v7968 = vsel %vm7240, %v7967, %v7966
        %v7969 = vsel %vm7243, %v7235, %v7968
        %v7970 = vpack.c.b16 %v7963, %v7963
        %v7971 = vpack.c.b16 %v7969, %v7969
        %v8006 = vunpack.c.l.b16 %v7926
        %v8007 = vunpack.c.h.b16 %v7926
        %v8008 = vunpack.c.l.b16 %v7927
        %v8009 = vunpack.c.h.b16 %v7927
        %v8010 = vunpack.c.l.b16 %v7928
        %v8011 = vunpack.c.h.b16 %v7928
        %v8012 = vunpack.c.l.b16 %v7929
        %v8013 = vunpack.c.h.b16 %v7929
        %v8014 = vunpack.c.l.b16 %v7930
        %v8015 = vunpack.c.h.b16 %v7930
        %v8016 = vunpack.c.l.b16 %v7931
        %v8017 = vunpack.c.h.b16 %v7931
        %v8018 = vunpack.c.l.b16 %v7932
        %v8019 = vunpack.c.h.b16 %v7932
        %v8020 = vunpack.c.l.b16 %v7933
        %v8021 = vunpack.c.h.b16 %v7933
        %v8022 = vunpack.c.l.b16 %v7934
        %v8023 = vunpack.c.h.b16 %v7934
        %v8024 = vunpack.c.l.b16 %v7935
        %v8025 = vunpack.c.h.b16 %v7935
        %v8026 = vunpack.c.l.b16 %v7936
        %v8027 = vunpack.c.h.b16 %v7936
        %v8028 = vunpack.c.l.b16 %v7937
        %v8029 = vunpack.c.h.b16 %v7937
        %v8030 = vunpack.c.l.b16 %v7938
        %v8031 = vunpack.c.h.b16 %v7938
        %v8032 = vunpack.c.l.b16 %v7939
        %v8033 = vunpack.c.h.b16 %v7939
        %v8034 = vunpack.c.l.b16 %v7940
        %v8035 = vunpack.c.h.b16 %v7940
        %v8036 = vunpack.c.l.b16 %v7941
        %v8037 = vunpack.c.h.b16 %v7941
        %v8038 = vunpack.c.l.b16 %v7942
        %v8039 = vunpack.c.h.b16 %v7942
        %v8040 = vunpack.c.l.b16 %v7943
        %v8041 = vunpack.c.h.b16 %v7943
        %v8042 = vunpack.c.l.b16 %v7944
        %v8043 = vunpack.c.h.b16 %v7944
        %v8044 = vunpack.c.l.b16 %v7945
        %v8045 = vunpack.c.h.b16 %v7945
        %v8046 = vunpack.c.l.b16 %v7946
        %v8047 = vunpack.c.h.b16 %v7946
        %v8048 = vunpack.c.l.b16 %v7947
        %v8049 = vunpack.c.h.b16 %v7947
        %v8050 = vunpack.c.l.b16 %v7948
        %v8051 = vunpack.c.h.b16 %v7948
        %v8052 = vunpack.c.l.b16 %v7949
        %v8053 = vunpack.c.h.b16 %v7949
        %v8054 = vunpack.c.l.b16 %v7950
        %v8055 = vunpack.c.h.b16 %v7950
        %v8056 = vunpack.c.l.b16 %v7951
        %v8057 = vunpack.c.h.b16 %v7951
        %v8058 = vunpack.c.l.b16 %v7952
        %v8059 = vunpack.c.h.b16 %v7952
        %v8060 = vunpack.c.l.b16 %v7953
        %v8061 = vunpack.c.h.b16 %v7953
        %v8062 = vunpack.c.l.b16 %v7954
        %v8063 = vunpack.c.h.b16 %v7954
        %v8064 = vunpack.c.l.b16 %v7955
        %v8065 = vunpack.c.h.b16 %v7955
        %v8066 = vunpack.c.l.b16 %v7956
        %v8067 = vunpack.c.h.b16 %v7956
        %v8068 = vunpack.c.l.b16 %v7957
        %v8069 = vunpack.c.h.b16 %v7957
        %v8070 = vpack.c.b16 %v8008, %v8006
        %v8071 = vpack.c.b16 %v8009, %v8007
        %v8072 = vpack.c.b16 %v8012, %v8010
        %v8073 = vpack.c.b16 %v8013, %v8011
        %v8074 = vpack.c.b16 %v8016, %v8014
        %v8075 = vpack.c.b16 %v8017, %v8015
        %v8076 = vpack.c.b16 %v8020, %v8018
        %v8077 = vpack.c.b16 %v8021, %v8019
        %v8078 = vpack.c.b16 %v8024, %v8022
        %v8079 = vpack.c.b16 %v8025, %v8023
        %v8080 = vpack.c.b16 %v8028, %v8026
        %v8081 = vpack.c.b16 %v8029, %v8027
        %v8082 = vpack.c.b16 %v8032, %v8030
        %v8083 = vpack.c.b16 %v8033, %v8031
        %v8084 = vpack.c.b16 %v8036, %v8034
        %v8085 = vpack.c.b16 %v8037, %v8035
        %v8086 = vpack.c.b16 %v8040, %v8038
        %v8087 = vpack.c.b16 %v8041, %v8039
        %v8088 = vpack.c.b16 %v8044, %v8042
        %v8089 = vpack.c.b16 %v8045, %v8043
        %v8090 = vpack.c.b16 %v8048, %v8046
        %v8091 = vpack.c.b16 %v8049, %v8047
        %v8092 = vpack.c.b16 %v8052, %v8050
        %v8093 = vpack.c.b16 %v8053, %v8051
        %v8094 = vpack.c.b16 %v8056, %v8054
        %v8095 = vpack.c.b16 %v8057, %v8055
        %v8096 = vpack.c.b16 %v8060, %v8058
        %v8097 = vpack.c.b16 %v8061, %v8059
        %v8098 = vpack.c.b16 %v8064, %v8062
        %v8099 = vpack.c.b16 %v8065, %v8063
        %v8100 = vpack.c.b16 %v8068, %v8066
        %v8101 = vpack.c.b16 %v8069, %v8067
        %8134 = vmatprep.subr.bf16.mxu0 %v8071
        %8135 = vmatpush1.bf16.msra.mxu0 %v8070
        %8136 = vmatprep.subr.bf16.mxu0 %v8073
        %8137 = vmatpush1.bf16.msra.mxu0 %v8072
        %8138 = vmatprep.subr.bf16.mxu0 %v8075
        %8139 = vmatpush1.bf16.msra.mxu0 %v8074
        %8140 = vmatprep.subr.bf16.mxu0 %v8077
        %8141 = vmatpush1.bf16.msra.mxu0 %v8076
        %8142 = vmatprep.subr.bf16.mxu0 %v8079
        %8143 = vmatpush1.bf16.msra.mxu0 %v8078
        %8144 = vmatprep.subr.bf16.mxu0 %v8081
        %8145 = vmatpush1.bf16.msra.mxu0 %v8080
        %8146 = vmatprep.subr.bf16.mxu0 %v8083
        %8147 = vmatpush1.bf16.msra.mxu0 %v8082
        %8148 = vmatprep.subr.bf16.mxu0 %v8085
        %8149 = vmatpush1.bf16.msra.mxu0 %v8084
        %8150 = vmatprep.subr.bf16.mxu0 %v8087
        %8151 = vmatpush1.bf16.msra.mxu0 %v8086
        %8152 = vmatprep.subr.bf16.mxu0 %v8089
        %8153 = vmatpush1.bf16.msra.mxu0 %v8088
        %8154 = vmatprep.subr.bf16.mxu0 %v8091
        %8155 = vmatpush1.bf16.msra.mxu0 %v8090
        %8156 = vmatprep.subr.bf16.mxu0 %v8093
        %8157 = vmatpush1.bf16.msra.mxu0 %v8092
        %8158 = vmatprep.subr.bf16.mxu0 %v8095
        %8159 = vmatpush1.bf16.msra.mxu0 %v8094
        %8160 = vmatprep.subr.bf16.mxu0 %v8097
        %8161 = vmatpush1.bf16.msra.mxu0 %v8096
        %8162 = vmatprep.subr.bf16.mxu0 %v8099
        %8163 = vmatpush1.bf16.msra.mxu0 %v8098
        %8164 = vmatprep.subr.bf16.mxu0 %v8101
        %8165 = vmatpush1.bf16.msra.mxu0 %v8100
        %8166 = vmatprep.mubr.bf16.mxu0 %v7971
        %8167 = vmatmul.mubr.bf16.gmra.mrb[0].mxu0 %v7970
        %v8168 = vpop.f32.mrb[0].mxu0
        %v8169 = vadd.f32 0.0, %v8168
        %v8170 = vpop.f32.mrb[0].mxu0
        %v8171 = vadd.f32 0.0, %v8170
        %v8172 = vpop.f32.mrb[0].mxu0
        %v8173 = vpop.f32.mrb[0].mxu0
        %8174 = vdwg.mxu0
        %v8175 = vadd.f32 %v7923, %v8169
        %v8176 = vadd.f32 %v7924, %v8171
        %s8177 = scalar_lea.vmem %s7, 1024
        %v8178 = vld [vmem:[%s8177] sm:$0xff]
        %v8179 = vld [vmem:[%s8177 + $0x8] sm:$0xff]
        %v8180 = vld [vmem:[%s8177 + $0x10] sm:$0xff]
        %v8181 = vld [vmem:[%s8177 + $0x18] sm:$0xff]
        %v8182 = vld [vmem:[%s8177 + $0x20] sm:$0xff]
        %v8183 = vld [vmem:[%s8177 + $0x28] sm:$0xff]
        %v8184 = vld [vmem:[%s8177 + $0x30] sm:$0xff]
        %v8185 = vld [vmem:[%s8177 + $0x38] sm:$0xff]
        %v8186 = vld [vmem:[%s8177 + $0x40] sm:$0xff]
        %v8187 = vld [vmem:[%s8177 + $0x48] sm:$0xff]
        %v8188 = vld [vmem:[%s8177 + $0x50] sm:$0xff]
        %v8189 = vld [vmem:[%s8177 + $0x58] sm:$0xff]
        %v8190 = vld [vmem:[%s8177 + $0x60] sm:$0xff]
        %v8191 = vld [vmem:[%s8177 + $0x68] sm:$0xff]
        %v8192 = vld [vmem:[%s8177 + $0x70] sm:$0xff]
        %v8193 = vld [vmem:[%s8177 + $0x78] sm:$0xff]
        %v8194 = vld [vmem:[%s8177 + $0x80] sm:$0xff]
        %v8195 = vld [vmem:[%s8177 + $0x88] sm:$0xff]
        %v8196 = vld [vmem:[%s8177 + $0x90] sm:$0xff]
        %v8197 = vld [vmem:[%s8177 + $0x98] sm:$0xff]
        %v8198 = vld [vmem:[%s8177 + $0xa0] sm:$0xff]
        %v8199 = vld [vmem:[%s8177 + $0xa8] sm:$0xff]
        %v8200 = vld [vmem:[%s8177 + $0xb0] sm:$0xff]
        %v8201 = vld [vmem:[%s8177 + $0xb8] sm:$0xff]
        %v8202 = vld [vmem:[%s8177 + $0xc0] sm:$0xff]
        %v8203 = vld [vmem:[%s8177 + $0xc8] sm:$0xff]
        %v8204 = vld [vmem:[%s8177 + $0xd0] sm:$0xff]
        %v8205 = vld [vmem:[%s8177 + $0xd8] sm:$0xff]
        %v8206 = vld [vmem:[%s8177 + $0xe0] sm:$0xff]
        %v8207 = vld [vmem:[%s8177 + $0xe8] sm:$0xff]
        %v8208 = vld [vmem:[%s8177 + $0xf0] sm:$0xff]
        %v8209 = vld [vmem:[%s8177 + $0xf8] sm:$0xff]
        %v8210 = vrot.slane %v7228, 4
        %v8211 = vrot.slane %v7230, 3
        %v8212 = vsel %vm7237, %v8211, %v8210
        %v8213 = vrot.slane %v7232, 2
        %v8214 = vsel %vm7240, %v8213, %v8212
        %v8215 = vrot.slane %v7234, 1
        %v8216 = vsel %vm7243, %v8215, %v8214
        %v8217 = vrot.slane %v7229, 4
        %v8218 = vrot.slane %v7231, 3
        %v8219 = vsel %vm7237, %v8218, %v8217
        %v8220 = vrot.slane %v7233, 2
        %v8221 = vsel %vm7240, %v8220, %v8219
        %v8222 = vrot.slane %v7235, 1
        %v8223 = vsel %vm7243, %v8222, %v8221
        %v8224 = vpack.c.b16 %v8216, %v8216
        %v8225 = vpack.c.b16 %v8223, %v8223
        %v8260 = vunpack.c.l.b16 %v8178
        %v8261 = vunpack.c.h.b16 %v8178
        %v8262 = vunpack.c.l.b16 %v8179
        %v8263 = vunpack.c.h.b16 %v8179
        %v8264 = vunpack.c.l.b16 %v8180
        %v8265 = vunpack.c.h.b16 %v8180
        %v8266 = vunpack.c.l.b16 %v8181
        %v8267 = vunpack.c.h.b16 %v8181
        %v8268 = vunpack.c.l.b16 %v8182
        %v8269 = vunpack.c.h.b16 %v8182
        %v8270 = vunpack.c.l.b16 %v8183
        %v8271 = vunpack.c.h.b16 %v8183
        %v8272 = vunpack.c.l.b16 %v8184
        %v8273 = vunpack.c.h.b16 %v8184
        %v8274 = vunpack.c.l.b16 %v8185
        %v8275 = vunpack.c.h.b16 %v8185
        %v8276 = vunpack.c.l.b16 %v8186
        %v8277 = vunpack.c.h.b16 %v8186
        %v8278 = vunpack.c.l.b16 %v8187
        %v8279 = vunpack.c.h.b16 %v8187
        %v8280 = vunpack.c.l.b16 %v8188
        %v8281 = vunpack.c.h.b16 %v8188
        %v8282 = vunpack.c.l.b16 %v8189
        %v8283 = vunpack.c.h.b16 %v8189
        %v8284 = vunpack.c.l.b16 %v8190
        %v8285 = vunpack.c.h.b16 %v8190
        %v8286 = vunpack.c.l.b16 %v8191
        %v8287 = vunpack.c.h.b16 %v8191
        %v8288 = vunpack.c.l.b16 %v8192
        %v8289 = vunpack.c.h.b16 %v8192
        %v8290 = vunpack.c.l.b16 %v8193
        %v8291 = vunpack.c.h.b16 %v8193
        %v8292 = vunpack.c.l.b16 %v8194
        %v8293 = vunpack.c.h.b16 %v8194
        %v8294 = vunpack.c.l.b16 %v8195
        %v8295 = vunpack.c.h.b16 %v8195
        %v8296 = vunpack.c.l.b16 %v8196
        %v8297 = vunpack.c.h.b16 %v8196
        %v8298 = vunpack.c.l.b16 %v8197
        %v8299 = vunpack.c.h.b16 %v8197
        %v8300 = vunpack.c.l.b16 %v8198
        %v8301 = vunpack.c.h.b16 %v8198
        %v8302 = vunpack.c.l.b16 %v8199
        %v8303 = vunpack.c.h.b16 %v8199
        %v8304 = vunpack.c.l.b16 %v8200
        %v8305 = vunpack.c.h.b16 %v8200
        %v8306 = vunpack.c.l.b16 %v8201
        %v8307 = vunpack.c.h.b16 %v8201
        %v8308 = vunpack.c.l.b16 %v8202
        %v8309 = vunpack.c.h.b16 %v8202
        %v8310 = vunpack.c.l.b16 %v8203
        %v8311 = vunpack.c.h.b16 %v8203
        %v8312 = vunpack.c.l.b16 %v8204
        %v8313 = vunpack.c.h.b16 %v8204
        %v8314 = vunpack.c.l.b16 %v8205
        %v8315 = vunpack.c.h.b16 %v8205
        %v8316 = vunpack.c.l.b16 %v8206
        %v8317 = vunpack.c.h.b16 %v8206
        %v8318 = vunpack.c.l.b16 %v8207
        %v8319 = vunpack.c.h.b16 %v8207
        %v8320 = vunpack.c.l.b16 %v8208
        %v8321 = vunpack.c.h.b16 %v8208
        %v8322 = vunpack.c.l.b16 %v8209
        %v8323 = vunpack.c.h.b16 %v8209
        %v8324 = vpack.c.b16 %v8262, %v8260
        %v8325 = vpack.c.b16 %v8263, %v8261
        %v8326 = vpack.c.b16 %v8266, %v8264
        %v8327 = vpack.c.b16 %v8267, %v8265
        %v8328 = vpack.c.b16 %v8270, %v8268
        %v8329 = vpack.c.b16 %v8271, %v8269
        %v8330 = vpack.c.b16 %v8274, %v8272
        %v8331 = vpack.c.b16 %v8275, %v8273
        %v8332 = vpack.c.b16 %v8278, %v8276
        %v8333 = vpack.c.b16 %v8279, %v8277
        %v8334 = vpack.c.b16 %v8282, %v8280
        %v8335 = vpack.c.b16 %v8283, %v8281
        %v8336 = vpack.c.b16 %v8286, %v8284
        %v8337 = vpack.c.b16 %v8287, %v8285
        %v8338 = vpack.c.b16 %v8290, %v8288
        %v8339 = vpack.c.b16 %v8291, %v8289
        %v8340 = vpack.c.b16 %v8294, %v8292
        %v8341 = vpack.c.b16 %v8295, %v8293
        %v8342 = vpack.c.b16 %v8298, %v8296
        %v8343 = vpack.c.b16 %v8299, %v8297
        %v8344 = vpack.c.b16 %v8302, %v8300
        %v8345 = vpack.c.b16 %v8303, %v8301
        %v8346 = vpack.c.b16 %v8306, %v8304
        %v8347 = vpack.c.b16 %v8307, %v8305
        %v8348 = vpack.c.b16 %v8310, %v8308
        %v8349 = vpack.c.b16 %v8311, %v8309
        %v8350 = vpack.c.b16 %v8314, %v8312
        %v8351 = vpack.c.b16 %v8315, %v8313
        %v8352 = vpack.c.b16 %v8318, %v8316
        %v8353 = vpack.c.b16 %v8319, %v8317
        %v8354 = vpack.c.b16 %v8322, %v8320
        %v8355 = vpack.c.b16 %v8323, %v8321
        %8388 = vmatprep.subr.bf16.mxu0 %v8325
        %8389 = vmatpush1.bf16.msra.mxu0 %v8324
        %8390 = vmatprep.subr.bf16.mxu0 %v8327
        %8391 = vmatpush1.bf16.msra.mxu0 %v8326
        %8392 = vmatprep.subr.bf16.mxu0 %v8329
        %8393 = vmatpush1.bf16.msra.mxu0 %v8328
        %8394 = vmatprep.subr.bf16.mxu0 %v8331
        %8395 = vmatpush1.bf16.msra.mxu0 %v8330
        %8396 = vmatprep.subr.bf16.mxu0 %v8333
        %8397 = vmatpush1.bf16.msra.mxu0 %v8332
        %8398 = vmatprep.subr.bf16.mxu0 %v8335
        %8399 = vmatpush1.bf16.msra.mxu0 %v8334
        %8400 = vmatprep.subr.bf16.mxu0 %v8337
        %8401 = vmatpush1.bf16.msra.mxu0 %v8336
        %8402 = vmatprep.subr.bf16.mxu0 %v8339
        %8403 = vmatpush1.bf16.msra.mxu0 %v8338
        %8404 = vmatprep.subr.bf16.mxu0 %v8341
        %8405 = vmatpush1.bf16.msra.mxu0 %v8340
        %8406 = vmatprep.subr.bf16.mxu0 %v8343
        %8407 = vmatpush1.bf16.msra.mxu0 %v8342
        %8408 = vmatprep.subr.bf16.mxu0 %v8345
        %8409 = vmatpush1.bf16.msra.mxu0 %v8344
        %8410 = vmatprep.subr.bf16.mxu0 %v8347
        %8411 = vmatpush1.bf16.msra.mxu0 %v8346
        %8412 = vmatprep.subr.bf16.mxu0 %v8349
        %8413 = vmatpush1.bf16.msra.mxu0 %v8348
        %8414 = vmatprep.subr.bf16.mxu0 %v8351
        %8415 = vmatpush1.bf16.msra.mxu0 %v8350
        %8416 = vmatprep.subr.bf16.mxu0 %v8353
        %8417 = vmatpush1.bf16.msra.mxu0 %v8352
        %8418 = vmatprep.subr.bf16.mxu0 %v8355
        %8419 = vmatpush1.bf16.msra.mxu0 %v8354
        %8420 = vmatprep.mubr.bf16.mxu0 %v8225
        %8421 = vmatmul.mubr.bf16.gmra.mrb[0].mxu0 %v8224
        %v8422 = vpop.f32.mrb[0].mxu0
        %v8423 = vadd.f32 0.0, %v8422
        %v8424 = vpop.f32.mrb[0].mxu0
        %v8425 = vadd.f32 0.0, %v8424
        %v8426 = vpop.f32.mrb[0].mxu0
        %v8427 = vpop.f32.mrb[0].mxu0
        %8428 = vdwg.mxu0
        %v8429 = vadd.f32 %v8175, %v8423
        %v8430 = vadd.f32 %v8176, %v8425
        %v8431 = vld [vmem:[%s8] sm:$0x3]
        %v8433 = vlaneseq
        %v8434 = vshrl.u32 %v8433, 7
        %v8435 = vsub.s32 0, %v8434
        %v8436 = vrot.slane %v8431, %v8435
        %v8437 = vlaneseq
        %v8438 = vshrl.u32 %v8437, 7
        %v8439 = vsub.s32 1, %v8438
        %v8440 = vrot.slane %v8431, %v8439
        %v8443 = vadd.f32 %v8429, %v8436
        %v8444 = vadd.f32 %v8430, %v8440
        %v8445 = vmax.f32 %v8443, 0.0
        %v8446 = vmax.f32 %v8444, 0.0
        %v8447 = vpack.c.bf16 %v8445, %v8445
        %v8448 = vpack.c.bf16 %v8446, %v8446
        %v8449 = vld [vmem:[#allocation9] sm:$0xf]
        %v8450 = vld [vmem:[#allocation9 + $0x4] sm:$0xf]
        %v8451 = vld [vmem:[#allocation9 + $0x8] sm:$0xf]
        %v8452 = vld [vmem:[#allocation9 + $0xc] sm:$0xf]
        %v8453 = vld [vmem:[#allocation9 + $0x10] sm:$0xf]
        %v8454 = vld [vmem:[#allocation9 + $0x14] sm:$0xf]
        %v8455 = vld [vmem:[#allocation9 + $0x18] sm:$0xf]
        %v8456 = vld [vmem:[#allocation9 + $0x1c] sm:$0xf]
        %v8457 = vld [vmem:[#allocation9 + $0x20] sm:$0xf]
        %v8458 = vld [vmem:[#allocation9 + $0x24] sm:$0xf]
        %v8459 = vld [vmem:[#allocation9 + $0x28] sm:$0xf]
        %v8460 = vld [vmem:[#allocation9 + $0x2c] sm:$0xf]
        %v8461 = vld [vmem:[#allocation9 + $0x30] sm:$0xf]
        %v8462 = vld [vmem:[#allocation9 + $0x34] sm:$0xf]
        %v8463 = vld [vmem:[#allocation9 + $0x38] sm:$0xf]
        %v8464 = vld [vmem:[#allocation9 + $0x3c] sm:$0xf]
        %v8465 = vld [vmem:[#allocation9 + $0x40] sm:$0xf]
        %v8466 = vld [vmem:[#allocation9 + $0x44] sm:$0xf]
        %v8467 = vld [vmem:[#allocation9 + $0x48] sm:$0xf]
        %v8468 = vld [vmem:[#allocation9 + $0x4c] sm:$0xf]
        %v8469 = vld [vmem:[#allocation9 + $0x50] sm:$0xf]
        %v8470 = vld [vmem:[#allocation9 + $0x54] sm:$0xf]
        %v8471 = vld [vmem:[#allocation9 + $0x58] sm:$0xf]
        %v8472 = vld [vmem:[#allocation9 + $0x5c] sm:$0xf]
        %v8473 = vld [vmem:[#allocation9 + $0x60] sm:$0xf]
        %v8474 = vld [vmem:[#allocation9 + $0x64] sm:$0xf]
        %v8475 = vld [vmem:[#allocation9 + $0x68] sm:$0xf]
        %v8476 = vld [vmem:[#allocation9 + $0x6c] sm:$0xf]
        %v8477 = vld [vmem:[#allocation9 + $0x70] sm:$0xf]
        %v8478 = vld [vmem:[#allocation9 + $0x74] sm:$0xf]
        %v8479 = vld [vmem:[#allocation9 + $0x78] sm:$0xf]
        %v8480 = vld [vmem:[#allocation9 + $0x7c] sm:$0xf]
        %v8481 = vld [vmem:[%s10] sm:$0x1]
        %v8483 = vlaneseq
        %v8484 = vshrl.u32 %v8483, 7
        %v8485 = vsub.s32 0, %v8484
        %v8486 = vrot.slane %v8481, %v8485
        %v8520 = vunpack.c.l.b16 %v8449
        %v8521 = vunpack.c.l.b16 %v8450
        %v8522 = vunpack.c.l.b16 %v8451
        %v8523 = vunpack.c.l.b16 %v8452
        %v8524 = vunpack.c.l.b16 %v8453
        %v8525 = vunpack.c.l.b16 %v8454
        %v8526 = vunpack.c.l.b16 %v8455
        %v8527 = vunpack.c.l.b16 %v8456
        %v8528 = vunpack.c.l.b16 %v8457
        %v8529 = vunpack.c.l.b16 %v8458
        %v8530 = vunpack.c.l.b16 %v8459
        %v8531 = vunpack.c.l.b16 %v8460
        %v8532 = vunpack.c.l.b16 %v8461
        %v8533 = vunpack.c.l.b16 %v8462
        %v8534 = vunpack.c.l.b16 %v8463
        %v8535 = vunpack.c.l.b16 %v8464
        %v8536 = vunpack.c.l.b16 %v8465
        %v8537 = vunpack.c.l.b16 %v8466
        %v8538 = vunpack.c.l.b16 %v8467
        %v8539 = vunpack.c.l.b16 %v8468
        %v8540 = vunpack.c.l.b16 %v8469
        %v8541 = vunpack.c.l.b16 %v8470
        %v8542 = vunpack.c.l.b16 %v8471
        %v8543 = vunpack.c.l.b16 %v8472
        %v8544 = vunpack.c.l.b16 %v8473
        %v8545 = vunpack.c.l.b16 %v8474
        %v8546 = vunpack.c.l.b16 %v8475
        %v8547 = vunpack.c.l.b16 %v8476
        %v8548 = vunpack.c.l.b16 %v8477
        %v8549 = vunpack.c.l.b16 %v8478
        %v8550 = vunpack.c.l.b16 %v8479
        %v8551 = vunpack.c.l.b16 %v8480
        %v8552 = vpack.c.b16 %v8521, %v8520
        %v8553 = vpack.c.b16 %v8523, %v8522
        %v8554 = vpack.c.b16 %v8525, %v8524
        %v8555 = vpack.c.b16 %v8527, %v8526
        %v8556 = vpack.c.b16 %v8529, %v8528
        %v8557 = vpack.c.b16 %v8531, %v8530
        %v8558 = vpack.c.b16 %v8533, %v8532
        %v8559 = vpack.c.b16 %v8535, %v8534
        %v8560 = vpack.c.b16 %v8537, %v8536
        %v8561 = vpack.c.b16 %v8539, %v8538
        %v8562 = vpack.c.b16 %v8541, %v8540
        %v8563 = vpack.c.b16 %v8543, %v8542
        %v8564 = vpack.c.b16 %v8545, %v8544
        %v8565 = vpack.c.b16 %v8547, %v8546
        %v8566 = vpack.c.b16 %v8549, %v8548
        %v8567 = vpack.c.b16 %v8551, %v8550
        %8584 = vmatprep.subr.bf16.mxu0 0
        %8585 = vmatpush1.bf16.msra.mxu0 %v8552
        %8586 = vmatprep.subr.bf16.mxu0 0
        %8587 = vmatpush1.bf16.msra.mxu0 %v8553
        %8588 = vmatprep.subr.bf16.mxu0 0
        %8589 = vmatpush1.bf16.msra.mxu0 %v8554
        %8590 = vmatprep.subr.bf16.mxu0 0
        %8591 = vmatpush1.bf16.msra.mxu0 %v8555
        %8592 = vmatprep.subr.bf16.mxu0 0
        %8593 = vmatpush1.bf16.msra.mxu0 %v8556
        %8594 = vmatprep.subr.bf16.mxu0 0
        %8595 = vmatpush1.bf16.msra.mxu0 %v8557
        %8596 = vmatprep.subr.bf16.mxu0 0
        %8597 = vmatpush1.bf16.msra.mxu0 %v8558
        %8598 = vmatprep.subr.bf16.mxu0 0
        %8599 = vmatpush1.bf16.msra.mxu0 %v8559
        %8600 = vmatprep.subr.bf16.mxu0 0
        %8601 = vmatpush1.bf16.msra.mxu0 %v8560
        %8602 = vmatprep.subr.bf16.mxu0 0
        %8603 = vmatpush1.bf16.msra.mxu0 %v8561
        %8604 = vmatprep.subr.bf16.mxu0 0
        %8605 = vmatpush1.bf16.msra.mxu0 %v8562
        %8606 = vmatprep.subr.bf16.mxu0 0
        %8607 = vmatpush1.bf16.msra.mxu0 %v8563
        %8608 = vmatprep.subr.bf16.mxu0 0
        %8609 = vmatpush1.bf16.msra.mxu0 %v8564
        %8610 = vmatprep.subr.bf16.mxu0 0
        %8611 = vmatpush1.bf16.msra.mxu0 %v8565
        %8612 = vmatprep.subr.bf16.mxu0 0
        %8613 = vmatpush1.bf16.msra.mxu0 %v8566
        %8614 = vmatprep.subr.bf16.mxu0 0
        %8615 = vmatpush1.bf16.msra.mxu0 %v8567
        %8616 = vmatprep.mubr.bf16.mxu0 %v8448
        %8617 = vmatmul.mubr.bf16.gmra.mrb[0].mxu0 %v8447
        %v8618 = vpop.f32.mrb[0].mxu0
        %v8619 = vadd.f32 %v8486, %v8618
        %v8620 = vpop.f32.mrb[0].mxu0
        %v8621 = vpop.f32.mrb[0].mxu0
        %v8622 = vpop.f32.mrb[0].mxu0
        %8623 = vdwg.mxu0
        %v8624 = vmax.f32 %v8619, 0.0
        %v8625 = vpack.c.bf16 %v8624, %v8624
        %v8626 = vld [vmem:[#allocation11] sm:$0xf]
        %v8627 = vld [vmem:[#allocation11 + $0x4] sm:$0xf]
        %v8628 = vld [vmem:[#allocation11 + $0x8] sm:$0xf]
        %v8629 = vld [vmem:[#allocation11 + $0xc] sm:$0xf]
        %v8630 = vld [vmem:[#allocation11 + $0x10] sm:$0xf]
        %v8631 = vld [vmem:[#allocation11 + $0x14] sm:$0xf]
        %v8632 = vld [vmem:[#allocation11 + $0x18] sm:$0xf]
        %v8633 = vld [vmem:[#allocation11 + $0x1c] sm:$0xf]
        %v8634 = vld [vmem:[#allocation11 + $0x20] sm:$0xf]
        %v8635 = vld [vmem:[#allocation11 + $0x24] sm:$0xf]
        %v8636 = vld [vmem:[#allocation11 + $0x28] sm:$0xf]
        %v8637 = vld [vmem:[#allocation11 + $0x2c] sm:$0xf]
        %v8638 = vld [vmem:[#allocation11 + $0x30] sm:$0xf]
        %v8639 = vld [vmem:[#allocation11 + $0x34] sm:$0xf]
        %v8640 = vld [vmem:[#allocation11 + $0x38] sm:$0xf]
        %v8641 = vld [vmem:[#allocation11 + $0x3c] sm:$0xf]
        %v8642 = vld [vmem:[%s12] sm:$0x1]
        %v8644 = vlaneseq
        %v8645 = vshrl.u32 %v8644, 7
        %v8646 = vsub.s32 0, %v8645
        %v8647 = vrot.slane %v8642, %v8646
        %v8665 = vunpack.c.l.b16 %v8626
        %v8666 = vunpack.c.l.b16 %v8627
        %v8667 = vunpack.c.l.b16 %v8628
        %v8668 = vunpack.c.l.b16 %v8629
        %v8669 = vunpack.c.l.b16 %v8630
        %v8670 = vunpack.c.l.b16 %v8631
        %v8671 = vunpack.c.l.b16 %v8632
        %v8672 = vunpack.c.l.b16 %v8633
        %v8673 = vunpack.c.l.b16 %v8634
        %v8674 = vunpack.c.l.b16 %v8635
        %v8675 = vunpack.c.l.b16 %v8636
        %v8676 = vunpack.c.l.b16 %v8637
        %v8677 = vunpack.c.l.b16 %v8638
        %v8678 = vunpack.c.l.b16 %v8639
        %v8679 = vunpack.c.l.b16 %v8640
        %v8680 = vunpack.c.l.b16 %v8641
        %v8681 = vpack.c.b16 %v8666, %v8665
        %v8682 = vpack.c.b16 %v8668, %v8667
        %v8683 = vpack.c.b16 %v8670, %v8669
        %v8684 = vpack.c.b16 %v8672, %v8671
        %v8685 = vpack.c.b16 %v8674, %v8673
        %v8686 = vpack.c.b16 %v8676, %v8675
        %v8687 = vpack.c.b16 %v8678, %v8677
        %v8688 = vpack.c.b16 %v8680, %v8679
        %8697 = vmatprep.subr.bf16.mxu0 0
        %8698 = vmatpush1.bf16.msra.mxu0 %v8681
        %8699 = vmatprep.subr.bf16.mxu0 0
        %8700 = vmatpush1.bf16.msra.mxu0 %v8682
        %8701 = vmatprep.subr.bf16.mxu0 0
        %8702 = vmatpush1.bf16.msra.mxu0 %v8683
        %8703 = vmatprep.subr.bf16.mxu0 0
        %8704 = vmatpush1.bf16.msra.mxu0 %v8684
        %8705 = vmatprep.subr.bf16.mxu0 0
        %8706 = vmatpush1.bf16.msra.mxu0 %v8685
        %8707 = vmatprep.subr.bf16.mxu0 0
        %8708 = vmatpush1.bf16.msra.mxu0 %v8686
        %8709 = vmatprep.subr.bf16.mxu0 0
        %8710 = vmatpush1.bf16.msra.mxu0 %v8687
        %8711 = vmatprep.subr.bf16.mxu0 0
        %8712 = vmatpush1.bf16.msra.mxu0 %v8688
        %8713 = vmatprep.subr.bf16.mxu0 0
        %8714 = vmatpush1.bf16.msra.mxu0 0
        %8715 = vmatprep.subr.bf16.mxu0 0
        %8716 = vmatpush1.bf16.msra.mxu0 0
        %8717 = vmatprep.subr.bf16.mxu0 0
        %8718 = vmatpush1.bf16.msra.mxu0 0
        %8719 = vmatprep.subr.bf16.mxu0 0
        %8720 = vmatpush1.bf16.msra.mxu0 0
        %8721 = vmatprep.subr.bf16.mxu0 0
        %8722 = vmatpush1.bf16.msra.mxu0 0
        %8723 = vmatprep.subr.bf16.mxu0 0
        %8724 = vmatpush1.bf16.msra.mxu0 0
        %8725 = vmatprep.subr.bf16.mxu0 0
        %8726 = vmatpush1.bf16.msra.mxu0 0
        %8727 = vmatprep.subr.bf16.mxu0 0
        %8728 = vmatpush1.bf16.msra.mxu0 0
        %8729 = vmatprep.mubr.bf16.mxu0 0
        %8730 = vmatmul.mubr.bf16.gmra.mrb[0].mxu0 %v8625
        %v8731 = vpop.f32.mrb[0].mxu0
        %v8732 = vadd.f32 %v8647, %v8731
        %v8733 = vpop.f32.mrb[0].mxu0
        %v8734 = vpop.f32.mrb[0].mxu0
        %v8735 = vpop.f32.mrb[0].mxu0
        %8736 = vdwg.mxu0
        %8737 = vst [vmem:[%s507] sm:$0xf] %v8732
        %s8738 = sand.u32 %s316, 1
        %s8739 = scalar_lea.sflag [#allocation5], %s8738
        %s8740 = sand.u32 %s316, 1
        %s8741 = smul.addr %s8740, 4
        %s8742 = scalar_lea.vmem [#allocation12], %s8741
        // Predicated region
        $region93: #{forward.1} parent=71 // pred_check
          %p8743 = pneg %p326
        $region94: #{forward.1} parent=71 // pred_check_branch
          %8745 = sbr.rel (%p8743) target = $region96
        $region95: #{forward.1} parent=71 // pred_region
          %s8747 = ssub.s32 64, 64
          %8748 = vsyncadd %s8739, %s8747
          %s8749 = smul.addr %s30, 64
          %s8750 = scalar_lea.hbm %s13, %s8749
          %s8752 = sshll.u32 %s8742, 4
          %s8753 = int_to_ptr.vmem [resolvable:$true] %s8752
          %8755 = dma.vmem_to_hbm [thread:$0]  %s8753, 64, %s8750, %s8739
        $region96: #{forward.1} parent=71 // pred_fallthru
          _
      $region72: #{forward.1} parent=5 // pred_fallthru
        _
      %p8756 = scmp.le.s32.totalorder 2, %s25
      // Predicated region
      $region97: #{forward.1} parent=5 // pred_check
        %p8757 = pneg %p8756
      $region98: #{forward.1} parent=5 // pred_check_branch
        %8759 = sbr.rel (%p8757) target = $region100
      $region99: #{forward.1} parent=5 // pred_region
        %s8760 = ssub.s32 %s25, 2
        // Predicated region
        $region101: #{forward.1} parent=99 // pred_check
          %p8761 = pneg %p332
        $region102: #{forward.1} parent=99 // pred_check_branch
          %8763 = sbr.rel (%p8761) target = $region104
        $region103: #{forward.1} parent=99 // pred_region
          %s8764 = sand.u32 %s317, 1
          %s8765 = scalar_lea.sflag [#allocation5], %s8764
          %s8766 = sand.u32 %s317, 1
          %s8767 = smul.addr %s8766, 4
          %s8768 = scalar_lea.vmem [#allocation12], %s8767
          %8769 = dma.done %s8765, 64
        $region104: #{forward.1} parent=99 // pred_fallthru
          _
      $region100: #{forward.1} parent=5 // pred_fallthru
        _
    $region6: #{forward.1} parent=1 // loop_footer
      %s29 = sadd.s32 1, %s25
    $region7: #{forward.1} parent=1 // loop_footer_branch
      %24 = sbr.rel target = $region3
    $region8: #{forward.1} parent=1 // loop_exit
      _
    %8770 = vsyncpa [#allocation4], 1
    %s8771 = scalar_lea.sflag [#allocation4], 1
    %8772 = vsyncpa %s8771, 1
    %8773 = vsyncpa [#allocation7], 1
    %8774 = vsyncpa [#allocation10], 1
    %8775 = vsyncpa [#allocation5], 1
    %s8776 = scalar_lea.sflag [#allocation5], 1
    %8777 = vsyncpa %s8776, 1

</llo_original>
